<compile_context>
chip_gen: v7x
topology: tpu7x:2x2x1
jax: 0.10.0
libtpu: 0.0.40
codegen_flags: <defaults>
</compile_context>

<pallas_src>
import functools

import jax
import jax.numpy as jnp
from jax.experimental import pallas as pl
from jax.experimental.pallas import tpu as pltpu

BN_EPS = 1e-5
TM = 256                          # M tile (im2col rows)
TN = 256                          # N tile (output channels)
VMEM_LIMIT = 32 * 1024 * 1024     # explicit budget, safe on v5e/v6e/v7x


def _round_up(x, m):
    return (x + m - 1) // m * m


def _pick_tk(kp):
    """Largest K tile in {512,384,256,128} that divides the padded K."""
    for t in (512, 384, 256, 128):
        if kp % t == 0:
            return t
    return 128


# --------------------------------------------------------------------------
# Pallas kernels
# --------------------------------------------------------------------------

def _matmul_bn_kernel(x_ref, w_ref, scale_ref, shift_ref, *rest,
                      apply_relu, has_residual):
    """acc += x @ w over K tiles; epilogue: affine (+residual) (+ReLU)."""
    if has_residual:
        res_ref, o_ref, acc_ref = rest
    else:
        res_ref = None
        o_ref, acc_ref = rest

    k = pl.program_id(2)

    @pl.when(k == 0)
    def _():
        acc_ref[...] = jnp.zeros_like(acc_ref)

    acc_ref[...] += jnp.dot(x_ref[...], w_ref[...],
                            preferred_element_type=jnp.float32)

    @pl.when(k == pl.num_programs(2) - 1)
    def _():
        y = acc_ref[...] * scale_ref[...] + shift_ref[...]   # f32 epilogue
        if has_residual:
            y = y + res_ref[...].astype(jnp.float32)
        if apply_relu:
            y = jnp.maximum(y, 0.0)
        o_ref[...] = y.astype(o_ref.dtype)


def matmul_affine(x, w_p, scale_p, shift_p, n_out, *, apply_relu,
                  residual=None, out_dtype=jnp.bfloat16):
    """(M,K)@(Kp,Np) with per-column affine (+residual +ReLU) epilogue.

    w_p/scale_p/shift_p are pre-packed and padded (bf16 / f32). The matmul is
    tiled over (M, N, K) with bf16 operands and a (tm, tn) f32 accumulator.
    """
    M, K = x.shape
    Kp, Np = w_p.shape

    tm = min(TM, _round_up(M, 8))
    Mp = _round_up(M, tm)
    tn = TN if Np % TN == 0 else 128
    tk = _pick_tk(Kp)

    x = x.astype(jnp.bfloat16)
    if (Mp, Kp) != (M, K):
        x = jnp.pad(x, ((0, Mp - M), (0, Kp - K)))

    has_res = residual is not None
    inputs = [x, w_p, scale_p, shift_p]
    in_specs = [
        pl.BlockSpec((tm, tk), lambda i, j, k: (i, k)),
        pl.BlockSpec((tk, tn), lambda i, j, k: (k, j)),
        pl.BlockSpec((1, tn), lambda i, j, k: (0, j)),
        pl.BlockSpec((1, tn), lambda i, j, k: (0, j)),
    ]
    if has_res:
        r = residual.astype(jnp.bfloat16)
        if r.shape != (Mp, Np):
            r = jnp.pad(r, ((0, Mp - r.shape[0]), (0, Np - r.shape[1])))
        inputs.append(r)
        in_specs.append(pl.BlockSpec((tm, tn), lambda i, j, k: (i, j)))

    out = pl.pallas_call(
        functools.partial(_matmul_bn_kernel, apply_relu=apply_relu,
                          has_residual=has_res),
        out_shape=jax.ShapeDtypeStruct((Mp, Np), out_dtype),
        grid_spec=pltpu.PrefetchScalarGridSpec(
            num_scalar_prefetch=0,
            grid=(Mp // tm, Np // tn, Kp // tk),
            in_specs=in_specs,
            out_specs=pl.BlockSpec((tm, tn), lambda i, j, k: (i, j)),
            scratch_shapes=[pltpu.VMEM((tm, tn), jnp.float32)],
        ),
        compiler_params=pltpu.CompilerParams(
            dimension_semantics=("parallel", "parallel", "arbitrary"),
            vmem_limit_bytes=VMEM_LIMIT),
    )(*inputs)
    return out[:M, :n_out]


def _maxpool3x3s2_kernel(xee_ref, xeo_ref, xoe_ref, xoo_ref, o_ref):
    """3x3 stride-2 max pool from even/odd parity planes (contiguous slices)."""
    Ho, Wo = o_ref.shape[1], o_ref.shape[2]
    xee = xee_ref[...].astype(jnp.float32)
    xeo = xeo_ref[...].astype(jnp.float32)
    xoe = xoe_ref[...].astype(jnp.float32)
    xoo = xoo_ref[...].astype(jnp.float32)
    m = xoo[:, :Ho, :Wo, :]                      # (odd row, odd col)
    for a in range(2):
        for b in range(2):
            m = jnp.maximum(m, xee[:, a:a + Ho, b:b + Wo, :])
        m = jnp.maximum(m, xeo[:, a:a + Ho, :Wo, :])
    for b in range(2):
        m = jnp.maximum(m, xoe[:, :Ho, b:b + Wo, :])
    o_ref[...] = m.astype(o_ref.dtype)


def maxpool2d(x, k=3, stride=2):
    """nn.MaxPool2d(3, 2) (no padding, floor mode) via parity decomposition.

    The four parity planes together are exactly 1x the input (no 9x window
    materialization); the 9-way max runs inside the kernel on a per-batch
    block with a 'parallel' grid over batch.
    """
    assert k == 3 and stride == 2
    B, H, W, C = x.shape
    Ho = (H - k) // stride + 1
    Wo = (W - k) // stride + 1
    xee = x[:, 0::2, 0::2, :]
    xeo = x[:, 0::2, 1::2, :]
    xoe = x[:, 1::2, 0::2, :]
    xoo = x[:, 1::2, 1::2, :]

    def spec(a):
        return pl.BlockSpec((1,) + a.shape[1:], lambda b: (b, 0, 0, 0))

    return pl.pallas_call(
        _maxpool3x3s2_kernel,
        out_shape=jax.ShapeDtypeStruct((B, Ho, Wo, C), x.dtype),
        grid_spec=pltpu.PrefetchScalarGridSpec(
            num_scalar_prefetch=0,
            grid=(B,),
            in_specs=[spec(xee), spec(xeo), spec(xoe), spec(xoo)],
            out_specs=pl.BlockSpec((1, Ho, Wo, C), lambda b: (b, 0, 0, 0)),
        ),
        compiler_params=pltpu.CompilerParams(
            dimension_semantics=("parallel",),
            vmem_limit_bytes=VMEM_LIMIT),
    )(xee, xeo, xoe, xoo)


def _spatial_mean_kernel(x_ref, o_ref, acc_ref, *, inv_hw):
    s = pl.program_id(0)

    @pl.when(s == 0)
    def _():
        acc_ref[...] = jnp.zeros_like(acc_ref)

    acc_ref[...] += jnp.sum(x_ref[...].astype(jnp.float32), axis=1)

    @pl.when(s == pl.num_programs(0) - 1)
    def _():
        o_ref[...] = acc_ref[...] * inv_hw


def avgpool(x):
    """Mean over H,W -> (B, C), tiled reduction over the spatial axis."""
    B, H, W, C = x.shape
    HW = H * W
    Bp = _round_up(B, 8)
    ts = min(512, _round_up(HW, 8))
    HWp = _round_up(HW, ts)
    x2 = x.reshape(B, HW, C)
    if (Bp, HWp) != (B, HW):
        x2 = jnp.pad(x2, ((0, Bp - B), (0, HWp - HW), (0, 0)))
    out = pl.pallas_call(
        functools.partial(_spatial_mean_kernel, inv_hw=1.0 / HW),
        out_shape=jax.ShapeDtypeStruct((Bp, C), jnp.float32),
        grid_spec=pltpu.PrefetchScalarGridSpec(
            num_scalar_prefetch=0,
            grid=(HWp // ts,),
            in_specs=[pl.BlockSpec((Bp, ts, C), lambda s: (0, s, 0))],
            out_specs=pl.BlockSpec((Bp, C), lambda s: (0, 0)),
            scratch_shapes=[pltpu.VMEM((Bp, C), jnp.float32)],
        ),
        compiler_params=pltpu.CompilerParams(
            dimension_semantics=("arbitrary",),
            vmem_limit_bytes=VMEM_LIMIT),
    )(x2)
    return out[:B]


# --------------------------------------------------------------------------
# Glue: im2col (layout plumbing in plain JAX, single bf16 materialization)
# --------------------------------------------------------------------------

def _im2col(x, kh, kw, stride, pad):
    """x: (B,H,W,C) bf16 -> patches (B*Ho*Wo, kh*kw*C), PyTorch conv order."""
    # Streaming the patches directly via BlockSpec index_maps would remove this
    # HBM materialization entirely; kept as a single bf16 materialization here.
    x = jnp.pad(x, ((0, 0), (pad, pad), (pad, pad), (0, 0)))
    B, Hp, Wp, C = x.shape
    Ho = (Hp - kh) // stride + 1
    Wo = (Wp - kw) // stride + 1
    cols = []
    for i in range(kh):
        for j in range(kw):
            cols.append(x[:, i:i + stride * Ho:stride,
                          j:j + stride * Wo:stride, :])
    p = jnp.stack(cols, axis=3)                        # (B,Ho,Wo,kh*kw,C)
    return p.reshape(B * Ho * Wo, kh * kw * C), Ho, Wo


def conv_bn(x, layer, *, relu, residual=None):
    """Conv2d + BatchNorm2d (+ residual add) (+ ReLU), one Pallas matmul."""
    B = x.shape[0]
    patches, Ho, Wo = _im2col(x, layer["kh"], layer["kw"],
                              layer["stride"], layer["pad"])
    res2 = residual.reshape(B * Ho * Wo, -1) if residual is not None else None
    out = matmul_affine(patches, layer["w"], layer["scale"], layer["shift"],
                        layer["n"], apply_relu=relu, residual=res2,
                        out_dtype=jnp.bfloat16)
    return out.reshape(B, Ho, Wo, layer["n"])


# --------------------------------------------------------------------------
# ResNet model
# --------------------------------------------------------------------------

def residual_block(x, blk):
    stride = blk["stride"]
    left = conv_bn(x, blk["conv1"], relu=True)
    if stride == 1:
        right = x                                   # nn.Identity
    else:
        right = conv_bn(x, blk["conv_ds"], relu=False)
    # relu(bn2(conv2(left)) + right) fused into the conv2 matmul epilogue.
    return conv_bn(left, blk["conv2"], relu=True, residual=right)


def resnet_forward(packed, x_nchw):
    x = jnp.transpose(x_nchw, (0, 2, 3, 1)).astype(jnp.bfloat16)   # NCHW->NHWC
    x = conv_bn(x, packed["stem"], relu=True)
    x = maxpool2d(x, 3, 2)
    for group in packed["groups"]:
        # TODO(synk): nn.Dropout(p=0.0) is the identity; not emitted.
        for blk in group:
            x = residual_block(x, blk)
    pooled = avgpool(x)                                            # (B, C) f32
    fc = packed["fc"]
    logits = matmul_affine(pooled, fc["w"], fc["scale"], fc["shift"], fc["n"],
                           apply_relu=False, out_dtype=jnp.float32)
    return logits


# --------------------------------------------------------------------------
# Parameter init (PyTorch-like) + one-time packing/padding for the kernels
# --------------------------------------------------------------------------

def init_params(key, n_blocks_per_group, out_features_per_group,
                first_strides_per_group, n_classes, first_conv_size):
    keys = iter(jax.random.split(key, 2048))

    def conv(cin, cout, k):
        w = jax.random.normal(next(keys), (cout, cin, k, k),
                              jnp.float32) / jnp.sqrt(cin * k * k)
        b = 0.01 * jax.random.normal(next(keys), (cout,), jnp.float32)
        return {"w": w, "b": b}

    def bn(c):
        # TODO(synk): BatchNorm implemented in inference mode (running stats),
        # not training-mode batch statistics.
        return {
            "gamma": 1.0 + 0.1 * jax.random.normal(next(keys), (c,), jnp.float32),
            "beta": 0.1 * jax.random.normal(next(keys), (c,), jnp.float32),
            "mean": 0.1 * jax.random.normal(next(keys), (c,), jnp.float32),
            "var": jax.random.uniform(next(keys), (c,), jnp.float32, 0.5, 1.5),
        }

    params = {
        "conv0": conv(3, out_features_per_group[0], first_conv_size),
        "bn0": bn(out_features_per_group[0]),
        "groups": [],
    }
    in_feats = out_features_per_group[0]
    for n, out_feats, stride in zip(n_blocks_per_group, out_features_per_group,
                                    first_strides_per_group):
        blocks = []
        for bi in range(n):
            s = stride if bi == 0 else 1
            cin = in_feats if bi == 0 else out_feats
            blk = {"conv1": conv(cin, out_feats, 3), "bn1": bn(out_feats),
                   "conv2": conv(out_feats, out_feats, 3), "bn2": bn(out_feats)}
            if s != 1:
                blk["conv_ds"] = conv(cin, out_feats, 1)
                blk["bn_ds"] = bn(out_feats)
            blocks.append(blk)
        params["groups"].append(blocks)
        in_feats = out_feats
    params["fc_w"] = jax.random.normal(
        next(keys), (n_classes, out_features_per_group[-1]),
        jnp.float32) / jnp.sqrt(out_features_per_group[-1])
    params["fc_b"] = 0.01 * jax.random.normal(next(keys), (n_classes,),
                                              jnp.float32)
    return params


def _pack_conv_bn(conv_p, bn_p, stride, pad):
    """Pre-fold BN into (scale, shift) and pad weight mat once (bf16/Kp/Np)."""
    w = conv_p["w"]                                  # (Cout, Cin, kh, kw)
    Cout, Cin, kh, kw = w.shape
    K = kh * kw * Cin
    wmat = jnp.transpose(w, (2, 3, 1, 0)).reshape(K, Cout)
    scale = bn_p["gamma"] / jnp.sqrt(bn_p["var"] + BN_EPS)
    shift = scale * (conv_p["b"] - bn_p["mean"]) + bn_p["beta"]
    Kp, Np = _round_up(K, 128), _round_up(Cout, 128)
    wp = jnp.zeros((Kp, Np), jnp.bfloat16).at[:K, :Cout].set(
        wmat.astype(jnp.bfloat16))
    sp = jnp.zeros((1, Np), jnp.float32).at[0, :Cout].set(scale)
    shp = jnp.zeros((1, Np), jnp.float32).at[0, :Cout].set(shift)
    return {"w": wp, "scale": sp, "shift": shp, "n": Cout,
            "kh": kh, "kw": kw, "stride": stride, "pad": pad}


def pack_params(params, first_strides_per_group):
    packed = {"stem": _pack_conv_bn(params["conv0"], params["bn0"],
                                    stride=2, pad=3),
              "groups": []}
    for group, first_stride in zip(params["groups"], first_strides_per_group):
        g = []
        for bi, blk in enumerate(group):
            s = first_stride if bi == 0 else 1
            pb = {"stride": s,
                  "conv1": _pack_conv_bn(blk["conv1"], blk["bn1"], s, 1),
                  "conv2": _pack_conv_bn(blk["conv2"], blk["bn2"], 1, 1)}
            if s != 1:
                pb["conv_ds"] = _pack_conv_bn(blk["conv_ds"], blk["bn_ds"], s, 0)
            g.append(pb)
        packed["groups"].append(g)
    fc_w, fc_b = params["fc_w"], params["fc_b"]       # (n_classes, C), (n_classes,)
    n_classes, C = fc_w.shape
    Kp, Np = _round_up(C, 128), _round_up(n_classes, 128)
    wp = jnp.zeros((Kp, Np), jnp.bfloat16).at[:C, :n_classes].set(
        fc_w.T.astype(jnp.bfloat16))
    sp = jnp.ones((1, Np), jnp.float32)
    shp = jnp.zeros((1, Np), jnp.float32).at[0, :n_classes].set(fc_b)
    packed["fc"] = {"w": wp, "scale": sp, "shift": shp, "n": n_classes}
    return packed


# --------------------------------------------------------------------------

if __name__ == "__main__":
    key = jax.random.PRNGKey(0)
    pkey, xkey = jax.random.split(key)

    # Small ResNet34-style config (same architecture family, reduced size).
    n_blocks_per_group = [1, 1, 1, 1]
    out_features_per_group = [8, 16, 32, 64]
    first_strides_per_group = [1, 2, 2, 2]
    n_classes = 10
    first_conv_size = 7

    raw = init_params(pkey, n_blocks_per_group, out_features_per_group,
                      first_strides_per_group, n_classes, first_conv_size)
    packed = pack_params(raw, first_strides_per_group)   # one-time packing

    x = jax.random.normal(xkey, (2, 3, 32, 32), jnp.float32)   # NCHW input

    fwd = jax.jit(functools.partial(resnet_forward, packed))
    out = fwd(x)
    jax.block_until_ready(out)
    assert out.shape == (2, n_classes), out.shape
    assert bool(jnp.all(jnp.isfinite(out)))
    print("KERNEL_OK")
</pallas_src>

<mosaic_0001>
module attributes {stable_mosaic.version = 11 : i64} {
  func.func @_matmul_bn_kernel(%arg0: i32, %arg1: i32, %arg2: i32, %arg3: memref<256x256xbf16, #tpu.memory_space<vmem>>, %arg4: memref<256x128xbf16, #tpu.memory_space<vmem>>, %arg5: memref<1x128xf32, #tpu.memory_space<vmem>>, %arg6: memref<1x128xf32, #tpu.memory_space<vmem>>, %arg7: memref<256x128xbf16, #tpu.memory_space<vmem>>, %arg8: memref<256x128xf32, #tpu.memory_space<vmem>>) attributes {dimension_semantics = [#tpu.dimension_semantics<parallel>, #tpu.dimension_semantics<parallel>, #tpu.dimension_semantics<arbitrary>], iteration_bounds = array<i64: 2, 1, 1>, scalar_prefetch = 0 : i64, scratch_operands = 1 : i64, tpu.core_type = #tpu.core_type<tc>, window_params = [{transform_indices = @transform_0, window_bounds = array<i64: 256, 256>}, {transform_indices = @transform_1, window_bounds = array<i64: 256, 128>}, {transform_indices = @transform_2, window_bounds = array<i64: 1, 128>}, {transform_indices = @transform_3, window_bounds = array<i64: 1, 128>}, {transform_indices = @transform_4, window_bounds = array<i64: 256, 128>}]} {
    %c0_i32 = arith.constant 0 : i32
    %0 = arith.cmpi eq, %arg2, %c0_i32 : i32
    %1 = arith.extui %0 : i1 to i32
    %c0_i32_0 = arith.constant 0 : i32
    %2 = arith.cmpi ne, %1, %c0_i32_0 : i32
    scf.if %2 {
      %cst_10 = arith.constant 0.000000e+00 : f32
      %12 = vector.broadcast %cst_10 : f32 to vector<256x128xf32>
      %c0_11 = arith.constant 0 : index
      %c0_12 = arith.constant 0 : index
      %13 = vector.load %arg8[%c0_11, %c0_12] : memref<256x128xf32, #tpu.memory_space<vmem>>, vector<256x128xf32>
      tpu.vector_store %arg8[%c0_11, %c0_12], %12 {strides = array<i32>} : memref<256x128xf32, #tpu.memory_space<vmem>>, vector<256x128xf32>,
    } else {
    }
    %c0 = arith.constant 0 : index
    %c0_1 = arith.constant 0 : index
    %3 = vector.load %arg8[%c0, %c0_1] : memref<256x128xf32, #tpu.memory_space<vmem>>, vector<256x128xf32>
    %c0_2 = arith.constant 0 : index
    %c0_3 = arith.constant 0 : index
    %4 = vector.load %arg3[%c0_2, %c0_3] : memref<256x256xbf16, #tpu.memory_space<vmem>>, vector<256x256xbf16>
    %c0_4 = arith.constant 0 : index
    %c0_5 = arith.constant 0 : index
    %5 = vector.load %arg4[%c0_4, %c0_5] : memref<256x128xbf16, #tpu.memory_space<vmem>>, vector<256x128xbf16>
    %cst = arith.constant dense<0.000000e+00> : vector<256x128xf32>
    %6 = tpu.matmul %4, %5, %cst {dimension_numbers = #tpu.dot_dimension_numbers<[1], [0], [0], [1], [0, 0, 1, 1], [], []>} : vector<256x256xbf16>, vector<256x128xbf16>, vector<256x128xf32> -> vector<256x128xf32>
    %7 = arith.addf %3, %6 : vector<256x128xf32>
    %c0_6 = arith.constant 0 : index
    %c0_7 = arith.constant 0 : index
    %8 = vector.load %arg8[%c0_6, %c0_7] : memref<256x128xf32, #tpu.memory_space<vmem>>, vector<256x128xf32>
    tpu.vector_store %arg8[%c0_6, %c0_7], %7 {strides = array<i32>} : memref<256x128xf32, #tpu.memory_space<vmem>>, vector<256x128xf32>,
    %c0_i32_8 = arith.constant 0 : i32
    %9 = arith.cmpi eq, %arg2, %c0_i32_8 : i32
    %10 = arith.extui %9 : i1 to i32
    %c0_i32_9 = arith.constant 0 : i32
    %11 = arith.cmpi ne, %10, %c0_i32_9 : i32
    scf.if %11 {
      %c0_10 = arith.constant 0 : index
      %c0_11 = arith.constant 0 : index
      %12 = vector.load %arg8[%c0_10, %c0_11] : memref<256x128xf32, #tpu.memory_space<vmem>>, vector<256x128xf32>
      %c0_12 = arith.constant 0 : index
      %c0_13 = arith.constant 0 : index
      %13 = vector.load %arg5[%c0_12, %c0_13] : memref<1x128xf32, #tpu.memory_space<vmem>>, vector<1x128xf32>
      %14 = vector.broadcast %13 : vector<1x128xf32> to vector<256x128xf32>
      %15 = arith.mulf %12, %14 : vector<256x128xf32>
      %c0_14 = arith.constant 0 : index
      %c0_15 = arith.constant 0 : index
      %16 = vector.load %arg6[%c0_14, %c0_15] : memref<1x128xf32, #tpu.memory_space<vmem>>, vector<1x128xf32>
      %17 = vector.broadcast %16 : vector<1x128xf32> to vector<256x128xf32>
      %18 = arith.addf %15, %17 : vector<256x128xf32>
      %cst_16 = arith.constant 0.000000e+00 : f32
      %19 = vector.broadcast %cst_16 : f32 to vector<256x128xf32>
      %20 = arith.maximumf %18, %19 : vector<256x128xf32>
      %21 = arith.truncf %20 : vector<256x128xf32> to vector<256x128xbf16>
      %c0_17 = arith.constant 0 : index
      %c0_18 = arith.constant 0 : index
      %22 = vector.load %arg7[%c0_17, %c0_18] : memref<256x128xbf16, #tpu.memory_space<vmem>>, vector<256x128xbf16>
      tpu.vector_store %arg7[%c0_17, %c0_18], %21 {strides = array<i32>} : memref<256x128xbf16, #tpu.memory_space<vmem>>, vector<256x128xbf16>,
    } else {
    }
    return
  }
  func.func @transform_0(%arg0: i32, %arg1: i32, %arg2: i32) -> (i32, i32) {
    %c0_i32 = arith.constant 0 : i32
    return %arg0, %arg2 : i32, i32
  }
  func.func @transform_1(%arg0: i32, %arg1: i32, %arg2: i32) -> (i32, i32) {
    %c0_i32 = arith.constant 0 : i32
    return %arg2, %arg1 : i32, i32
  }
  func.func @transform_2(%arg0: i32, %arg1: i32, %arg2: i32) -> (i32, i32) {
    %c0_i32 = arith.constant 0 : i32
    %c0_i32_0 = arith.constant 0 : i32
    return %c0_i32, %arg1 : i32, i32
  }
  func.func @transform_3(%arg0: i32, %arg1: i32, %arg2: i32) -> (i32, i32) {
    %c0_i32 = arith.constant 0 : i32
    %c0_i32_0 = arith.constant 0 : i32
    return %c0_i32, %arg1 : i32, i32
  }
  func.func @transform_4(%arg0: i32, %arg1: i32, %arg2: i32) -> (i32, i32) {
    %c0_i32 = arith.constant 0 : i32
    return %arg0, %arg1 : i32, i32
  }
}

module attributes {stable_mosaic.version = 11 : i64} {
  func.func @_maxpool3x3s2_kernel(%arg0: i32, %arg1: memref<1x8x8x8xbf16, #tpu.memory_space<vmem>>, %arg2: memref<1x8x8x8xbf16, #tpu.memory_space<vmem>>, %arg3: memref<1x8x8x8xbf16, #tpu.memory_space<vmem>>, %arg4: memref<1x8x8x8xbf16, #tpu.memory_space<vmem>>, %arg5: memref<1x7x7x8xbf16, #tpu.memory_space<vmem>>) attributes {dimension_semantics = [#tpu.dimension_semantics<parallel>], iteration_bounds = array<i64: 2>, scalar_prefetch = 0 : i64, scratch_operands = 0 : i64, tpu.core_type = #tpu.core_type<tc>, window_params = [{transform_indices = @transform_0, window_bounds = array<i64: 1, 8, 8, 8>}, {transform_indices = @transform_1, window_bounds = array<i64: 1, 8, 8, 8>}, {transform_indices = @transform_2, window_bounds = array<i64: 1, 8, 8, 8>}, {transform_indices = @transform_3, window_bounds = array<i64: 1, 8, 8, 8>}, {transform_indices = @transform_4, window_bounds = array<i64: 1, 7, 7, 8>}]} {
    %c0 = arith.constant 0 : index
    %c0_0 = arith.constant 0 : index
    %c0_1 = arith.constant 0 : index
    %c0_2 = arith.constant 0 : index
    %0 = vector.load %arg1[%c0, %c0_0, %c0_1, %c0_2] : memref<1x8x8x8xbf16, #tpu.memory_space<vmem>>, vector<1x8x8x8xbf16>
    %1 = arith.extf %0 : vector<1x8x8x8xbf16> to vector<1x8x8x8xf32>
    %c0_3 = arith.constant 0 : index
    %c0_4 = arith.constant 0 : index
    %c0_5 = arith.constant 0 : index
    %c0_6 = arith.constant 0 : index
    %2 = vector.load %arg2[%c0_3, %c0_4, %c0_5, %c0_6] : memref<1x8x8x8xbf16, #tpu.memory_space<vmem>>, vector<1x8x8x8xbf16>
    %3 = arith.extf %2 : vector<1x8x8x8xbf16> to vector<1x8x8x8xf32>
    %c0_7 = arith.constant 0 : index
    %c0_8 = arith.constant 0 : index
    %c0_9 = arith.constant 0 : index
    %c0_10 = arith.constant 0 : index
    %4 = vector.load %arg3[%c0_7, %c0_8, %c0_9, %c0_10] : memref<1x8x8x8xbf16, #tpu.memory_space<vmem>>, vector<1x8x8x8xbf16>
    %5 = arith.extf %4 : vector<1x8x8x8xbf16> to vector<1x8x8x8xf32>
    %c0_11 = arith.constant 0 : index
    %c0_12 = arith.constant 0 : index
    %c0_13 = arith.constant 0 : index
    %c0_14 = arith.constant 0 : index
    %6 = vector.load %arg4[%c0_11, %c0_12, %c0_13, %c0_14] : memref<1x8x8x8xbf16, #tpu.memory_space<vmem>>, vector<1x8x8x8xbf16>
    %7 = arith.extf %6 : vector<1x8x8x8xbf16> to vector<1x8x8x8xf32>
    %8 = vector.extract_strided_slice %7 {offsets = [0, 0, 0, 0], sizes = [1, 7, 7, 8], strides = [1, 1, 1, 1]} : vector<1x8x8x8xf32> to vector<1x7x7x8xf32>
    %9 = vector.extract_strided_slice %1 {offsets = [0, 0, 0, 0], sizes = [1, 7, 7, 8], strides = [1, 1, 1, 1]} : vector<1x8x8x8xf32> to vector<1x7x7x8xf32>
    %10 = arith.maximumf %8, %9 : vector<1x7x7x8xf32>
    %11 = vector.extract_strided_slice %1 {offsets = [0, 0, 1, 0], sizes = [1, 7, 7, 8], strides = [1, 1, 1, 1]} : vector<1x8x8x8xf32> to vector<1x7x7x8xf32>
    %12 = arith.maximumf %10, %11 : vector<1x7x7x8xf32>
    %13 = vector.extract_strided_slice %3 {offsets = [0, 0, 0, 0], sizes = [1, 7, 7, 8], strides = [1, 1, 1, 1]} : vector<1x8x8x8xf32> to vector<1x7x7x8xf32>
    %14 = arith.maximumf %12, %13 : vector<1x7x7x8xf32>
    %15 = vector.extract_strided_slice %1 {offsets = [0, 1, 0, 0], sizes = [1, 7, 7, 8], strides = [1, 1, 1, 1]} : vector<1x8x8x8xf32> to vector<1x7x7x8xf32>
    %16 = arith.maximumf %14, %15 : vector<1x7x7x8xf32>
    %17 = vector.extract_strided_slice %1 {offsets = [0, 1, 1, 0], sizes = [1, 7, 7, 8], strides = [1, 1, 1, 1]} : vector<1x8x8x8xf32> to vector<1x7x7x8xf32>
    %18 = arith.maximumf %16, %17 : vector<1x7x7x8xf32>
    %19 = vector.extract_strided_slice %3 {offsets = [0, 1, 0, 0], sizes = [1, 7, 7, 8], strides = [1, 1, 1, 1]} : vector<1x8x8x8xf32> to vector<1x7x7x8xf32>
    %20 = arith.maximumf %18, %19 : vector<1x7x7x8xf32>
    %21 = vector.extract_strided_slice %5 {offsets = [0, 0, 0, 0], sizes = [1, 7, 7, 8], strides = [1, 1, 1, 1]} : vector<1x8x8x8xf32> to vector<1x7x7x8xf32>
    %22 = arith.maximumf %20, %21 : vector<1x7x7x8xf32>
    %23 = vector.extract_strided_slice %5 {offsets = [0, 0, 1, 0], sizes = [1, 7, 7, 8], strides = [1, 1, 1, 1]} : vector<1x8x8x8xf32> to vector<1x7x7x8xf32>
    %24 = arith.maximumf %22, %23 : vector<1x7x7x8xf32>
    %25 = arith.truncf %24 : vector<1x7x7x8xf32> to vector<1x7x7x8xbf16>
    %c0_15 = arith.constant 0 : index
    %c0_16 = arith.constant 0 : index
    %c0_17 = arith.constant 0 : index
    %c0_18 = arith.constant 0 : index
    %26 = vector.load %arg5[%c0_15, %c0_16, %c0_17, %c0_18] : memref<1x7x7x8xbf16, #tpu.memory_space<vmem>>, vector<1x7x7x8xbf16>
    tpu.vector_store %arg5[%c0_15, %c0_16, %c0_17, %c0_18], %25 {strides = array<i32>} : memref<1x7x7x8xbf16, #tpu.memory_space<vmem>>, vector<1x7x7x8xbf16>,
    return
  }
  func.func @transform_0(%arg0: i32) -> (i32, i32, i32, i32) {
    %c0_i32 = arith.constant 0 : i32
    %c0_i32_0 = arith.constant 0 : i32
    %c0_i32_1 = arith.constant 0 : i32
    %c0_i32_2 = arith.constant 0 : i32
    return %arg0, %c0_i32, %c0_i32_0, %c0_i32_1 : i32, i32, i32, i32
  }
  func.func @transform_1(%arg0: i32) -> (i32, i32, i32, i32) {
    %c0_i32 = arith.constant 0 : i32
    %c0_i32_0 = arith.constant 0 : i32
    %c0_i32_1 = arith.constant 0 : i32
    %c0_i32_2 = arith.constant 0 : i32
    return %arg0, %c0_i32, %c0_i32_0, %c0_i32_1 : i32, i32, i32, i32
  }
  func.func @transform_2(%arg0: i32) -> (i32, i32, i32, i32) {
    %c0_i32 = arith.constant 0 : i32
    %c0_i32_0 = arith.constant 0 : i32
    %c0_i32_1 = arith.constant 0 : i32
    %c0_i32_2 = arith.constant 0 : i32
    return %arg0, %c0_i32, %c0_i32_0, %c0_i32_1 : i32, i32, i32, i32
  }
  func.func @transform_3(%arg0: i32) -> (i32, i32, i32, i32) {
    %c0_i32 = arith.constant 0 : i32
    %c0_i32_0 = arith.constant 0 : i32
    %c0_i32_1 = arith.constant 0 : i32
    %c0_i32_2 = arith.constant 0 : i32
    return %arg0, %c0_i32, %c0_i32_0, %c0_i32_1 : i32, i32, i32, i32
  }
  func.func @transform_4(%arg0: i32) -> (i32, i32, i32, i32) {
    %c0_i32 = arith.constant 0 : i32
    %c0_i32_0 = arith.constant 0 : i32
    %c0_i32_1 = arith.constant 0 : i32
    %c0_i32_2 = arith.constant 0 : i32
    return %arg0, %c0_i32, %c0_i32_0, %c0_i32_1 : i32, i32, i32, i32
  }
}

module attributes {stable_mosaic.version = 11 : i64} {
  func.func @_matmul_bn_kernel(%arg0: i32, %arg1: i32, %arg2: i32, %arg3: memref<104x128xbf16, #tpu.memory_space<vmem>>, %arg4: memref<128x128xbf16, #tpu.memory_space<vmem>>, %arg5: memref<1x128xf32, #tpu.memory_space<vmem>>, %arg6: memref<1x128xf32, #tpu.memory_space<vmem>>, %arg7: memref<104x128xbf16, #tpu.memory_space<vmem>>, %arg8: memref<104x128xf32, #tpu.memory_space<vmem>>) attributes {dimension_semantics = [#tpu.dimension_semantics<parallel>, #tpu.dimension_semantics<parallel>, #tpu.dimension_semantics<arbitrary>], iteration_bounds = array<i64: 1, 1, 1>, scalar_prefetch = 0 : i64, scratch_operands = 1 : i64, tpu.core_type = #tpu.core_type<tc>, window_params = [{transform_indices = @transform_0, window_bounds = array<i64: 104, 128>}, {transform_indices = @transform_1, window_bounds = array<i64: 128, 128>}, {transform_indices = @transform_2, window_bounds = array<i64: 1, 128>}, {transform_indices = @transform_3, window_bounds = array<i64: 1, 128>}, {transform_indices = @transform_4, window_bounds = array<i64: 104, 128>}]} {
    %c0_i32 = arith.constant 0 : i32
    %0 = arith.cmpi eq, %arg2, %c0_i32 : i32
    %1 = arith.extui %0 : i1 to i32
    %c0_i32_0 = arith.constant 0 : i32
    %2 = arith.cmpi ne, %1, %c0_i32_0 : i32
    scf.if %2 {
      %cst_10 = arith.constant 0.000000e+00 : f32
      %12 = vector.broadcast %cst_10 : f32 to vector<104x128xf32>
      %c0_11 = arith.constant 0 : index
      %c0_12 = arith.constant 0 : index
      %13 = vector.load %arg8[%c0_11, %c0_12] : memref<104x128xf32, #tpu.memory_space<vmem>>, vector<104x128xf32>
      tpu.vector_store %arg8[%c0_11, %c0_12], %12 {strides = array<i32>} : memref<104x128xf32, #tpu.memory_space<vmem>>, vector<104x128xf32>,
    } else {
    }
    %c0 = arith.constant 0 : index
    %c0_1 = arith.constant 0 : index
    %3 = vector.load %arg8[%c0, %c0_1] : memref<104x128xf32, #tpu.memory_space<vmem>>, vector<104x128xf32>
    %c0_2 = arith.constant 0 : index
    %c0_3 = arith.constant 0 : index
    %4 = vector.load %arg3[%c0_2, %c0_3] : memref<104x128xbf16, #tpu.memory_space<vmem>>, vector<104x128xbf16>
    %c0_4 = arith.constant 0 : index
    %c0_5 = arith.constant 0 : index
    %5 = vector.load %arg4[%c0_4, %c0_5] : memref<128x128xbf16, #tpu.memory_space<vmem>>, vector<128x128xbf16>
    %cst = arith.constant dense<0.000000e+00> : vector<104x128xf32>
    %6 = tpu.matmul %4, %5, %cst {dimension_numbers = #tpu.dot_dimension_numbers<[1], [0], [0], [1], [0, 0, 1, 1], [], []>} : vector<104x128xbf16>, vector<128x128xbf16>, vector<104x128xf32> -> vector<104x128xf32>
    %7 = arith.addf %3, %6 : vector<104x128xf32>
    %c0_6 = arith.constant 0 : index
    %c0_7 = arith.constant 0 : index
    %8 = vector.load %arg8[%c0_6, %c0_7] : memref<104x128xf32, #tpu.memory_space<vmem>>, vector<104x128xf32>
    tpu.vector_store %arg8[%c0_6, %c0_7], %7 {strides = array<i32>} : memref<104x128xf32, #tpu.memory_space<vmem>>, vector<104x128xf32>,
    %c0_i32_8 = arith.constant 0 : i32
    %9 = arith.cmpi eq, %arg2, %c0_i32_8 : i32
    %10 = arith.extui %9 : i1 to i32
    %c0_i32_9 = arith.constant 0 : i32
    %11 = arith.cmpi ne, %10, %c0_i32_9 : i32
    scf.if %11 {
      %c0_10 = arith.constant 0 : index
      %c0_11 = arith.constant 0 : index
      %12 = vector.load %arg8[%c0_10, %c0_11] : memref<104x128xf32, #tpu.memory_space<vmem>>, vector<104x128xf32>
      %c0_12 = arith.constant 0 : index
      %c0_13 = arith.constant 0 : index
      %13 = vector.load %arg5[%c0_12, %c0_13] : memref<1x128xf32, #tpu.memory_space<vmem>>, vector<1x128xf32>
      %14 = vector.broadcast %13 : vector<1x128xf32> to vector<104x128xf32>
      %15 = arith.mulf %12, %14 : vector<104x128xf32>
      %c0_14 = arith.constant 0 : index
      %c0_15 = arith.constant 0 : index
      %16 = vector.load %arg6[%c0_14, %c0_15] : memref<1x128xf32, #tpu.memory_space<vmem>>, vector<1x128xf32>
      %17 = vector.broadcast %16 : vector<1x128xf32> to vector<104x128xf32>
      %18 = arith.addf %15, %17 : vector<104x128xf32>
      %cst_16 = arith.constant 0.000000e+00 : f32
      %19 = vector.broadcast %cst_16 : f32 to vector<104x128xf32>
      %20 = arith.maximumf %18, %19 : vector<104x128xf32>
      %21 = arith.truncf %20 : vector<104x128xf32> to vector<104x128xbf16>
      %c0_17 = arith.constant 0 : index
      %c0_18 = arith.constant 0 : index
      %22 = vector.load %arg7[%c0_17, %c0_18] : memref<104x128xbf16, #tpu.memory_space<vmem>>, vector<104x128xbf16>
      tpu.vector_store %arg7[%c0_17, %c0_18], %21 {strides = array<i32>} : memref<104x128xbf16, #tpu.memory_space<vmem>>, vector<104x128xbf16>,
    } else {
    }
    return
  }
  func.func @transform_0(%arg0: i32, %arg1: i32, %arg2: i32) -> (i32, i32) {
    %c0_i32 = arith.constant 0 : i32
    return %arg0, %arg2 : i32, i32
  }
  func.func @transform_1(%arg0: i32, %arg1: i32, %arg2: i32) -> (i32, i32) {
    %c0_i32 = arith.constant 0 : i32
    return %arg2, %arg1 : i32, i32
  }
  func.func @transform_2(%arg0: i32, %arg1: i32, %arg2: i32) -> (i32, i32) {
    %c0_i32 = arith.constant 0 : i32
    %c0_i32_0 = arith.constant 0 : i32
    return %c0_i32, %arg1 : i32, i32
  }
  func.func @transform_3(%arg0: i32, %arg1: i32, %arg2: i32) -> (i32, i32) {
    %c0_i32 = arith.constant 0 : i32
    %c0_i32_0 = arith.constant 0 : i32
    return %c0_i32, %arg1 : i32, i32
  }
  func.func @transform_4(%arg0: i32, %arg1: i32, %arg2: i32) -> (i32, i32) {
    %c0_i32 = arith.constant 0 : i32
    return %arg0, %arg1 : i32, i32
  }
}

module attributes {stable_mosaic.version = 11 : i64} {
  func.func @_matmul_bn_kernel(%arg0: i32, %arg1: i32, %arg2: i32, %arg3: memref<104x128xbf16, #tpu.memory_space<vmem>>, %arg4: memref<128x128xbf16, #tpu.memory_space<vmem>>, %arg5: memref<1x128xf32, #tpu.memory_space<vmem>>, %arg6: memref<1x128xf32, #tpu.memory_space<vmem>>, %arg7: memref<104x128xbf16, #tpu.memory_space<vmem>>, %arg8: memref<104x128xbf16, #tpu.memory_space<vmem>>, %arg9: memref<104x128xf32, #tpu.memory_space<vmem>>) attributes {dimension_semantics = [#tpu.dimension_semantics<parallel>, #tpu.dimension_semantics<parallel>, #tpu.dimension_semantics<arbitrary>], iteration_bounds = array<i64: 1, 1, 1>, scalar_prefetch = 0 : i64, scratch_operands = 1 : i64, tpu.core_type = #tpu.core_type<tc>, window_params = [{transform_indices = @transform_0, window_bounds = array<i64: 104, 128>}, {transform_indices = @transform_1, window_bounds = array<i64: 128, 128>}, {transform_indices = @transform_2, window_bounds = array<i64: 1, 128>}, {transform_indices = @transform_3, window_bounds = array<i64: 1, 128>}, {transform_indices = @transform_4, window_bounds = array<i64: 104, 128>}, {transform_indices = @transform_5, window_bounds = array<i64: 104, 128>}]} {
    %c0_i32 = arith.constant 0 : i32
    %0 = arith.cmpi eq, %arg2, %c0_i32 : i32
    %1 = arith.extui %0 : i1 to i32
    %c0_i32_0 = arith.constant 0 : i32
    %2 = arith.cmpi ne, %1, %c0_i32_0 : i32
    scf.if %2 {
      %cst_10 = arith.constant 0.000000e+00 : f32
      %12 = vector.broadcast %cst_10 : f32 to vector<104x128xf32>
      %c0_11 = arith.constant 0 : index
      %c0_12 = arith.constant 0 : index
      %13 = vector.load %arg9[%c0_11, %c0_12] : memref<104x128xf32, #tpu.memory_space<vmem>>, vector<104x128xf32>
      tpu.vector_store %arg9[%c0_11, %c0_12], %12 {strides = array<i32>} : memref<104x128xf32, #tpu.memory_space<vmem>>, vector<104x128xf32>,
    } else {
    }
    %c0 = arith.constant 0 : index
    %c0_1 = arith.constant 0 : index
    %3 = vector.load %arg9[%c0, %c0_1] : memref<104x128xf32, #tpu.memory_space<vmem>>, vector<104x128xf32>
    %c0_2 = arith.constant 0 : index
    %c0_3 = arith.constant 0 : index
    %4 = vector.load %arg3[%c0_2, %c0_3] : memref<104x128xbf16, #tpu.memory_space<vmem>>, vector<104x128xbf16>
    %c0_4 = arith.constant 0 : index
    %c0_5 = arith.constant 0 : index
    %5 = vector.load %arg4[%c0_4, %c0_5] : memref<128x128xbf16, #tpu.memory_space<vmem>>, vector<128x128xbf16>
    %cst = arith.constant dense<0.000000e+00> : vector<104x128xf32>
    %6 = tpu.matmul %4, %5, %cst {dimension_numbers = #tpu.dot_dimension_numbers<[1], [0], [0], [1], [0, 0, 1, 1], [], []>} : vector<104x128xbf16>, vector<128x128xbf16>, vector<104x128xf32> -> vector<104x128xf32>
    %7 = arith.addf %3, %6 : vector<104x128xf32>
    %c0_6 = arith.constant 0 : index
    %c0_7 = arith.constant 0 : index
    %8 = vector.load %arg9[%c0_6, %c0_7] : memref<104x128xf32, #tpu.memory_space<vmem>>, vector<104x128xf32>
    tpu.vector_store %arg9[%c0_6, %c0_7], %7 {strides = array<i32>} : memref<104x128xf32, #tpu.memory_space<vmem>>, vector<104x128xf32>,
    %c0_i32_8 = arith.constant 0 : i32
    %9 = arith.cmpi eq, %arg2, %c0_i32_8 : i32
    %10 = arith.extui %9 : i1 to i32
    %c0_i32_9 = arith.constant 0 : i32
    %11 = arith.cmpi ne, %10, %c0_i32_9 : i32
    scf.if %11 {
      %c0_10 = arith.constant 0 : index
      %c0_11 = arith.constant 0 : index
      %12 = vector.load %arg9[%c0_10, %c0_11] : memref<104x128xf32, #tpu.memory_space<vmem>>, vector<104x128xf32>
      %c0_12 = arith.constant 0 : index
      %c0_13 = arith.constant 0 : index
      %13 = vector.load %arg5[%c0_12, %c0_13] : memref<1x128xf32, #tpu.memory_space<vmem>>, vector<1x128xf32>
      %14 = vector.broadcast %13 : vector<1x128xf32> to vector<104x128xf32>
      %15 = arith.mulf %12, %14 : vector<104x128xf32>
      %c0_14 = arith.constant 0 : index
      %c0_15 = arith.constant 0 : index
      %16 = vector.load %arg6[%c0_14, %c0_15] : memref<1x128xf32, #tpu.memory_space<vmem>>, vector<1x128xf32>
      %17 = vector.broadcast %16 : vector<1x128xf32> to vector<104x128xf32>
      %18 = arith.addf %15, %17 : vector<104x128xf32>
      %c0_16 = arith.constant 0 : index
      %c0_17 = arith.constant 0 : index
      %19 = vector.load %arg7[%c0_16, %c0_17] : memref<104x128xbf16, #tpu.memory_space<vmem>>, vector<104x128xbf16>
      %20 = arith.extf %19 : vector<104x128xbf16> to vector<104x128xf32>
      %21 = arith.addf %18, %20 : vector<104x128xf32>
      %cst_18 = arith.constant 0.000000e+00 : f32
      %22 = vector.broadcast %cst_18 : f32 to vector<104x128xf32>
      %23 = arith.maximumf %21, %22 : vector<104x128xf32>
      %24 = arith.truncf %23 : vector<104x128xf32> to vector<104x128xbf16>
      %c0_19 = arith.constant 0 : index
      %c0_20 = arith.constant 0 : index
      %25 = vector.load %arg8[%c0_19, %c0_20] : memref<104x128xbf16, #tpu.memory_space<vmem>>, vector<104x128xbf16>
      tpu.vector_store %arg8[%c0_19, %c0_20], %24 {strides = array<i32>} : memref<104x128xbf16, #tpu.memory_space<vmem>>, vector<104x128xbf16>,
    } else {
    }
    return
  }
  func.func @transform_0(%arg0: i32, %arg1: i32, %arg2: i32) -> (i32, i32) {
    %c0_i32 = arith.constant 0 : i32
    return %arg0, %arg2 : i32, i32
  }
  func.func @transform_1(%arg0: i32, %arg1: i32, %arg2: i32) -> (i32, i32) {
    %c0_i32 = arith.constant 0 : i32
    return %arg2, %arg1 : i32, i32
  }
  func.func @transform_2(%arg0: i32, %arg1: i32, %arg2: i32) -> (i32, i32) {
    %c0_i32 = arith.constant 0 : i32
    %c0_i32_0 = arith.constant 0 : i32
    return %c0_i32, %arg1 : i32, i32
  }
  func.func @transform_3(%arg0: i32, %arg1: i32, %arg2: i32) -> (i32, i32) {
    %c0_i32 = arith.constant 0 : i32
    %c0_i32_0 = arith.constant 0 : i32
    return %c0_i32, %arg1 : i32, i32
  }
  func.func @transform_4(%arg0: i32, %arg1: i32, %arg2: i32) -> (i32, i32) {
    %c0_i32 = arith.constant 0 : i32
    return %arg0, %arg1 : i32, i32
  }
  func.func @transform_5(%arg0: i32, %arg1: i32, %arg2: i32) -> (i32, i32) {
    %c0_i32 = arith.constant 0 : i32
    return %arg0, %arg1 : i32, i32
  }
}

module attributes {stable_mosaic.version = 11 : i64} {
  func.func @_matmul_bn_kernel(%arg0: i32, %arg1: i32, %arg2: i32, %arg3: memref<32x128xbf16, #tpu.memory_space<vmem>>, %arg4: memref<128x128xbf16, #tpu.memory_space<vmem>>, %arg5: memref<1x128xf32, #tpu.memory_space<vmem>>, %arg6: memref<1x128xf32, #tpu.memory_space<vmem>>, %arg7: memref<32x128xbf16, #tpu.memory_space<vmem>>, %arg8: memref<32x128xf32, #tpu.memory_space<vmem>>) attributes {dimension_semantics = [#tpu.dimension_semantics<parallel>, #tpu.dimension_semantics<parallel>, #tpu.dimension_semantics<arbitrary>], iteration_bounds = array<i64: 1, 1, 1>, scalar_prefetch = 0 : i64, scratch_operands = 1 : i64, tpu.core_type = #tpu.core_type<tc>, window_params = [{transform_indices = @transform_0, window_bounds = array<i64: 32, 128>}, {transform_indices = @transform_1, window_bounds = array<i64: 128, 128>}, {transform_indices = @transform_2, window_bounds = array<i64: 1, 128>}, {transform_indices = @transform_3, window_bounds = array<i64: 1, 128>}, {transform_indices = @transform_4, window_bounds = array<i64: 32, 128>}]} {
    %c0_i32 = arith.constant 0 : i32
    %0 = arith.cmpi eq, %arg2, %c0_i32 : i32
    %1 = arith.extui %0 : i1 to i32
    %c0_i32_0 = arith.constant 0 : i32
    %2 = arith.cmpi ne, %1, %c0_i32_0 : i32
    scf.if %2 {
      %cst_10 = arith.constant 0.000000e+00 : f32
      %12 = vector.broadcast %cst_10 : f32 to vector<32x128xf32>
      %c0_11 = arith.constant 0 : index
      %c0_12 = arith.constant 0 : index
      %13 = vector.load %arg8[%c0_11, %c0_12] : memref<32x128xf32, #tpu.memory_space<vmem>>, vector<32x128xf32>
      tpu.vector_store %arg8[%c0_11, %c0_12], %12 {strides = array<i32>} : memref<32x128xf32, #tpu.memory_space<vmem>>, vector<32x128xf32>,
    } else {
    }
    %c0 = arith.constant 0 : index
    %c0_1 = arith.constant 0 : index
    %3 = vector.load %arg8[%c0, %c0_1] : memref<32x128xf32, #tpu.memory_space<vmem>>, vector<32x128xf32>
    %c0_2 = arith.constant 0 : index
    %c0_3 = arith.constant 0 : index
    %4 = vector.load %arg3[%c0_2, %c0_3] : memref<32x128xbf16, #tpu.memory_space<vmem>>, vector<32x128xbf16>
    %c0_4 = arith.constant 0 : index
    %c0_5 = arith.constant 0 : index
    %5 = vector.load %arg4[%c0_4, %c0_5] : memref<128x128xbf16, #tpu.memory_space<vmem>>, vector<128x128xbf16>
    %cst = arith.constant dense<0.000000e+00> : vector<32x128xf32>
    %6 = tpu.matmul %4, %5, %cst {dimension_numbers = #tpu.dot_dimension_numbers<[1], [0], [0], [1], [0, 0, 1, 1], [], []>} : vector<32x128xbf16>, vector<128x128xbf16>, vector<32x128xf32> -> vector<32x128xf32>
    %7 = arith.addf %3, %6 : vector<32x128xf32>
    %c0_6 = arith.constant 0 : index
    %c0_7 = arith.constant 0 : index
    %8 = vector.load %arg8[%c0_6, %c0_7] : memref<32x128xf32, #tpu.memory_space<vmem>>, vector<32x128xf32>
    tpu.vector_store %arg8[%c0_6, %c0_7], %7 {strides = array<i32>} : memref<32x128xf32, #tpu.memory_space<vmem>>, vector<32x128xf32>,
    %c0_i32_8 = arith.constant 0 : i32
    %9 = arith.cmpi eq, %arg2, %c0_i32_8 : i32
    %10 = arith.extui %9 : i1 to i32
    %c0_i32_9 = arith.constant 0 : i32
    %11 = arith.cmpi ne, %10, %c0_i32_9 : i32
    scf.if %11 {
      %c0_10 = arith.constant 0 : index
      %c0_11 = arith.constant 0 : index
      %12 = vector.load %arg8[%c0_10, %c0_11] : memref<32x128xf32, #tpu.memory_space<vmem>>, vector<32x128xf32>
      %c0_12 = arith.constant 0 : index
      %c0_13 = arith.constant 0 : index
      %13 = vector.load %arg5[%c0_12, %c0_13] : memref<1x128xf32, #tpu.memory_space<vmem>>, vector<1x128xf32>
      %14 = vector.broadcast %13 : vector<1x128xf32> to vector<32x128xf32>
      %15 = arith.mulf %12, %14 : vector<32x128xf32>
      %c0_14 = arith.constant 0 : index
      %c0_15 = arith.constant 0 : index
      %16 = vector.load %arg6[%c0_14, %c0_15] : memref<1x128xf32, #tpu.memory_space<vmem>>, vector<1x128xf32>
      %17 = vector.broadcast %16 : vector<1x128xf32> to vector<32x128xf32>
      %18 = arith.addf %15, %17 : vector<32x128xf32>
      %cst_16 = arith.constant 0.000000e+00 : f32
      %19 = vector.broadcast %cst_16 : f32 to vector<32x128xf32>
      %20 = arith.maximumf %18, %19 : vector<32x128xf32>
      %21 = arith.truncf %20 : vector<32x128xf32> to vector<32x128xbf16>
      %c0_17 = arith.constant 0 : index
      %c0_18 = arith.constant 0 : index
      %22 = vector.load %arg7[%c0_17, %c0_18] : memref<32x128xbf16, #tpu.memory_space<vmem>>, vector<32x128xbf16>
      tpu.vector_store %arg7[%c0_17, %c0_18], %21 {strides = array<i32>} : memref<32x128xbf16, #tpu.memory_space<vmem>>, vector<32x128xbf16>,
    } else {
    }
    return
  }
  func.func @transform_0(%arg0: i32, %arg1: i32, %arg2: i32) -> (i32, i32) {
    %c0_i32 = arith.constant 0 : i32
    return %arg0, %arg2 : i32, i32
  }
  func.func @transform_1(%arg0: i32, %arg1: i32, %arg2: i32) -> (i32, i32) {
    %c0_i32 = arith.constant 0 : i32
    return %arg2, %arg1 : i32, i32
  }
  func.func @transform_2(%arg0: i32, %arg1: i32, %arg2: i32) -> (i32, i32) {
    %c0_i32 = arith.constant 0 : i32
    %c0_i32_0 = arith.constant 0 : i32
    return %c0_i32, %arg1 : i32, i32
  }
  func.func @transform_3(%arg0: i32, %arg1: i32, %arg2: i32) -> (i32, i32) {
    %c0_i32 = arith.constant 0 : i32
    %c0_i32_0 = arith.constant 0 : i32
    return %c0_i32, %arg1 : i32, i32
  }
  func.func @transform_4(%arg0: i32, %arg1: i32, %arg2: i32) -> (i32, i32) {
    %c0_i32 = arith.constant 0 : i32
    return %arg0, %arg1 : i32, i32
  }
}

module attributes {stable_mosaic.version = 11 : i64} {
  func.func @_matmul_bn_kernel(%arg0: i32, %arg1: i32, %arg2: i32, %arg3: memref<32x128xbf16, #tpu.memory_space<vmem>>, %arg4: memref<128x128xbf16, #tpu.memory_space<vmem>>, %arg5: memref<1x128xf32, #tpu.memory_space<vmem>>, %arg6: memref<1x128xf32, #tpu.memory_space<vmem>>, %arg7: memref<32x128xbf16, #tpu.memory_space<vmem>>, %arg8: memref<32x128xf32, #tpu.memory_space<vmem>>) attributes {dimension_semantics = [#tpu.dimension_semantics<parallel>, #tpu.dimension_semantics<parallel>, #tpu.dimension_semantics<arbitrary>], iteration_bounds = array<i64: 1, 1, 1>, scalar_prefetch = 0 : i64, scratch_operands = 1 : i64, tpu.core_type = #tpu.core_type<tc>, window_params = [{transform_indices = @transform_0, window_bounds = array<i64: 32, 128>}, {transform_indices = @transform_1, window_bounds = array<i64: 128, 128>}, {transform_indices = @transform_2, window_bounds = array<i64: 1, 128>}, {transform_indices = @transform_3, window_bounds = array<i64: 1, 128>}, {transform_indices = @transform_4, window_bounds = array<i64: 32, 128>}]} {
    %c0_i32 = arith.constant 0 : i32
    %0 = arith.cmpi eq, %arg2, %c0_i32 : i32
    %1 = arith.extui %0 : i1 to i32
    %c0_i32_0 = arith.constant 0 : i32
    %2 = arith.cmpi ne, %1, %c0_i32_0 : i32
    scf.if %2 {
      %cst_10 = arith.constant 0.000000e+00 : f32
      %12 = vector.broadcast %cst_10 : f32 to vector<32x128xf32>
      %c0_11 = arith.constant 0 : index
      %c0_12 = arith.constant 0 : index
      %13 = vector.load %arg8[%c0_11, %c0_12] : memref<32x128xf32, #tpu.memory_space<vmem>>, vector<32x128xf32>
      tpu.vector_store %arg8[%c0_11, %c0_12], %12 {strides = array<i32>} : memref<32x128xf32, #tpu.memory_space<vmem>>, vector<32x128xf32>,
    } else {
    }
    %c0 = arith.constant 0 : index
    %c0_1 = arith.constant 0 : index
    %3 = vector.load %arg8[%c0, %c0_1] : memref<32x128xf32, #tpu.memory_space<vmem>>, vector<32x128xf32>
    %c0_2 = arith.constant 0 : index
    %c0_3 = arith.constant 0 : index
    %4 = vector.load %arg3[%c0_2, %c0_3] : memref<32x128xbf16, #tpu.memory_space<vmem>>, vector<32x128xbf16>
    %c0_4 = arith.constant 0 : index
    %c0_5 = arith.constant 0 : index
    %5 = vector.load %arg4[%c0_4, %c0_5] : memref<128x128xbf16, #tpu.memory_space<vmem>>, vector<128x128xbf16>
    %cst = arith.constant dense<0.000000e+00> : vector<32x128xf32>
    %6 = tpu.matmul %4, %5, %cst {dimension_numbers = #tpu.dot_dimension_numbers<[1], [0], [0], [1], [0, 0, 1, 1], [], []>} : vector<32x128xbf16>, vector<128x128xbf16>, vector<32x128xf32> -> vector<32x128xf32>
    %7 = arith.addf %3, %6 : vector<32x128xf32>
    %c0_6 = arith.constant 0 : index
    %c0_7 = arith.constant 0 : index
    %8 = vector.load %arg8[%c0_6, %c0_7] : memref<32x128xf32, #tpu.memory_space<vmem>>, vector<32x128xf32>
    tpu.vector_store %arg8[%c0_6, %c0_7], %7 {strides = array<i32>} : memref<32x128xf32, #tpu.memory_space<vmem>>, vector<32x128xf32>,
    %c0_i32_8 = arith.constant 0 : i32
    %9 = arith.cmpi eq, %arg2, %c0_i32_8 : i32
    %10 = arith.extui %9 : i1 to i32
    %c0_i32_9 = arith.constant 0 : i32
    %11 = arith.cmpi ne, %10, %c0_i32_9 : i32
    scf.if %11 {
      %c0_10 = arith.constant 0 : index
      %c0_11 = arith.constant 0 : index
      %12 = vector.load %arg8[%c0_10, %c0_11] : memref<32x128xf32, #tpu.memory_space<vmem>>, vector<32x128xf32>
      %c0_12 = arith.constant 0 : index
      %c0_13 = arith.constant 0 : index
      %13 = vector.load %arg5[%c0_12, %c0_13] : memref<1x128xf32, #tpu.memory_space<vmem>>, vector<1x128xf32>
      %14 = vector.broadcast %13 : vector<1x128xf32> to vector<32x128xf32>
      %15 = arith.mulf %12, %14 : vector<32x128xf32>
      %c0_14 = arith.constant 0 : index
      %c0_15 = arith.constant 0 : index
      %16 = vector.load %arg6[%c0_14, %c0_15] : memref<1x128xf32, #tpu.memory_space<vmem>>, vector<1x128xf32>
      %17 = vector.broadcast %16 : vector<1x128xf32> to vector<32x128xf32>
      %18 = arith.addf %15, %17 : vector<32x128xf32>
      %19 = arith.truncf %18 : vector<32x128xf32> to vector<32x128xbf16>
      %c0_16 = arith.constant 0 : index
      %c0_17 = arith.constant 0 : index
      %20 = vector.load %arg7[%c0_16, %c0_17] : memref<32x128xbf16, #tpu.memory_space<vmem>>, vector<32x128xbf16>
      tpu.vector_store %arg7[%c0_16, %c0_17], %19 {strides = array<i32>} : memref<32x128xbf16, #tpu.memory_space<vmem>>, vector<32x128xbf16>,
    } else {
    }
    return
  }
  func.func @transform_0(%arg0: i32, %arg1: i32, %arg2: i32) -> (i32, i32) {
    %c0_i32 = arith.constant 0 : i32
    return %arg0, %arg2 : i32, i32
  }
  func.func @transform_1(%arg0: i32, %arg1: i32, %arg2: i32) -> (i32, i32) {
    %c0_i32 = arith.constant 0 : i32
    return %arg2, %arg1 : i32, i32
  }
  func.func @transform_2(%arg0: i32, %arg1: i32, %arg2: i32) -> (i32, i32) {
    %c0_i32 = arith.constant 0 : i32
    %c0_i32_0 = arith.constant 0 : i32
    return %c0_i32, %arg1 : i32, i32
  }
  func.func @transform_3(%arg0: i32, %arg1: i32, %arg2: i32) -> (i32, i32) {
    %c0_i32 = arith.constant 0 : i32
    %c0_i32_0 = arith.constant 0 : i32
    return %c0_i32, %arg1 : i32, i32
  }
  func.func @transform_4(%arg0: i32, %arg1: i32, %arg2: i32) -> (i32, i32) {
    %c0_i32 = arith.constant 0 : i32
    return %arg0, %arg1 : i32, i32
  }
}

module attributes {stable_mosaic.version = 11 : i64} {
  func.func @_matmul_bn_kernel(%arg0: i32, %arg1: i32, %arg2: i32, %arg3: memref<32x256xbf16, #tpu.memory_space<vmem>>, %arg4: memref<256x128xbf16, #tpu.memory_space<vmem>>, %arg5: memref<1x128xf32, #tpu.memory_space<vmem>>, %arg6: memref<1x128xf32, #tpu.memory_space<vmem>>, %arg7: memref<32x128xbf16, #tpu.memory_space<vmem>>, %arg8: memref<32x128xbf16, #tpu.memory_space<vmem>>, %arg9: memref<32x128xf32, #tpu.memory_space<vmem>>) attributes {dimension_semantics = [#tpu.dimension_semantics<parallel>, #tpu.dimension_semantics<parallel>, #tpu.dimension_semantics<arbitrary>], iteration_bounds = array<i64: 1, 1, 1>, scalar_prefetch = 0 : i64, scratch_operands = 1 : i64, tpu.core_type = #tpu.core_type<tc>, window_params = [{transform_indices = @transform_0, window_bounds = array<i64: 32, 256>}, {transform_indices = @transform_1, window_bounds = array<i64: 256, 128>}, {transform_indices = @transform_2, window_bounds = array<i64: 1, 128>}, {transform_indices = @transform_3, window_bounds = array<i64: 1, 128>}, {transform_indices = @transform_4, window_bounds = array<i64: 32, 128>}, {transform_indices = @transform_5, window_bounds = array<i64: 32, 128>}]} {
    %c0_i32 = arith.constant 0 : i32
    %0 = arith.cmpi eq, %arg2, %c0_i32 : i32
    %1 = arith.extui %0 : i1 to i32
    %c0_i32_0 = arith.constant 0 : i32
    %2 = arith.cmpi ne, %1, %c0_i32_0 : i32
    scf.if %2 {
      %cst_10 = arith.constant 0.000000e+00 : f32
      %12 = vector.broadcast %cst_10 : f32 to vector<32x128xf32>
      %c0_11 = arith.constant 0 : index
      %c0_12 = arith.constant 0 : index
      %13 = vector.load %arg9[%c0_11, %c0_12] : memref<32x128xf32, #tpu.memory_space<vmem>>, vector<32x128xf32>
      tpu.vector_store %arg9[%c0_11, %c0_12], %12 {strides = array<i32>} : memref<32x128xf32, #tpu.memory_space<vmem>>, vector<32x128xf32>,
    } else {
    }
    %c0 = arith.constant 0 : index
    %c0_1 = arith.constant 0 : index
    %3 = vector.load %arg9[%c0, %c0_1] : memref<32x128xf32, #tpu.memory_space<vmem>>, vector<32x128xf32>
    %c0_2 = arith.constant 0 : index
    %c0_3 = arith.constant 0 : index
    %4 = vector.load %arg3[%c0_2, %c0_3] : memref<32x256xbf16, #tpu.memory_space<vmem>>, vector<32x256xbf16>
    %c0_4 = arith.constant 0 : index
    %c0_5 = arith.constant 0 : index
    %5 = vector.load %arg4[%c0_4, %c0_5] : memref<256x128xbf16, #tpu.memory_space<vmem>>, vector<256x128xbf16>
    %cst = arith.constant dense<0.000000e+00> : vector<32x128xf32>
    %6 = tpu.matmul %4, %5, %cst {dimension_numbers = #tpu.dot_dimension_numbers<[1], [0], [0], [1], [0, 0, 1, 1], [], []>} : vector<32x256xbf16>, vector<256x128xbf16>, vector<32x128xf32> -> vector<32x128xf32>
    %7 = arith.addf %3, %6 : vector<32x128xf32>
    %c0_6 = arith.constant 0 : index
    %c0_7 = arith.constant 0 : index
    %8 = vector.load %arg9[%c0_6, %c0_7] : memref<32x128xf32, #tpu.memory_space<vmem>>, vector<32x128xf32>
    tpu.vector_store %arg9[%c0_6, %c0_7], %7 {strides = array<i32>} : memref<32x128xf32, #tpu.memory_space<vmem>>, vector<32x128xf32>,
    %c0_i32_8 = arith.constant 0 : i32
    %9 = arith.cmpi eq, %arg2, %c0_i32_8 : i32
    %10 = arith.extui %9 : i1 to i32
    %c0_i32_9 = arith.constant 0 : i32
    %11 = arith.cmpi ne, %10, %c0_i32_9 : i32
    scf.if %11 {
      %c0_10 = arith.constant 0 : index
      %c0_11 = arith.constant 0 : index
      %12 = vector.load %arg9[%c0_10, %c0_11] : memref<32x128xf32, #tpu.memory_space<vmem>>, vector<32x128xf32>
      %c0_12 = arith.constant 0 : index
      %c0_13 = arith.constant 0 : index
      %13 = vector.load %arg5[%c0_12, %c0_13] : memref<1x128xf32, #tpu.memory_space<vmem>>, vector<1x128xf32>
      %14 = vector.broadcast %13 : vector<1x128xf32> to vector<32x128xf32>
      %15 = arith.mulf %12, %14 : vector<32x128xf32>
      %c0_14 = arith.constant 0 : index
      %c0_15 = arith.constant 0 : index
      %16 = vector.load %arg6[%c0_14, %c0_15] : memref<1x128xf32, #tpu.memory_space<vmem>>, vector<1x128xf32>
      %17 = vector.broadcast %16 : vector<1x128xf32> to vector<32x128xf32>
      %18 = arith.addf %15, %17 : vector<32x128xf32>
      %c0_16 = arith.constant 0 : index
      %c0_17 = arith.constant 0 : index
      %19 = vector.load %arg7[%c0_16, %c0_17] : memref<32x128xbf16, #tpu.memory_space<vmem>>, vector<32x128xbf16>
      %20 = arith.extf %19 : vector<32x128xbf16> to vector<32x128xf32>
      %21 = arith.addf %18, %20 : vector<32x128xf32>
      %cst_18 = arith.constant 0.000000e+00 : f32
      %22 = vector.broadcast %cst_18 : f32 to vector<32x128xf32>
      %23 = arith.maximumf %21, %22 : vector<32x128xf32>
      %24 = arith.truncf %23 : vector<32x128xf32> to vector<32x128xbf16>
      %c0_19 = arith.constant 0 : index
      %c0_20 = arith.constant 0 : index
      %25 = vector.load %arg8[%c0_19, %c0_20] : memref<32x128xbf16, #tpu.memory_space<vmem>>, vector<32x128xbf16>
      tpu.vector_store %arg8[%c0_19, %c0_20], %24 {strides = array<i32>} : memref<32x128xbf16, #tpu.memory_space<vmem>>, vector<32x128xbf16>,
    } else {
    }
    return
  }
  func.func @transform_0(%arg0: i32, %arg1: i32, %arg2: i32) -> (i32, i32) {
    %c0_i32 = arith.constant 0 : i32
    return %arg0, %arg2 : i32, i32
  }
  func.func @transform_1(%arg0: i32, %arg1: i32, %arg2: i32) -> (i32, i32) {
    %c0_i32 = arith.constant 0 : i32
    return %arg2, %arg1 : i32, i32
  }
  func.func @transform_2(%arg0: i32, %arg1: i32, %arg2: i32) -> (i32, i32) {
    %c0_i32 = arith.constant 0 : i32
    %c0_i32_0 = arith.constant 0 : i32
    return %c0_i32, %arg1 : i32, i32
  }
  func.func @transform_3(%arg0: i32, %arg1: i32, %arg2: i32) -> (i32, i32) {
    %c0_i32 = arith.constant 0 : i32
    %c0_i32_0 = arith.constant 0 : i32
    return %c0_i32, %arg1 : i32, i32
  }
  func.func @transform_4(%arg0: i32, %arg1: i32, %arg2: i32) -> (i32, i32) {
    %c0_i32 = arith.constant 0 : i32
    return %arg0, %arg1 : i32, i32
  }
  func.func @transform_5(%arg0: i32, %arg1: i32, %arg2: i32) -> (i32, i32) {
    %c0_i32 = arith.constant 0 : i32
    return %arg0, %arg1 : i32, i32
  }
}

module attributes {stable_mosaic.version = 11 : i64} {
  func.func @_matmul_bn_kernel(%arg0: i32, %arg1: i32, %arg2: i32, %arg3: memref<8x256xbf16, #tpu.memory_space<vmem>>, %arg4: memref<256x128xbf16, #tpu.memory_space<vmem>>, %arg5: memref<1x128xf32, #tpu.memory_space<vmem>>, %arg6: memref<1x128xf32, #tpu.memory_space<vmem>>, %arg7: memref<8x128xbf16, #tpu.memory_space<vmem>>, %arg8: memref<8x128xf32, #tpu.memory_space<vmem>>) attributes {dimension_semantics = [#tpu.dimension_semantics<parallel>, #tpu.dimension_semantics<parallel>, #tpu.dimension_semantics<arbitrary>], iteration_bounds = array<i64: 1, 1, 1>, scalar_prefetch = 0 : i64, scratch_operands = 1 : i64, tpu.core_type = #tpu.core_type<tc>, window_params = [{transform_indices = @transform_0, window_bounds = array<i64: 8, 256>}, {transform_indices = @transform_1, window_bounds = array<i64: 256, 128>}, {transform_indices = @transform_2, window_bounds = array<i64: 1, 128>}, {transform_indices = @transform_3, window_bounds = array<i64: 1, 128>}, {transform_indices = @transform_4, window_bounds = array<i64: 8, 128>}]} {
    %c0_i32 = arith.constant 0 : i32
    %0 = arith.cmpi eq, %arg2, %c0_i32 : i32
    %1 = arith.extui %0 : i1 to i32
    %c0_i32_0 = arith.constant 0 : i32
    %2 = arith.cmpi ne, %1, %c0_i32_0 : i32
    scf.if %2 {
      %cst_10 = arith.constant 0.000000e+00 : f32
      %12 = vector.broadcast %cst_10 : f32 to vector<8x128xf32>
      %c0_11 = arith.constant 0 : index
      %c0_12 = arith.constant 0 : index
      %13 = vector.load %arg8[%c0_11, %c0_12] : memref<8x128xf32, #tpu.memory_space<vmem>>, vector<8x128xf32>
      tpu.vector_store %arg8[%c0_11, %c0_12], %12 {strides = array<i32>} : memref<8x128xf32, #tpu.memory_space<vmem>>, vector<8x128xf32>,
    } else {
    }
    %c0 = arith.constant 0 : index
    %c0_1 = arith.constant 0 : index
    %3 = vector.load %arg8[%c0, %c0_1] : memref<8x128xf32, #tpu.memory_space<vmem>>, vector<8x128xf32>
    %c0_2 = arith.constant 0 : index
    %c0_3 = arith.constant 0 : index
    %4 = vector.load %arg3[%c0_2, %c0_3] : memref<8x256xbf16, #tpu.memory_space<vmem>>, vector<8x256xbf16>
    %c0_4 = arith.constant 0 : index
    %c0_5 = arith.constant 0 : index
    %5 = vector.load %arg4[%c0_4, %c0_5] : memref<256x128xbf16, #tpu.memory_space<vmem>>, vector<256x128xbf16>
    %cst = arith.constant dense<0.000000e+00> : vector<8x128xf32>
    %6 = tpu.matmul %4, %5, %cst {dimension_numbers = #tpu.dot_dimension_numbers<[1], [0], [0], [1], [0, 0, 1, 1], [], []>} : vector<8x256xbf16>, vector<256x128xbf16>, vector<8x128xf32> -> vector<8x128xf32>
    %7 = arith.addf %3, %6 : vector<8x128xf32>
    %c0_6 = arith.constant 0 : index
    %c0_7 = arith.constant 0 : index
    %8 = vector.load %arg8[%c0_6, %c0_7] : memref<8x128xf32, #tpu.memory_space<vmem>>, vector<8x128xf32>
    tpu.vector_store %arg8[%c0_6, %c0_7], %7 {strides = array<i32>} : memref<8x128xf32, #tpu.memory_space<vmem>>, vector<8x128xf32>,
    %c0_i32_8 = arith.constant 0 : i32
    %9 = arith.cmpi eq, %arg2, %c0_i32_8 : i32
    %10 = arith.extui %9 : i1 to i32
    %c0_i32_9 = arith.constant 0 : i32
    %11 = arith.cmpi ne, %10, %c0_i32_9 : i32
    scf.if %11 {
      %c0_10 = arith.constant 0 : index
      %c0_11 = arith.constant 0 : index
      %12 = vector.load %arg8[%c0_10, %c0_11] : memref<8x128xf32, #tpu.memory_space<vmem>>, vector<8x128xf32>
      %c0_12 = arith.constant 0 : index
      %c0_13 = arith.constant 0 : index
      %13 = vector.load %arg5[%c0_12, %c0_13] : memref<1x128xf32, #tpu.memory_space<vmem>>, vector<1x128xf32>
      %14 = vector.broadcast %13 : vector<1x128xf32> to vector<8x128xf32>
      %15 = arith.mulf %12, %14 : vector<8x128xf32>
      %c0_14 = arith.constant 0 : index
      %c0_15 = arith.constant 0 : index
      %16 = vector.load %arg6[%c0_14, %c0_15] : memref<1x128xf32, #tpu.memory_space<vmem>>, vector<1x128xf32>
      %17 = vector.broadcast %16 : vector<1x128xf32> to vector<8x128xf32>
      %18 = arith.addf %15, %17 : vector<8x128xf32>
      %cst_16 = arith.constant 0.000000e+00 : f32
      %19 = vector.broadcast %cst_16 : f32 to vector<8x128xf32>
      %20 = arith.maximumf %18, %19 : vector<8x128xf32>
      %21 = arith.truncf %20 : vector<8x128xf32> to vector<8x128xbf16>
      %c0_17 = arith.constant 0 : index
      %c0_18 = arith.constant 0 : index
      %22 = vector.load %arg7[%c0_17, %c0_18] : memref<8x128xbf16, #tpu.memory_space<vmem>>, vector<8x128xbf16>
      tpu.vector_store %arg7[%c0_17, %c0_18], %21 {strides = array<i32>} : memref<8x128xbf16, #tpu.memory_space<vmem>>, vector<8x128xbf16>,
    } else {
    }
    return
  }
  func.func @transform_0(%arg0: i32, %arg1: i32, %arg2: i32) -> (i32, i32) {
    %c0_i32 = arith.constant 0 : i32
    return %arg0, %arg2 : i32, i32
  }
  func.func @transform_1(%arg0: i32, %arg1: i32, %arg2: i32) -> (i32, i32) {
    %c0_i32 = arith.constant 0 : i32
    return %arg2, %arg1 : i32, i32
  }
  func.func @transform_2(%arg0: i32, %arg1: i32, %arg2: i32) -> (i32, i32) {
    %c0_i32 = arith.constant 0 : i32
    %c0_i32_0 = arith.constant 0 : i32
    return %c0_i32, %arg1 : i32, i32
  }
  func.func @transform_3(%arg0: i32, %arg1: i32, %arg2: i32) -> (i32, i32) {
    %c0_i32 = arith.constant 0 : i32
    %c0_i32_0 = arith.constant 0 : i32
    return %c0_i32, %arg1 : i32, i32
  }
  func.func @transform_4(%arg0: i32, %arg1: i32, %arg2: i32) -> (i32, i32) {
    %c0_i32 = arith.constant 0 : i32
    return %arg0, %arg1 : i32, i32
  }
}

module attributes {stable_mosaic.version = 11 : i64} {
  func.func @_matmul_bn_kernel(%arg0: i32, %arg1: i32, %arg2: i32, %arg3: memref<8x384xbf16, #tpu.memory_space<vmem>>, %arg4: memref<384x128xbf16, #tpu.memory_space<vmem>>, %arg5: memref<1x128xf32, #tpu.memory_space<vmem>>, %arg6: memref<1x128xf32, #tpu.memory_space<vmem>>, %arg7: memref<8x128xbf16, #tpu.memory_space<vmem>>, %arg8: memref<8x128xbf16, #tpu.memory_space<vmem>>, %arg9: memref<8x128xf32, #tpu.memory_space<vmem>>) attributes {dimension_semantics = [#tpu.dimension_semantics<parallel>, #tpu.dimension_semantics<parallel>, #tpu.dimension_semantics<arbitrary>], iteration_bounds = array<i64: 1, 1, 1>, scalar_prefetch = 0 : i64, scratch_operands = 1 : i64, tpu.core_type = #tpu.core_type<tc>, window_params = [{transform_indices = @transform_0, window_bounds = array<i64: 8, 384>}, {transform_indices = @transform_1, window_bounds = array<i64: 384, 128>}, {transform_indices = @transform_2, window_bounds = array<i64: 1, 128>}, {transform_indices = @transform_3, window_bounds = array<i64: 1, 128>}, {transform_indices = @transform_4, window_bounds = array<i64: 8, 128>}, {transform_indices = @transform_5, window_bounds = array<i64: 8, 128>}]} {
    %c0_i32 = arith.constant 0 : i32
    %0 = arith.cmpi eq, %arg2, %c0_i32 : i32
    %1 = arith.extui %0 : i1 to i32
    %c0_i32_0 = arith.constant 0 : i32
    %2 = arith.cmpi ne, %1, %c0_i32_0 : i32
    scf.if %2 {
      %cst_10 = arith.constant 0.000000e+00 : f32
      %12 = vector.broadcast %cst_10 : f32 to vector<8x128xf32>
      %c0_11 = arith.constant 0 : index
      %c0_12 = arith.constant 0 : index
      %13 = vector.load %arg9[%c0_11, %c0_12] : memref<8x128xf32, #tpu.memory_space<vmem>>, vector<8x128xf32>
      tpu.vector_store %arg9[%c0_11, %c0_12], %12 {strides = array<i32>} : memref<8x128xf32, #tpu.memory_space<vmem>>, vector<8x128xf32>,
    } else {
    }
    %c0 = arith.constant 0 : index
    %c0_1 = arith.constant 0 : index
    %3 = vector.load %arg9[%c0, %c0_1] : memref<8x128xf32, #tpu.memory_space<vmem>>, vector<8x128xf32>
    %c0_2 = arith.constant 0 : index
    %c0_3 = arith.constant 0 : index
    %4 = vector.load %arg3[%c0_2, %c0_3] : memref<8x384xbf16, #tpu.memory_space<vmem>>, vector<8x384xbf16>
    %c0_4 = arith.constant 0 : index
    %c0_5 = arith.constant 0 : index
    %5 = vector.load %arg4[%c0_4, %c0_5] : memref<384x128xbf16, #tpu.memory_space<vmem>>, vector<384x128xbf16>
    %cst = arith.constant dense<0.000000e+00> : vector<8x128xf32>
    %6 = tpu.matmul %4, %5, %cst {dimension_numbers = #tpu.dot_dimension_numbers<[1], [0], [0], [1], [0, 0, 1, 1], [], []>} : vector<8x384xbf16>, vector<384x128xbf16>, vector<8x128xf32> -> vector<8x128xf32>
    %7 = arith.addf %3, %6 : vector<8x128xf32>
    %c0_6 = arith.constant 0 : index
    %c0_7 = arith.constant 0 : index
    %8 = vector.load %arg9[%c0_6, %c0_7] : memref<8x128xf32, #tpu.memory_space<vmem>>, vector<8x128xf32>
    tpu.vector_store %arg9[%c0_6, %c0_7], %7 {strides = array<i32>} : memref<8x128xf32, #tpu.memory_space<vmem>>, vector<8x128xf32>,
    %c0_i32_8 = arith.constant 0 : i32
    %9 = arith.cmpi eq, %arg2, %c0_i32_8 : i32
    %10 = arith.extui %9 : i1 to i32
    %c0_i32_9 = arith.constant 0 : i32
    %11 = arith.cmpi ne, %10, %c0_i32_9 : i32
    scf.if %11 {
      %c0_10 = arith.constant 0 : index
      %c0_11 = arith.constant 0 : index
      %12 = vector.load %arg9[%c0_10, %c0_11] : memref<8x128xf32, #tpu.memory_space<vmem>>, vector<8x128xf32>
      %c0_12 = arith.constant 0 : index
      %c0_13 = arith.constant 0 : index
      %13 = vector.load %arg5[%c0_12, %c0_13] : memref<1x128xf32, #tpu.memory_space<vmem>>, vector<1x128xf32>
      %14 = vector.broadcast %13 : vector<1x128xf32> to vector<8x128xf32>
      %15 = arith.mulf %12, %14 : vector<8x128xf32>
      %c0_14 = arith.constant 0 : index
      %c0_15 = arith.constant 0 : index
      %16 = vector.load %arg6[%c0_14, %c0_15] : memref<1x128xf32, #tpu.memory_space<vmem>>, vector<1x128xf32>
      %17 = vector.broadcast %16 : vector<1x128xf32> to vector<8x128xf32>
      %18 = arith.addf %15, %17 : vector<8x128xf32>
      %c0_16 = arith.constant 0 : index
      %c0_17 = arith.constant 0 : index
      %19 = vector.load %arg7[%c0_16, %c0_17] : memref<8x128xbf16, #tpu.memory_space<vmem>>, vector<8x128xbf16>
      %20 = arith.extf %19 : vector<8x128xbf16> to vector<8x128xf32>
      %21 = arith.addf %18, %20 : vector<8x128xf32>
      %cst_18 = arith.constant 0.000000e+00 : f32
      %22 = vector.broadcast %cst_18 : f32 to vector<8x128xf32>
      %23 = arith.maximumf %21, %22 : vector<8x128xf32>
      %24 = arith.truncf %23 : vector<8x128xf32> to vector<8x128xbf16>
      %c0_19 = arith.constant 0 : index
      %c0_20 = arith.constant 0 : index
      %25 = vector.load %arg8[%c0_19, %c0_20] : memref<8x128xbf16, #tpu.memory_space<vmem>>, vector<8x128xbf16>
      tpu.vector_store %arg8[%c0_19, %c0_20], %24 {strides = array<i32>} : memref<8x128xbf16, #tpu.memory_space<vmem>>, vector<8x128xbf16>,
    } else {
    }
    return
  }
  func.func @transform_0(%arg0: i32, %arg1: i32, %arg2: i32) -> (i32, i32) {
    %c0_i32 = arith.constant 0 : i32
    return %arg0, %arg2 : i32, i32
  }
  func.func @transform_1(%arg0: i32, %arg1: i32, %arg2: i32) -> (i32, i32) {
    %c0_i32 = arith.constant 0 : i32
    return %arg2, %arg1 : i32, i32
  }
  func.func @transform_2(%arg0: i32, %arg1: i32, %arg2: i32) -> (i32, i32) {
    %c0_i32 = arith.constant 0 : i32
    %c0_i32_0 = arith.constant 0 : i32
    return %c0_i32, %arg1 : i32, i32
  }
  func.func @transform_3(%arg0: i32, %arg1: i32, %arg2: i32) -> (i32, i32) {
    %c0_i32 = arith.constant 0 : i32
    %c0_i32_0 = arith.constant 0 : i32
    return %c0_i32, %arg1 : i32, i32
  }
  func.func @transform_4(%arg0: i32, %arg1: i32, %arg2: i32) -> (i32, i32) {
    %c0_i32 = arith.constant 0 : i32
    return %arg0, %arg1 : i32, i32
  }
  func.func @transform_5(%arg0: i32, %arg1: i32, %arg2: i32) -> (i32, i32) {
    %c0_i32 = arith.constant 0 : i32
    return %arg0, %arg1 : i32, i32
  }
}

module attributes {stable_mosaic.version = 11 : i64} {
  func.func @_matmul_bn_kernel(%arg0: i32, %arg1: i32, %arg2: i32, %arg3: memref<8x128xbf16, #tpu.memory_space<vmem>>, %arg4: memref<128x128xbf16, #tpu.memory_space<vmem>>, %arg5: memref<1x128xf32, #tpu.memory_space<vmem>>, %arg6: memref<1x128xf32, #tpu.memory_space<vmem>>, %arg7: memref<8x128xbf16, #tpu.memory_space<vmem>>, %arg8: memref<8x128xf32, #tpu.memory_space<vmem>>) attributes {dimension_semantics = [#tpu.dimension_semantics<parallel>, #tpu.dimension_semantics<parallel>, #tpu.dimension_semantics<arbitrary>], iteration_bounds = array<i64: 1, 1, 1>, scalar_prefetch = 0 : i64, scratch_operands = 1 : i64, tpu.core_type = #tpu.core_type<tc>, window_params = [{transform_indices = @transform_0, window_bounds = array<i64: 8, 128>}, {transform_indices = @transform_1, window_bounds = array<i64: 128, 128>}, {transform_indices = @transform_2, window_bounds = array<i64: 1, 128>}, {transform_indices = @transform_3, window_bounds = array<i64: 1, 128>}, {transform_indices = @transform_4, window_bounds = array<i64: 8, 128>}]} {
    %c0_i32 = arith.constant 0 : i32
    %0 = arith.cmpi eq, %arg2, %c0_i32 : i32
    %1 = arith.extui %0 : i1 to i32
    %c0_i32_0 = arith.constant 0 : i32
    %2 = arith.cmpi ne, %1, %c0_i32_0 : i32
    scf.if %2 {
      %cst_10 = arith.constant 0.000000e+00 : f32
      %12 = vector.broadcast %cst_10 : f32 to vector<8x128xf32>
      %c0_11 = arith.constant 0 : index
      %c0_12 = arith.constant 0 : index
      %13 = vector.load %arg8[%c0_11, %c0_12] : memref<8x128xf32, #tpu.memory_space<vmem>>, vector<8x128xf32>
      tpu.vector_store %arg8[%c0_11, %c0_12], %12 {strides = array<i32>} : memref<8x128xf32, #tpu.memory_space<vmem>>, vector<8x128xf32>,
    } else {
    }
    %c0 = arith.constant 0 : index
    %c0_1 = arith.constant 0 : index
    %3 = vector.load %arg8[%c0, %c0_1] : memref<8x128xf32, #tpu.memory_space<vmem>>, vector<8x128xf32>
    %c0_2 = arith.constant 0 : index
    %c0_3 = arith.constant 0 : index
    %4 = vector.load %arg3[%c0_2, %c0_3] : memref<8x128xbf16, #tpu.memory_space<vmem>>, vector<8x128xbf16>
    %c0_4 = arith.constant 0 : index
    %c0_5 = arith.constant 0 : index
    %5 = vector.load %arg4[%c0_4, %c0_5] : memref<128x128xbf16, #tpu.memory_space<vmem>>, vector<128x128xbf16>
    %cst = arith.constant dense<0.000000e+00> : vector<8x128xf32>
    %6 = tpu.matmul %4, %5, %cst {dimension_numbers = #tpu.dot_dimension_numbers<[1], [0], [0], [1], [0, 0, 1, 1], [], []>} : vector<8x128xbf16>, vector<128x128xbf16>, vector<8x128xf32> -> vector<8x128xf32>
    %7 = arith.addf %3, %6 : vector<8x128xf32>
    %c0_6 = arith.constant 0 : index
    %c0_7 = arith.constant 0 : index
    %8 = vector.load %arg8[%c0_6, %c0_7] : memref<8x128xf32, #tpu.memory_space<vmem>>, vector<8x128xf32>
    tpu.vector_store %arg8[%c0_6, %c0_7], %7 {strides = array<i32>} : memref<8x128xf32, #tpu.memory_space<vmem>>, vector<8x128xf32>,
    %c0_i32_8 = arith.constant 0 : i32
    %9 = arith.cmpi eq, %arg2, %c0_i32_8 : i32
    %10 = arith.extui %9 : i1 to i32
    %c0_i32_9 = arith.constant 0 : i32
    %11 = arith.cmpi ne, %10, %c0_i32_9 : i32
    scf.if %11 {
      %c0_10 = arith.constant 0 : index
      %c0_11 = arith.constant 0 : index
      %12 = vector.load %arg8[%c0_10, %c0_11] : memref<8x128xf32, #tpu.memory_space<vmem>>, vector<8x128xf32>
      %c0_12 = arith.constant 0 : index
      %c0_13 = arith.constant 0 : index
      %13 = vector.load %arg5[%c0_12, %c0_13] : memref<1x128xf32, #tpu.memory_space<vmem>>, vector<1x128xf32>
      %14 = vector.broadcast %13 : vector<1x128xf32> to vector<8x128xf32>
      %15 = arith.mulf %12, %14 : vector<8x128xf32>
      %c0_14 = arith.constant 0 : index
      %c0_15 = arith.constant 0 : index
      %16 = vector.load %arg6[%c0_14, %c0_15] : memref<1x128xf32, #tpu.memory_space<vmem>>, vector<1x128xf32>
      %17 = vector.broadcast %16 : vector<1x128xf32> to vector<8x128xf32>
      %18 = arith.addf %15, %17 : vector<8x128xf32>
      %19 = arith.truncf %18 : vector<8x128xf32> to vector<8x128xbf16>
      %c0_16 = arith.constant 0 : index
      %c0_17 = arith.constant 0 : index
      %20 = vector.load %arg7[%c0_16, %c0_17] : memref<8x128xbf16, #tpu.memory_space<vmem>>, vector<8x128xbf16>
      tpu.vector_store %arg7[%c0_16, %c0_17], %19 {strides = array<i32>} : memref<8x128xbf16, #tpu.memory_space<vmem>>, vector<8x128xbf16>,
    } else {
    }
    return
  }
  func.func @transform_0(%arg0: i32, %arg1: i32, %arg2: i32) -> (i32, i32) {
    %c0_i32 = arith.constant 0 : i32
    return %arg0, %arg2 : i32, i32
  }
  func.func @transform_1(%arg0: i32, %arg1: i32, %arg2: i32) -> (i32, i32) {
    %c0_i32 = arith.constant 0 : i32
    return %arg2, %arg1 : i32, i32
  }
  func.func @transform_2(%arg0: i32, %arg1: i32, %arg2: i32) -> (i32, i32) {
    %c0_i32 = arith.constant 0 : i32
    %c0_i32_0 = arith.constant 0 : i32
    return %c0_i32, %arg1 : i32, i32
  }
  func.func @transform_3(%arg0: i32, %arg1: i32, %arg2: i32) -> (i32, i32) {
    %c0_i32 = arith.constant 0 : i32
    %c0_i32_0 = arith.constant 0 : i32
    return %c0_i32, %arg1 : i32, i32
  }
  func.func @transform_4(%arg0: i32, %arg1: i32, %arg2: i32) -> (i32, i32) {
    %c0_i32 = arith.constant 0 : i32
    return %arg0, %arg1 : i32, i32
  }
}

module attributes {stable_mosaic.version = 11 : i64} {
  func.func @_matmul_bn_kernel(%arg0: i32, %arg1: i32, %arg2: i32, %arg3: memref<8x384xbf16, #tpu.memory_space<vmem>>, %arg4: memref<384x128xbf16, #tpu.memory_space<vmem>>, %arg5: memref<1x128xf32, #tpu.memory_space<vmem>>, %arg6: memref<1x128xf32, #tpu.memory_space<vmem>>, %arg7: memref<8x128xbf16, #tpu.memory_space<vmem>>, %arg8: memref<8x128xf32, #tpu.memory_space<vmem>>) attributes {dimension_semantics = [#tpu.dimension_semantics<parallel>, #tpu.dimension_semantics<parallel>, #tpu.dimension_semantics<arbitrary>], iteration_bounds = array<i64: 1, 1, 1>, scalar_prefetch = 0 : i64, scratch_operands = 1 : i64, tpu.core_type = #tpu.core_type<tc>, window_params = [{transform_indices = @transform_0, window_bounds = array<i64: 8, 384>}, {transform_indices = @transform_1, window_bounds = array<i64: 384, 128>}, {transform_indices = @transform_2, window_bounds = array<i64: 1, 128>}, {transform_indices = @transform_3, window_bounds = array<i64: 1, 128>}, {transform_indices = @transform_4, window_bounds = array<i64: 8, 128>}]} {
    %c0_i32 = arith.constant 0 : i32
    %0 = arith.cmpi eq, %arg2, %c0_i32 : i32
    %1 = arith.extui %0 : i1 to i32
    %c0_i32_0 = arith.constant 0 : i32
    %2 = arith.cmpi ne, %1, %c0_i32_0 : i32
    scf.if %2 {
      %cst_10 = arith.constant 0.000000e+00 : f32
      %12 = vector.broadcast %cst_10 : f32 to vector<8x128xf32>
      %c0_11 = arith.constant 0 : index
      %c0_12 = arith.constant 0 : index
      %13 = vector.load %arg8[%c0_11, %c0_12] : memref<8x128xf32, #tpu.memory_space<vmem>>, vector<8x128xf32>
      tpu.vector_store %arg8[%c0_11, %c0_12], %12 {strides = array<i32>} : memref<8x128xf32, #tpu.memory_space<vmem>>, vector<8x128xf32>,
    } else {
    }
    %c0 = arith.constant 0 : index
    %c0_1 = arith.constant 0 : index
    %3 = vector.load %arg8[%c0, %c0_1] : memref<8x128xf32, #tpu.memory_space<vmem>>, vector<8x128xf32>
    %c0_2 = arith.constant 0 : index
    %c0_3 = arith.constant 0 : index
    %4 = vector.load %arg3[%c0_2, %c0_3] : memref<8x384xbf16, #tpu.memory_space<vmem>>, vector<8x384xbf16>
    %c0_4 = arith.constant 0 : index
    %c0_5 = arith.constant 0 : index
    %5 = vector.load %arg4[%c0_4, %c0_5] : memref<384x128xbf16, #tpu.memory_space<vmem>>, vector<384x128xbf16>
    %cst = arith.constant dense<0.000000e+00> : vector<8x128xf32>
    %6 = tpu.matmul %4, %5, %cst {dimension_numbers = #tpu.dot_dimension_numbers<[1], [0], [0], [1], [0, 0, 1, 1], [], []>} : vector<8x384xbf16>, vector<384x128xbf16>, vector<8x128xf32> -> vector<8x128xf32>
    %7 = arith.addf %3, %6 : vector<8x128xf32>
    %c0_6 = arith.constant 0 : index
    %c0_7 = arith.constant 0 : index
    %8 = vector.load %arg8[%c0_6, %c0_7] : memref<8x128xf32, #tpu.memory_space<vmem>>, vector<8x128xf32>
    tpu.vector_store %arg8[%c0_6, %c0_7], %7 {strides = array<i32>} : memref<8x128xf32, #tpu.memory_space<vmem>>, vector<8x128xf32>,
    %c0_i32_8 = arith.constant 0 : i32
    %9 = arith.cmpi eq, %arg2, %c0_i32_8 : i32
    %10 = arith.extui %9 : i1 to i32
    %c0_i32_9 = arith.constant 0 : i32
    %11 = arith.cmpi ne, %10, %c0_i32_9 : i32
    scf.if %11 {
      %c0_10 = arith.constant 0 : index
      %c0_11 = arith.constant 0 : index
      %12 = vector.load %arg8[%c0_10, %c0_11] : memref<8x128xf32, #tpu.memory_space<vmem>>, vector<8x128xf32>
      %c0_12 = arith.constant 0 : index
      %c0_13 = arith.constant 0 : index
      %13 = vector.load %arg5[%c0_12, %c0_13] : memref<1x128xf32, #tpu.memory_space<vmem>>, vector<1x128xf32>
      %14 = vector.broadcast %13 : vector<1x128xf32> to vector<8x128xf32>
      %15 = arith.mulf %12, %14 : vector<8x128xf32>
      %c0_14 = arith.constant 0 : index
      %c0_15 = arith.constant 0 : index
      %16 = vector.load %arg6[%c0_14, %c0_15] : memref<1x128xf32, #tpu.memory_space<vmem>>, vector<1x128xf32>
      %17 = vector.broadcast %16 : vector<1x128xf32> to vector<8x128xf32>
      %18 = arith.addf %15, %17 : vector<8x128xf32>
      %cst_16 = arith.constant 0.000000e+00 : f32
      %19 = vector.broadcast %cst_16 : f32 to vector<8x128xf32>
      %20 = arith.maximumf %18, %19 : vector<8x128xf32>
      %21 = arith.truncf %20 : vector<8x128xf32> to vector<8x128xbf16>
      %c0_17 = arith.constant 0 : index
      %c0_18 = arith.constant 0 : index
      %22 = vector.load %arg7[%c0_17, %c0_18] : memref<8x128xbf16, #tpu.memory_space<vmem>>, vector<8x128xbf16>
      tpu.vector_store %arg7[%c0_17, %c0_18], %21 {strides = array<i32>} : memref<8x128xbf16, #tpu.memory_space<vmem>>, vector<8x128xbf16>,
    } else {
    }
    return
  }
  func.func @transform_0(%arg0: i32, %arg1: i32, %arg2: i32) -> (i32, i32) {
    %c0_i32 = arith.constant 0 : i32
    return %arg0, %arg2 : i32, i32
  }
  func.func @transform_1(%arg0: i32, %arg1: i32, %arg2: i32) -> (i32, i32) {
    %c0_i32 = arith.constant 0 : i32
    return %arg2, %arg1 : i32, i32
  }
  func.func @transform_2(%arg0: i32, %arg1: i32, %arg2: i32) -> (i32, i32) {
    %c0_i32 = arith.constant 0 : i32
    %c0_i32_0 = arith.constant 0 : i32
    return %c0_i32, %arg1 : i32, i32
  }
  func.func @transform_3(%arg0: i32, %arg1: i32, %arg2: i32) -> (i32, i32) {
    %c0_i32 = arith.constant 0 : i32
    %c0_i32_0 = arith.constant 0 : i32
    return %c0_i32, %arg1 : i32, i32
  }
  func.func @transform_4(%arg0: i32, %arg1: i32, %arg2: i32) -> (i32, i32) {
    %c0_i32 = arith.constant 0 : i32
    return %arg0, %arg1 : i32, i32
  }
}

module attributes {stable_mosaic.version = 11 : i64} {
  func.func @_matmul_bn_kernel(%arg0: i32, %arg1: i32, %arg2: i32, %arg3: memref<8x128xbf16, #tpu.memory_space<vmem>>, %arg4: memref<128x128xbf16, #tpu.memory_space<vmem>>, %arg5: memref<1x128xf32, #tpu.memory_space<vmem>>, %arg6: memref<1x128xf32, #tpu.memory_space<vmem>>, %arg7: memref<8x128xbf16, #tpu.memory_space<vmem>>, %arg8: memref<8x128xbf16, #tpu.memory_space<vmem>>, %arg9: memref<8x128xf32, #tpu.memory_space<vmem>>) attributes {dimension_semantics = [#tpu.dimension_semantics<parallel>, #tpu.dimension_semantics<parallel>, #tpu.dimension_semantics<arbitrary>], iteration_bounds = array<i64: 1, 1, 5>, scalar_prefetch = 0 : i64, scratch_operands = 1 : i64, tpu.core_type = #tpu.core_type<tc>, window_params = [{transform_indices = @transform_0, window_bounds = array<i64: 8, 128>}, {transform_indices = @transform_1, window_bounds = array<i64: 128, 128>}, {transform_indices = @transform_2, window_bounds = array<i64: 1, 128>}, {transform_indices = @transform_3, window_bounds = array<i64: 1, 128>}, {transform_indices = @transform_4, window_bounds = array<i64: 8, 128>}, {transform_indices = @transform_5, window_bounds = array<i64: 8, 128>}]} {
    %c0_i32 = arith.constant 0 : i32
    %0 = arith.cmpi eq, %arg2, %c0_i32 : i32
    %1 = arith.extui %0 : i1 to i32
    %c0_i32_0 = arith.constant 0 : i32
    %2 = arith.cmpi ne, %1, %c0_i32_0 : i32
    scf.if %2 {
      %cst_9 = arith.constant 0.000000e+00 : f32
      %12 = vector.broadcast %cst_9 : f32 to vector<8x128xf32>
      %c0_10 = arith.constant 0 : index
      %c0_11 = arith.constant 0 : index
      %13 = vector.load %arg9[%c0_10, %c0_11] : memref<8x128xf32, #tpu.memory_space<vmem>>, vector<8x128xf32>
      tpu.vector_store %arg9[%c0_10, %c0_11], %12 {strides = array<i32>} : memref<8x128xf32, #tpu.memory_space<vmem>>, vector<8x128xf32>,
    } else {
    }
    %c0 = arith.constant 0 : index
    %c0_1 = arith.constant 0 : index
    %3 = vector.load %arg9[%c0, %c0_1] : memref<8x128xf32, #tpu.memory_space<vmem>>, vector<8x128xf32>
    %c0_2 = arith.constant 0 : index
    %c0_3 = arith.constant 0 : index
    %4 = vector.load %arg3[%c0_2, %c0_3] : memref<8x128xbf16, #tpu.memory_space<vmem>>, vector<8x128xbf16>
    %c0_4 = arith.constant 0 : index
    %c0_5 = arith.constant 0 : index
    %5 = vector.load %arg4[%c0_4, %c0_5] : memref<128x128xbf16, #tpu.memory_space<vmem>>, vector<128x128xbf16>
    %cst = arith.constant dense<0.000000e+00> : vector<8x128xf32>
    %6 = tpu.matmul %4, %5, %cst {dimension_numbers = #tpu.dot_dimension_numbers<[1], [0], [0], [1], [0, 0, 1, 1], [], []>} : vector<8x128xbf16>, vector<128x128xbf16>, vector<8x128xf32> -> vector<8x128xf32>
    %7 = arith.addf %3, %6 : vector<8x128xf32>
    %c0_6 = arith.constant 0 : index
    %c0_7 = arith.constant 0 : index
    %8 = vector.load %arg9[%c0_6, %c0_7] : memref<8x128xf32, #tpu.memory_space<vmem>>, vector<8x128xf32>
    tpu.vector_store %arg9[%c0_6, %c0_7], %7 {strides = array<i32>} : memref<8x128xf32, #tpu.memory_space<vmem>>, vector<8x128xf32>,
    %c4_i32 = arith.constant 4 : i32
    %9 = arith.cmpi eq, %arg2, %c4_i32 : i32
    %10 = arith.extui %9 : i1 to i32
    %c0_i32_8 = arith.constant 0 : i32
    %11 = arith.cmpi ne, %10, %c0_i32_8 : i32
    scf.if %11 {
      %c0_9 = arith.constant 0 : index
      %c0_10 = arith.constant 0 : index
      %12 = vector.load %arg9[%c0_9, %c0_10] : memref<8x128xf32, #tpu.memory_space<vmem>>, vector<8x128xf32>
      %c0_11 = arith.constant 0 : index
      %c0_12 = arith.constant 0 : index
      %13 = vector.load %arg5[%c0_11, %c0_12] : memref<1x128xf32, #tpu.memory_space<vmem>>, vector<1x128xf32>
      %14 = vector.broadcast %13 : vector<1x128xf32> to vector<8x128xf32>
      %15 = arith.mulf %12, %14 : vector<8x128xf32>
      %c0_13 = arith.constant 0 : index
      %c0_14 = arith.constant 0 : index
      %16 = vector.load %arg6[%c0_13, %c0_14] : memref<1x128xf32, #tpu.memory_space<vmem>>, vector<1x128xf32>
      %17 = vector.broadcast %16 : vector<1x128xf32> to vector<8x128xf32>
      %18 = arith.addf %15, %17 : vector<8x128xf32>
      %c0_15 = arith.constant 0 : index
      %c0_16 = arith.constant 0 : index
      %19 = vector.load %arg7[%c0_15, %c0_16] : memref<8x128xbf16, #tpu.memory_space<vmem>>, vector<8x128xbf16>
      %20 = arith.extf %19 : vector<8x128xbf16> to vector<8x128xf32>
      %21 = arith.addf %18, %20 : vector<8x128xf32>
      %cst_17 = arith.constant 0.000000e+00 : f32
      %22 = vector.broadcast %cst_17 : f32 to vector<8x128xf32>
      %23 = arith.maximumf %21, %22 : vector<8x128xf32>
      %24 = arith.truncf %23 : vector<8x128xf32> to vector<8x128xbf16>
      %c0_18 = arith.constant 0 : index
      %c0_19 = arith.constant 0 : index
      %25 = vector.load %arg8[%c0_18, %c0_19] : memref<8x128xbf16, #tpu.memory_space<vmem>>, vector<8x128xbf16>
      tpu.vector_store %arg8[%c0_18, %c0_19], %24 {strides = array<i32>} : memref<8x128xbf16, #tpu.memory_space<vmem>>, vector<8x128xbf16>,
    } else {
    }
    return
  }
  func.func @transform_0(%arg0: i32, %arg1: i32, %arg2: i32) -> (i32, i32) {
    %c0_i32 = arith.constant 0 : i32
    return %arg0, %arg2 : i32, i32
  }
  func.func @transform_1(%arg0: i32, %arg1: i32, %arg2: i32) -> (i32, i32) {
    %c0_i32 = arith.constant 0 : i32
    return %arg2, %arg1 : i32, i32
  }
  func.func @transform_2(%arg0: i32, %arg1: i32, %arg2: i32) -> (i32, i32) {
    %c0_i32 = arith.constant 0 : i32
    %c0_i32_0 = arith.constant 0 : i32
    return %c0_i32, %arg1 : i32, i32
  }
  func.func @transform_3(%arg0: i32, %arg1: i32, %arg2: i32) -> (i32, i32) {
    %c0_i32 = arith.constant 0 : i32
    %c0_i32_0 = arith.constant 0 : i32
    return %c0_i32, %arg1 : i32, i32
  }
  func.func @transform_4(%arg0: i32, %arg1: i32, %arg2: i32) -> (i32, i32) {
    %c0_i32 = arith.constant 0 : i32
    return %arg0, %arg1 : i32, i32
  }
  func.func @transform_5(%arg0: i32, %arg1: i32, %arg2: i32) -> (i32, i32) {
    %c0_i32 = arith.constant 0 : i32
    return %arg0, %arg1 : i32, i32
  }
}

module attributes {stable_mosaic.version = 11 : i64} {
  func.func @_spatial_mean_kernel(%arg0: i32, %arg1: memref<8x8x64xbf16, #tpu.memory_space<vmem>>, %arg2: memref<8x64xf32, #tpu.memory_space<vmem>>, %arg3: memref<8x64xf32, #tpu.memory_space<vmem>>) attributes {dimension_semantics = [#tpu.dimension_semantics<arbitrary>], iteration_bounds = array<i64: 1>, scalar_prefetch = 0 : i64, scratch_operands = 1 : i64, tpu.core_type = #tpu.core_type<tc>, window_params = [{transform_indices = @transform_0, window_bounds = array<i64: 8, 8, 64>}, {pipeline_mode = #tpu.pipeline_mode<synchronous>, transform_indices = @transform_1, window_bounds = array<i64: 8, 64>}]} {
    %c0_i32 = arith.constant 0 : i32
    %0 = arith.cmpi eq, %arg0, %c0_i32 : i32
    %1 = arith.extui %0 : i1 to i32
    %c0_i32_0 = arith.constant 0 : i32
    %2 = arith.cmpi ne, %1, %c0_i32_0 : i32
    scf.if %2 {
      %cst_9 = arith.constant 0.000000e+00 : f32
      %12 = vector.broadcast %cst_9 : f32 to vector<8x64xf32>
      %c0_10 = arith.constant 0 : index
      %c0_11 = arith.constant 0 : index
      %13 = vector.load %arg3[%c0_10, %c0_11] : memref<8x64xf32, #tpu.memory_space<vmem>>, vector<8x64xf32>
      tpu.vector_store %arg3[%c0_10, %c0_11], %12 {strides = array<i32>} : memref<8x64xf32, #tpu.memory_space<vmem>>, vector<8x64xf32>,
    } else {
    }
    %c0 = arith.constant 0 : index
    %c0_1 = arith.constant 0 : index
    %3 = vector.load %arg3[%c0, %c0_1] : memref<8x64xf32, #tpu.memory_space<vmem>>, vector<8x64xf32>
    %c0_2 = arith.constant 0 : index
    %c0_3 = arith.constant 0 : index
    %c0_4 = arith.constant 0 : index
    %4 = vector.load %arg1[%c0_2, %c0_3, %c0_4] : memref<8x8x64xbf16, #tpu.memory_space<vmem>>, vector<8x8x64xbf16>
    %5 = arith.extf %4 : vector<8x8x64xbf16> to vector<8x8x64xf32>
    %cst = arith.constant dense<0.000000e+00> : vector<8x64xf32>
    %6 = vector.multi_reduction <add>, %5, %cst [1] : vector<8x8x64xf32> to vector<8x64xf32>
    %7 = arith.addf %3, %6 : vector<8x64xf32>
    %c0_5 = arith.constant 0 : index
    %c0_6 = arith.constant 0 : index
    %8 = vector.load %arg3[%c0_5, %c0_6] : memref<8x64xf32, #tpu.memory_space<vmem>>, vector<8x64xf32>
    tpu.vector_store %arg3[%c0_5, %c0_6], %7 {strides = array<i32>} : memref<8x64xf32, #tpu.memory_space<vmem>>, vector<8x64xf32>,
    %c0_i32_7 = arith.constant 0 : i32
    %9 = arith.cmpi eq, %arg0, %c0_i32_7 : i32
    %10 = arith.extui %9 : i1 to i32
    %c0_i32_8 = arith.constant 0 : i32
    %11 = arith.cmpi ne, %10, %c0_i32_8 : i32
    scf.if %11 {
      %c0_9 = arith.constant 0 : index
      %c0_10 = arith.constant 0 : index
      %12 = vector.load %arg3[%c0_9, %c0_10] : memref<8x64xf32, #tpu.memory_space<vmem>>, vector<8x64xf32>
      %cst_11 = arith.constant 1.000000e+00 : f32
      %13 = vector.broadcast %cst_11 : f32 to vector<8x64xf32>
      %14 = arith.mulf %12, %13 : vector<8x64xf32>
      %c0_12 = arith.constant 0 : index
      %c0_13 = arith.constant 0 : index
      %15 = vector.load %arg2[%c0_12, %c0_13] : memref<8x64xf32, #tpu.memory_space<vmem>>, vector<8x64xf32>
      tpu.vector_store %arg2[%c0_12, %c0_13], %14 {strides = array<i32>} : memref<8x64xf32, #tpu.memory_space<vmem>>, vector<8x64xf32>,
    } else {
    }
    return
  }
  func.func @transform_0(%arg0: i32) -> (i32, i32, i32) {
    %c0_i32 = arith.constant 0 : i32
    %c0_i32_0 = arith.constant 0 : i32
    %c0_i32_1 = arith.constant 0 : i32
    return %c0_i32, %arg0, %c0_i32_0 : i32, i32, i32
  }
  func.func @transform_1(%arg0: i32) -> (i32, i32) {
    %c0_i32 = arith.constant 0 : i32
    %c0_i32_0 = arith.constant 0 : i32
    %c0_i32_1 = arith.constant 0 : i32
    return %c0_i32, %c0_i32_0 : i32, i32
  }
}

module attributes {stable_mosaic.version = 11 : i64} {
  func.func @_matmul_bn_kernel(%arg0: i32, %arg1: i32, %arg2: i32, %arg3: memref<8x128xbf16, #tpu.memory_space<vmem>>, %arg4: memref<128x128xbf16, #tpu.memory_space<vmem>>, %arg5: memref<1x128xf32, #tpu.memory_space<vmem>>, %arg6: memref<1x128xf32, #tpu.memory_space<vmem>>, %arg7: memref<8x128xf32, #tpu.memory_space<vmem>>, %arg8: memref<8x128xf32, #tpu.memory_space<vmem>>) attributes {dimension_semantics = [#tpu.dimension_semantics<parallel>, #tpu.dimension_semantics<parallel>, #tpu.dimension_semantics<arbitrary>], iteration_bounds = array<i64: 1, 1, 1>, scalar_prefetch = 0 : i64, scratch_operands = 1 : i64, tpu.core_type = #tpu.core_type<tc>, window_params = [{transform_indices = @transform_0, window_bounds = array<i64: 8, 128>}, {transform_indices = @transform_1, window_bounds = array<i64: 128, 128>}, {transform_indices = @transform_2, window_bounds = array<i64: 1, 128>}, {transform_indices = @transform_3, window_bounds = array<i64: 1, 128>}, {transform_indices = @transform_4, window_bounds = array<i64: 8, 128>}]} {
    %c0_i32 = arith.constant 0 : i32
    %0 = arith.cmpi eq, %arg2, %c0_i32 : i32
    %1 = arith.extui %0 : i1 to i32
    %c0_i32_0 = arith.constant 0 : i32
    %2 = arith.cmpi ne, %1, %c0_i32_0 : i32
    scf.if %2 {
      %cst_10 = arith.constant 0.000000e+00 : f32
      %12 = vector.broadcast %cst_10 : f32 to vector<8x128xf32>
      %c0_11 = arith.constant 0 : index
      %c0_12 = arith.constant 0 : index
      %13 = vector.load %arg8[%c0_11, %c0_12] : memref<8x128xf32, #tpu.memory_space<vmem>>, vector<8x128xf32>
      tpu.vector_store %arg8[%c0_11, %c0_12], %12 {strides = array<i32>} : memref<8x128xf32, #tpu.memory_space<vmem>>, vector<8x128xf32>,
    } else {
    }
    %c0 = arith.constant 0 : index
    %c0_1 = arith.constant 0 : index
    %3 = vector.load %arg8[%c0, %c0_1] : memref<8x128xf32, #tpu.memory_space<vmem>>, vector<8x128xf32>
    %c0_2 = arith.constant 0 : index
    %c0_3 = arith.constant 0 : index
    %4 = vector.load %arg3[%c0_2, %c0_3] : memref<8x128xbf16, #tpu.memory_space<vmem>>, vector<8x128xbf16>
    %c0_4 = arith.constant 0 : index
    %c0_5 = arith.constant 0 : index
    %5 = vector.load %arg4[%c0_4, %c0_5] : memref<128x128xbf16, #tpu.memory_space<vmem>>, vector<128x128xbf16>
    %cst = arith.constant dense<0.000000e+00> : vector<8x128xf32>
    %6 = tpu.matmul %4, %5, %cst {dimension_numbers = #tpu.dot_dimension_numbers<[1], [0], [0], [1], [0, 0, 1, 1], [], []>} : vector<8x128xbf16>, vector<128x128xbf16>, vector<8x128xf32> -> vector<8x128xf32>
    %7 = arith.addf %3, %6 : vector<8x128xf32>
    %c0_6 = arith.constant 0 : index
    %c0_7 = arith.constant 0 : index
    %8 = vector.load %arg8[%c0_6, %c0_7] : memref<8x128xf32, #tpu.memory_space<vmem>>, vector<8x128xf32>
    tpu.vector_store %arg8[%c0_6, %c0_7], %7 {strides = array<i32>} : memref<8x128xf32, #tpu.memory_space<vmem>>, vector<8x128xf32>,
    %c0_i32_8 = arith.constant 0 : i32
    %9 = arith.cmpi eq, %arg2, %c0_i32_8 : i32
    %10 = arith.extui %9 : i1 to i32
    %c0_i32_9 = arith.constant 0 : i32
    %11 = arith.cmpi ne, %10, %c0_i32_9 : i32
    scf.if %11 {
      %c0_10 = arith.constant 0 : index
      %c0_11 = arith.constant 0 : index
      %12 = vector.load %arg8[%c0_10, %c0_11] : memref<8x128xf32, #tpu.memory_space<vmem>>, vector<8x128xf32>
      %c0_12 = arith.constant 0 : index
      %c0_13 = arith.constant 0 : index
      %13 = vector.load %arg5[%c0_12, %c0_13] : memref<1x128xf32, #tpu.memory_space<vmem>>, vector<1x128xf32>
      %14 = vector.broadcast %13 : vector<1x128xf32> to vector<8x128xf32>
      %15 = arith.mulf %12, %14 : vector<8x128xf32>
      %c0_14 = arith.constant 0 : index
      %c0_15 = arith.constant 0 : index
      %16 = vector.load %arg6[%c0_14, %c0_15] : memref<1x128xf32, #tpu.memory_space<vmem>>, vector<1x128xf32>
      %17 = vector.broadcast %16 : vector<1x128xf32> to vector<8x128xf32>
      %18 = arith.addf %15, %17 : vector<8x128xf32>
      %c0_16 = arith.constant 0 : index
      %c0_17 = arith.constant 0 : index
      %19 = vector.load %arg7[%c0_16, %c0_17] : memref<8x128xf32, #tpu.memory_space<vmem>>, vector<8x128xf32>
      tpu.vector_store %arg7[%c0_16, %c0_17], %18 {strides = array<i32>} : memref<8x128xf32, #tpu.memory_space<vmem>>, vector<8x128xf32>,
    } else {
    }
    return
  }
  func.func @transform_0(%arg0: i32, %arg1: i32, %arg2: i32) -> (i32, i32) {
    %c0_i32 = arith.constant 0 : i32
    return %arg0, %arg2 : i32, i32
  }
  func.func @transform_1(%arg0: i32, %arg1: i32, %arg2: i32) -> (i32, i32) {
    %c0_i32 = arith.constant 0 : i32
    return %arg2, %arg1 : i32, i32
  }
  func.func @transform_2(%arg0: i32, %arg1: i32, %arg2: i32) -> (i32, i32) {
    %c0_i32 = arith.constant 0 : i32
    %c0_i32_0 = arith.constant 0 : i32
    return %c0_i32, %arg1 : i32, i32
  }
  func.func @transform_3(%arg0: i32, %arg1: i32, %arg2: i32) -> (i32, i32) {
    %c0_i32 = arith.constant 0 : i32
    %c0_i32_0 = arith.constant 0 : i32
    return %c0_i32, %arg1 : i32, i32
  }
  func.func @transform_4(%arg0: i32, %arg1: i32, %arg2: i32) -> (i32, i32) {
    %c0_i32 = arith.constant 0 : i32
    return %arg0, %arg1 : i32, i32
  }
}

</mosaic_0001>

<llo_original>
// kernel: resnet_forward.15
$region0: #{resnet_forward.15}
  #allocation0 [shape = 'u32[]', space=smem, size = 0x4, offset = 0x4, fixed_abs, tag = 'smem constant byte address 0x4 - core index']
  #allocation1 [shape = 'u32[144,128]{1,0:T(1,128)}', space=vmem, size = 0x12000, scoped, tag = 'internal scratch']
  #allocation2 [shape = 'f32[256,128]{1,0:T(8,128)}', space=vmem, size = 0x20000, scoped, tag = 'scratch operand']
  %s0 = inlined_call_operand.vmem [shape: bf16[512,256], index: 0, kind: input, shape index: {}]
  %s1 = inlined_call_operand.vmem [shape: bf16[256,128], index: 1, kind: input, shape index: {}]
  %s2 = inlined_call_operand.vmem [shape: f32[1,128], index: 2, kind: input, shape index: {}]
  %s3 = inlined_call_operand.vmem [shape: f32[1,128], index: 3, kind: input, shape index: {}]
  %s4 = inlined_call_operand.vmem [shape: bf16[512,128], index: 4, kind: output, shape index: {}]
  %s5 = sld [smem:[#allocation0]]
  $region57: #{resnet_forward.15} parent=0
    _
  %s7 = ssub.s32 1, %s5
  %s8 = scalar_select 0, %s7, %s5
  loop: start=0, step=1, limit=4
  $region2: #{resnet_forward.15} parent=0 // loop_pre_header
    _
  $region3: #{resnet_forward.15} parent=0 // loop_header
    %s10 = sphi 0, %s14
    %p11 = scmp.ge.s32.totalorder %s10, 4
    %s17 = sphi 0, %s36
    %s18 = sphi 0, %s32
    %s19 = sphi 0, %s28
    %s20 = sphi 0, %s17
    %s21 = sphi 0, %s18
    %s22 = sphi 0, %s19
    %s23 = sphi 0, %s20
    %s24 = sphi 0, %s21
    %s25 = sphi 0, %s22
    %s41 = sphi 0, %s43
    %s44 = sphi 0, %s41
    %s45 = sphi 0, %s44
    %s61 = sphi 0, %s45
    %s69 = sphi 0, %s71
    %s72 = sphi 0, %s69
    %s73 = sphi 0, %s72
    %s89 = sphi 0, %s73
    %s95 = sphi 0, %s97
    %s98 = sphi 0, %s95
    %s99 = sphi 0, %s98
    %s115 = sphi 0, %s99
    %s121 = sphi 0, %s123
    %s124 = sphi 0, %s121
    %s125 = sphi 0, %s124
    %s141 = sphi 0, %s125
    %s149 = sphi 0, %s151
    %s152 = sphi 0, %s149
    %s153 = sphi 0, %s152
    %s169 = sphi 0, %s153
  $region4: #{resnet_forward.15} parent=0 // loop_header_branch
    %13 = sbr.rel (%p11) target = $region8
  $region5: #{resnet_forward.15} parent=0 // loop_body
    %s15 = ssub.s32 %s10, 1
    %s16 = ssub.s32 %s10, 2
    %s26 = sadd.s32 1, %s19
    %p27 = scmp.ge.s32.totalorder %s26, 1
    %s28 = scalar_select %p27, 0, %s26
    %s29 = sadd.s32 1, %s18
    %s30 = scalar_select %p27, %s29, %s18
    %p31 = scmp.ge.s32.totalorder %s30, 1
    %s32 = scalar_select %p31, 0, %s30
    %s33 = sadd.s32 1, %s17
    %s34 = scalar_select %p31, %s33, %s17
    %p35 = scmp.ge.s32.totalorder %s34, 2
    %s36 = scalar_select %p35, 0, %s34
    %s37 = ssub.s32 %s17, %s36
    %s38 = ssub.s32 %s19, %s28
    %s39 = sor.u32 %s37, %s38
    %p40 = scmp.eq.s32.totalorder %s39, 0
    %s42 = sadd.s32 %s41, 1
    %s43 = scalar_select %p40, %s41, %s42
    %p46 = pneg %p40
    %p47 = scmp.eq.s32.totalorder %s10, 1
    %p48 = por %p46, %p47
    %p49 = scmp.ne.s32.totalorder %s41, %s44
    %p50 = scmp.eq.s32.totalorder %s10, 0
    %p51 = por %p49, %p50
    %p52 = scmp.ne.s32.totalorder %s41, %s44
    %p53 = scmp.eq.s32.totalorder %s15, 1
    %p54 = por %p52, %p53
    %p55 = scmp.ne.s32.totalorder %s44, %s45
    %p56 = scmp.eq.s32.totalorder %s15, 0
    %p57 = por %p55, %p56
    %p58 = scmp.ne.s32.totalorder %s44, %s45
    %p59 = scmp.eq.s32.totalorder %s16, 1
    %p60 = por %p58, %p59
    %p62 = scmp.ne.s32.totalorder %s45, %s61
    %p63 = scmp.eq.s32.totalorder %s16, 0
    %p64 = por %p62, %p63
    %s65 = ssub.s32 %s19, %s28
    %s66 = ssub.s32 %s18, %s32
    %s67 = sor.u32 %s65, %s66
    %p68 = scmp.eq.s32.totalorder %s67, 0
    %s70 = sadd.s32 %s69, 1
    %s71 = scalar_select %p68, %s69, %s70
    %p74 = pneg %p68
    %p75 = scmp.eq.s32.totalorder %s10, 1
    %p76 = por %p74, %p75
    %p77 = scmp.ne.s32.totalorder %s69, %s72
    %p78 = scmp.eq.s32.totalorder %s10, 0
    %p79 = por %p77, %p78
    %p80 = scmp.ne.s32.totalorder %s69, %s72
    %p81 = scmp.eq.s32.totalorder %s15, 1
    %p82 = por %p80, %p81
    %p83 = scmp.ne.s32.totalorder %s72, %s73
    %p84 = scmp.eq.s32.totalorder %s15, 0
    %p85 = por %p83, %p84
    %p86 = scmp.ne.s32.totalorder %s72, %s73
    %p87 = scmp.eq.s32.totalorder %s16, 1
    %p88 = por %p86, %p87
    %p90 = scmp.ne.s32.totalorder %s73, %s89
    %p91 = scmp.eq.s32.totalorder %s16, 0
    %p92 = por %p90, %p91
    %s93 = ssub.s32 %s18, %s32
    %p94 = scmp.eq.s32.totalorder %s93, 0
    %s96 = sadd.s32 %s95, 1
    %s97 = scalar_select %p94, %s95, %s96
    %p100 = pneg %p94
    %p101 = scmp.eq.s32.totalorder %s10, 1
    %p102 = por %p100, %p101
    %p103 = scmp.ne.s32.totalorder %s95, %s98
    %p104 = scmp.eq.s32.totalorder %s10, 0
    %p105 = por %p103, %p104
    %p106 = scmp.ne.s32.totalorder %s95, %s98
    %p107 = scmp.eq.s32.totalorder %s15, 1
    %p108 = por %p106, %p107
    %p109 = scmp.ne.s32.totalorder %s98, %s99
    %p110 = scmp.eq.s32.totalorder %s15, 0
    %p111 = por %p109, %p110
    %p112 = scmp.ne.s32.totalorder %s98, %s99
    %p113 = scmp.eq.s32.totalorder %s16, 1
    %p114 = por %p112, %p113
    %p116 = scmp.ne.s32.totalorder %s99, %s115
    %p117 = scmp.eq.s32.totalorder %s16, 0
    %p118 = por %p116, %p117
    %s119 = ssub.s32 %s18, %s32
    %p120 = scmp.eq.s32.totalorder %s119, 0
    %s122 = sadd.s32 %s121, 1
    %s123 = scalar_select %p120, %s121, %s122
    %p126 = pneg %p120
    %p127 = scmp.eq.s32.totalorder %s10, 1
    %p128 = por %p126, %p127
    %p129 = scmp.ne.s32.totalorder %s121, %s124
    %p130 = scmp.eq.s32.totalorder %s10, 0
    %p131 = por %p129, %p130
    %p132 = scmp.ne.s32.totalorder %s121, %s124
    %p133 = scmp.eq.s32.totalorder %s15, 1
    %p134 = por %p132, %p133
    %p135 = scmp.ne.s32.totalorder %s124, %s125
    %p136 = scmp.eq.s32.totalorder %s15, 0
    %p137 = por %p135, %p136
    %p138 = scmp.ne.s32.totalorder %s124, %s125
    %p139 = scmp.eq.s32.totalorder %s16, 1
    %p140 = por %p138, %p139
    %p142 = scmp.ne.s32.totalorder %s125, %s141
    %p143 = scmp.eq.s32.totalorder %s16, 0
    %p144 = por %p142, %p143
    %s145 = ssub.s32 %s17, %s36
    %s146 = ssub.s32 %s18, %s32
    %s147 = sor.u32 %s145, %s146
    %p148 = scmp.eq.s32.totalorder %s147, 0
    %s150 = sadd.s32 %s149, 1
    %s151 = scalar_select %p148, %s149, %s150
    %p154 = pneg %p148
    %p155 = scmp.eq.s32.totalorder %s10, 1
    %p156 = por %p154, %p155
    %p157 = scmp.ne.s32.totalorder %s149, %s152
    %p158 = scmp.eq.s32.totalorder %s10, 0
    %p159 = por %p157, %p158
    %p160 = scmp.ne.s32.totalorder %s149, %s152
    %p161 = scmp.eq.s32.totalorder %s15, 1
    %p162 = por %p160, %p161
    %p163 = scmp.ne.s32.totalorder %s152, %s153
    %p164 = scmp.eq.s32.totalorder %s15, 0
    %p165 = por %p163, %p164
    %p166 = scmp.ne.s32.totalorder %s152, %s153
    %p167 = scmp.eq.s32.totalorder %s16, 1
    %p168 = por %p166, %p167
    %p170 = scmp.ne.s32.totalorder %s153, %s169
    %p171 = scmp.eq.s32.totalorder %s16, 0
    %p172 = por %p170, %p171
    %p173 = scmp.le.s32.totalorder 1, %s10
    %p174 = scmp.lt.s32.totalorder %s10, 3
    %p175 = pnand %p173, %p174
    %p176 = pneg %p175
    // Predicated region
    $region9: #{resnet_forward.15} parent=5 // pred_check
      _
    $region10: #{resnet_forward.15} parent=5 // pred_check_branch
      %178 = sbr.rel (%p175) target = $region12
    $region11: #{resnet_forward.15} parent=5 // pred_region
      %s179 = ssub.s32 %s10, 1
      // Predicated region
      $region13: #{resnet_forward.15} parent=11 // pred_check
        %p180 = pneg %p85
      $region14: #{resnet_forward.15} parent=11 // pred_check_branch
        %182 = sbr.rel (%p180) target = $region16
      $region15: #{resnet_forward.15} parent=11 // pred_region
        %s183 = smul.u32 32, %s22
        %p184 = scmp.lt.s32.totalorder %s183, 31
        %s185 = scalar_select %p184, %s183, 31
        %p186 = scmp.lt.s32.totalorder %s21, 0
        %s187 = scalar_select %p186, %s21, 0
        %s188 = sadd.s32 %s187, %s185
        %s189 = smul.addr %s188, 4
        %s190 = scalar_lea.vmem %s1, %s189
        %s191 = smul.u32 32, %s22
      $region16: #{resnet_forward.15} parent=11 // pred_fallthru
        _
      // Predicated region
      $region17: #{resnet_forward.15} parent=11 // pred_check
        %p192 = pneg %p111
      $region18: #{resnet_forward.15} parent=11 // pred_check_branch
        %194 = sbr.rel (%p192) target = $region20
      $region19: #{resnet_forward.15} parent=11 // pred_region
        %p195 = scmp.lt.s32.totalorder %s21, 0
        %s196 = scalar_select %p195, %s21, 0
        %s197 = scalar_lea.vmem %s2, %s196
      $region20: #{resnet_forward.15} parent=11 // pred_fallthru
        _
      // Predicated region
      $region21: #{resnet_forward.15} parent=11 // pred_check
        %p198 = pneg %p137
      $region22: #{resnet_forward.15} parent=11 // pred_check_branch
        %200 = sbr.rel (%p198) target = $region24
      $region23: #{resnet_forward.15} parent=11 // pred_region
        %p201 = scmp.lt.s32.totalorder %s21, 0
        %s202 = scalar_select %p201, %s21, 0
        %s203 = scalar_lea.vmem %s3, %s202
      $region24: #{resnet_forward.15} parent=11 // pred_fallthru
        _
    $region12: #{resnet_forward.15} parent=5 // pred_fallthru
      _
    %p204 = scmp.lt.s32.totalorder %s10, 2
    // Predicated region
    $region25: #{resnet_forward.15} parent=5 // pred_check
      %p205 = pneg %p204
    $region26: #{resnet_forward.15} parent=5 // pred_check_branch
      %207 = sbr.rel (%p205) target = $region28
    $region27: #{resnet_forward.15} parent=5 // pred_region
      // Predicated region
      $region29: #{resnet_forward.15} parent=27 // pred_check
        %p208 = pneg %p51
      $region30: #{resnet_forward.15} parent=27 // pred_check_branch
        %210 = sbr.rel (%p208) target = $region32
      $region31: #{resnet_forward.15} parent=27 // pred_region
        %s211 = smul.u32 32, %s17
        %s212 = smul.u32 2, %s19
        %p213 = scmp.lt.s32.totalorder %s211, 63
        %s214 = scalar_select %p213, %s211, 63
        %p215 = scmp.lt.s32.totalorder %s212, 1
        %s216 = scalar_select %p215, %s212, 1
        %s217 = smul.addr %s214, 2
        %s218 = sadd.s32 %s216, %s217
        %s219 = smul.addr %s218, 4
        %s220 = scalar_lea.vmem %s0, %s219
        %s221 = smul.u32 32, %s17
        %s222 = smul.u32 2, %s19
      $region32: #{resnet_forward.15} parent=27 // pred_fallthru
        _
    $region28: #{resnet_forward.15} parent=5 // pred_fallthru
      _
    %p223 = scmp.le.s32.totalorder 1, %s10
    %p224 = scmp.lt.s32.totalorder %s10, 3
    %p225 = pnand %p223, %p224
    %p226 = pneg %p225
    // Predicated region
    $region33: #{resnet_forward.15} parent=5 // pred_check
      _
    $region34: #{resnet_forward.15} parent=5 // pred_check_branch
      %228 = sbr.rel (%p225) target = $region36
    $region35: #{resnet_forward.15} parent=5 // pred_region
      %s229 = ssub.s32 %s10, 1
      %s230 = smul.u32 32, %s20
      %s231 = smul.u32 2, %s22
      %p232 = scmp.lt.s32.totalorder %s230, 63
      %s233 = scalar_select %p232, %s230, 63
      %p234 = scmp.lt.s32.totalorder %s231, 1
      %s235 = scalar_select %p234, %s231, 1
      %s236 = smul.addr %s233, 2
      %s237 = sadd.s32 %s235, %s236
      %s238 = smul.addr %s237, 4
      %s239 = scalar_lea.vmem %s0, %s238
      %p240 = pneg %p57
      %p241 = pneg %p54
      %s242 = smul.u32 32, %s22
      %p243 = scmp.lt.s32.totalorder %s242, 31
      %s244 = scalar_select %p243, %s242, 31
      %p245 = scmp.lt.s32.totalorder %s21, 0
      %s246 = scalar_select %p245, %s21, 0
      %s247 = sadd.s32 %s246, %s244
      %s248 = smul.addr %s247, 4
      %s249 = scalar_lea.vmem %s1, %s248
      %p250 = pneg %p85
      %p251 = pneg %p82
      %p252 = scmp.lt.s32.totalorder %s21, 0
      %s253 = scalar_select %p252, %s21, 0
      %s254 = scalar_lea.vmem %s2, %s253
      %p255 = pneg %p111
      %p256 = pneg %p108
      %p257 = scmp.lt.s32.totalorder %s21, 0
      %s258 = scalar_select %p257, %s21, 0
      %s259 = scalar_lea.vmem %s3, %s258
      %p260 = pneg %p137
      %p261 = pneg %p134
      %p262 = pneg %p165
      %p263 = pneg %p162
      %s264 = smul.u32 32, %s20
      %p265 = scmp.lt.s32.totalorder %s264, 63
      %s266 = scalar_select %p265, %s264, 63
      %p267 = scmp.lt.s32.totalorder %s21, 0
      %s268 = scalar_select %p267, %s21, 0
      %s269 = sadd.s32 %s268, %s266
      %s270 = smul.addr %s269, 4
      %s271 = scalar_lea.vmem %s4, %s270
      %s272 = smul.u32 32, %s20
      %s273 = smul.u32 2, %s22
      %p274 = scmp.lt.s32.totalorder %s272, 63
      %s275 = scalar_select %p274, %s272, 63
      %p276 = scmp.lt.s32.totalorder %s273, 1
      %s277 = scalar_select %p276, %s273, 1
      %s278 = smul.addr %s275, 2
      %s279 = sadd.s32 %s277, %s278
      %s280 = smul.addr %s279, 4
      %s281 = scalar_lea.vmem %s0, %s280
      %s282 = smul.u32 32, %s20
      %s283 = smul.u32 2, %s22
      %s284 = smul.u32 32, %s22
      %p285 = scmp.lt.s32.totalorder %s284, 31
      %s286 = scalar_select %p285, %s284, 31
      %p287 = scmp.lt.s32.totalorder %s21, 0
      %s288 = scalar_select %p287, %s21, 0
      %s289 = sadd.s32 %s288, %s286
      %s290 = smul.addr %s289, 4
      %s291 = scalar_lea.vmem %s1, %s290
      %s292 = smul.u32 32, %s22
      %p293 = scmp.lt.s32.totalorder %s21, 0
      %s294 = scalar_select %p293, %s21, 0
      %s295 = scalar_lea.vmem %s2, %s294
      %p296 = scmp.lt.s32.totalorder %s21, 0
      %s297 = scalar_select %p296, %s21, 0
      %s298 = scalar_lea.vmem %s3, %s297
      %s299 = smul.u32 32, %s20
      %p300 = scmp.lt.s32.totalorder %s299, 63
      %s301 = scalar_select %p300, %s299, 63
      %p302 = scmp.lt.s32.totalorder %s21, 0
      %s303 = scalar_select %p302, %s21, 0
      %s304 = sadd.s32 %s303, %s301
      %s305 = smul.addr %s304, 4
      %s306 = scalar_lea.vmem %s4, %s305
      %s307 = smul.u32 32, %s20
      %p309 = scmp.eq.s32.totalorder %s22, 0
      // Predicated region
      $region37: #{resnet_forward.15} parent=35 // pred_check
        %p310 = pneg %p309
      $region38: #{resnet_forward.15} parent=35 // pred_check_branch
        %312 = sbr.rel (%p310) target = $region40
      $region39: #{resnet_forward.15} parent=35 // pred_region
        %313 = vst [vmem:[#allocation2] sm:$0xff] 0.0
        %314 = vst [vmem:[#allocation2 + $0x8] sm:$0xff] 0.0
        %315 = vst [vmem:[#allocation2 + $0x10] sm:$0xff] 0.0
        %316 = vst [vmem:[#allocation2 + $0x18] sm:$0xff] 0.0
        %317 = vst [vmem:[#allocation2 + $0x20] sm:$0xff] 0.0
        %318 = vst [vmem:[#allocation2 + $0x28] sm:$0xff] 0.0
        %319 = vst [vmem:[#allocation2 + $0x30] sm:$0xff] 0.0
        %320 = vst [vmem:[#allocation2 + $0x38] sm:$0xff] 0.0
        %321 = vst [vmem:[#allocation2 + $0x40] sm:$0xff] 0.0
        %322 = vst [vmem:[#allocation2 + $0x48] sm:$0xff] 0.0
        %323 = vst [vmem:[#allocation2 + $0x50] sm:$0xff] 0.0
        %324 = vst [vmem:[#allocation2 + $0x58] sm:$0xff] 0.0
        %325 = vst [vmem:[#allocation2 + $0x60] sm:$0xff] 0.0
        %326 = vst [vmem:[#allocation2 + $0x68] sm:$0xff] 0.0
        %327 = vst [vmem:[#allocation2 + $0x70] sm:$0xff] 0.0
        %328 = vst [vmem:[#allocation2 + $0x78] sm:$0xff] 0.0
        %329 = vst [vmem:[#allocation2 + $0x80] sm:$0xff] 0.0
        %330 = vst [vmem:[#allocation2 + $0x88] sm:$0xff] 0.0
        %331 = vst [vmem:[#allocation2 + $0x90] sm:$0xff] 0.0
        %332 = vst [vmem:[#allocation2 + $0x98] sm:$0xff] 0.0
        %333 = vst [vmem:[#allocation2 + $0xa0] sm:$0xff] 0.0
        %334 = vst [vmem:[#allocation2 + $0xa8] sm:$0xff] 0.0
        %335 = vst [vmem:[#allocation2 + $0xb0] sm:$0xff] 0.0
        %336 = vst [vmem:[#allocation2 + $0xb8] sm:$0xff] 0.0
        %337 = vst [vmem:[#allocation2 + $0xc0] sm:$0xff] 0.0
        %338 = vst [vmem:[#allocation2 + $0xc8] sm:$0xff] 0.0
        %339 = vst [vmem:[#allocation2 + $0xd0] sm:$0xff] 0.0
        %340 = vst [vmem:[#allocation2 + $0xd8] sm:$0xff] 0.0
        %341 = vst [vmem:[#allocation2 + $0xe0] sm:$0xff] 0.0
        %342 = vst [vmem:[#allocation2 + $0xe8] sm:$0xff] 0.0
        %343 = vst [vmem:[#allocation2 + $0xf0] sm:$0xff] 0.0
        %344 = vst [vmem:[#allocation2 + $0xf8] sm:$0xff] 0.0
      $region40: #{resnet_forward.15} parent=35 // pred_fallthru
        _
      %v345 = vld [vmem:[#allocation2] sm:$0xff]
      %v346 = vld [vmem:[#allocation2 + $0x8] sm:$0xff]
      %v347 = vld [vmem:[#allocation2 + $0x10] sm:$0xff]
      %v348 = vld [vmem:[#allocation2 + $0x18] sm:$0xff]
      %v349 = vld [vmem:[#allocation2 + $0x20] sm:$0xff]
      %v350 = vld [vmem:[#allocation2 + $0x28] sm:$0xff]
      %v351 = vld [vmem:[#allocation2 + $0x30] sm:$0xff]
      %v352 = vld [vmem:[#allocation2 + $0x38] sm:$0xff]
      %v353 = vld [vmem:[#allocation2 + $0x40] sm:$0xff]
      %v354 = vld [vmem:[#allocation2 + $0x48] sm:$0xff]
      %v355 = vld [vmem:[#allocation2 + $0x50] sm:$0xff]
      %v356 = vld [vmem:[#allocation2 + $0x58] sm:$0xff]
      %v357 = vld [vmem:[#allocation2 + $0x60] sm:$0xff]
      %v358 = vld [vmem:[#allocation2 + $0x68] sm:$0xff]
      %v359 = vld [vmem:[#allocation2 + $0x70] sm:$0xff]
      %v360 = vld [vmem:[#allocation2 + $0x78] sm:$0xff]
      %v361 = vld [vmem:[#allocation2 + $0x80] sm:$0xff]
      %v362 = vld [vmem:[#allocation2 + $0x88] sm:$0xff]
      %v363 = vld [vmem:[#allocation2 + $0x90] sm:$0xff]
      %v364 = vld [vmem:[#allocation2 + $0x98] sm:$0xff]
      %v365 = vld [vmem:[#allocation2 + $0xa0] sm:$0xff]
      %v366 = vld [vmem:[#allocation2 + $0xa8] sm:$0xff]
      %v367 = vld [vmem:[#allocation2 + $0xb0] sm:$0xff]
      %v368 = vld [vmem:[#allocation2 + $0xb8] sm:$0xff]
      %v369 = vld [vmem:[#allocation2 + $0xc0] sm:$0xff]
      %v370 = vld [vmem:[#allocation2 + $0xc8] sm:$0xff]
      %v371 = vld [vmem:[#allocation2 + $0xd0] sm:$0xff]
      %v372 = vld [vmem:[#allocation2 + $0xd8] sm:$0xff]
      %v373 = vld [vmem:[#allocation2 + $0xe0] sm:$0xff]
      %v374 = vld [vmem:[#allocation2 + $0xe8] sm:$0xff]
      %v375 = vld [vmem:[#allocation2 + $0xf0] sm:$0xff]
      %v376 = vld [vmem:[#allocation2 + $0xf8] sm:$0xff]
      %v377 = vld [vmem:[%s281] sm:$0xff]
      %v378 = vld [vmem:[%s281 + $0x8] sm:$0xff]
      %v379 = vld [vmem:[%s281 + $0x10] sm:$0xff]
      %v380 = vld [vmem:[%s281 + $0x18] sm:$0xff]
      %v381 = vld [vmem:[%s281 + $0x20] sm:$0xff]
      %v382 = vld [vmem:[%s281 + $0x28] sm:$0xff]
      %v383 = vld [vmem:[%s281 + $0x30] sm:$0xff]
      %v384 = vld [vmem:[%s281 + $0x38] sm:$0xff]
      %v385 = vld [vmem:[%s281 + $0x40] sm:$0xff]
      %v386 = vld [vmem:[%s281 + $0x48] sm:$0xff]
      %v387 = vld [vmem:[%s281 + $0x50] sm:$0xff]
      %v388 = vld [vmem:[%s281 + $0x58] sm:$0xff]
      %v389 = vld [vmem:[%s281 + $0x60] sm:$0xff]
      %v390 = vld [vmem:[%s281 + $0x68] sm:$0xff]
      %v391 = vld [vmem:[%s281 + $0x70] sm:$0xff]
      %v392 = vld [vmem:[%s281 + $0x78] sm:$0xff]
      %v393 = vld [vmem:[%s281 + $0x80] sm:$0xff]
      %v394 = vld [vmem:[%s281 + $0x88] sm:$0xff]
      %v395 = vld [vmem:[%s281 + $0x90] sm:$0xff]
      %v396 = vld [vmem:[%s281 + $0x98] sm:$0xff]
      %v397 = vld [vmem:[%s281 + $0xa0] sm:$0xff]
      %v398 = vld [vmem:[%s281 + $0xa8] sm:$0xff]
      %v399 = vld [vmem:[%s281 + $0xb0] sm:$0xff]
      %v400 = vld [vmem:[%s281 + $0xb8] sm:$0xff]
      %v401 = vld [vmem:[%s281 + $0xc0] sm:$0xff]
      %v402 = vld [vmem:[%s281 + $0xc8] sm:$0xff]
      %v403 = vld [vmem:[%s281 + $0xd0] sm:$0xff]
      %v404 = vld [vmem:[%s281 + $0xd8] sm:$0xff]
      %v405 = vld [vmem:[%s281 + $0xe0] sm:$0xff]
      %v406 = vld [vmem:[%s281 + $0xe8] sm:$0xff]
      %v407 = vld [vmem:[%s281 + $0xf0] sm:$0xff]
      %v408 = vld [vmem:[%s281 + $0xf8] sm:$0xff]
      %v409 = vld [vmem:[%s291] sm:$0xf]
      %v410 = vld [vmem:[%s291 + $0x4] sm:$0xf]
      %v411 = vld [vmem:[%s291 + $0x8] sm:$0xf]
      %v412 = vld [vmem:[%s291 + $0xc] sm:$0xf]
      %v413 = vld [vmem:[%s291 + $0x10] sm:$0xf]
      %v414 = vld [vmem:[%s291 + $0x14] sm:$0xf]
      %v415 = vld [vmem:[%s291 + $0x18] sm:$0xf]
      %v416 = vld [vmem:[%s291 + $0x1c] sm:$0xf]
      %v417 = vld [vmem:[%s291 + $0x20] sm:$0xf]
      %v418 = vld [vmem:[%s291 + $0x24] sm:$0xf]
      %v419 = vld [vmem:[%s291 + $0x28] sm:$0xf]
      %v420 = vld [vmem:[%s291 + $0x2c] sm:$0xf]
      %v421 = vld [vmem:[%s291 + $0x30] sm:$0xf]
      %v422 = vld [vmem:[%s291 + $0x34] sm:$0xf]
      %v423 = vld [vmem:[%s291 + $0x38] sm:$0xf]
      %v424 = vld [vmem:[%s291 + $0x3c] sm:$0xf]
      %v425 = vld [vmem:[%s291 + $0x40] sm:$0xf]
      %v426 = vld [vmem:[%s291 + $0x44] sm:$0xf]
      %v427 = vld [vmem:[%s291 + $0x48] sm:$0xf]
      %v428 = vld [vmem:[%s291 + $0x4c] sm:$0xf]
      %v429 = vld [vmem:[%s291 + $0x50] sm:$0xf]
      %v430 = vld [vmem:[%s291 + $0x54] sm:$0xf]
      %v431 = vld [vmem:[%s291 + $0x58] sm:$0xf]
      %v432 = vld [vmem:[%s291 + $0x5c] sm:$0xf]
      %v433 = vld [vmem:[%s291 + $0x60] sm:$0xf]
      %v434 = vld [vmem:[%s291 + $0x64] sm:$0xf]
      %v435 = vld [vmem:[%s291 + $0x68] sm:$0xf]
      %v436 = vld [vmem:[%s291 + $0x6c] sm:$0xf]
      %v437 = vld [vmem:[%s291 + $0x70] sm:$0xf]
      %v438 = vld [vmem:[%s291 + $0x74] sm:$0xf]
      %v439 = vld [vmem:[%s291 + $0x78] sm:$0xf]
      %v440 = vld [vmem:[%s291 + $0x7c] sm:$0xf]
      %v473 = vunpack.c.l.b16 %v377
      %v474 = vunpack.c.h.b16 %v377
      %v475 = vunpack.c.l.b16 %v378
      %v476 = vunpack.c.h.b16 %v378
      %v477 = vunpack.c.l.b16 %v379
      %v478 = vunpack.c.h.b16 %v379
      %v479 = vunpack.c.l.b16 %v380
      %v480 = vunpack.c.h.b16 %v380
      %v481 = vunpack.c.l.b16 %v381
      %v482 = vunpack.c.h.b16 %v381
      %v483 = vunpack.c.l.b16 %v382
      %v484 = vunpack.c.h.b16 %v382
      %v485 = vunpack.c.l.b16 %v383
      %v486 = vunpack.c.h.b16 %v383
      %v487 = vunpack.c.l.b16 %v384
      %v488 = vunpack.c.h.b16 %v384
      %v489 = vunpack.c.l.b16 %v385
      %v490 = vunpack.c.h.b16 %v385
      %v491 = vunpack.c.l.b16 %v386
      %v492 = vunpack.c.h.b16 %v386
      %v493 = vunpack.c.l.b16 %v387
      %v494 = vunpack.c.h.b16 %v387
      %v495 = vunpack.c.l.b16 %v388
      %v496 = vunpack.c.h.b16 %v388
      %v497 = vunpack.c.l.b16 %v389
      %v498 = vunpack.c.h.b16 %v389
      %v499 = vunpack.c.l.b16 %v390
      %v500 = vunpack.c.h.b16 %v390
      %v501 = vunpack.c.l.b16 %v391
      %v502 = vunpack.c.h.b16 %v391
      %v503 = vunpack.c.l.b16 %v392
      %v504 = vunpack.c.h.b16 %v392
      %v505 = vunpack.c.l.b16 %v393
      %v506 = vunpack.c.h.b16 %v393
      %v507 = vunpack.c.l.b16 %v394
      %v508 = vunpack.c.h.b16 %v394
      %v509 = vunpack.c.l.b16 %v395
      %v510 = vunpack.c.h.b16 %v395
      %v511 = vunpack.c.l.b16 %v396
      %v512 = vunpack.c.h.b16 %v396
      %v513 = vunpack.c.l.b16 %v397
      %v514 = vunpack.c.h.b16 %v397
      %v515 = vunpack.c.l.b16 %v398
      %v516 = vunpack.c.h.b16 %v398
      %v517 = vunpack.c.l.b16 %v399
      %v518 = vunpack.c.h.b16 %v399
      %v519 = vunpack.c.l.b16 %v400
      %v520 = vunpack.c.h.b16 %v400
      %v521 = vunpack.c.l.b16 %v401
      %v522 = vunpack.c.h.b16 %v401
      %v523 = vunpack.c.l.b16 %v402
      %v524 = vunpack.c.h.b16 %v402
      %v525 = vunpack.c.l.b16 %v403
      %v526 = vunpack.c.h.b16 %v403
      %v527 = vunpack.c.l.b16 %v404
      %v528 = vunpack.c.h.b16 %v404
      %v529 = vunpack.c.l.b16 %v405
      %v530 = vunpack.c.h.b16 %v405
      %v531 = vunpack.c.l.b16 %v406
      %v532 = vunpack.c.h.b16 %v406
      %v533 = vunpack.c.l.b16 %v407
      %v534 = vunpack.c.h.b16 %v407
      %v535 = vunpack.c.l.b16 %v408
      %v536 = vunpack.c.h.b16 %v408
      %v537 = vpack.c.b16 %v475, %v473
      %v538 = vpack.c.b16 %v476, %v474
      %v539 = vpack.c.b16 %v479, %v477
      %v540 = vpack.c.b16 %v480, %v478
      %v541 = vpack.c.b16 %v483, %v481
      %v542 = vpack.c.b16 %v484, %v482
      %v543 = vpack.c.b16 %v487, %v485
      %v544 = vpack.c.b16 %v488, %v486
      %v545 = vpack.c.b16 %v491, %v489
      %v546 = vpack.c.b16 %v492, %v490
      %v547 = vpack.c.b16 %v495, %v493
      %v548 = vpack.c.b16 %v496, %v494
      %v549 = vpack.c.b16 %v499, %v497
      %v550 = vpack.c.b16 %v500, %v498
      %v551 = vpack.c.b16 %v503, %v501
      %v552 = vpack.c.b16 %v504, %v502
      %v553 = vpack.c.b16 %v507, %v505
      %v554 = vpack.c.b16 %v508, %v506
      %v555 = vpack.c.b16 %v511, %v509
      %v556 = vpack.c.b16 %v512, %v510
      %v557 = vpack.c.b16 %v515, %v513
      %v558 = vpack.c.b16 %v516, %v514
      %v559 = vpack.c.b16 %v519, %v517
      %v560 = vpack.c.b16 %v520, %v518
      %v561 = vpack.c.b16 %v523, %v521
      %v562 = vpack.c.b16 %v524, %v522
      %v563 = vpack.c.b16 %v527, %v525
      %v564 = vpack.c.b16 %v528, %v526
      %v565 = vpack.c.b16 %v531, %v529
      %v566 = vpack.c.b16 %v532, %v530
      %v567 = vpack.c.b16 %v535, %v533
      %v568 = vpack.c.b16 %v536, %v534
      %v633 = vunpack.c.l.b16 %v409
      %v634 = vunpack.c.l.b16 %v410
      %v635 = vunpack.c.l.b16 %v411
      %v636 = vunpack.c.l.b16 %v412
      %v637 = vunpack.c.l.b16 %v413
      %v638 = vunpack.c.l.b16 %v414
      %v639 = vunpack.c.l.b16 %v415
      %v640 = vunpack.c.l.b16 %v416
      %v641 = vunpack.c.l.b16 %v417
      %v642 = vunpack.c.l.b16 %v418
      %v643 = vunpack.c.l.b16 %v419
      %v644 = vunpack.c.l.b16 %v420
      %v645 = vunpack.c.l.b16 %v421
      %v646 = vunpack.c.l.b16 %v422
      %v647 = vunpack.c.l.b16 %v423
      %v648 = vunpack.c.l.b16 %v424
      %v649 = vunpack.c.l.b16 %v425
      %v650 = vunpack.c.l.b16 %v426
      %v651 = vunpack.c.l.b16 %v427
      %v652 = vunpack.c.l.b16 %v428
      %v653 = vunpack.c.l.b16 %v429
      %v654 = vunpack.c.l.b16 %v430
      %v655 = vunpack.c.l.b16 %v431
      %v656 = vunpack.c.l.b16 %v432
      %v657 = vunpack.c.l.b16 %v433
      %v658 = vunpack.c.l.b16 %v434
      %v659 = vunpack.c.l.b16 %v435
      %v660 = vunpack.c.l.b16 %v436
      %v661 = vunpack.c.l.b16 %v437
      %v662 = vunpack.c.l.b16 %v438
      %v663 = vunpack.c.l.b16 %v439
      %v664 = vunpack.c.l.b16 %v440
      %v665 = vpack.c.b16 %v634, %v633
      %v666 = vpack.c.b16 %v636, %v635
      %v667 = vpack.c.b16 %v638, %v637
      %v668 = vpack.c.b16 %v640, %v639
      %v669 = vpack.c.b16 %v642, %v641
      %v670 = vpack.c.b16 %v644, %v643
      %v671 = vpack.c.b16 %v646, %v645
      %v672 = vpack.c.b16 %v648, %v647
      %v673 = vpack.c.b16 %v650, %v649
      %v674 = vpack.c.b16 %v652, %v651
      %v675 = vpack.c.b16 %v654, %v653
      %v676 = vpack.c.b16 %v656, %v655
      %v677 = vpack.c.b16 %v658, %v657
      %v678 = vpack.c.b16 %v660, %v659
      %v679 = vpack.c.b16 %v662, %v661
      %v680 = vpack.c.b16 %v664, %v663
      %697 = vmatprep.subr.bf16.mxu0 0
      %698 = vmatpush1.bf16.msra.mxu0 %v665
      %699 = vmatprep.subr.bf16.mxu0 0
      %700 = vmatpush1.bf16.msra.mxu0 %v666
      %701 = vmatprep.subr.bf16.mxu0 0
      %702 = vmatpush1.bf16.msra.mxu0 %v667
      %703 = vmatprep.subr.bf16.mxu0 0
      %704 = vmatpush1.bf16.msra.mxu0 %v668
      %705 = vmatprep.subr.bf16.mxu0 0
      %706 = vmatpush1.bf16.msra.mxu0 %v669
      %707 = vmatprep.subr.bf16.mxu0 0
      %708 = vmatpush1.bf16.msra.mxu0 %v670
      %709 = vmatprep.subr.bf16.mxu0 0
      %710 = vmatpush1.bf16.msra.mxu0 %v671
      %711 = vmatprep.subr.bf16.mxu0 0
      %712 = vmatpush1.bf16.msra.mxu0 %v672
      %713 = vmatprep.subr.bf16.mxu0 0
      %714 = vmatpush1.bf16.msra.mxu0 %v673
      %715 = vmatprep.subr.bf16.mxu0 0
      %716 = vmatpush1.bf16.msra.mxu0 %v674
      %717 = vmatprep.subr.bf16.mxu0 0
      %718 = vmatpush1.bf16.msra.mxu0 %v675
      %719 = vmatprep.subr.bf16.mxu0 0
      %720 = vmatpush1.bf16.msra.mxu0 %v676
      %721 = vmatprep.subr.bf16.mxu0 0
      %722 = vmatpush1.bf16.msra.mxu0 %v677
      %723 = vmatprep.subr.bf16.mxu0 0
      %724 = vmatpush1.bf16.msra.mxu0 %v678
      %725 = vmatprep.subr.bf16.mxu0 0
      %726 = vmatpush1.bf16.msra.mxu0 %v679
      %727 = vmatprep.subr.bf16.mxu0 0
      %728 = vmatpush1.bf16.msra.mxu0 %v680
      %729 = vmatprep.mubr.bf16.mxu0 %v538
      %730 = vmatmul.mubr.bf16.gmra.mrb[0].mxu0 %v537
      %v731 = vpop.f32.mrb[0].mxu0
      %v732 = vadd.f32 0.0, %v731
      %v733 = vpop.f32.mrb[0].mxu0
      %v734 = vpop.f32.mrb[0].mxu0
      %v735 = vadd.f32 0.0, %v734
      %v736 = vpop.f32.mrb[0].mxu0
      %737 = vmatprep.mubr.bf16.mxu0 %v540
      %738 = vmatmul.mubr.bf16.gmra.mrb[0].mxu0 %v539
      %v739 = vpop.f32.mrb[0].mxu0
      %v740 = vadd.f32 0.0, %v739
      %v741 = vpop.f32.mrb[0].mxu0
      %v742 = vpop.f32.mrb[0].mxu0
      %v743 = vadd.f32 0.0, %v742
      %v744 = vpop.f32.mrb[0].mxu0
      %745 = vmatprep.mubr.bf16.mxu0 %v542
      %746 = vmatmul.mubr.bf16.gmra.mrb[0].mxu0 %v541
      %v747 = vpop.f32.mrb[0].mxu0
      %v748 = vadd.f32 0.0, %v747
      %v749 = vpop.f32.mrb[0].mxu0
      %v750 = vpop.f32.mrb[0].mxu0
      %v751 = vadd.f32 0.0, %v750
      %v752 = vpop.f32.mrb[0].mxu0
      %753 = vmatprep.mubr.bf16.mxu0 %v544
      %754 = vmatmul.mubr.bf16.gmra.mrb[0].mxu0 %v543
      %v755 = vpop.f32.mrb[0].mxu0
      %v756 = vadd.f32 0.0, %v755
      %v757 = vpop.f32.mrb[0].mxu0
      %v758 = vpop.f32.mrb[0].mxu0
      %v759 = vadd.f32 0.0, %v758
      %v760 = vpop.f32.mrb[0].mxu0
      %761 = vmatprep.mubr.bf16.mxu0 %v546
      %762 = vmatmul.mubr.bf16.gmra.mrb[0].mxu0 %v545
      %v763 = vpop.f32.mrb[0].mxu0
      %v764 = vadd.f32 0.0, %v763
      %v765 = vpop.f32.mrb[0].mxu0
      %v766 = vpop.f32.mrb[0].mxu0
      %v767 = vadd.f32 0.0, %v766
      %v768 = vpop.f32.mrb[0].mxu0
      %769 = vmatprep.mubr.bf16.mxu0 %v548
      %770 = vmatmul.mubr.bf16.gmra.mrb[0].mxu0 %v547
      %v771 = vpop.f32.mrb[0].mxu0
      %v772 = vadd.f32 0.0, %v771
      %v773 = vpop.f32.mrb[0].mxu0
      %v774 = vpop.f32.mrb[0].mxu0
      %v775 = vadd.f32 0.0, %v774
      %v776 = vpop.f32.mrb[0].mxu0
      %777 = vmatprep.mubr.bf16.mxu0 %v550
      %778 = vmatmul.mubr.bf16.gmra.mrb[0].mxu0 %v549
      %v779 = vpop.f32.mrb[0].mxu0
      %v780 = vadd.f32 0.0, %v779
      %v781 = vpop.f32.mrb[0].mxu0
      %v782 = vpop.f32.mrb[0].mxu0
      %v783 = vadd.f32 0.0, %v782
      %v784 = vpop.f32.mrb[0].mxu0
      %785 = vmatprep.mubr.bf16.mxu0 %v552
      %786 = vmatmul.mubr.bf16.gmra.mrb[0].mxu0 %v551
      %v787 = vpop.f32.mrb[0].mxu0
      %v788 = vadd.f32 0.0, %v787
      %v789 = vpop.f32.mrb[0].mxu0
      %v790 = vpop.f32.mrb[0].mxu0
      %v791 = vadd.f32 0.0, %v790
      %v792 = vpop.f32.mrb[0].mxu0
      %793 = vmatprep.mubr.bf16.mxu0 %v554
      %794 = vmatmul.mubr.bf16.gmra.mrb[0].mxu0 %v553
      %v795 = vpop.f32.mrb[0].mxu0
      %v796 = vadd.f32 0.0, %v795
      %v797 = vpop.f32.mrb[0].mxu0
      %v798 = vpop.f32.mrb[0].mxu0
      %v799 = vadd.f32 0.0, %v798
      %v800 = vpop.f32.mrb[0].mxu0
      %801 = vmatprep.mubr.bf16.mxu0 %v556
      %802 = vmatmul.mubr.bf16.gmra.mrb[0].mxu0 %v555
      %v803 = vpop.f32.mrb[0].mxu0
      %v804 = vadd.f32 0.0, %v803
      %v805 = vpop.f32.mrb[0].mxu0
      %v806 = vpop.f32.mrb[0].mxu0
      %v807 = vadd.f32 0.0, %v806
      %v808 = vpop.f32.mrb[0].mxu0
      %809 = vmatprep.mubr.bf16.mxu0 %v558
      %810 = vmatmul.mubr.bf16.gmra.mrb[0].mxu0 %v557
      %v811 = vpop.f32.mrb[0].mxu0
      %v812 = vadd.f32 0.0, %v811
      %v813 = vpop.f32.mrb[0].mxu0
      %v814 = vpop.f32.mrb[0].mxu0
      %v815 = vadd.f32 0.0, %v814
      %v816 = vpop.f32.mrb[0].mxu0
      %817 = vmatprep.mubr.bf16.mxu0 %v560
      %818 = vmatmul.mubr.bf16.gmra.mrb[0].mxu0 %v559
      %v819 = vpop.f32.mrb[0].mxu0
      %v820 = vadd.f32 0.0, %v819
      %v821 = vpop.f32.mrb[0].mxu0
      %v822 = vpop.f32.mrb[0].mxu0
      %v823 = vadd.f32 0.0, %v822
      %v824 = vpop.f32.mrb[0].mxu0
      %825 = vmatprep.mubr.bf16.mxu0 %v562
      %826 = vmatmul.mubr.bf16.gmra.mrb[0].mxu0 %v561
      %v827 = vpop.f32.mrb[0].mxu0
      %v828 = vadd.f32 0.0, %v827
      %v829 = vpop.f32.mrb[0].mxu0
      %v830 = vpop.f32.mrb[0].mxu0
      %v831 = vadd.f32 0.0, %v830
      %v832 = vpop.f32.mrb[0].mxu0
      %833 = vmatprep.mubr.bf16.mxu0 %v564
      %834 = vmatmul.mubr.bf16.gmra.mrb[0].mxu0 %v563
      %v835 = vpop.f32.mrb[0].mxu0
      %v836 = vadd.f32 0.0, %v835
      %v837 = vpop.f32.mrb[0].mxu0
      %v838 = vpop.f32.mrb[0].mxu0
      %v839 = vadd.f32 0.0, %v838
      %v840 = vpop.f32.mrb[0].mxu0
      %841 = vmatprep.mubr.bf16.mxu0 %v566
      %842 = vmatmul.mubr.bf16.gmra.mrb[0].mxu0 %v565
      %v843 = vpop.f32.mrb[0].mxu0
      %v844 = vadd.f32 0.0, %v843
      %v845 = vpop.f32.mrb[0].mxu0
      %v846 = vpop.f32.mrb[0].mxu0
      %v847 = vadd.f32 0.0, %v846
      %v848 = vpop.f32.mrb[0].mxu0
      %849 = vmatprep.mubr.bf16.mxu0 %v568
      %850 = vmatmul.mubr.bf16.gmra.mrb[0].mxu0 %v567
      %v851 = vpop.f32.mrb[0].mxu0
      %v852 = vadd.f32 0.0, %v851
      %v853 = vpop.f32.mrb[0].mxu0
      %v854 = vpop.f32.mrb[0].mxu0
      %v855 = vadd.f32 0.0, %v854
      %v856 = vpop.f32.mrb[0].mxu0
      %857 = vdwg.mxu0
      %v858 = vadd.f32 %v345, %v732
      %v859 = vadd.f32 %v346, %v735
      %v860 = vadd.f32 %v347, %v740
      %v861 = vadd.f32 %v348, %v743
      %v862 = vadd.f32 %v349, %v748
      %v863 = vadd.f32 %v350, %v751
      %v864 = vadd.f32 %v351, %v756
      %v865 = vadd.f32 %v352, %v759
      %v866 = vadd.f32 %v353, %v764
      %v867 = vadd.f32 %v354, %v767
      %v868 = vadd.f32 %v355, %v772
      %v869 = vadd.f32 %v356, %v775
      %v870 = vadd.f32 %v357, %v780
      %v871 = vadd.f32 %v358, %v783
      %v872 = vadd.f32 %v359, %v788
      %v873 = vadd.f32 %v360, %v791
      %v874 = vadd.f32 %v361, %v796
      %v875 = vadd.f32 %v362, %v799
      %v876 = vadd.f32 %v363, %v804
      %v877 = vadd.f32 %v364, %v807
      %v878 = vadd.f32 %v365, %v812
      %v879 = vadd.f32 %v366, %v815
      %v880 = vadd.f32 %v367, %v820
      %v881 = vadd.f32 %v368, %v823
      %v882 = vadd.f32 %v369, %v828
      %v883 = vadd.f32 %v370, %v831
      %v884 = vadd.f32 %v371, %v836
      %v885 = vadd.f32 %v372, %v839
      %v886 = vadd.f32 %v373, %v844
      %v887 = vadd.f32 %v374, %v847
      %v888 = vadd.f32 %v375, %v852
      %v889 = vadd.f32 %v376, %v855
      %890 = vst [vmem:[#allocation2] sm:$0xff] %v858
      %891 = vst [vmem:[#allocation2 + $0x8] sm:$0xff] %v859
      %892 = vst [vmem:[#allocation2 + $0x10] sm:$0xff] %v860
      %893 = vst [vmem:[#allocation2 + $0x18] sm:$0xff] %v861
      %894 = vst [vmem:[#allocation2 + $0x20] sm:$0xff] %v862
      %895 = vst [vmem:[#allocation2 + $0x28] sm:$0xff] %v863
      %896 = vst [vmem:[#allocation2 + $0x30] sm:$0xff] %v864
      %897 = vst [vmem:[#allocation2 + $0x38] sm:$0xff] %v865
      %898 = vst [vmem:[#allocation2 + $0x40] sm:$0xff] %v866
      %899 = vst [vmem:[#allocation2 + $0x48] sm:$0xff] %v867
      %900 = vst [vmem:[#allocation2 + $0x50] sm:$0xff] %v868
      %901 = vst [vmem:[#allocation2 + $0x58] sm:$0xff] %v869
      %902 = vst [vmem:[#allocation2 + $0x60] sm:$0xff] %v870
      %903 = vst [vmem:[#allocation2 + $0x68] sm:$0xff] %v871
      %904 = vst [vmem:[#allocation2 + $0x70] sm:$0xff] %v872
      %905 = vst [vmem:[#allocation2 + $0x78] sm:$0xff] %v873
      %906 = vst [vmem:[#allocation2 + $0x80] sm:$0xff] %v874
      %907 = vst [vmem:[#allocation2 + $0x88] sm:$0xff] %v875
      %908 = vst [vmem:[#allocation2 + $0x90] sm:$0xff] %v876
      %909 = vst [vmem:[#allocation2 + $0x98] sm:$0xff] %v877
      %910 = vst [vmem:[#allocation2 + $0xa0] sm:$0xff] %v878
      %911 = vst [vmem:[#allocation2 + $0xa8] sm:$0xff] %v879
      %912 = vst [vmem:[#allocation2 + $0xb0] sm:$0xff] %v880
      %913 = vst [vmem:[#allocation2 + $0xb8] sm:$0xff] %v881
      %914 = vst [vmem:[#allocation2 + $0xc0] sm:$0xff] %v882
      %915 = vst [vmem:[#allocation2 + $0xc8] sm:$0xff] %v883
      %916 = vst [vmem:[#allocation2 + $0xd0] sm:$0xff] %v884
      %917 = vst [vmem:[#allocation2 + $0xd8] sm:$0xff] %v885
      %918 = vst [vmem:[#allocation2 + $0xe0] sm:$0xff] %v886
      %919 = vst [vmem:[#allocation2 + $0xe8] sm:$0xff] %v887
      %920 = vst [vmem:[#allocation2 + $0xf0] sm:$0xff] %v888
      %921 = vst [vmem:[#allocation2 + $0xf8] sm:$0xff] %v889
      // Predicated region
      $region41: #{resnet_forward.15} parent=35 // pred_check
        %p922 = pneg %p309
      $region42: #{resnet_forward.15} parent=35 // pred_check_branch
        %924 = sbr.rel (%p922) target = $region44
      $region43: #{resnet_forward.15} parent=35 // pred_region
        %v925 = vld [vmem:[#allocation2] sm:$0xff]
        %v926 = vld [vmem:[#allocation2 + $0x8] sm:$0xff]
        %v927 = vld [vmem:[#allocation2 + $0x10] sm:$0xff]
        %v928 = vld [vmem:[#allocation2 + $0x18] sm:$0xff]
        %v929 = vld [vmem:[#allocation2 + $0x20] sm:$0xff]
        %v930 = vld [vmem:[#allocation2 + $0x28] sm:$0xff]
        %v931 = vld [vmem:[#allocation2 + $0x30] sm:$0xff]
        %v932 = vld [vmem:[#allocation2 + $0x38] sm:$0xff]
        %v933 = vld [vmem:[#allocation2 + $0x40] sm:$0xff]
        %v934 = vld [vmem:[#allocation2 + $0x48] sm:$0xff]
        %v935 = vld [vmem:[#allocation2 + $0x50] sm:$0xff]
        %v936 = vld [vmem:[#allocation2 + $0x58] sm:$0xff]
        %v937 = vld [vmem:[#allocation2 + $0x60] sm:$0xff]
        %v938 = vld [vmem:[#allocation2 + $0x68] sm:$0xff]
        %v939 = vld [vmem:[#allocation2 + $0x70] sm:$0xff]
        %v940 = vld [vmem:[#allocation2 + $0x78] sm:$0xff]
        %v941 = vld [vmem:[#allocation2 + $0x80] sm:$0xff]
        %v942 = vld [vmem:[#allocation2 + $0x88] sm:$0xff]
        %v943 = vld [vmem:[#allocation2 + $0x90] sm:$0xff]
        %v944 = vld [vmem:[#allocation2 + $0x98] sm:$0xff]
        %v945 = vld [vmem:[#allocation2 + $0xa0] sm:$0xff]
        %v946 = vld [vmem:[#allocation2 + $0xa8] sm:$0xff]
        %v947 = vld [vmem:[#allocation2 + $0xb0] sm:$0xff]
        %v948 = vld [vmem:[#allocation2 + $0xb8] sm:$0xff]
        %v949 = vld [vmem:[#allocation2 + $0xc0] sm:$0xff]
        %v950 = vld [vmem:[#allocation2 + $0xc8] sm:$0xff]
        %v951 = vld [vmem:[#allocation2 + $0xd0] sm:$0xff]
        %v952 = vld [vmem:[#allocation2 + $0xd8] sm:$0xff]
        %v953 = vld [vmem:[#allocation2 + $0xe0] sm:$0xff]
        %v954 = vld [vmem:[#allocation2 + $0xe8] sm:$0xff]
        %v955 = vld [vmem:[#allocation2 + $0xf0] sm:$0xff]
        %v956 = vld [vmem:[#allocation2 + $0xf8] sm:$0xff]
        %v957 = vld [vmem:[%s295] sm:$0x1]
        %v959 = vlaneseq
        %v960 = vshrl.u32 %v959, 7
        %v961 = vsub.s32 0, %v960
        %v962 = vrot.slane %v957, %v961
        %v964 = vmul.f32 %v925, %v962
        %v965 = vmul.f32 %v926, %v962
        %v966 = vmul.f32 %v927, %v962
        %v967 = vmul.f32 %v928, %v962
        %v968 = vmul.f32 %v929, %v962
        %v969 = vmul.f32 %v930, %v962
        %v970 = vmul.f32 %v931, %v962
        %v971 = vmul.f32 %v932, %v962
        %v972 = vmul.f32 %v933, %v962
        %v973 = vmul.f32 %v934, %v962
        %v974 = vmul.f32 %v935, %v962
        %v975 = vmul.f32 %v936, %v962
        %v976 = vmul.f32 %v937, %v962
        %v977 = vmul.f32 %v938, %v962
        %v978 = vmul.f32 %v939, %v962
        %v979 = vmul.f32 %v940, %v962
        %v980 = vmul.f32 %v941, %v962
        %v981 = vmul.f32 %v942, %v962
        %v982 = vmul.f32 %v943, %v962
        %v983 = vmul.f32 %v944, %v962
        %v984 = vmul.f32 %v945, %v962
        %v985 = vmul.f32 %v946, %v962
        %v986 = vmul.f32 %v947, %v962
        %v987 = vmul.f32 %v948, %v962
        %v988 = vmul.f32 %v949, %v962
        %v989 = vmul.f32 %v950, %v962
        %v990 = vmul.f32 %v951, %v962
        %v991 = vmul.f32 %v952, %v962
        %v992 = vmul.f32 %v953, %v962
        %v993 = vmul.f32 %v954, %v962
        %v994 = vmul.f32 %v955, %v962
        %v995 = vmul.f32 %v956, %v962
        %v996 = vld [vmem:[%s298] sm:$0x1]
        %v998 = vlaneseq
        %v999 = vshrl.u32 %v998, 7
        %v1000 = vsub.s32 0, %v999
        %v1001 = vrot.slane %v996, %v1000
        %v1003 = vadd.f32 %v964, %v1001
        %v1004 = vadd.f32 %v965, %v1001
        %v1005 = vadd.f32 %v966, %v1001
        %v1006 = vadd.f32 %v967, %v1001
        %v1007 = vadd.f32 %v968, %v1001
        %v1008 = vadd.f32 %v969, %v1001
        %v1009 = vadd.f32 %v970, %v1001
        %v1010 = vadd.f32 %v971, %v1001
        %v1011 = vadd.f32 %v972, %v1001
        %v1012 = vadd.f32 %v973, %v1001
        %v1013 = vadd.f32 %v974, %v1001
        %v1014 = vadd.f32 %v975, %v1001
        %v1015 = vadd.f32 %v976, %v1001
        %v1016 = vadd.f32 %v977, %v1001
        %v1017 = vadd.f32 %v978, %v1001
        %v1018 = vadd.f32 %v979, %v1001
        %v1019 = vadd.f32 %v980, %v1001
        %v1020 = vadd.f32 %v981, %v1001
        %v1021 = vadd.f32 %v982, %v1001
        %v1022 = vadd.f32 %v983, %v1001
        %v1023 = vadd.f32 %v984, %v1001
        %v1024 = vadd.f32 %v985, %v1001
        %v1025 = vadd.f32 %v986, %v1001
        %v1026 = vadd.f32 %v987, %v1001
        %v1027 = vadd.f32 %v988, %v1001
        %v1028 = vadd.f32 %v989, %v1001
        %v1029 = vadd.f32 %v990, %v1001
        %v1030 = vadd.f32 %v991, %v1001
        %v1031 = vadd.f32 %v992, %v1001
        %v1032 = vadd.f32 %v993, %v1001
        %v1033 = vadd.f32 %v994, %v1001
        %v1034 = vadd.f32 %v995, %v1001
        %v1035 = vmax.f32 %v1003, 0.0
        %v1036 = vmax.f32 %v1004, 0.0
        %v1037 = vmax.f32 %v1005, 0.0
        %v1038 = vmax.f32 %v1006, 0.0
        %v1039 = vmax.f32 %v1007, 0.0
        %v1040 = vmax.f32 %v1008, 0.0
        %v1041 = vmax.f32 %v1009, 0.0
        %v1042 = vmax.f32 %v1010, 0.0
        %v1043 = vmax.f32 %v1011, 0.0
        %v1044 = vmax.f32 %v1012, 0.0
        %v1045 = vmax.f32 %v1013, 0.0
        %v1046 = vmax.f32 %v1014, 0.0
        %v1047 = vmax.f32 %v1015, 0.0
        %v1048 = vmax.f32 %v1016, 0.0
        %v1049 = vmax.f32 %v1017, 0.0
        %v1050 = vmax.f32 %v1018, 0.0
        %v1051 = vmax.f32 %v1019, 0.0
        %v1052 = vmax.f32 %v1020, 0.0
        %v1053 = vmax.f32 %v1021, 0.0
        %v1054 = vmax.f32 %v1022, 0.0
        %v1055 = vmax.f32 %v1023, 0.0
        %v1056 = vmax.f32 %v1024, 0.0
        %v1057 = vmax.f32 %v1025, 0.0
        %v1058 = vmax.f32 %v1026, 0.0
        %v1059 = vmax.f32 %v1027, 0.0
        %v1060 = vmax.f32 %v1028, 0.0
        %v1061 = vmax.f32 %v1029, 0.0
        %v1062 = vmax.f32 %v1030, 0.0
        %v1063 = vmax.f32 %v1031, 0.0
        %v1064 = vmax.f32 %v1032, 0.0
        %v1065 = vmax.f32 %v1033, 0.0
        %v1066 = vmax.f32 %v1034, 0.0
        %v1067 = vpack.c.bf16 %v1036, %v1035
        %v1068 = vpack.c.bf16 %v1038, %v1037
        %v1069 = vpack.c.bf16 %v1040, %v1039
        %v1070 = vpack.c.bf16 %v1042, %v1041
        %v1071 = vpack.c.bf16 %v1044, %v1043
        %v1072 = vpack.c.bf16 %v1046, %v1045
        %v1073 = vpack.c.bf16 %v1048, %v1047
        %v1074 = vpack.c.bf16 %v1050, %v1049
        %v1075 = vpack.c.bf16 %v1052, %v1051
        %v1076 = vpack.c.bf16 %v1054, %v1053
        %v1077 = vpack.c.bf16 %v1056, %v1055
        %v1078 = vpack.c.bf16 %v1058, %v1057
        %v1079 = vpack.c.bf16 %v1060, %v1059
        %v1080 = vpack.c.bf16 %v1062, %v1061
        %v1081 = vpack.c.bf16 %v1064, %v1063
        %v1082 = vpack.c.bf16 %v1066, %v1065
        %v1099 = vunpack.c.l.b16 %v1067
        %v1100 = vunpack.c.h.b16 %v1067
        %v1101 = vunpack.c.l.b16 %v1068
        %v1102 = vunpack.c.h.b16 %v1068
        %v1103 = vunpack.c.l.b16 %v1069
        %v1104 = vunpack.c.h.b16 %v1069
        %v1105 = vunpack.c.l.b16 %v1070
        %v1106 = vunpack.c.h.b16 %v1070
        %v1107 = vunpack.c.l.b16 %v1071
        %v1108 = vunpack.c.h.b16 %v1071
        %v1109 = vunpack.c.l.b16 %v1072
        %v1110 = vunpack.c.h.b16 %v1072
        %v1111 = vunpack.c.l.b16 %v1073
        %v1112 = vunpack.c.h.b16 %v1073
        %v1113 = vunpack.c.l.b16 %v1074
        %v1114 = vunpack.c.h.b16 %v1074
        %v1115 = vunpack.c.l.b16 %v1075
        %v1116 = vunpack.c.h.b16 %v1075
        %v1117 = vunpack.c.l.b16 %v1076
        %v1118 = vunpack.c.h.b16 %v1076
        %v1119 = vunpack.c.l.b16 %v1077
        %v1120 = vunpack.c.h.b16 %v1077
        %v1121 = vunpack.c.l.b16 %v1078
        %v1122 = vunpack.c.h.b16 %v1078
        %v1123 = vunpack.c.l.b16 %v1079
        %v1124 = vunpack.c.h.b16 %v1079
        %v1125 = vunpack.c.l.b16 %v1080
        %v1126 = vunpack.c.h.b16 %v1080
        %v1127 = vunpack.c.l.b16 %v1081
        %v1128 = vunpack.c.h.b16 %v1081
        %v1129 = vunpack.c.l.b16 %v1082
        %v1130 = vunpack.c.h.b16 %v1082
        %v1131 = vpack.c.b16 %v1099, %v1099
        %v1132 = vpack.c.b16 %v1100, %v1100
        %v1133 = vpack.c.b16 %v1101, %v1101
        %v1134 = vpack.c.b16 %v1102, %v1102
        %v1135 = vpack.c.b16 %v1103, %v1103
        %v1136 = vpack.c.b16 %v1104, %v1104
        %v1137 = vpack.c.b16 %v1105, %v1105
        %v1138 = vpack.c.b16 %v1106, %v1106
        %v1139 = vpack.c.b16 %v1107, %v1107
        %v1140 = vpack.c.b16 %v1108, %v1108
        %v1141 = vpack.c.b16 %v1109, %v1109
        %v1142 = vpack.c.b16 %v1110, %v1110
        %v1143 = vpack.c.b16 %v1111, %v1111
        %v1144 = vpack.c.b16 %v1112, %v1112
        %v1145 = vpack.c.b16 %v1113, %v1113
        %v1146 = vpack.c.b16 %v1114, %v1114
        %v1147 = vpack.c.b16 %v1115, %v1115
        %v1148 = vpack.c.b16 %v1116, %v1116
        %v1149 = vpack.c.b16 %v1117, %v1117
        %v1150 = vpack.c.b16 %v1118, %v1118
        %v1151 = vpack.c.b16 %v1119, %v1119
        %v1152 = vpack.c.b16 %v1120, %v1120
        %v1153 = vpack.c.b16 %v1121, %v1121
        %v1154 = vpack.c.b16 %v1122, %v1122
        %v1155 = vpack.c.b16 %v1123, %v1123
        %v1156 = vpack.c.b16 %v1124, %v1124
        %v1157 = vpack.c.b16 %v1125, %v1125
        %v1158 = vpack.c.b16 %v1126, %v1126
        %v1159 = vpack.c.b16 %v1127, %v1127
        %v1160 = vpack.c.b16 %v1128, %v1128
        %v1161 = vpack.c.b16 %v1129, %v1129
        %v1162 = vpack.c.b16 %v1130, %v1130
        %1195 = vst [vmem:[%s306] sm:$0xf] %v1131
        %1196 = vst [vmem:[%s306 + $0x4] sm:$0xf] %v1132
        %1197 = vst [vmem:[%s306 + $0x8] sm:$0xf] %v1133
        %1198 = vst [vmem:[%s306 + $0xc] sm:$0xf] %v1134
        %1199 = vst [vmem:[%s306 + $0x10] sm:$0xf] %v1135
        %1200 = vst [vmem:[%s306 + $0x14] sm:$0xf] %v1136
        %1201 = vst [vmem:[%s306 + $0x18] sm:$0xf] %v1137
        %1202 = vst [vmem:[%s306 + $0x1c] sm:$0xf] %v1138
        %1203 = vst [vmem:[%s306 + $0x20] sm:$0xf] %v1139
        %1204 = vst [vmem:[%s306 + $0x24] sm:$0xf] %v1140
        %1205 = vst [vmem:[%s306 + $0x28] sm:$0xf] %v1141
        %1206 = vst [vmem:[%s306 + $0x2c] sm:$0xf] %v1142
        %1207 = vst [vmem:[%s306 + $0x30] sm:$0xf] %v1143
        %1208 = vst [vmem:[%s306 + $0x34] sm:$0xf] %v1144
        %1209 = vst [vmem:[%s306 + $0x38] sm:$0xf] %v1145
        %1210 = vst [vmem:[%s306 + $0x3c] sm:$0xf] %v1146
        %1211 = vst [vmem:[%s306 + $0x40] sm:$0xf] %v1147
        %1212 = vst [vmem:[%s306 + $0x44] sm:$0xf] %v1148
        %1213 = vst [vmem:[%s306 + $0x48] sm:$0xf] %v1149
        %1214 = vst [vmem:[%s306 + $0x4c] sm:$0xf] %v1150
        %1215 = vst [vmem:[%s306 + $0x50] sm:$0xf] %v1151
        %1216 = vst [vmem:[%s306 + $0x54] sm:$0xf] %v1152
        %1217 = vst [vmem:[%s306 + $0x58] sm:$0xf] %v1153
        %1218 = vst [vmem:[%s306 + $0x5c] sm:$0xf] %v1154
        %1219 = vst [vmem:[%s306 + $0x60] sm:$0xf] %v1155
        %1220 = vst [vmem:[%s306 + $0x64] sm:$0xf] %v1156
        %1221 = vst [vmem:[%s306 + $0x68] sm:$0xf] %v1157
        %1222 = vst [vmem:[%s306 + $0x6c] sm:$0xf] %v1158
        %1223 = vst [vmem:[%s306 + $0x70] sm:$0xf] %v1159
        %1224 = vst [vmem:[%s306 + $0x74] sm:$0xf] %v1160
        %1225 = vst [vmem:[%s306 + $0x78] sm:$0xf] %v1161
        %1226 = vst [vmem:[%s306 + $0x7c] sm:$0xf] %v1162
      $region44: #{resnet_forward.15} parent=35 // pred_fallthru
        _
      %s1227 = smul.u32 32, %s20
      %p1228 = scmp.lt.s32.totalorder %s1227, 63
      %s1229 = scalar_select %p1228, %s1227, 63
      %p1230 = scmp.lt.s32.totalorder %s21, 0
      %s1231 = scalar_select %p1230, %s21, 0
      %s1232 = sadd.s32 %s1231, %s1229
      %s1233 = smul.addr %s1232, 4
      %s1234 = scalar_lea.vmem %s4, %s1233
      // Predicated region
      $region45: #{resnet_forward.15} parent=35 // pred_check
        %p1235 = pneg %p162
      $region46: #{resnet_forward.15} parent=35 // pred_check_branch
        %1237 = sbr.rel (%p1235) target = $region48
      $region47: #{resnet_forward.15} parent=35 // pred_region
        %s1238 = smul.u32 32, %s20
      $region48: #{resnet_forward.15} parent=35 // pred_fallthru
        _
    $region36: #{resnet_forward.15} parent=5 // pred_fallthru
      _
    %p1239 = scmp.le.s32.totalorder 2, %s10
    // Predicated region
    $region49: #{resnet_forward.15} parent=5 // pred_check
      %p1240 = pneg %p1239
    $region50: #{resnet_forward.15} parent=5 // pred_check_branch
      %1242 = sbr.rel (%p1240) target = $region52
    $region51: #{resnet_forward.15} parent=5 // pred_region
      %s1243 = ssub.s32 %s10, 2
      // Predicated region
      $region53: #{resnet_forward.15} parent=51 // pred_check
        %p1244 = pneg %p168
      $region54: #{resnet_forward.15} parent=51 // pred_check_branch
        %1246 = sbr.rel (%p1244) target = $region56
      $region55: #{resnet_forward.15} parent=51 // pred_region
        %s1247 = smul.u32 32, %s23
        %p1248 = scmp.lt.s32.totalorder %s1247, 63
        %s1249 = scalar_select %p1248, %s1247, 63
        %p1250 = scmp.lt.s32.totalorder %s24, 0
        %s1251 = scalar_select %p1250, %s24, 0
        %s1252 = sadd.s32 %s1251, %s1249
        %s1253 = smul.addr %s1252, 4
        %s1254 = scalar_lea.vmem %s4, %s1253
      $region56: #{resnet_forward.15} parent=51 // pred_fallthru
        _
    $region52: #{resnet_forward.15} parent=5 // pred_fallthru
      _
  $region6: #{resnet_forward.15} parent=0 // loop_footer
    %s14 = sadd.s32 1, %s10
  $region7: #{resnet_forward.15} parent=0 // loop_footer_branch
    %9 = sbr.rel target = $region3
  $region8: #{resnet_forward.15} parent=0 // loop_exit
    _

// kernel: resnet_forward.16
$region0: #{resnet_forward.16}
  #allocation0 [shape = 'u32[]', space=smem, size = 0x4, offset = 0x4, fixed_abs, tag = 'smem constant byte address 0x4 - core index']
  #allocation1 [shape = 'u32[144,128]{1,0:T(1,128)}', space=vmem, size = 0x12000, scoped, tag = 'internal scratch']
  %s0 = inlined_call_operand.vmem [shape: bf16[2,8,8,8], index: 0, kind: input, shape index: {}]
  %s1 = inlined_call_operand.vmem [shape: bf16[2,8,8,8], index: 1, kind: input, shape index: {}]
  %s2 = inlined_call_operand.vmem [shape: bf16[2,8,8,8], index: 2, kind: input, shape index: {}]
  %s3 = inlined_call_operand.vmem [shape: bf16[2,8,8,8], index: 3, kind: input, shape index: {}]
  %s4 = inlined_call_operand.vmem [shape: bf16[2,7,7,8], index: 4, kind: output, shape index: {}]
  %s5 = sld [smem:[#allocation0]]
  $region49: #{resnet_forward.16} parent=0
    _
  %s7 = ssub.s32 1, %s5
  %s8 = scalar_select 0, %s7, %s5
  loop: start=0, step=1, limit=4
  $region2: #{resnet_forward.16} parent=0 // loop_pre_header
    _
  $region3: #{resnet_forward.16} parent=0 // loop_header
    %s10 = sphi 0, %s14
    %p11 = scmp.ge.s32.totalorder %s10, 4
    %s20 = sphi 0, %s22
    %s23 = sphi 0, %s20
    %s24 = sphi 0, %s23
    %s40 = sphi 0, %s24
    %s46 = sphi 0, %s48
    %s49 = sphi 0, %s46
    %s50 = sphi 0, %s49
    %s66 = sphi 0, %s50
    %s72 = sphi 0, %s74
    %s75 = sphi 0, %s72
    %s76 = sphi 0, %s75
    %s92 = sphi 0, %s76
    %s98 = sphi 0, %s100
    %s101 = sphi 0, %s98
    %s102 = sphi 0, %s101
    %s118 = sphi 0, %s102
    %s124 = sphi 0, %s126
    %s127 = sphi 0, %s124
    %s128 = sphi 0, %s127
    %s144 = sphi 0, %s128
  $region4: #{resnet_forward.16} parent=0 // loop_header_branch
    %13 = sbr.rel (%p11) target = $region8
  $region5: #{resnet_forward.16} parent=0 // loop_body
    %s15 = ssub.s32 %s10, 1
    %s16 = ssub.s32 %s10, 2
    %s17 = sadd.s32 %s10, 1
    %s18 = ssub.s32 %s10, %s17
    %p19 = scmp.eq.s32.totalorder %s18, 0
    %s21 = sadd.s32 %s20, 1
    %s22 = scalar_select %p19, %s20, %s21
    %p25 = pneg %p19
    %p26 = scmp.eq.s32.totalorder %s10, 1
    %p27 = por %p25, %p26
    %p28 = scmp.ne.s32.totalorder %s20, %s23
    %p29 = scmp.eq.s32.totalorder %s10, 0
    %p30 = por %p28, %p29
    %p31 = scmp.ne.s32.totalorder %s20, %s23
    %p32 = scmp.eq.s32.totalorder %s15, 1
    %p33 = por %p31, %p32
    %p34 = scmp.ne.s32.totalorder %s23, %s24
    %p35 = scmp.eq.s32.totalorder %s15, 0
    %p36 = por %p34, %p35
    %p37 = scmp.ne.s32.totalorder %s23, %s24
    %p38 = scmp.eq.s32.totalorder %s16, 1
    %p39 = por %p37, %p38
    %p41 = scmp.ne.s32.totalorder %s24, %s40
    %p42 = scmp.eq.s32.totalorder %s16, 0
    %p43 = por %p41, %p42
    %s44 = ssub.s32 %s10, %s17
    %p45 = scmp.eq.s32.totalorder %s44, 0
    %s47 = sadd.s32 %s46, 1
    %s48 = scalar_select %p45, %s46, %s47
    %p51 = pneg %p45
    %p52 = scmp.eq.s32.totalorder %s10, 1
    %p53 = por %p51, %p52
    %p54 = scmp.ne.s32.totalorder %s46, %s49
    %p55 = scmp.eq.s32.totalorder %s10, 0
    %p56 = por %p54, %p55
    %p57 = scmp.ne.s32.totalorder %s46, %s49
    %p58 = scmp.eq.s32.totalorder %s15, 1
    %p59 = por %p57, %p58
    %p60 = scmp.ne.s32.totalorder %s49, %s50
    %p61 = scmp.eq.s32.totalorder %s15, 0
    %p62 = por %p60, %p61
    %p63 = scmp.ne.s32.totalorder %s49, %s50
    %p64 = scmp.eq.s32.totalorder %s16, 1
    %p65 = por %p63, %p64
    %p67 = scmp.ne.s32.totalorder %s50, %s66
    %p68 = scmp.eq.s32.totalorder %s16, 0
    %p69 = por %p67, %p68
    %s70 = ssub.s32 %s10, %s17
    %p71 = scmp.eq.s32.totalorder %s70, 0
    %s73 = sadd.s32 %s72, 1
    %s74 = scalar_select %p71, %s72, %s73
    %p77 = pneg %p71
    %p78 = scmp.eq.s32.totalorder %s10, 1
    %p79 = por %p77, %p78
    %p80 = scmp.ne.s32.totalorder %s72, %s75
    %p81 = scmp.eq.s32.totalorder %s10, 0
    %p82 = por %p80, %p81
    %p83 = scmp.ne.s32.totalorder %s72, %s75
    %p84 = scmp.eq.s32.totalorder %s15, 1
    %p85 = por %p83, %p84
    %p86 = scmp.ne.s32.totalorder %s75, %s76
    %p87 = scmp.eq.s32.totalorder %s15, 0
    %p88 = por %p86, %p87
    %p89 = scmp.ne.s32.totalorder %s75, %s76
    %p90 = scmp.eq.s32.totalorder %s16, 1
    %p91 = por %p89, %p90
    %p93 = scmp.ne.s32.totalorder %s76, %s92
    %p94 = scmp.eq.s32.totalorder %s16, 0
    %p95 = por %p93, %p94
    %s96 = ssub.s32 %s10, %s17
    %p97 = scmp.eq.s32.totalorder %s96, 0
    %s99 = sadd.s32 %s98, 1
    %s100 = scalar_select %p97, %s98, %s99
    %p103 = pneg %p97
    %p104 = scmp.eq.s32.totalorder %s10, 1
    %p105 = por %p103, %p104
    %p106 = scmp.ne.s32.totalorder %s98, %s101
    %p107 = scmp.eq.s32.totalorder %s10, 0
    %p108 = por %p106, %p107
    %p109 = scmp.ne.s32.totalorder %s98, %s101
    %p110 = scmp.eq.s32.totalorder %s15, 1
    %p111 = por %p109, %p110
    %p112 = scmp.ne.s32.totalorder %s101, %s102
    %p113 = scmp.eq.s32.totalorder %s15, 0
    %p114 = por %p112, %p113
    %p115 = scmp.ne.s32.totalorder %s101, %s102
    %p116 = scmp.eq.s32.totalorder %s16, 1
    %p117 = por %p115, %p116
    %p119 = scmp.ne.s32.totalorder %s102, %s118
    %p120 = scmp.eq.s32.totalorder %s16, 0
    %p121 = por %p119, %p120
    %s122 = ssub.s32 %s10, %s17
    %p123 = scmp.eq.s32.totalorder %s122, 0
    %s125 = sadd.s32 %s124, 1
    %s126 = scalar_select %p123, %s124, %s125
    %p129 = pneg %p123
    %p130 = scmp.eq.s32.totalorder %s10, 1
    %p131 = por %p129, %p130
    %p132 = scmp.ne.s32.totalorder %s124, %s127
    %p133 = scmp.eq.s32.totalorder %s10, 0
    %p134 = por %p132, %p133
    %p135 = scmp.ne.s32.totalorder %s124, %s127
    %p136 = scmp.eq.s32.totalorder %s15, 1
    %p137 = por %p135, %p136
    %p138 = scmp.ne.s32.totalorder %s127, %s128
    %p139 = scmp.eq.s32.totalorder %s15, 0
    %p140 = por %p138, %p139
    %p141 = scmp.ne.s32.totalorder %s127, %s128
    %p142 = scmp.eq.s32.totalorder %s16, 1
    %p143 = por %p141, %p142
    %p145 = scmp.ne.s32.totalorder %s128, %s144
    %p146 = scmp.eq.s32.totalorder %s16, 0
    %p147 = por %p145, %p146
    %p148 = scmp.le.s32.totalorder 1, %s10
    %p149 = scmp.lt.s32.totalorder %s10, 3
    %p150 = pnand %p148, %p149
    %p151 = pneg %p150
    // Predicated region
    $region9: #{resnet_forward.16} parent=5 // pred_check
      _
    $region10: #{resnet_forward.16} parent=5 // pred_check_branch
      %153 = sbr.rel (%p150) target = $region12
    $region11: #{resnet_forward.16} parent=5 // pred_region
      %s154 = ssub.s32 %s10, 1
    $region12: #{resnet_forward.16} parent=5 // pred_fallthru
      _
    %p155 = scmp.lt.s32.totalorder %s10, 2
    // Predicated region
    $region13: #{resnet_forward.16} parent=5 // pred_check
      %p156 = pneg %p155
    $region14: #{resnet_forward.16} parent=5 // pred_check_branch
      %158 = sbr.rel (%p156) target = $region16
    $region15: #{resnet_forward.16} parent=5 // pred_region
      // Predicated region
      $region17: #{resnet_forward.16} parent=15 // pred_check
        %p159 = pneg %p30
      $region18: #{resnet_forward.16} parent=15 // pred_check_branch
        %161 = sbr.rel (%p159) target = $region20
      $region19: #{resnet_forward.16} parent=15 // pred_region
        %p162 = scmp.lt.s32.totalorder %s10, 1
        %s163 = scalar_select %p162, %s10, 1
        %s164 = smul.addr %s163, 8
        %s165 = smul.addr %s164, 4
        %s166 = scalar_lea.vmem %s0, %s165
      $region20: #{resnet_forward.16} parent=15 // pred_fallthru
        _
      // Predicated region
      $region21: #{resnet_forward.16} parent=15 // pred_check
        %p167 = pneg %p56
      $region22: #{resnet_forward.16} parent=15 // pred_check_branch
        %169 = sbr.rel (%p167) target = $region24
      $region23: #{resnet_forward.16} parent=15 // pred_region
        %p170 = scmp.lt.s32.totalorder %s10, 1
        %s171 = scalar_select %p170, %s10, 1
        %s172 = smul.addr %s171, 8
        %s173 = smul.addr %s172, 4
        %s174 = scalar_lea.vmem %s1, %s173
      $region24: #{resnet_forward.16} parent=15 // pred_fallthru
        _
      // Predicated region
      $region25: #{resnet_forward.16} parent=15 // pred_check
        %p175 = pneg %p82
      $region26: #{resnet_forward.16} parent=15 // pred_check_branch
        %177 = sbr.rel (%p175) target = $region28
      $region27: #{resnet_forward.16} parent=15 // pred_region
        %p178 = scmp.lt.s32.totalorder %s10, 1
        %s179 = scalar_select %p178, %s10, 1
        %s180 = smul.addr %s179, 8
        %s181 = smul.addr %s180, 4
        %s182 = scalar_lea.vmem %s2, %s181
      $region28: #{resnet_forward.16} parent=15 // pred_fallthru
        _
      // Predicated region
      $region29: #{resnet_forward.16} parent=15 // pred_check
        %p183 = pneg %p108
      $region30: #{resnet_forward.16} parent=15 // pred_check_branch
        %185 = sbr.rel (%p183) target = $region32
      $region31: #{resnet_forward.16} parent=15 // pred_region
        %p186 = scmp.lt.s32.totalorder %s10, 1
        %s187 = scalar_select %p186, %s10, 1
        %s188 = smul.addr %s187, 8
        %s189 = smul.addr %s188, 4
        %s190 = scalar_lea.vmem %s3, %s189
      $region32: #{resnet_forward.16} parent=15 // pred_fallthru
        _
    $region16: #{resnet_forward.16} parent=5 // pred_fallthru
      _
    %p191 = scmp.le.s32.totalorder 1, %s10
    %p192 = scmp.lt.s32.totalorder %s10, 3
    %p193 = pnand %p191, %p192
    %p194 = pneg %p193
    // Predicated region
    $region33: #{resnet_forward.16} parent=5 // pred_check
      _
    $region34: #{resnet_forward.16} parent=5 // pred_check_branch
      %196 = sbr.rel (%p193) target = $region36
    $region35: #{resnet_forward.16} parent=5 // pred_region
      %s197 = ssub.s32 %s10, 1
      %p198 = scmp.lt.s32.totalorder %s15, 1
      %s199 = scalar_select %p198, %s15, 1
      %s200 = smul.addr %s199, 8
      %s201 = smul.addr %s200, 4
      %s202 = scalar_lea.vmem %s0, %s201
      %p203 = pneg %p36
      %p204 = pneg %p33
      %p205 = scmp.lt.s32.totalorder %s15, 1
      %s206 = scalar_select %p205, %s15, 1
      %s207 = smul.addr %s206, 8
      %s208 = smul.addr %s207, 4
      %s209 = scalar_lea.vmem %s1, %s208
      %p210 = pneg %p62
      %p211 = pneg %p59
      %p212 = scmp.lt.s32.totalorder %s15, 1
      %s213 = scalar_select %p212, %s15, 1
      %s214 = smul.addr %s213, 8
      %s215 = smul.addr %s214, 4
      %s216 = scalar_lea.vmem %s2, %s215
      %p217 = pneg %p88
      %p218 = pneg %p85
      %p219 = scmp.lt.s32.totalorder %s15, 1
      %s220 = scalar_select %p219, %s15, 1
      %s221 = smul.addr %s220, 8
      %s222 = smul.addr %s221, 4
      %s223 = scalar_lea.vmem %s3, %s222
      %p224 = pneg %p114
      %p225 = pneg %p111
      %p226 = pneg %p140
      %p227 = pneg %p137
      %p228 = scmp.lt.s32.totalorder %s15, 1
      %s229 = scalar_select %p228, %s15, 1
      %s230 = smul.addr %s229, 7
      %s231 = smul.addr %s230, 4
      %s232 = scalar_lea.vmem %s4, %s231
      %p233 = scmp.lt.s32.totalorder %s15, 1
      %s234 = scalar_select %p233, %s15, 1
      %s235 = smul.addr %s234, 8
      %s236 = smul.addr %s235, 4
      %s237 = scalar_lea.vmem %s0, %s236
      %p238 = scmp.lt.s32.totalorder %s15, 1
      %s239 = scalar_select %p238, %s15, 1
      %s240 = smul.addr %s239, 8
      %s241 = smul.addr %s240, 4
      %s242 = scalar_lea.vmem %s1, %s241
      %p243 = scmp.lt.s32.totalorder %s15, 1
      %s244 = scalar_select %p243, %s15, 1
      %s245 = smul.addr %s244, 8
      %s246 = smul.addr %s245, 4
      %s247 = scalar_lea.vmem %s2, %s246
      %p248 = scmp.lt.s32.totalorder %s15, 1
      %s249 = scalar_select %p248, %s15, 1
      %s250 = smul.addr %s249, 8
      %s251 = smul.addr %s250, 4
      %s252 = scalar_lea.vmem %s3, %s251
      %p253 = scmp.lt.s32.totalorder %s15, 1
      %s254 = scalar_select %p253, %s15, 1
      %s255 = smul.addr %s254, 7
      %s256 = smul.addr %s255, 4
      %s257 = scalar_lea.vmem %s4, %s256
      %v258 = vld [vmem:[%s237] sm:$0xf]
      %v259 = vld [vmem:[%s237 + $0x4] sm:$0xf]
      %v260 = vld [vmem:[%s237 + $0x8] sm:$0xf]
      %v261 = vld [vmem:[%s237 + $0xc] sm:$0xf]
      %v262 = vld [vmem:[%s237 + $0x10] sm:$0xf]
      %v263 = vld [vmem:[%s237 + $0x14] sm:$0xf]
      %v264 = vld [vmem:[%s237 + $0x18] sm:$0xf]
      %v265 = vld [vmem:[%s237 + $0x1c] sm:$0xf]
      %v266 = vunpack.c.l.bf16 %v258
      %v267 = vunpack.c.l.bf16 %v259
      %v268 = vunpack.c.l.bf16 %v260
      %v269 = vunpack.c.l.bf16 %v261
      %v270 = vunpack.c.l.bf16 %v262
      %v271 = vunpack.c.l.bf16 %v263
      %v272 = vunpack.c.l.bf16 %v264
      %v273 = vunpack.c.l.bf16 %v265
      %v274 = vld [vmem:[%s242] sm:$0xf]
      %v275 = vld [vmem:[%s242 + $0x4] sm:$0xf]
      %v276 = vld [vmem:[%s242 + $0x8] sm:$0xf]
      %v277 = vld [vmem:[%s242 + $0xc] sm:$0xf]
      %v278 = vld [vmem:[%s242 + $0x10] sm:$0xf]
      %v279 = vld [vmem:[%s242 + $0x14] sm:$0xf]
      %v280 = vld [vmem:[%s242 + $0x18] sm:$0xf]
      %v281 = vld [vmem:[%s242 + $0x1c] sm:$0xf]
      %v282 = vunpack.c.l.bf16 %v274
      %v283 = vunpack.c.l.bf16 %v275
      %v284 = vunpack.c.l.bf16 %v276
      %v285 = vunpack.c.l.bf16 %v277
      %v286 = vunpack.c.l.bf16 %v278
      %v287 = vunpack.c.l.bf16 %v279
      %v288 = vunpack.c.l.bf16 %v280
      %v289 = vunpack.c.l.bf16 %v281
      %v290 = vld [vmem:[%s247] sm:$0xf]
      %v291 = vld [vmem:[%s247 + $0x4] sm:$0xf]
      %v292 = vld [vmem:[%s247 + $0x8] sm:$0xf]
      %v293 = vld [vmem:[%s247 + $0xc] sm:$0xf]
      %v294 = vld [vmem:[%s247 + $0x10] sm:$0xf]
      %v295 = vld [vmem:[%s247 + $0x14] sm:$0xf]
      %v296 = vld [vmem:[%s247 + $0x18] sm:$0xf]
      %v297 = vunpack.c.l.bf16 %v290
      %v298 = vunpack.c.l.bf16 %v291
      %v299 = vunpack.c.l.bf16 %v292
      %v300 = vunpack.c.l.bf16 %v293
      %v301 = vunpack.c.l.bf16 %v294
      %v302 = vunpack.c.l.bf16 %v295
      %v303 = vunpack.c.l.bf16 %v296
      %v304 = vld [vmem:[%s252] sm:$0xf]
      %v305 = vld [vmem:[%s252 + $0x4] sm:$0xf]
      %v306 = vld [vmem:[%s252 + $0x8] sm:$0xf]
      %v307 = vld [vmem:[%s252 + $0xc] sm:$0xf]
      %v308 = vld [vmem:[%s252 + $0x10] sm:$0xf]
      %v309 = vld [vmem:[%s252 + $0x14] sm:$0xf]
      %v310 = vld [vmem:[%s252 + $0x18] sm:$0xf]
      %v311 = vunpack.c.l.bf16 %v304
      %v312 = vunpack.c.l.bf16 %v305
      %v313 = vunpack.c.l.bf16 %v306
      %v314 = vunpack.c.l.bf16 %v307
      %v315 = vunpack.c.l.bf16 %v308
      %v316 = vunpack.c.l.bf16 %v309
      %v317 = vunpack.c.l.bf16 %v310
      %v318 = vmax.f32 %v311, %v266
      %v319 = vmax.f32 %v312, %v267
      %v320 = vmax.f32 %v313, %v268
      %v321 = vmax.f32 %v314, %v269
      %v322 = vmax.f32 %v315, %v270
      %v323 = vmax.f32 %v316, %v271
      %v324 = vmax.f32 %v317, %v272
      %v332 = vrot.slane %v266, 1
      %v333 = vrot.slane %v267, 1
      %v334 = vrot.slane %v268, 1
      %v335 = vrot.slane %v269, 1
      %v336 = vrot.slane %v270, 1
      %v337 = vrot.slane %v271, 1
      %v338 = vrot.slane %v272, 1
      %v346 = vmax.f32 %v318, %v332
      %v347 = vmax.f32 %v319, %v333
      %v348 = vmax.f32 %v320, %v334
      %v349 = vmax.f32 %v321, %v335
      %v350 = vmax.f32 %v322, %v336
      %v351 = vmax.f32 %v323, %v337
      %v352 = vmax.f32 %v324, %v338
      %v353 = vmax.f32 %v346, %v282
      %v354 = vmax.f32 %v347, %v283
      %v355 = vmax.f32 %v348, %v284
      %v356 = vmax.f32 %v349, %v285
      %v357 = vmax.f32 %v350, %v286
      %v358 = vmax.f32 %v351, %v287
      %v359 = vmax.f32 %v352, %v288
      %v360 = vmax.f32 %v353, %v267
      %v361 = vmax.f32 %v354, %v268
      %v362 = vmax.f32 %v355, %v269
      %v363 = vmax.f32 %v356, %v270
      %v364 = vmax.f32 %v357, %v271
      %v365 = vmax.f32 %v358, %v272
      %v366 = vmax.f32 %v359, %v273
      %v368 = vrot.slane %v273, 1
      %v370 = vmax.f32 %v360, %v333
      %v371 = vmax.f32 %v361, %v334
      %v372 = vmax.f32 %v362, %v335
      %v373 = vmax.f32 %v363, %v336
      %v374 = vmax.f32 %v364, %v337
      %v375 = vmax.f32 %v365, %v338
      %v376 = vmax.f32 %v366, %v368
      %v377 = vmax.f32 %v370, %v283
      %v378 = vmax.f32 %v371, %v284
      %v379 = vmax.f32 %v372, %v285
      %v380 = vmax.f32 %v373, %v286
      %v381 = vmax.f32 %v374, %v287
      %v382 = vmax.f32 %v375, %v288
      %v383 = vmax.f32 %v376, %v289
      %v384 = vmax.f32 %v377, %v297
      %v385 = vmax.f32 %v378, %v298
      %v386 = vmax.f32 %v379, %v299
      %v387 = vmax.f32 %v380, %v300
      %v388 = vmax.f32 %v381, %v301
      %v389 = vmax.f32 %v382, %v302
      %v390 = vmax.f32 %v383, %v303
      %v398 = vrot.slane %v297, 1
      %v399 = vrot.slane %v298, 1
      %v400 = vrot.slane %v299, 1
      %v401 = vrot.slane %v300, 1
      %v402 = vrot.slane %v301, 1
      %v403 = vrot.slane %v302, 1
      %v404 = vrot.slane %v303, 1
      %v412 = vmax.f32 %v384, %v398
      %v413 = vmax.f32 %v385, %v399
      %v414 = vmax.f32 %v386, %v400
      %v415 = vmax.f32 %v387, %v401
      %v416 = vmax.f32 %v388, %v402
      %v417 = vmax.f32 %v389, %v403
      %v418 = vmax.f32 %v390, %v404
      %v419 = vpack.c.bf16 %v412, %v412
      %v420 = vpack.c.bf16 %v413, %v413
      %v421 = vpack.c.bf16 %v414, %v414
      %v422 = vpack.c.bf16 %v415, %v415
      %v423 = vpack.c.bf16 %v416, %v416
      %v424 = vpack.c.bf16 %v417, %v417
      %v425 = vpack.c.bf16 %v418, %v418
      %vm426 = vcmask 60416
      %vm427 = vsmask.f32 3328
      %vm428 = vmand %vm426, %vm427
      %v429 = vld [vmem:[%s257] sm:$0xf]
      %v430 = vsel %vm428, %v419, %v429
      %431 = vst [vmem:[%s257] sm:$0xf] %v430
      %v432 = vld [vmem:[%s257 + $0x4] sm:$0xf]
      %v433 = vsel %vm428, %v420, %v432
      %434 = vst [vmem:[%s257 + $0x4] sm:$0xf] %v433
      %v435 = vld [vmem:[%s257 + $0x8] sm:$0xf]
      %v436 = vsel %vm428, %v421, %v435
      %437 = vst [vmem:[%s257 + $0x8] sm:$0xf] %v436
      %v438 = vld [vmem:[%s257 + $0xc] sm:$0xf]
      %v439 = vsel %vm428, %v422, %v438
      %440 = vst [vmem:[%s257 + $0xc] sm:$0xf] %v439
      %v441 = vld [vmem:[%s257 + $0x10] sm:$0xf]
      %v442 = vsel %vm428, %v423, %v441
      %443 = vst [vmem:[%s257 + $0x10] sm:$0xf] %v442
      %v444 = vld [vmem:[%s257 + $0x14] sm:$0xf]
      %v445 = vsel %vm428, %v424, %v444
      %446 = vst [vmem:[%s257 + $0x14] sm:$0xf] %v445
      %v447 = vld [vmem:[%s257 + $0x18] sm:$0xf]
      %v448 = vsel %vm428, %v425, %v447
      %449 = vst [vmem:[%s257 + $0x18] sm:$0xf] %v448
      %p450 = scmp.lt.s32.totalorder %s15, 1
      %s451 = scalar_select %p450, %s15, 1
      %s452 = smul.addr %s451, 7
      %s453 = smul.addr %s452, 4
      %s454 = scalar_lea.vmem %s4, %s453
      // Predicated region
      $region37: #{resnet_forward.16} parent=35 // pred_check
        %p455 = pneg %p137
      $region38: #{resnet_forward.16} parent=35 // pred_check_branch
        %457 = sbr.rel (%p455) target = $region40
      $region39: #{resnet_forward.16} parent=35 // pred_region
        _
      $region40: #{resnet_forward.16} parent=35 // pred_fallthru
        _
    $region36: #{resnet_forward.16} parent=5 // pred_fallthru
      _
    %p458 = scmp.le.s32.totalorder 2, %s10
    // Predicated region
    $region41: #{resnet_forward.16} parent=5 // pred_check
      %p459 = pneg %p458
    $region42: #{resnet_forward.16} parent=5 // pred_check_branch
      %461 = sbr.rel (%p459) target = $region44
    $region43: #{resnet_forward.16} parent=5 // pred_region
      %s462 = ssub.s32 %s10, 2
      // Predicated region
      $region45: #{resnet_forward.16} parent=43 // pred_check
        %p463 = pneg %p143
      $region46: #{resnet_forward.16} parent=43 // pred_check_branch
        %465 = sbr.rel (%p463) target = $region48
      $region47: #{resnet_forward.16} parent=43 // pred_region
        %p466 = scmp.lt.s32.totalorder %s16, 1
        %s467 = scalar_select %p466, %s16, 1
        %s468 = smul.addr %s467, 7
        %s469 = smul.addr %s468, 4
        %s470 = scalar_lea.vmem %s4, %s469
      $region48: #{resnet_forward.16} parent=43 // pred_fallthru
        _
    $region44: #{resnet_forward.16} parent=5 // pred_fallthru
      _
  $region6: #{resnet_forward.16} parent=0 // loop_footer
    %s14 = sadd.s32 1, %s10
  $region7: #{resnet_forward.16} parent=0 // loop_footer_branch
    %9 = sbr.rel target = $region3
  $region8: #{resnet_forward.16} parent=0 // loop_exit
    _

// kernel: resnet_forward.17
$region0: #{resnet_forward.17}
  #allocation0 [shape = 'u32[]', space=smem, size = 0x4, offset = 0x4, fixed_abs, tag = 'smem constant byte address 0x4 - core index']
  #allocation1 [shape = 'u32[144,128]{1,0:T(1,128)}', space=vmem, size = 0x12000, scoped, tag = 'internal scratch']
  #allocation2 [shape = 'f32[104,128]{1,0:T(8,128)}', space=vmem, size = 0xd000, scoped, tag = 'scratch operand']
  %s0 = inlined_call_operand.vmem [shape: bf16[104,128], index: 0, kind: input, shape index: {}]
  %s1 = inlined_call_operand.vmem [shape: bf16[128,128], index: 1, kind: input, shape index: {}]
  %s2 = inlined_call_operand.vmem [shape: f32[1,128], index: 2, kind: input, shape index: {}]
  %s3 = inlined_call_operand.vmem [shape: f32[1,128], index: 3, kind: input, shape index: {}]
  %s4 = inlined_call_operand.vmem [shape: bf16[104,128], index: 4, kind: output, shape index: {}]
  %s5 = sld [smem:[#allocation0]]
  $region34: #{resnet_forward.17} parent=0
    _
  %s7 = ssub.s32 1, %s5
  %s8 = scalar_select 0, %s7, %s5
  // Predicated region
  $region2: #{resnet_forward.17} parent=0 // pred_check
    _
  $region3: #{resnet_forward.17} parent=0 // pred_check_branch
    %10 = sbr.rel (0) target = $region5
  $region4: #{resnet_forward.17} parent=0 // pred_region
    _
  $region5: #{resnet_forward.17} parent=0 // pred_fallthru
    _
  // Predicated region
  $region6: #{resnet_forward.17} parent=0 // pred_check
    _
  $region7: #{resnet_forward.17} parent=0 // pred_check_branch
    %12 = sbr.rel (0) target = $region9
  $region8: #{resnet_forward.17} parent=0 // pred_region
    _
  $region9: #{resnet_forward.17} parent=0 // pred_fallthru
    _
  // Predicated region
  $region10: #{resnet_forward.17} parent=0 // pred_check
    _
  $region11: #{resnet_forward.17} parent=0 // pred_check_branch
    %14 = sbr.rel (0) target = $region13
  $region12: #{resnet_forward.17} parent=0 // pred_region
    _
  $region13: #{resnet_forward.17} parent=0 // pred_fallthru
    _
  // Predicated region
  $region14: #{resnet_forward.17} parent=0 // pred_check
    _
  $region15: #{resnet_forward.17} parent=0 // pred_check_branch
    %16 = sbr.rel (0) target = $region17
  $region16: #{resnet_forward.17} parent=0 // pred_region
    _
  $region17: #{resnet_forward.17} parent=0 // pred_fallthru
    _
  %p18 = scmp.eq.s32.totalorder 0, 0
  // Predicated region
  $region18: #{resnet_forward.17} parent=0 // pred_check
    %p19 = pneg %p18
  $region19: #{resnet_forward.17} parent=0 // pred_check_branch
    %21 = sbr.rel (%p19) target = $region21
  $region20: #{resnet_forward.17} parent=0 // pred_region
    %22 = vst [vmem:[#allocation2] sm:$0xff] 0.0
    %23 = vst [vmem:[#allocation2 + $0x8] sm:$0xff] 0.0
    %24 = vst [vmem:[#allocation2 + $0x10] sm:$0xff] 0.0
    %25 = vst [vmem:[#allocation2 + $0x18] sm:$0xff] 0.0
    %26 = vst [vmem:[#allocation2 + $0x20] sm:$0xff] 0.0
    %27 = vst [vmem:[#allocation2 + $0x28] sm:$0xff] 0.0
    %28 = vst [vmem:[#allocation2 + $0x30] sm:$0xff] 0.0
    %29 = vst [vmem:[#allocation2 + $0x38] sm:$0xff] 0.0
    %30 = vst [vmem:[#allocation2 + $0x40] sm:$0xff] 0.0
    %31 = vst [vmem:[#allocation2 + $0x48] sm:$0xff] 0.0
    %32 = vst [vmem:[#allocation2 + $0x50] sm:$0xff] 0.0
    %33 = vst [vmem:[#allocation2 + $0x58] sm:$0xff] 0.0
    %34 = vst [vmem:[#allocation2 + $0x60] sm:$0xff] 0.0
  $region21: #{resnet_forward.17} parent=0 // pred_fallthru
    _
  %v35 = vld [vmem:[#allocation2] sm:$0xff]
  %v36 = vld [vmem:[#allocation2 + $0x8] sm:$0xff]
  %v37 = vld [vmem:[#allocation2 + $0x10] sm:$0xff]
  %v38 = vld [vmem:[#allocation2 + $0x18] sm:$0xff]
  %v39 = vld [vmem:[#allocation2 + $0x20] sm:$0xff]
  %v40 = vld [vmem:[#allocation2 + $0x28] sm:$0xff]
  %v41 = vld [vmem:[#allocation2 + $0x30] sm:$0xff]
  %v42 = vld [vmem:[#allocation2 + $0x38] sm:$0xff]
  %v43 = vld [vmem:[#allocation2 + $0x40] sm:$0xff]
  %v44 = vld [vmem:[#allocation2 + $0x48] sm:$0xff]
  %v45 = vld [vmem:[#allocation2 + $0x50] sm:$0xff]
  %v46 = vld [vmem:[#allocation2 + $0x58] sm:$0xff]
  %v47 = vld [vmem:[#allocation2 + $0x60] sm:$0xff]
  %v48 = vld [vmem:[%s0] sm:$0xf]
  %v49 = vld [vmem:[%s0 + $0x4] sm:$0xf]
  %v50 = vld [vmem:[%s0 + $0x8] sm:$0xf]
  %v51 = vld [vmem:[%s0 + $0xc] sm:$0xf]
  %v52 = vld [vmem:[%s0 + $0x10] sm:$0xf]
  %v53 = vld [vmem:[%s0 + $0x14] sm:$0xf]
  %v54 = vld [vmem:[%s0 + $0x18] sm:$0xf]
  %v55 = vld [vmem:[%s0 + $0x1c] sm:$0xf]
  %v56 = vld [vmem:[%s0 + $0x20] sm:$0xf]
  %v57 = vld [vmem:[%s0 + $0x24] sm:$0xf]
  %v58 = vld [vmem:[%s0 + $0x28] sm:$0xf]
  %v59 = vld [vmem:[%s0 + $0x2c] sm:$0xf]
  %v60 = vld [vmem:[%s0 + $0x30] sm:$0xf]
  %v61 = vld [vmem:[%s1] sm:$0xf]
  %v62 = vld [vmem:[%s1 + $0x4] sm:$0xf]
  %v63 = vld [vmem:[%s1 + $0x8] sm:$0xf]
  %v64 = vld [vmem:[%s1 + $0xc] sm:$0xf]
  %v65 = vld [vmem:[%s1 + $0x10] sm:$0xf]
  %v66 = vld [vmem:[%s1 + $0x14] sm:$0xf]
  %v67 = vld [vmem:[%s1 + $0x18] sm:$0xf]
  %v68 = vld [vmem:[%s1 + $0x1c] sm:$0xf]
  %v69 = vld [vmem:[%s1 + $0x20] sm:$0xf]
  %v70 = vld [vmem:[%s1 + $0x24] sm:$0xf]
  %v71 = vld [vmem:[%s1 + $0x28] sm:$0xf]
  %v72 = vld [vmem:[%s1 + $0x2c] sm:$0xf]
  %v73 = vld [vmem:[%s1 + $0x30] sm:$0xf]
  %v74 = vld [vmem:[%s1 + $0x34] sm:$0xf]
  %v75 = vld [vmem:[%s1 + $0x38] sm:$0xf]
  %v76 = vld [vmem:[%s1 + $0x3c] sm:$0xf]
  %v90 = vunpack.c.l.b16 %v48
  %v91 = vunpack.c.l.b16 %v49
  %v92 = vunpack.c.l.b16 %v50
  %v93 = vunpack.c.l.b16 %v51
  %v94 = vunpack.c.l.b16 %v52
  %v95 = vunpack.c.l.b16 %v53
  %v96 = vunpack.c.l.b16 %v54
  %v97 = vunpack.c.l.b16 %v55
  %v98 = vunpack.c.l.b16 %v56
  %v99 = vunpack.c.l.b16 %v57
  %v100 = vunpack.c.l.b16 %v58
  %v101 = vunpack.c.l.b16 %v59
  %v102 = vunpack.c.l.b16 %v60
  %v103 = vpack.c.b16 %v91, %v90
  %v104 = vpack.c.b16 %v93, %v92
  %v105 = vpack.c.b16 %v95, %v94
  %v106 = vpack.c.b16 %v97, %v96
  %v107 = vpack.c.b16 %v99, %v98
  %v108 = vpack.c.b16 %v101, %v100
  %v109 = vpack.c.b16 %v102, %v102
  %v133 = vunpack.c.l.b16 %v61
  %v134 = vunpack.c.l.b16 %v62
  %v135 = vunpack.c.l.b16 %v63
  %v136 = vunpack.c.l.b16 %v64
  %v137 = vunpack.c.l.b16 %v65
  %v138 = vunpack.c.l.b16 %v66
  %v139 = vunpack.c.l.b16 %v67
  %v140 = vunpack.c.l.b16 %v68
  %v141 = vunpack.c.l.b16 %v69
  %v142 = vunpack.c.l.b16 %v70
  %v143 = vunpack.c.l.b16 %v71
  %v144 = vunpack.c.l.b16 %v72
  %v145 = vunpack.c.l.b16 %v73
  %v146 = vunpack.c.l.b16 %v74
  %v147 = vunpack.c.l.b16 %v75
  %v148 = vunpack.c.l.b16 %v76
  %v149 = vpack.c.b16 %v134, %v133
  %v150 = vpack.c.b16 %v136, %v135
  %v151 = vpack.c.b16 %v138, %v137
  %v152 = vpack.c.b16 %v140, %v139
  %v153 = vpack.c.b16 %v142, %v141
  %v154 = vpack.c.b16 %v144, %v143
  %v155 = vpack.c.b16 %v146, %v145
  %v156 = vpack.c.b16 %v148, %v147
  %165 = vmatprep.subr.bf16.mxu0 0
  %166 = vmatpush1.bf16.msra.mxu0 %v149
  %167 = vmatprep.subr.bf16.mxu0 0
  %168 = vmatpush1.bf16.msra.mxu0 %v150
  %169 = vmatprep.subr.bf16.mxu0 0
  %170 = vmatpush1.bf16.msra.mxu0 %v151
  %171 = vmatprep.subr.bf16.mxu0 0
  %172 = vmatpush1.bf16.msra.mxu0 %v152
  %173 = vmatprep.subr.bf16.mxu0 0
  %174 = vmatpush1.bf16.msra.mxu0 %v153
  %175 = vmatprep.subr.bf16.mxu0 0
  %176 = vmatpush1.bf16.msra.mxu0 %v154
  %177 = vmatprep.subr.bf16.mxu0 0
  %178 = vmatpush1.bf16.msra.mxu0 %v155
  %179 = vmatprep.subr.bf16.mxu0 0
  %180 = vmatpush1.bf16.msra.mxu0 %v156
  %181 = vmatprep.subr.bf16.mxu0 0
  %182 = vmatpush1.bf16.msra.mxu0 0
  %183 = vmatprep.subr.bf16.mxu0 0
  %184 = vmatpush1.bf16.msra.mxu0 0
  %185 = vmatprep.subr.bf16.mxu0 0
  %186 = vmatpush1.bf16.msra.mxu0 0
  %187 = vmatprep.subr.bf16.mxu0 0
  %188 = vmatpush1.bf16.msra.mxu0 0
  %189 = vmatprep.subr.bf16.mxu0 0
  %190 = vmatpush1.bf16.msra.mxu0 0
  %191 = vmatprep.subr.bf16.mxu0 0
  %192 = vmatpush1.bf16.msra.mxu0 0
  %193 = vmatprep.subr.bf16.mxu0 0
  %194 = vmatpush1.bf16.msra.mxu0 0
  %195 = vmatprep.subr.bf16.mxu0 0
  %196 = vmatpush1.bf16.msra.mxu0 0
  %197 = vmatprep.mubr.bf16.mxu0 0
  %198 = vmatmul.mubr.bf16.gmra.mrb[0].mxu0 %v103
  %v199 = vpop.f32.mrb[0].mxu0
  %v200 = vadd.f32 0.0, %v199
  %v201 = vpop.f32.mrb[0].mxu0
  %v202 = vpop.f32.mrb[0].mxu0
  %v203 = vadd.f32 0.0, %v202
  %v204 = vpop.f32.mrb[0].mxu0
  %205 = vmatprep.mubr.bf16.mxu0 0
  %206 = vmatmul.mubr.bf16.gmra.mrb[0].mxu0 %v104
  %v207 = vpop.f32.mrb[0].mxu0
  %v208 = vadd.f32 0.0, %v207
  %v209 = vpop.f32.mrb[0].mxu0
  %v210 = vpop.f32.mrb[0].mxu0
  %v211 = vadd.f32 0.0, %v210
  %v212 = vpop.f32.mrb[0].mxu0
  %213 = vmatprep.mubr.bf16.mxu0 0
  %214 = vmatmul.mubr.bf16.gmra.mrb[0].mxu0 %v105
  %v215 = vpop.f32.mrb[0].mxu0
  %v216 = vadd.f32 0.0, %v215
  %v217 = vpop.f32.mrb[0].mxu0
  %v218 = vpop.f32.mrb[0].mxu0
  %v219 = vadd.f32 0.0, %v218
  %v220 = vpop.f32.mrb[0].mxu0
  %221 = vmatprep.mubr.bf16.mxu0 0
  %222 = vmatmul.mubr.bf16.gmra.mrb[0].mxu0 %v106
  %v223 = vpop.f32.mrb[0].mxu0
  %v224 = vadd.f32 0.0, %v223
  %v225 = vpop.f32.mrb[0].mxu0
  %v226 = vpop.f32.mrb[0].mxu0
  %v227 = vadd.f32 0.0, %v226
  %v228 = vpop.f32.mrb[0].mxu0
  %229 = vmatprep.mubr.bf16.mxu0 0
  %230 = vmatmul.mubr.bf16.gmra.mrb[0].mxu0 %v107
  %v231 = vpop.f32.mrb[0].mxu0
  %v232 = vadd.f32 0.0, %v231
  %v233 = vpop.f32.mrb[0].mxu0
  %v234 = vpop.f32.mrb[0].mxu0
  %v235 = vadd.f32 0.0, %v234
  %v236 = vpop.f32.mrb[0].mxu0
  %237 = vmatprep.mubr.bf16.mxu0 0
  %238 = vmatmul.mubr.bf16.gmra.mrb[0].mxu0 %v108
  %v239 = vpop.f32.mrb[0].mxu0
  %v240 = vadd.f32 0.0, %v239
  %v241 = vpop.f32.mrb[0].mxu0
  %v242 = vpop.f32.mrb[0].mxu0
  %v243 = vadd.f32 0.0, %v242
  %v244 = vpop.f32.mrb[0].mxu0
  %245 = vmatprep.mubr.bf16.mxu0 0
  %246 = vmatmul.mubr.bf16.gmra.mrb[0].mxu0 %v109
  %v247 = vpop.f32.mrb[0].mxu0
  %v248 = vadd.f32 0.0, %v247
  %v249 = vpop.f32.mrb[0].mxu0
  %v250 = vpop.f32.mrb[0].mxu0
  %v251 = vpop.f32.mrb[0].mxu0
  %252 = vdwg.mxu0
  %v253 = vadd.f32 %v35, %v200
  %v254 = vadd.f32 %v36, %v203
  %v255 = vadd.f32 %v37, %v208
  %v256 = vadd.f32 %v38, %v211
  %v257 = vadd.f32 %v39, %v216
  %v258 = vadd.f32 %v40, %v219
  %v259 = vadd.f32 %v41, %v224
  %v260 = vadd.f32 %v42, %v227
  %v261 = vadd.f32 %v43, %v232
  %v262 = vadd.f32 %v44, %v235
  %v263 = vadd.f32 %v45, %v240
  %v264 = vadd.f32 %v46, %v243
  %v265 = vadd.f32 %v47, %v248
  %266 = vst [vmem:[#allocation2] sm:$0xff] %v253
  %267 = vst [vmem:[#allocation2 + $0x8] sm:$0xff] %v254
  %268 = vst [vmem:[#allocation2 + $0x10] sm:$0xff] %v255
  %269 = vst [vmem:[#allocation2 + $0x18] sm:$0xff] %v256
  %270 = vst [vmem:[#allocation2 + $0x20] sm:$0xff] %v257
  %271 = vst [vmem:[#allocation2 + $0x28] sm:$0xff] %v258
  %272 = vst [vmem:[#allocation2 + $0x30] sm:$0xff] %v259
  %273 = vst [vmem:[#allocation2 + $0x38] sm:$0xff] %v260
  %274 = vst [vmem:[#allocation2 + $0x40] sm:$0xff] %v261
  %275 = vst [vmem:[#allocation2 + $0x48] sm:$0xff] %v262
  %276 = vst [vmem:[#allocation2 + $0x50] sm:$0xff] %v263
  %277 = vst [vmem:[#allocation2 + $0x58] sm:$0xff] %v264
  %278 = vst [vmem:[#allocation2 + $0x60] sm:$0xff] %v265
  // Predicated region
  $region22: #{resnet_forward.17} parent=0 // pred_check
    %p279 = pneg %p18
  $region23: #{resnet_forward.17} parent=0 // pred_check_branch
    %281 = sbr.rel (%p279) target = $region25
  $region24: #{resnet_forward.17} parent=0 // pred_region
    %v282 = vld [vmem:[#allocation2] sm:$0xff]
    %v283 = vld [vmem:[#allocation2 + $0x8] sm:$0xff]
    %v284 = vld [vmem:[#allocation2 + $0x10] sm:$0xff]
    %v285 = vld [vmem:[#allocation2 + $0x18] sm:$0xff]
    %v286 = vld [vmem:[#allocation2 + $0x20] sm:$0xff]
    %v287 = vld [vmem:[#allocation2 + $0x28] sm:$0xff]
    %v288 = vld [vmem:[#allocation2 + $0x30] sm:$0xff]
    %v289 = vld [vmem:[#allocation2 + $0x38] sm:$0xff]
    %v290 = vld [vmem:[#allocation2 + $0x40] sm:$0xff]
    %v291 = vld [vmem:[#allocation2 + $0x48] sm:$0xff]
    %v292 = vld [vmem:[#allocation2 + $0x50] sm:$0xff]
    %v293 = vld [vmem:[#allocation2 + $0x58] sm:$0xff]
    %v294 = vld [vmem:[#allocation2 + $0x60] sm:$0xff]
    %v295 = vld [vmem:[%s2] sm:$0x1]
    %v297 = vlaneseq
    %v298 = vshrl.u32 %v297, 7
    %v299 = vsub.s32 0, %v298
    %v300 = vrot.slane %v295, %v299
    %v302 = vmul.f32 %v282, %v300
    %v303 = vmul.f32 %v283, %v300
    %v304 = vmul.f32 %v284, %v300
    %v305 = vmul.f32 %v285, %v300
    %v306 = vmul.f32 %v286, %v300
    %v307 = vmul.f32 %v287, %v300
    %v308 = vmul.f32 %v288, %v300
    %v309 = vmul.f32 %v289, %v300
    %v310 = vmul.f32 %v290, %v300
    %v311 = vmul.f32 %v291, %v300
    %v312 = vmul.f32 %v292, %v300
    %v313 = vmul.f32 %v293, %v300
    %v314 = vmul.f32 %v294, %v300
    %v315 = vld [vmem:[%s3] sm:$0x1]
    %v317 = vlaneseq
    %v318 = vshrl.u32 %v317, 7
    %v319 = vsub.s32 0, %v318
    %v320 = vrot.slane %v315, %v319
    %v322 = vadd.f32 %v302, %v320
    %v323 = vadd.f32 %v303, %v320
    %v324 = vadd.f32 %v304, %v320
    %v325 = vadd.f32 %v305, %v320
    %v326 = vadd.f32 %v306, %v320
    %v327 = vadd.f32 %v307, %v320
    %v328 = vadd.f32 %v308, %v320
    %v329 = vadd.f32 %v309, %v320
    %v330 = vadd.f32 %v310, %v320
    %v331 = vadd.f32 %v311, %v320
    %v332 = vadd.f32 %v312, %v320
    %v333 = vadd.f32 %v313, %v320
    %v334 = vadd.f32 %v314, %v320
    %v335 = vmax.f32 %v322, 0.0
    %v336 = vmax.f32 %v323, 0.0
    %v337 = vmax.f32 %v324, 0.0
    %v338 = vmax.f32 %v325, 0.0
    %v339 = vmax.f32 %v326, 0.0
    %v340 = vmax.f32 %v327, 0.0
    %v341 = vmax.f32 %v328, 0.0
    %v342 = vmax.f32 %v329, 0.0
    %v343 = vmax.f32 %v330, 0.0
    %v344 = vmax.f32 %v331, 0.0
    %v345 = vmax.f32 %v332, 0.0
    %v346 = vmax.f32 %v333, 0.0
    %v347 = vmax.f32 %v334, 0.0
    %v348 = vpack.c.bf16 %v336, %v335
    %v349 = vpack.c.bf16 %v338, %v337
    %v350 = vpack.c.bf16 %v340, %v339
    %v351 = vpack.c.bf16 %v342, %v341
    %v352 = vpack.c.bf16 %v344, %v343
    %v353 = vpack.c.bf16 %v346, %v345
    %v354 = vpack.c.bf16 %v347, %v347
    %v362 = vunpack.c.l.b16 %v348
    %v363 = vunpack.c.h.b16 %v348
    %v364 = vunpack.c.l.b16 %v349
    %v365 = vunpack.c.h.b16 %v349
    %v366 = vunpack.c.l.b16 %v350
    %v367 = vunpack.c.h.b16 %v350
    %v368 = vunpack.c.l.b16 %v351
    %v369 = vunpack.c.h.b16 %v351
    %v370 = vunpack.c.l.b16 %v352
    %v371 = vunpack.c.h.b16 %v352
    %v372 = vunpack.c.l.b16 %v353
    %v373 = vunpack.c.h.b16 %v353
    %v374 = vunpack.c.l.b16 %v354
    %v375 = vpack.c.b16 %v362, %v362
    %v376 = vpack.c.b16 %v363, %v363
    %v377 = vpack.c.b16 %v364, %v364
    %v378 = vpack.c.b16 %v365, %v365
    %v379 = vpack.c.b16 %v366, %v366
    %v380 = vpack.c.b16 %v367, %v367
    %v381 = vpack.c.b16 %v368, %v368
    %v382 = vpack.c.b16 %v369, %v369
    %v383 = vpack.c.b16 %v370, %v370
    %v384 = vpack.c.b16 %v371, %v371
    %v385 = vpack.c.b16 %v372, %v372
    %v386 = vpack.c.b16 %v373, %v373
    %v387 = vpack.c.b16 %v374, %v374
    %401 = vst [vmem:[%s4] sm:$0xf] %v375
    %402 = vst [vmem:[%s4 + $0x4] sm:$0xf] %v376
    %403 = vst [vmem:[%s4 + $0x8] sm:$0xf] %v377
    %404 = vst [vmem:[%s4 + $0xc] sm:$0xf] %v378
    %405 = vst [vmem:[%s4 + $0x10] sm:$0xf] %v379
    %406 = vst [vmem:[%s4 + $0x14] sm:$0xf] %v380
    %407 = vst [vmem:[%s4 + $0x18] sm:$0xf] %v381
    %408 = vst [vmem:[%s4 + $0x1c] sm:$0xf] %v382
    %409 = vst [vmem:[%s4 + $0x20] sm:$0xf] %v383
    %410 = vst [vmem:[%s4 + $0x24] sm:$0xf] %v384
    %411 = vst [vmem:[%s4 + $0x28] sm:$0xf] %v385
    %412 = vst [vmem:[%s4 + $0x2c] sm:$0xf] %v386
    %413 = vst [vmem:[%s4 + $0x30] sm:$0xf] %v387
  $region25: #{resnet_forward.17} parent=0 // pred_fallthru
    _
  // Predicated region
  $region26: #{resnet_forward.17} parent=0 // pred_check
    _
  $region27: #{resnet_forward.17} parent=0 // pred_check_branch
    %415 = sbr.rel (0) target = $region29
  $region28: #{resnet_forward.17} parent=0 // pred_region
    _
  $region29: #{resnet_forward.17} parent=0 // pred_fallthru
    _
  // Predicated region
  $region30: #{resnet_forward.17} parent=0 // pred_check
    _
  $region31: #{resnet_forward.17} parent=0 // pred_check_branch
    %417 = sbr.rel (0) target = $region33
  $region32: #{resnet_forward.17} parent=0 // pred_region
    _
  $region33: #{resnet_forward.17} parent=0 // pred_fallthru
    _

// kernel: resnet_forward.18
$region0: #{resnet_forward.18}
  #allocation0 [shape = 'u32[]', space=smem, size = 0x4, offset = 0x4, fixed_abs, tag = 'smem constant byte address 0x4 - core index']
  #allocation1 [shape = 'u32[144,128]{1,0:T(1,128)}', space=vmem, size = 0x12000, scoped, tag = 'internal scratch']
  #allocation2 [shape = 'f32[104,128]{1,0:T(8,128)}', space=vmem, size = 0xd000, scoped, tag = 'scratch operand']
  %s0 = inlined_call_operand.vmem [shape: bf16[104,128], index: 0, kind: input, shape index: {}]
  %s1 = inlined_call_operand.vmem [shape: bf16[128,128], index: 1, kind: input, shape index: {}]
  %s2 = inlined_call_operand.vmem [shape: f32[1,128], index: 2, kind: input, shape index: {}]
  %s3 = inlined_call_operand.vmem [shape: f32[1,128], index: 3, kind: input, shape index: {}]
  %s4 = inlined_call_operand.vmem [shape: bf16[104,128], index: 4, kind: input, shape index: {}]
  %s5 = inlined_call_operand.vmem [shape: bf16[104,128], index: 5, kind: output, shape index: {}]
  %s6 = sld [smem:[#allocation0]]
  $region38: #{resnet_forward.18} parent=0
    _
  %s8 = ssub.s32 1, %s6
  %s9 = scalar_select 0, %s8, %s6
  // Predicated region
  $region2: #{resnet_forward.18} parent=0 // pred_check
    _
  $region3: #{resnet_forward.18} parent=0 // pred_check_branch
    %11 = sbr.rel (0) target = $region5
  $region4: #{resnet_forward.18} parent=0 // pred_region
    _
  $region5: #{resnet_forward.18} parent=0 // pred_fallthru
    _
  // Predicated region
  $region6: #{resnet_forward.18} parent=0 // pred_check
    _
  $region7: #{resnet_forward.18} parent=0 // pred_check_branch
    %13 = sbr.rel (0) target = $region9
  $region8: #{resnet_forward.18} parent=0 // pred_region
    _
  $region9: #{resnet_forward.18} parent=0 // pred_fallthru
    _
  // Predicated region
  $region10: #{resnet_forward.18} parent=0 // pred_check
    _
  $region11: #{resnet_forward.18} parent=0 // pred_check_branch
    %15 = sbr.rel (0) target = $region13
  $region12: #{resnet_forward.18} parent=0 // pred_region
    _
  $region13: #{resnet_forward.18} parent=0 // pred_fallthru
    _
  // Predicated region
  $region14: #{resnet_forward.18} parent=0 // pred_check
    _
  $region15: #{resnet_forward.18} parent=0 // pred_check_branch
    %17 = sbr.rel (0) target = $region17
  $region16: #{resnet_forward.18} parent=0 // pred_region
    _
  $region17: #{resnet_forward.18} parent=0 // pred_fallthru
    _
  // Predicated region
  $region18: #{resnet_forward.18} parent=0 // pred_check
    _
  $region19: #{resnet_forward.18} parent=0 // pred_check_branch
    %19 = sbr.rel (0) target = $region21
  $region20: #{resnet_forward.18} parent=0 // pred_region
    _
  $region21: #{resnet_forward.18} parent=0 // pred_fallthru
    _
  %p21 = scmp.eq.s32.totalorder 0, 0
  // Predicated region
  $region22: #{resnet_forward.18} parent=0 // pred_check
    %p22 = pneg %p21
  $region23: #{resnet_forward.18} parent=0 // pred_check_branch
    %24 = sbr.rel (%p22) target = $region25
  $region24: #{resnet_forward.18} parent=0 // pred_region
    %25 = vst [vmem:[#allocation2] sm:$0xff] 0.0
    %26 = vst [vmem:[#allocation2 + $0x8] sm:$0xff] 0.0
    %27 = vst [vmem:[#allocation2 + $0x10] sm:$0xff] 0.0
    %28 = vst [vmem:[#allocation2 + $0x18] sm:$0xff] 0.0
    %29 = vst [vmem:[#allocation2 + $0x20] sm:$0xff] 0.0
    %30 = vst [vmem:[#allocation2 + $0x28] sm:$0xff] 0.0
    %31 = vst [vmem:[#allocation2 + $0x30] sm:$0xff] 0.0
    %32 = vst [vmem:[#allocation2 + $0x38] sm:$0xff] 0.0
    %33 = vst [vmem:[#allocation2 + $0x40] sm:$0xff] 0.0
    %34 = vst [vmem:[#allocation2 + $0x48] sm:$0xff] 0.0
    %35 = vst [vmem:[#allocation2 + $0x50] sm:$0xff] 0.0
    %36 = vst [vmem:[#allocation2 + $0x58] sm:$0xff] 0.0
    %37 = vst [vmem:[#allocation2 + $0x60] sm:$0xff] 0.0
  $region25: #{resnet_forward.18} parent=0 // pred_fallthru
    _
  %v38 = vld [vmem:[#allocation2] sm:$0xff]
  %v39 = vld [vmem:[#allocation2 + $0x8] sm:$0xff]
  %v40 = vld [vmem:[#allocation2 + $0x10] sm:$0xff]
  %v41 = vld [vmem:[#allocation2 + $0x18] sm:$0xff]
  %v42 = vld [vmem:[#allocation2 + $0x20] sm:$0xff]
  %v43 = vld [vmem:[#allocation2 + $0x28] sm:$0xff]
  %v44 = vld [vmem:[#allocation2 + $0x30] sm:$0xff]
  %v45 = vld [vmem:[#allocation2 + $0x38] sm:$0xff]
  %v46 = vld [vmem:[#allocation2 + $0x40] sm:$0xff]
  %v47 = vld [vmem:[#allocation2 + $0x48] sm:$0xff]
  %v48 = vld [vmem:[#allocation2 + $0x50] sm:$0xff]
  %v49 = vld [vmem:[#allocation2 + $0x58] sm:$0xff]
  %v50 = vld [vmem:[#allocation2 + $0x60] sm:$0xff]
  %v51 = vld [vmem:[%s0] sm:$0xf]
  %v52 = vld [vmem:[%s0 + $0x4] sm:$0xf]
  %v53 = vld [vmem:[%s0 + $0x8] sm:$0xf]
  %v54 = vld [vmem:[%s0 + $0xc] sm:$0xf]
  %v55 = vld [vmem:[%s0 + $0x10] sm:$0xf]
  %v56 = vld [vmem:[%s0 + $0x14] sm:$0xf]
  %v57 = vld [vmem:[%s0 + $0x18] sm:$0xf]
  %v58 = vld [vmem:[%s0 + $0x1c] sm:$0xf]
  %v59 = vld [vmem:[%s0 + $0x20] sm:$0xf]
  %v60 = vld [vmem:[%s0 + $0x24] sm:$0xf]
  %v61 = vld [vmem:[%s0 + $0x28] sm:$0xf]
  %v62 = vld [vmem:[%s0 + $0x2c] sm:$0xf]
  %v63 = vld [vmem:[%s0 + $0x30] sm:$0xf]
  %v64 = vld [vmem:[%s1] sm:$0xf]
  %v65 = vld [vmem:[%s1 + $0x4] sm:$0xf]
  %v66 = vld [vmem:[%s1 + $0x8] sm:$0xf]
  %v67 = vld [vmem:[%s1 + $0xc] sm:$0xf]
  %v68 = vld [vmem:[%s1 + $0x10] sm:$0xf]
  %v69 = vld [vmem:[%s1 + $0x14] sm:$0xf]
  %v70 = vld [vmem:[%s1 + $0x18] sm:$0xf]
  %v71 = vld [vmem:[%s1 + $0x1c] sm:$0xf]
  %v72 = vld [vmem:[%s1 + $0x20] sm:$0xf]
  %v73 = vld [vmem:[%s1 + $0x24] sm:$0xf]
  %v74 = vld [vmem:[%s1 + $0x28] sm:$0xf]
  %v75 = vld [vmem:[%s1 + $0x2c] sm:$0xf]
  %v76 = vld [vmem:[%s1 + $0x30] sm:$0xf]
  %v77 = vld [vmem:[%s1 + $0x34] sm:$0xf]
  %v78 = vld [vmem:[%s1 + $0x38] sm:$0xf]
  %v79 = vld [vmem:[%s1 + $0x3c] sm:$0xf]
  %v93 = vunpack.c.l.b16 %v51
  %v94 = vunpack.c.l.b16 %v52
  %v95 = vunpack.c.l.b16 %v53
  %v96 = vunpack.c.l.b16 %v54
  %v97 = vunpack.c.l.b16 %v55
  %v98 = vunpack.c.l.b16 %v56
  %v99 = vunpack.c.l.b16 %v57
  %v100 = vunpack.c.l.b16 %v58
  %v101 = vunpack.c.l.b16 %v59
  %v102 = vunpack.c.l.b16 %v60
  %v103 = vunpack.c.l.b16 %v61
  %v104 = vunpack.c.l.b16 %v62
  %v105 = vunpack.c.l.b16 %v63
  %v106 = vpack.c.b16 %v94, %v93
  %v107 = vpack.c.b16 %v96, %v95
  %v108 = vpack.c.b16 %v98, %v97
  %v109 = vpack.c.b16 %v100, %v99
  %v110 = vpack.c.b16 %v102, %v101
  %v111 = vpack.c.b16 %v104, %v103
  %v112 = vpack.c.b16 %v105, %v105
  %v136 = vunpack.c.l.b16 %v64
  %v137 = vunpack.c.l.b16 %v65
  %v138 = vunpack.c.l.b16 %v66
  %v139 = vunpack.c.l.b16 %v67
  %v140 = vunpack.c.l.b16 %v68
  %v141 = vunpack.c.l.b16 %v69
  %v142 = vunpack.c.l.b16 %v70
  %v143 = vunpack.c.l.b16 %v71
  %v144 = vunpack.c.l.b16 %v72
  %v145 = vunpack.c.l.b16 %v73
  %v146 = vunpack.c.l.b16 %v74
  %v147 = vunpack.c.l.b16 %v75
  %v148 = vunpack.c.l.b16 %v76
  %v149 = vunpack.c.l.b16 %v77
  %v150 = vunpack.c.l.b16 %v78
  %v151 = vunpack.c.l.b16 %v79
  %v152 = vpack.c.b16 %v137, %v136
  %v153 = vpack.c.b16 %v139, %v138
  %v154 = vpack.c.b16 %v141, %v140
  %v155 = vpack.c.b16 %v143, %v142
  %v156 = vpack.c.b16 %v145, %v144
  %v157 = vpack.c.b16 %v147, %v146
  %v158 = vpack.c.b16 %v149, %v148
  %v159 = vpack.c.b16 %v151, %v150
  %168 = vmatprep.subr.bf16.mxu0 0
  %169 = vmatpush1.bf16.msra.mxu0 %v152
  %170 = vmatprep.subr.bf16.mxu0 0
  %171 = vmatpush1.bf16.msra.mxu0 %v153
  %172 = vmatprep.subr.bf16.mxu0 0
  %173 = vmatpush1.bf16.msra.mxu0 %v154
  %174 = vmatprep.subr.bf16.mxu0 0
  %175 = vmatpush1.bf16.msra.mxu0 %v155
  %176 = vmatprep.subr.bf16.mxu0 0
  %177 = vmatpush1.bf16.msra.mxu0 %v156
  %178 = vmatprep.subr.bf16.mxu0 0
  %179 = vmatpush1.bf16.msra.mxu0 %v157
  %180 = vmatprep.subr.bf16.mxu0 0
  %181 = vmatpush1.bf16.msra.mxu0 %v158
  %182 = vmatprep.subr.bf16.mxu0 0
  %183 = vmatpush1.bf16.msra.mxu0 %v159
  %184 = vmatprep.subr.bf16.mxu0 0
  %185 = vmatpush1.bf16.msra.mxu0 0
  %186 = vmatprep.subr.bf16.mxu0 0
  %187 = vmatpush1.bf16.msra.mxu0 0
  %188 = vmatprep.subr.bf16.mxu0 0
  %189 = vmatpush1.bf16.msra.mxu0 0
  %190 = vmatprep.subr.bf16.mxu0 0
  %191 = vmatpush1.bf16.msra.mxu0 0
  %192 = vmatprep.subr.bf16.mxu0 0
  %193 = vmatpush1.bf16.msra.mxu0 0
  %194 = vmatprep.subr.bf16.mxu0 0
  %195 = vmatpush1.bf16.msra.mxu0 0
  %196 = vmatprep.subr.bf16.mxu0 0
  %197 = vmatpush1.bf16.msra.mxu0 0
  %198 = vmatprep.subr.bf16.mxu0 0
  %199 = vmatpush1.bf16.msra.mxu0 0
  %200 = vmatprep.mubr.bf16.mxu0 0
  %201 = vmatmul.mubr.bf16.gmra.mrb[0].mxu0 %v106
  %v202 = vpop.f32.mrb[0].mxu0
  %v203 = vadd.f32 0.0, %v202
  %v204 = vpop.f32.mrb[0].mxu0
  %v205 = vpop.f32.mrb[0].mxu0
  %v206 = vadd.f32 0.0, %v205
  %v207 = vpop.f32.mrb[0].mxu0
  %208 = vmatprep.mubr.bf16.mxu0 0
  %209 = vmatmul.mubr.bf16.gmra.mrb[0].mxu0 %v107
  %v210 = vpop.f32.mrb[0].mxu0
  %v211 = vadd.f32 0.0, %v210
  %v212 = vpop.f32.mrb[0].mxu0
  %v213 = vpop.f32.mrb[0].mxu0
  %v214 = vadd.f32 0.0, %v213
  %v215 = vpop.f32.mrb[0].mxu0
  %216 = vmatprep.mubr.bf16.mxu0 0
  %217 = vmatmul.mubr.bf16.gmra.mrb[0].mxu0 %v108
  %v218 = vpop.f32.mrb[0].mxu0
  %v219 = vadd.f32 0.0, %v218
  %v220 = vpop.f32.mrb[0].mxu0
  %v221 = vpop.f32.mrb[0].mxu0
  %v222 = vadd.f32 0.0, %v221
  %v223 = vpop.f32.mrb[0].mxu0
  %224 = vmatprep.mubr.bf16.mxu0 0
  %225 = vmatmul.mubr.bf16.gmra.mrb[0].mxu0 %v109
  %v226 = vpop.f32.mrb[0].mxu0
  %v227 = vadd.f32 0.0, %v226
  %v228 = vpop.f32.mrb[0].mxu0
  %v229 = vpop.f32.mrb[0].mxu0
  %v230 = vadd.f32 0.0, %v229
  %v231 = vpop.f32.mrb[0].mxu0
  %232 = vmatprep.mubr.bf16.mxu0 0
  %233 = vmatmul.mubr.bf16.gmra.mrb[0].mxu0 %v110
  %v234 = vpop.f32.mrb[0].mxu0
  %v235 = vadd.f32 0.0, %v234
  %v236 = vpop.f32.mrb[0].mxu0
  %v237 = vpop.f32.mrb[0].mxu0
  %v238 = vadd.f32 0.0, %v237
  %v239 = vpop.f32.mrb[0].mxu0
  %240 = vmatprep.mubr.bf16.mxu0 0
  %241 = vmatmul.mubr.bf16.gmra.mrb[0].mxu0 %v111
  %v242 = vpop.f32.mrb[0].mxu0
  %v243 = vadd.f32 0.0, %v242
  %v244 = vpop.f32.mrb[0].mxu0
  %v245 = vpop.f32.mrb[0].mxu0
  %v246 = vadd.f32 0.0, %v245
  %v247 = vpop.f32.mrb[0].mxu0
  %248 = vmatprep.mubr.bf16.mxu0 0
  %249 = vmatmul.mubr.bf16.gmra.mrb[0].mxu0 %v112
  %v250 = vpop.f32.mrb[0].mxu0
  %v251 = vadd.f32 0.0, %v250
  %v252 = vpop.f32.mrb[0].mxu0
  %v253 = vpop.f32.mrb[0].mxu0
  %v254 = vpop.f32.mrb[0].mxu0
  %255 = vdwg.mxu0
  %v256 = vadd.f32 %v38, %v203
  %v257 = vadd.f32 %v39, %v206
  %v258 = vadd.f32 %v40, %v211
  %v259 = vadd.f32 %v41, %v214
  %v260 = vadd.f32 %v42, %v219
  %v261 = vadd.f32 %v43, %v222
  %v262 = vadd.f32 %v44, %v227
  %v263 = vadd.f32 %v45, %v230
  %v264 = vadd.f32 %v46, %v235
  %v265 = vadd.f32 %v47, %v238
  %v266 = vadd.f32 %v48, %v243
  %v267 = vadd.f32 %v49, %v246
  %v268 = vadd.f32 %v50, %v251
  %269 = vst [vmem:[#allocation2] sm:$0xff] %v256
  %270 = vst [vmem:[#allocation2 + $0x8] sm:$0xff] %v257
  %271 = vst [vmem:[#allocation2 + $0x10] sm:$0xff] %v258
  %272 = vst [vmem:[#allocation2 + $0x18] sm:$0xff] %v259
  %273 = vst [vmem:[#allocation2 + $0x20] sm:$0xff] %v260
  %274 = vst [vmem:[#allocation2 + $0x28] sm:$0xff] %v261
  %275 = vst [vmem:[#allocation2 + $0x30] sm:$0xff] %v262
  %276 = vst [vmem:[#allocation2 + $0x38] sm:$0xff] %v263
  %277 = vst [vmem:[#allocation2 + $0x40] sm:$0xff] %v264
  %278 = vst [vmem:[#allocation2 + $0x48] sm:$0xff] %v265
  %279 = vst [vmem:[#allocation2 + $0x50] sm:$0xff] %v266
  %280 = vst [vmem:[#allocation2 + $0x58] sm:$0xff] %v267
  %281 = vst [vmem:[#allocation2 + $0x60] sm:$0xff] %v268
  // Predicated region
  $region26: #{resnet_forward.18} parent=0 // pred_check
    %p282 = pneg %p21
  $region27: #{resnet_forward.18} parent=0 // pred_check_branch
    %284 = sbr.rel (%p282) target = $region29
  $region28: #{resnet_forward.18} parent=0 // pred_region
    %v285 = vld [vmem:[#allocation2] sm:$0xff]
    %v286 = vld [vmem:[#allocation2 + $0x8] sm:$0xff]
    %v287 = vld [vmem:[#allocation2 + $0x10] sm:$0xff]
    %v288 = vld [vmem:[#allocation2 + $0x18] sm:$0xff]
    %v289 = vld [vmem:[#allocation2 + $0x20] sm:$0xff]
    %v290 = vld [vmem:[#allocation2 + $0x28] sm:$0xff]
    %v291 = vld [vmem:[#allocation2 + $0x30] sm:$0xff]
    %v292 = vld [vmem:[#allocation2 + $0x38] sm:$0xff]
    %v293 = vld [vmem:[#allocation2 + $0x40] sm:$0xff]
    %v294 = vld [vmem:[#allocation2 + $0x48] sm:$0xff]
    %v295 = vld [vmem:[#allocation2 + $0x50] sm:$0xff]
    %v296 = vld [vmem:[#allocation2 + $0x58] sm:$0xff]
    %v297 = vld [vmem:[#allocation2 + $0x60] sm:$0xff]
    %v298 = vld [vmem:[%s2] sm:$0x1]
    %v300 = vlaneseq
    %v301 = vshrl.u32 %v300, 7
    %v302 = vsub.s32 0, %v301
    %v303 = vrot.slane %v298, %v302
    %v305 = vmul.f32 %v285, %v303
    %v306 = vmul.f32 %v286, %v303
    %v307 = vmul.f32 %v287, %v303
    %v308 = vmul.f32 %v288, %v303
    %v309 = vmul.f32 %v289, %v303
    %v310 = vmul.f32 %v290, %v303
    %v311 = vmul.f32 %v291, %v303
    %v312 = vmul.f32 %v292, %v303
    %v313 = vmul.f32 %v293, %v303
    %v314 = vmul.f32 %v294, %v303
    %v315 = vmul.f32 %v295, %v303
    %v316 = vmul.f32 %v296, %v303
    %v317 = vmul.f32 %v297, %v303
    %v318 = vld [vmem:[%s3] sm:$0x1]
    %v320 = vlaneseq
    %v321 = vshrl.u32 %v320, 7
    %v322 = vsub.s32 0, %v321
    %v323 = vrot.slane %v318, %v322
    %v325 = vadd.f32 %v305, %v323
    %v326 = vadd.f32 %v306, %v323
    %v327 = vadd.f32 %v307, %v323
    %v328 = vadd.f32 %v308, %v323
    %v329 = vadd.f32 %v309, %v323
    %v330 = vadd.f32 %v310, %v323
    %v331 = vadd.f32 %v311, %v323
    %v332 = vadd.f32 %v312, %v323
    %v333 = vadd.f32 %v313, %v323
    %v334 = vadd.f32 %v314, %v323
    %v335 = vadd.f32 %v315, %v323
    %v336 = vadd.f32 %v316, %v323
    %v337 = vadd.f32 %v317, %v323
    %v338 = vld [vmem:[%s4] sm:$0xf]
    %v339 = vld [vmem:[%s4 + $0x4] sm:$0xf]
    %v340 = vld [vmem:[%s4 + $0x8] sm:$0xf]
    %v341 = vld [vmem:[%s4 + $0xc] sm:$0xf]
    %v342 = vld [vmem:[%s4 + $0x10] sm:$0xf]
    %v343 = vld [vmem:[%s4 + $0x14] sm:$0xf]
    %v344 = vld [vmem:[%s4 + $0x18] sm:$0xf]
    %v345 = vld [vmem:[%s4 + $0x1c] sm:$0xf]
    %v346 = vld [vmem:[%s4 + $0x20] sm:$0xf]
    %v347 = vld [vmem:[%s4 + $0x24] sm:$0xf]
    %v348 = vld [vmem:[%s4 + $0x28] sm:$0xf]
    %v349 = vld [vmem:[%s4 + $0x2c] sm:$0xf]
    %v350 = vld [vmem:[%s4 + $0x30] sm:$0xf]
    %v351 = vunpack.c.l.bf16 %v338
    %v352 = vunpack.c.l.bf16 %v339
    %v353 = vunpack.c.l.bf16 %v340
    %v354 = vunpack.c.l.bf16 %v341
    %v355 = vunpack.c.l.bf16 %v342
    %v356 = vunpack.c.l.bf16 %v343
    %v357 = vunpack.c.l.bf16 %v344
    %v358 = vunpack.c.l.bf16 %v345
    %v359 = vunpack.c.l.bf16 %v346
    %v360 = vunpack.c.l.bf16 %v347
    %v361 = vunpack.c.l.bf16 %v348
    %v362 = vunpack.c.l.bf16 %v349
    %v363 = vunpack.c.l.bf16 %v350
    %v364 = vadd.f32 %v325, %v351
    %v365 = vadd.f32 %v326, %v352
    %v366 = vadd.f32 %v327, %v353
    %v367 = vadd.f32 %v328, %v354
    %v368 = vadd.f32 %v329, %v355
    %v369 = vadd.f32 %v330, %v356
    %v370 = vadd.f32 %v331, %v357
    %v371 = vadd.f32 %v332, %v358
    %v372 = vadd.f32 %v333, %v359
    %v373 = vadd.f32 %v334, %v360
    %v374 = vadd.f32 %v335, %v361
    %v375 = vadd.f32 %v336, %v362
    %v376 = vadd.f32 %v337, %v363
    %v377 = vmax.f32 %v364, 0.0
    %v378 = vmax.f32 %v365, 0.0
    %v379 = vmax.f32 %v366, 0.0
    %v380 = vmax.f32 %v367, 0.0
    %v381 = vmax.f32 %v368, 0.0
    %v382 = vmax.f32 %v369, 0.0
    %v383 = vmax.f32 %v370, 0.0
    %v384 = vmax.f32 %v371, 0.0
    %v385 = vmax.f32 %v372, 0.0
    %v386 = vmax.f32 %v373, 0.0
    %v387 = vmax.f32 %v374, 0.0
    %v388 = vmax.f32 %v375, 0.0
    %v389 = vmax.f32 %v376, 0.0
    %v390 = vpack.c.bf16 %v378, %v377
    %v391 = vpack.c.bf16 %v380, %v379
    %v392 = vpack.c.bf16 %v382, %v381
    %v393 = vpack.c.bf16 %v384, %v383
    %v394 = vpack.c.bf16 %v386, %v385
    %v395 = vpack.c.bf16 %v388, %v387
    %v396 = vpack.c.bf16 %v389, %v389
    %v404 = vunpack.c.l.b16 %v390
    %v405 = vunpack.c.h.b16 %v390
    %v406 = vunpack.c.l.b16 %v391
    %v407 = vunpack.c.h.b16 %v391
    %v408 = vunpack.c.l.b16 %v392
    %v409 = vunpack.c.h.b16 %v392
    %v410 = vunpack.c.l.b16 %v393
    %v411 = vunpack.c.h.b16 %v393
    %v412 = vunpack.c.l.b16 %v394
    %v413 = vunpack.c.h.b16 %v394
    %v414 = vunpack.c.l.b16 %v395
    %v415 = vunpack.c.h.b16 %v395
    %v416 = vunpack.c.l.b16 %v396
    %v417 = vpack.c.b16 %v404, %v404
    %v418 = vpack.c.b16 %v405, %v405
    %v419 = vpack.c.b16 %v406, %v406
    %v420 = vpack.c.b16 %v407, %v407
    %v421 = vpack.c.b16 %v408, %v408
    %v422 = vpack.c.b16 %v409, %v409
    %v423 = vpack.c.b16 %v410, %v410
    %v424 = vpack.c.b16 %v411, %v411
    %v425 = vpack.c.b16 %v412, %v412
    %v426 = vpack.c.b16 %v413, %v413
    %v427 = vpack.c.b16 %v414, %v414
    %v428 = vpack.c.b16 %v415, %v415
    %v429 = vpack.c.b16 %v416, %v416
    %443 = vst [vmem:[%s5] sm:$0xf] %v417
    %444 = vst [vmem:[%s5 + $0x4] sm:$0xf] %v418
    %445 = vst [vmem:[%s5 + $0x8] sm:$0xf] %v419
    %446 = vst [vmem:[%s5 + $0xc] sm:$0xf] %v420
    %447 = vst [vmem:[%s5 + $0x10] sm:$0xf] %v421
    %448 = vst [vmem:[%s5 + $0x14] sm:$0xf] %v422
    %449 = vst [vmem:[%s5 + $0x18] sm:$0xf] %v423
    %450 = vst [vmem:[%s5 + $0x1c] sm:$0xf] %v424
    %451 = vst [vmem:[%s5 + $0x20] sm:$0xf] %v425
    %452 = vst [vmem:[%s5 + $0x24] sm:$0xf] %v426
    %453 = vst [vmem:[%s5 + $0x28] sm:$0xf] %v427
    %454 = vst [vmem:[%s5 + $0x2c] sm:$0xf] %v428
    %455 = vst [vmem:[%s5 + $0x30] sm:$0xf] %v429
  $region29: #{resnet_forward.18} parent=0 // pred_fallthru
    _
  // Predicated region
  $region30: #{resnet_forward.18} parent=0 // pred_check
    _
  $region31: #{resnet_forward.18} parent=0 // pred_check_branch
    %457 = sbr.rel (0) target = $region33
  $region32: #{resnet_forward.18} parent=0 // pred_region
    _
  $region33: #{resnet_forward.18} parent=0 // pred_fallthru
    _
  // Predicated region
  $region34: #{resnet_forward.18} parent=0 // pred_check
    _
  $region35: #{resnet_forward.18} parent=0 // pred_check_branch
    %459 = sbr.rel (0) target = $region37
  $region36: #{resnet_forward.18} parent=0 // pred_region
    _
  $region37: #{resnet_forward.18} parent=0 // pred_fallthru
    _

// kernel: resnet_forward.19
$region0: #{resnet_forward.19}
  #allocation0 [shape = 'u32[]', space=smem, size = 0x4, offset = 0x4, fixed_abs, tag = 'smem constant byte address 0x4 - core index']
  #allocation1 [shape = 'u32[144,128]{1,0:T(1,128)}', space=vmem, size = 0x12000, scoped, tag = 'internal scratch']
  #allocation2 [shape = 'f32[32,128]{1,0:T(8,128)}', space=vmem, size = 0x4000, scoped, tag = 'scratch operand']
  %s0 = inlined_call_operand.vmem [shape: bf16[32,128], index: 0, kind: input, shape index: {}]
  %s1 = inlined_call_operand.vmem [shape: bf16[128,128], index: 1, kind: input, shape index: {}]
  %s2 = inlined_call_operand.vmem [shape: f32[1,128], index: 2, kind: input, shape index: {}]
  %s3 = inlined_call_operand.vmem [shape: f32[1,128], index: 3, kind: input, shape index: {}]
  %s4 = inlined_call_operand.vmem [shape: bf16[32,128], index: 4, kind: output, shape index: {}]
  %s5 = sld [smem:[#allocation0]]
  $region34: #{resnet_forward.19} parent=0
    _
  %s7 = ssub.s32 1, %s5
  %s8 = scalar_select 0, %s7, %s5
  // Predicated region
  $region2: #{resnet_forward.19} parent=0 // pred_check
    _
  $region3: #{resnet_forward.19} parent=0 // pred_check_branch
    %10 = sbr.rel (0) target = $region5
  $region4: #{resnet_forward.19} parent=0 // pred_region
    _
  $region5: #{resnet_forward.19} parent=0 // pred_fallthru
    _
  // Predicated region
  $region6: #{resnet_forward.19} parent=0 // pred_check
    _
  $region7: #{resnet_forward.19} parent=0 // pred_check_branch
    %12 = sbr.rel (0) target = $region9
  $region8: #{resnet_forward.19} parent=0 // pred_region
    _
  $region9: #{resnet_forward.19} parent=0 // pred_fallthru
    _
  // Predicated region
  $region10: #{resnet_forward.19} parent=0 // pred_check
    _
  $region11: #{resnet_forward.19} parent=0 // pred_check_branch
    %14 = sbr.rel (0) target = $region13
  $region12: #{resnet_forward.19} parent=0 // pred_region
    _
  $region13: #{resnet_forward.19} parent=0 // pred_fallthru
    _
  // Predicated region
  $region14: #{resnet_forward.19} parent=0 // pred_check
    _
  $region15: #{resnet_forward.19} parent=0 // pred_check_branch
    %16 = sbr.rel (0) target = $region17
  $region16: #{resnet_forward.19} parent=0 // pred_region
    _
  $region17: #{resnet_forward.19} parent=0 // pred_fallthru
    _
  %p18 = scmp.eq.s32.totalorder 0, 0
  // Predicated region
  $region18: #{resnet_forward.19} parent=0 // pred_check
    %p19 = pneg %p18
  $region19: #{resnet_forward.19} parent=0 // pred_check_branch
    %21 = sbr.rel (%p19) target = $region21
  $region20: #{resnet_forward.19} parent=0 // pred_region
    %22 = vst [vmem:[#allocation2] sm:$0xff] 0.0
    %23 = vst [vmem:[#allocation2 + $0x8] sm:$0xff] 0.0
    %24 = vst [vmem:[#allocation2 + $0x10] sm:$0xff] 0.0
    %25 = vst [vmem:[#allocation2 + $0x18] sm:$0xff] 0.0
  $region21: #{resnet_forward.19} parent=0 // pred_fallthru
    _
  %v26 = vld [vmem:[#allocation2] sm:$0xff]
  %v27 = vld [vmem:[#allocation2 + $0x8] sm:$0xff]
  %v28 = vld [vmem:[#allocation2 + $0x10] sm:$0xff]
  %v29 = vld [vmem:[#allocation2 + $0x18] sm:$0xff]
  %v30 = vld [vmem:[%s0] sm:$0xf]
  %v31 = vld [vmem:[%s0 + $0x4] sm:$0xf]
  %v32 = vld [vmem:[%s0 + $0x8] sm:$0xf]
  %v33 = vld [vmem:[%s0 + $0xc] sm:$0xf]
  %v34 = vld [vmem:[%s1] sm:$0xf]
  %v35 = vld [vmem:[%s1 + $0x4] sm:$0xf]
  %v36 = vld [vmem:[%s1 + $0x8] sm:$0xf]
  %v37 = vld [vmem:[%s1 + $0xc] sm:$0xf]
  %v38 = vld [vmem:[%s1 + $0x10] sm:$0xf]
  %v39 = vld [vmem:[%s1 + $0x14] sm:$0xf]
  %v40 = vld [vmem:[%s1 + $0x18] sm:$0xf]
  %v41 = vld [vmem:[%s1 + $0x1c] sm:$0xf]
  %v42 = vld [vmem:[%s1 + $0x20] sm:$0xf]
  %v43 = vld [vmem:[%s1 + $0x24] sm:$0xf]
  %v44 = vld [vmem:[%s1 + $0x28] sm:$0xf]
  %v45 = vld [vmem:[%s1 + $0x2c] sm:$0xf]
  %v46 = vld [vmem:[%s1 + $0x30] sm:$0xf]
  %v47 = vld [vmem:[%s1 + $0x34] sm:$0xf]
  %v48 = vld [vmem:[%s1 + $0x38] sm:$0xf]
  %v49 = vld [vmem:[%s1 + $0x3c] sm:$0xf]
  %v54 = vunpack.c.l.b16 %v30
  %v55 = vunpack.c.l.b16 %v31
  %v56 = vunpack.c.l.b16 %v32
  %v57 = vunpack.c.l.b16 %v33
  %v58 = vpack.c.b16 %v55, %v54
  %v59 = vpack.c.b16 %v57, %v56
  %v78 = vunpack.c.l.b16 %v34
  %v79 = vunpack.c.l.b16 %v35
  %v80 = vunpack.c.l.b16 %v36
  %v81 = vunpack.c.l.b16 %v37
  %v82 = vunpack.c.l.b16 %v38
  %v83 = vunpack.c.l.b16 %v39
  %v84 = vunpack.c.l.b16 %v40
  %v85 = vunpack.c.l.b16 %v41
  %v86 = vunpack.c.l.b16 %v42
  %v87 = vunpack.c.l.b16 %v43
  %v88 = vunpack.c.l.b16 %v44
  %v89 = vunpack.c.l.b16 %v45
  %v90 = vunpack.c.l.b16 %v46
  %v91 = vunpack.c.l.b16 %v47
  %v92 = vunpack.c.l.b16 %v48
  %v93 = vunpack.c.l.b16 %v49
  %v94 = vpack.c.b16 %v79, %v78
  %v95 = vpack.c.b16 %v81, %v80
  %v96 = vpack.c.b16 %v83, %v82
  %v97 = vpack.c.b16 %v85, %v84
  %v98 = vpack.c.b16 %v87, %v86
  %v99 = vpack.c.b16 %v89, %v88
  %v100 = vpack.c.b16 %v91, %v90
  %v101 = vpack.c.b16 %v93, %v92
  %110 = vmatprep.subr.bf16.mxu0 0
  %111 = vmatpush1.bf16.msra.mxu0 %v94
  %112 = vmatprep.subr.bf16.mxu0 0
  %113 = vmatpush1.bf16.msra.mxu0 %v95
  %114 = vmatprep.subr.bf16.mxu0 0
  %115 = vmatpush1.bf16.msra.mxu0 %v96
  %116 = vmatprep.subr.bf16.mxu0 0
  %117 = vmatpush1.bf16.msra.mxu0 %v97
  %118 = vmatprep.subr.bf16.mxu0 0
  %119 = vmatpush1.bf16.msra.mxu0 %v98
  %120 = vmatprep.subr.bf16.mxu0 0
  %121 = vmatpush1.bf16.msra.mxu0 %v99
  %122 = vmatprep.subr.bf16.mxu0 0
  %123 = vmatpush1.bf16.msra.mxu0 %v100
  %124 = vmatprep.subr.bf16.mxu0 0
  %125 = vmatpush1.bf16.msra.mxu0 %v101
  %126 = vmatprep.subr.bf16.mxu0 0
  %127 = vmatpush1.bf16.msra.mxu0 0
  %128 = vmatprep.subr.bf16.mxu0 0
  %129 = vmatpush1.bf16.msra.mxu0 0
  %130 = vmatprep.subr.bf16.mxu0 0
  %131 = vmatpush1.bf16.msra.mxu0 0
  %132 = vmatprep.subr.bf16.mxu0 0
  %133 = vmatpush1.bf16.msra.mxu0 0
  %134 = vmatprep.subr.bf16.mxu0 0
  %135 = vmatpush1.bf16.msra.mxu0 0
  %136 = vmatprep.subr.bf16.mxu0 0
  %137 = vmatpush1.bf16.msra.mxu0 0
  %138 = vmatprep.subr.bf16.mxu0 0
  %139 = vmatpush1.bf16.msra.mxu0 0
  %140 = vmatprep.subr.bf16.mxu0 0
  %141 = vmatpush1.bf16.msra.mxu0 0
  %142 = vmatprep.mubr.bf16.mxu0 0
  %143 = vmatmul.mubr.bf16.gmra.mrb[0].mxu0 %v58
  %v144 = vpop.f32.mrb[0].mxu0
  %v145 = vadd.f32 0.0, %v144
  %v146 = vpop.f32.mrb[0].mxu0
  %v147 = vpop.f32.mrb[0].mxu0
  %v148 = vadd.f32 0.0, %v147
  %v149 = vpop.f32.mrb[0].mxu0
  %150 = vmatprep.mubr.bf16.mxu0 0
  %151 = vmatmul.mubr.bf16.gmra.mrb[0].mxu0 %v59
  %v152 = vpop.f32.mrb[0].mxu0
  %v153 = vadd.f32 0.0, %v152
  %v154 = vpop.f32.mrb[0].mxu0
  %v155 = vpop.f32.mrb[0].mxu0
  %v156 = vadd.f32 0.0, %v155
  %v157 = vpop.f32.mrb[0].mxu0
  %158 = vdwg.mxu0
  %v159 = vadd.f32 %v26, %v145
  %v160 = vadd.f32 %v27, %v148
  %v161 = vadd.f32 %v28, %v153
  %v162 = vadd.f32 %v29, %v156
  %163 = vst [vmem:[#allocation2] sm:$0xff] %v159
  %164 = vst [vmem:[#allocation2 + $0x8] sm:$0xff] %v160
  %165 = vst [vmem:[#allocation2 + $0x10] sm:$0xff] %v161
  %166 = vst [vmem:[#allocation2 + $0x18] sm:$0xff] %v162
  // Predicated region
  $region22: #{resnet_forward.19} parent=0 // pred_check
    %p167 = pneg %p18
  $region23: #{resnet_forward.19} parent=0 // pred_check_branch
    %169 = sbr.rel (%p167) target = $region25
  $region24: #{resnet_forward.19} parent=0 // pred_region
    %v170 = vld [vmem:[#allocation2] sm:$0xff]
    %v171 = vld [vmem:[#allocation2 + $0x8] sm:$0xff]
    %v172 = vld [vmem:[#allocation2 + $0x10] sm:$0xff]
    %v173 = vld [vmem:[#allocation2 + $0x18] sm:$0xff]
    %v174 = vld [vmem:[%s2] sm:$0x1]
    %v176 = vlaneseq
    %v177 = vshrl.u32 %v176, 7
    %v178 = vsub.s32 0, %v177
    %v179 = vrot.slane %v174, %v178
    %v181 = vmul.f32 %v170, %v179
    %v182 = vmul.f32 %v171, %v179
    %v183 = vmul.f32 %v172, %v179
    %v184 = vmul.f32 %v173, %v179
    %v185 = vld [vmem:[%s3] sm:$0x1]
    %v187 = vlaneseq
    %v188 = vshrl.u32 %v187, 7
    %v189 = vsub.s32 0, %v188
    %v190 = vrot.slane %v185, %v189
    %v192 = vadd.f32 %v181, %v190
    %v193 = vadd.f32 %v182, %v190
    %v194 = vadd.f32 %v183, %v190
    %v195 = vadd.f32 %v184, %v190
    %v196 = vmax.f32 %v192, 0.0
    %v197 = vmax.f32 %v193, 0.0
    %v198 = vmax.f32 %v194, 0.0
    %v199 = vmax.f32 %v195, 0.0
    %v200 = vpack.c.bf16 %v197, %v196
    %v201 = vpack.c.bf16 %v199, %v198
    %v204 = vunpack.c.l.b16 %v200
    %v205 = vunpack.c.h.b16 %v200
    %v206 = vunpack.c.l.b16 %v201
    %v207 = vunpack.c.h.b16 %v201
    %v208 = vpack.c.b16 %v204, %v204
    %v209 = vpack.c.b16 %v205, %v205
    %v210 = vpack.c.b16 %v206, %v206
    %v211 = vpack.c.b16 %v207, %v207
    %216 = vst [vmem:[%s4] sm:$0xf] %v208
    %217 = vst [vmem:[%s4 + $0x4] sm:$0xf] %v209
    %218 = vst [vmem:[%s4 + $0x8] sm:$0xf] %v210
    %219 = vst [vmem:[%s4 + $0xc] sm:$0xf] %v211
  $region25: #{resnet_forward.19} parent=0 // pred_fallthru
    _
  // Predicated region
  $region26: #{resnet_forward.19} parent=0 // pred_check
    _
  $region27: #{resnet_forward.19} parent=0 // pred_check_branch
    %221 = sbr.rel (0) target = $region29
  $region28: #{resnet_forward.19} parent=0 // pred_region
    _
  $region29: #{resnet_forward.19} parent=0 // pred_fallthru
    _
  // Predicated region
  $region30: #{resnet_forward.19} parent=0 // pred_check
    _
  $region31: #{resnet_forward.19} parent=0 // pred_check_branch
    %223 = sbr.rel (0) target = $region33
  $region32: #{resnet_forward.19} parent=0 // pred_region
    _
  $region33: #{resnet_forward.19} parent=0 // pred_fallthru
    _

// kernel: resnet_forward.20
$region0: #{resnet_forward.20}
  #allocation0 [shape = 'u32[]', space=smem, size = 0x4, offset = 0x4, fixed_abs, tag = 'smem constant byte address 0x4 - core index']
  #allocation1 [shape = 'u32[144,128]{1,0:T(1,128)}', space=vmem, size = 0x12000, scoped, tag = 'internal scratch']
  #allocation2 [shape = 'f32[32,128]{1,0:T(8,128)}', space=vmem, size = 0x4000, scoped, tag = 'scratch operand']
  %s0 = inlined_call_operand.vmem [shape: bf16[32,128], index: 0, kind: input, shape index: {}]
  %s1 = inlined_call_operand.vmem [shape: bf16[128,128], index: 1, kind: input, shape index: {}]
  %s2 = inlined_call_operand.vmem [shape: f32[1,128], index: 2, kind: input, shape index: {}]
  %s3 = inlined_call_operand.vmem [shape: f32[1,128], index: 3, kind: input, shape index: {}]
  %s4 = inlined_call_operand.vmem [shape: bf16[32,128], index: 4, kind: output, shape index: {}]
  %s5 = sld [smem:[#allocation0]]
  $region34: #{resnet_forward.20} parent=0
    _
  %s7 = ssub.s32 1, %s5
  %s8 = scalar_select 0, %s7, %s5
  // Predicated region
  $region2: #{resnet_forward.20} parent=0 // pred_check
    _
  $region3: #{resnet_forward.20} parent=0 // pred_check_branch
    %10 = sbr.rel (0) target = $region5
  $region4: #{resnet_forward.20} parent=0 // pred_region
    _
  $region5: #{resnet_forward.20} parent=0 // pred_fallthru
    _
  // Predicated region
  $region6: #{resnet_forward.20} parent=0 // pred_check
    _
  $region7: #{resnet_forward.20} parent=0 // pred_check_branch
    %12 = sbr.rel (0) target = $region9
  $region8: #{resnet_forward.20} parent=0 // pred_region
    _
  $region9: #{resnet_forward.20} parent=0 // pred_fallthru
    _
  // Predicated region
  $region10: #{resnet_forward.20} parent=0 // pred_check
    _
  $region11: #{resnet_forward.20} parent=0 // pred_check_branch
    %14 = sbr.rel (0) target = $region13
  $region12: #{resnet_forward.20} parent=0 // pred_region
    _
  $region13: #{resnet_forward.20} parent=0 // pred_fallthru
    _
  // Predicated region
  $region14: #{resnet_forward.20} parent=0 // pred_check
    _
  $region15: #{resnet_forward.20} parent=0 // pred_check_branch
    %16 = sbr.rel (0) target = $region17
  $region16: #{resnet_forward.20} parent=0 // pred_region
    _
  $region17: #{resnet_forward.20} parent=0 // pred_fallthru
    _
  %p18 = scmp.eq.s32.totalorder 0, 0
  // Predicated region
  $region18: #{resnet_forward.20} parent=0 // pred_check
    %p19 = pneg %p18
  $region19: #{resnet_forward.20} parent=0 // pred_check_branch
    %21 = sbr.rel (%p19) target = $region21
  $region20: #{resnet_forward.20} parent=0 // pred_region
    %22 = vst [vmem:[#allocation2] sm:$0xff] 0.0
    %23 = vst [vmem:[#allocation2 + $0x8] sm:$0xff] 0.0
    %24 = vst [vmem:[#allocation2 + $0x10] sm:$0xff] 0.0
    %25 = vst [vmem:[#allocation2 + $0x18] sm:$0xff] 0.0
  $region21: #{resnet_forward.20} parent=0 // pred_fallthru
    _
  %v26 = vld [vmem:[#allocation2] sm:$0xff]
  %v27 = vld [vmem:[#allocation2 + $0x8] sm:$0xff]
  %v28 = vld [vmem:[#allocation2 + $0x10] sm:$0xff]
  %v29 = vld [vmem:[#allocation2 + $0x18] sm:$0xff]
  %v30 = vld [vmem:[%s0] sm:$0xf]
  %v31 = vld [vmem:[%s0 + $0x4] sm:$0xf]
  %v32 = vld [vmem:[%s0 + $0x8] sm:$0xf]
  %v33 = vld [vmem:[%s0 + $0xc] sm:$0xf]
  %v34 = vld [vmem:[%s1] sm:$0xf]
  %v35 = vld [vmem:[%s1 + $0x4] sm:$0xf]
  %v36 = vld [vmem:[%s1 + $0x8] sm:$0xf]
  %v37 = vld [vmem:[%s1 + $0xc] sm:$0xf]
  %v38 = vld [vmem:[%s1 + $0x10] sm:$0xf]
  %v39 = vld [vmem:[%s1 + $0x14] sm:$0xf]
  %v40 = vld [vmem:[%s1 + $0x18] sm:$0xf]
  %v41 = vld [vmem:[%s1 + $0x1c] sm:$0xf]
  %v42 = vld [vmem:[%s1 + $0x20] sm:$0xf]
  %v43 = vld [vmem:[%s1 + $0x24] sm:$0xf]
  %v44 = vld [vmem:[%s1 + $0x28] sm:$0xf]
  %v45 = vld [vmem:[%s1 + $0x2c] sm:$0xf]
  %v46 = vld [vmem:[%s1 + $0x30] sm:$0xf]
  %v47 = vld [vmem:[%s1 + $0x34] sm:$0xf]
  %v48 = vld [vmem:[%s1 + $0x38] sm:$0xf]
  %v49 = vld [vmem:[%s1 + $0x3c] sm:$0xf]
  %v54 = vunpack.c.l.b16 %v30
  %v55 = vunpack.c.l.b16 %v31
  %v56 = vunpack.c.l.b16 %v32
  %v57 = vunpack.c.l.b16 %v33
  %v58 = vpack.c.b16 %v55, %v54
  %v59 = vpack.c.b16 %v57, %v56
  %v78 = vunpack.c.l.b16 %v34
  %v79 = vunpack.c.l.b16 %v35
  %v80 = vunpack.c.l.b16 %v36
  %v81 = vunpack.c.l.b16 %v37
  %v82 = vunpack.c.l.b16 %v38
  %v83 = vunpack.c.l.b16 %v39
  %v84 = vunpack.c.l.b16 %v40
  %v85 = vunpack.c.l.b16 %v41
  %v86 = vunpack.c.l.b16 %v42
  %v87 = vunpack.c.l.b16 %v43
  %v88 = vunpack.c.l.b16 %v44
  %v89 = vunpack.c.l.b16 %v45
  %v90 = vunpack.c.l.b16 %v46
  %v91 = vunpack.c.l.b16 %v47
  %v92 = vunpack.c.l.b16 %v48
  %v93 = vunpack.c.l.b16 %v49
  %v94 = vpack.c.b16 %v79, %v78
  %v95 = vpack.c.b16 %v81, %v80
  %v96 = vpack.c.b16 %v83, %v82
  %v97 = vpack.c.b16 %v85, %v84
  %v98 = vpack.c.b16 %v87, %v86
  %v99 = vpack.c.b16 %v89, %v88
  %v100 = vpack.c.b16 %v91, %v90
  %v101 = vpack.c.b16 %v93, %v92
  %110 = vmatprep.subr.bf16.mxu0 0
  %111 = vmatpush1.bf16.msra.mxu0 %v94
  %112 = vmatprep.subr.bf16.mxu0 0
  %113 = vmatpush1.bf16.msra.mxu0 %v95
  %114 = vmatprep.subr.bf16.mxu0 0
  %115 = vmatpush1.bf16.msra.mxu0 %v96
  %116 = vmatprep.subr.bf16.mxu0 0
  %117 = vmatpush1.bf16.msra.mxu0 %v97
  %118 = vmatprep.subr.bf16.mxu0 0
  %119 = vmatpush1.bf16.msra.mxu0 %v98
  %120 = vmatprep.subr.bf16.mxu0 0
  %121 = vmatpush1.bf16.msra.mxu0 %v99
  %122 = vmatprep.subr.bf16.mxu0 0
  %123 = vmatpush1.bf16.msra.mxu0 %v100
  %124 = vmatprep.subr.bf16.mxu0 0
  %125 = vmatpush1.bf16.msra.mxu0 %v101
  %126 = vmatprep.subr.bf16.mxu0 0
  %127 = vmatpush1.bf16.msra.mxu0 0
  %128 = vmatprep.subr.bf16.mxu0 0
  %129 = vmatpush1.bf16.msra.mxu0 0
  %130 = vmatprep.subr.bf16.mxu0 0
  %131 = vmatpush1.bf16.msra.mxu0 0
  %132 = vmatprep.subr.bf16.mxu0 0
  %133 = vmatpush1.bf16.msra.mxu0 0
  %134 = vmatprep.subr.bf16.mxu0 0
  %135 = vmatpush1.bf16.msra.mxu0 0
  %136 = vmatprep.subr.bf16.mxu0 0
  %137 = vmatpush1.bf16.msra.mxu0 0
  %138 = vmatprep.subr.bf16.mxu0 0
  %139 = vmatpush1.bf16.msra.mxu0 0
  %140 = vmatprep.subr.bf16.mxu0 0
  %141 = vmatpush1.bf16.msra.mxu0 0
  %142 = vmatprep.mubr.bf16.mxu0 0
  %143 = vmatmul.mubr.bf16.gmra.mrb[0].mxu0 %v58
  %v144 = vpop.f32.mrb[0].mxu0
  %v145 = vadd.f32 0.0, %v144
  %v146 = vpop.f32.mrb[0].mxu0
  %v147 = vpop.f32.mrb[0].mxu0
  %v148 = vadd.f32 0.0, %v147
  %v149 = vpop.f32.mrb[0].mxu0
  %150 = vmatprep.mubr.bf16.mxu0 0
  %151 = vmatmul.mubr.bf16.gmra.mrb[0].mxu0 %v59
  %v152 = vpop.f32.mrb[0].mxu0
  %v153 = vadd.f32 0.0, %v152
  %v154 = vpop.f32.mrb[0].mxu0
  %v155 = vpop.f32.mrb[0].mxu0
  %v156 = vadd.f32 0.0, %v155
  %v157 = vpop.f32.mrb[0].mxu0
  %158 = vdwg.mxu0
  %v159 = vadd.f32 %v26, %v145
  %v160 = vadd.f32 %v27, %v148
  %v161 = vadd.f32 %v28, %v153
  %v162 = vadd.f32 %v29, %v156
  %163 = vst [vmem:[#allocation2] sm:$0xff] %v159
  %164 = vst [vmem:[#allocation2 + $0x8] sm:$0xff] %v160
  %165 = vst [vmem:[#allocation2 + $0x10] sm:$0xff] %v161
  %166 = vst [vmem:[#allocation2 + $0x18] sm:$0xff] %v162
  // Predicated region
  $region22: #{resnet_forward.20} parent=0 // pred_check
    %p167 = pneg %p18
  $region23: #{resnet_forward.20} parent=0 // pred_check_branch
    %169 = sbr.rel (%p167) target = $region25
  $region24: #{resnet_forward.20} parent=0 // pred_region
    %v170 = vld [vmem:[#allocation2] sm:$0xff]
    %v171 = vld [vmem:[#allocation2 + $0x8] sm:$0xff]
    %v172 = vld [vmem:[#allocation2 + $0x10] sm:$0xff]
    %v173 = vld [vmem:[#allocation2 + $0x18] sm:$0xff]
    %v174 = vld [vmem:[%s2] sm:$0x1]
    %v176 = vlaneseq
    %v177 = vshrl.u32 %v176, 7
    %v178 = vsub.s32 0, %v177
    %v179 = vrot.slane %v174, %v178
    %v181 = vmul.f32 %v170, %v179
    %v182 = vmul.f32 %v171, %v179
    %v183 = vmul.f32 %v172, %v179
    %v184 = vmul.f32 %v173, %v179
    %v185 = vld [vmem:[%s3] sm:$0x1]
    %v187 = vlaneseq
    %v188 = vshrl.u32 %v187, 7
    %v189 = vsub.s32 0, %v188
    %v190 = vrot.slane %v185, %v189
    %v192 = vadd.f32 %v181, %v190
    %v193 = vadd.f32 %v182, %v190
    %v194 = vadd.f32 %v183, %v190
    %v195 = vadd.f32 %v184, %v190
    %v196 = vpack.c.bf16 %v193, %v192
    %v197 = vpack.c.bf16 %v195, %v194
    %v200 = vunpack.c.l.b16 %v196
    %v201 = vunpack.c.h.b16 %v196
    %v202 = vunpack.c.l.b16 %v197
    %v203 = vunpack.c.h.b16 %v197
    %v204 = vpack.c.b16 %v200, %v200
    %v205 = vpack.c.b16 %v201, %v201
    %v206 = vpack.c.b16 %v202, %v202
    %v207 = vpack.c.b16 %v203, %v203
    %212 = vst [vmem:[%s4] sm:$0xf] %v204
    %213 = vst [vmem:[%s4 + $0x4] sm:$0xf] %v205
    %214 = vst [vmem:[%s4 + $0x8] sm:$0xf] %v206
    %215 = vst [vmem:[%s4 + $0xc] sm:$0xf] %v207
  $region25: #{resnet_forward.20} parent=0 // pred_fallthru
    _
  // Predicated region
  $region26: #{resnet_forward.20} parent=0 // pred_check
    _
  $region27: #{resnet_forward.20} parent=0 // pred_check_branch
    %217 = sbr.rel (0) target = $region29
  $region28: #{resnet_forward.20} parent=0 // pred_region
    _
  $region29: #{resnet_forward.20} parent=0 // pred_fallthru
    _
  // Predicated region
  $region30: #{resnet_forward.20} parent=0 // pred_check
    _
  $region31: #{resnet_forward.20} parent=0 // pred_check_branch
    %219 = sbr.rel (0) target = $region33
  $region32: #{resnet_forward.20} parent=0 // pred_region
    _
  $region33: #{resnet_forward.20} parent=0 // pred_fallthru
    _

// kernel: resnet_forward.21
$region0: #{resnet_forward.21}
  #allocation0 [shape = 'u32[]', space=smem, size = 0x4, offset = 0x4, fixed_abs, tag = 'smem constant byte address 0x4 - core index']
  #allocation1 [shape = 'u32[144,128]{1,0:T(1,128)}', space=vmem, size = 0x12000, scoped, tag = 'internal scratch']
  #allocation2 [shape = 'f32[32,128]{1,0:T(8,128)}', space=vmem, size = 0x4000, scoped, tag = 'scratch operand']
  %s0 = inlined_call_operand.vmem [shape: bf16[32,256], index: 0, kind: input, shape index: {}]
  %s1 = inlined_call_operand.vmem [shape: bf16[256,128], index: 1, kind: input, shape index: {}]
  %s2 = inlined_call_operand.vmem [shape: f32[1,128], index: 2, kind: input, shape index: {}]
  %s3 = inlined_call_operand.vmem [shape: f32[1,128], index: 3, kind: input, shape index: {}]
  %s4 = inlined_call_operand.vmem [shape: bf16[32,128], index: 4, kind: input, shape index: {}]
  %s5 = inlined_call_operand.vmem [shape: bf16[32,128], index: 5, kind: output, shape index: {}]
  %s6 = sld [smem:[#allocation0]]
  $region38: #{resnet_forward.21} parent=0
    _
  %s8 = ssub.s32 1, %s6
  %s9 = scalar_select 0, %s8, %s6
  // Predicated region
  $region2: #{resnet_forward.21} parent=0 // pred_check
    _
  $region3: #{resnet_forward.21} parent=0 // pred_check_branch
    %11 = sbr.rel (0) target = $region5
  $region4: #{resnet_forward.21} parent=0 // pred_region
    _
  $region5: #{resnet_forward.21} parent=0 // pred_fallthru
    _
  // Predicated region
  $region6: #{resnet_forward.21} parent=0 // pred_check
    _
  $region7: #{resnet_forward.21} parent=0 // pred_check_branch
    %13 = sbr.rel (0) target = $region9
  $region8: #{resnet_forward.21} parent=0 // pred_region
    _
  $region9: #{resnet_forward.21} parent=0 // pred_fallthru
    _
  // Predicated region
  $region10: #{resnet_forward.21} parent=0 // pred_check
    _
  $region11: #{resnet_forward.21} parent=0 // pred_check_branch
    %15 = sbr.rel (0) target = $region13
  $region12: #{resnet_forward.21} parent=0 // pred_region
    _
  $region13: #{resnet_forward.21} parent=0 // pred_fallthru
    _
  // Predicated region
  $region14: #{resnet_forward.21} parent=0 // pred_check
    _
  $region15: #{resnet_forward.21} parent=0 // pred_check_branch
    %17 = sbr.rel (0) target = $region17
  $region16: #{resnet_forward.21} parent=0 // pred_region
    _
  $region17: #{resnet_forward.21} parent=0 // pred_fallthru
    _
  // Predicated region
  $region18: #{resnet_forward.21} parent=0 // pred_check
    _
  $region19: #{resnet_forward.21} parent=0 // pred_check_branch
    %19 = sbr.rel (0) target = $region21
  $region20: #{resnet_forward.21} parent=0 // pred_region
    _
  $region21: #{resnet_forward.21} parent=0 // pred_fallthru
    _
  %p21 = scmp.eq.s32.totalorder 0, 0
  // Predicated region
  $region22: #{resnet_forward.21} parent=0 // pred_check
    %p22 = pneg %p21
  $region23: #{resnet_forward.21} parent=0 // pred_check_branch
    %24 = sbr.rel (%p22) target = $region25
  $region24: #{resnet_forward.21} parent=0 // pred_region
    %25 = vst [vmem:[#allocation2] sm:$0xff] 0.0
    %26 = vst [vmem:[#allocation2 + $0x8] sm:$0xff] 0.0
    %27 = vst [vmem:[#allocation2 + $0x10] sm:$0xff] 0.0
    %28 = vst [vmem:[#allocation2 + $0x18] sm:$0xff] 0.0
  $region25: #{resnet_forward.21} parent=0 // pred_fallthru
    _
  %v29 = vld [vmem:[#allocation2] sm:$0xff]
  %v30 = vld [vmem:[#allocation2 + $0x8] sm:$0xff]
  %v31 = vld [vmem:[#allocation2 + $0x10] sm:$0xff]
  %v32 = vld [vmem:[#allocation2 + $0x18] sm:$0xff]
  %v33 = vld [vmem:[%s0] sm:$0xff]
  %v34 = vld [vmem:[%s0 + $0x8] sm:$0xff]
  %v35 = vld [vmem:[%s0 + $0x10] sm:$0xff]
  %v36 = vld [vmem:[%s0 + $0x18] sm:$0xff]
  %v37 = vld [vmem:[%s1] sm:$0xf]
  %v38 = vld [vmem:[%s1 + $0x4] sm:$0xf]
  %v39 = vld [vmem:[%s1 + $0x8] sm:$0xf]
  %v40 = vld [vmem:[%s1 + $0xc] sm:$0xf]
  %v41 = vld [vmem:[%s1 + $0x10] sm:$0xf]
  %v42 = vld [vmem:[%s1 + $0x14] sm:$0xf]
  %v43 = vld [vmem:[%s1 + $0x18] sm:$0xf]
  %v44 = vld [vmem:[%s1 + $0x1c] sm:$0xf]
  %v45 = vld [vmem:[%s1 + $0x20] sm:$0xf]
  %v46 = vld [vmem:[%s1 + $0x24] sm:$0xf]
  %v47 = vld [vmem:[%s1 + $0x28] sm:$0xf]
  %v48 = vld [vmem:[%s1 + $0x2c] sm:$0xf]
  %v49 = vld [vmem:[%s1 + $0x30] sm:$0xf]
  %v50 = vld [vmem:[%s1 + $0x34] sm:$0xf]
  %v51 = vld [vmem:[%s1 + $0x38] sm:$0xf]
  %v52 = vld [vmem:[%s1 + $0x3c] sm:$0xf]
  %v53 = vld [vmem:[%s1 + $0x40] sm:$0xf]
  %v54 = vld [vmem:[%s1 + $0x44] sm:$0xf]
  %v55 = vld [vmem:[%s1 + $0x48] sm:$0xf]
  %v56 = vld [vmem:[%s1 + $0x4c] sm:$0xf]
  %v57 = vld [vmem:[%s1 + $0x50] sm:$0xf]
  %v58 = vld [vmem:[%s1 + $0x54] sm:$0xf]
  %v59 = vld [vmem:[%s1 + $0x58] sm:$0xf]
  %v60 = vld [vmem:[%s1 + $0x5c] sm:$0xf]
  %v61 = vld [vmem:[%s1 + $0x60] sm:$0xf]
  %v62 = vld [vmem:[%s1 + $0x64] sm:$0xf]
  %v63 = vld [vmem:[%s1 + $0x68] sm:$0xf]
  %v64 = vld [vmem:[%s1 + $0x6c] sm:$0xf]
  %v65 = vld [vmem:[%s1 + $0x70] sm:$0xf]
  %v66 = vld [vmem:[%s1 + $0x74] sm:$0xf]
  %v67 = vld [vmem:[%s1 + $0x78] sm:$0xf]
  %v68 = vld [vmem:[%s1 + $0x7c] sm:$0xf]
  %v73 = vunpack.c.l.b16 %v33
  %v74 = vunpack.c.h.b16 %v33
  %v75 = vunpack.c.l.b16 %v34
  %v76 = vunpack.c.h.b16 %v34
  %v77 = vunpack.c.l.b16 %v35
  %v78 = vunpack.c.h.b16 %v35
  %v79 = vunpack.c.l.b16 %v36
  %v80 = vunpack.c.h.b16 %v36
  %v81 = vpack.c.b16 %v75, %v73
  %v82 = vpack.c.b16 %v76, %v74
  %v83 = vpack.c.b16 %v79, %v77
  %v84 = vpack.c.b16 %v80, %v78
  %v121 = vunpack.c.l.b16 %v37
  %v122 = vunpack.c.l.b16 %v38
  %v123 = vunpack.c.l.b16 %v39
  %v124 = vunpack.c.l.b16 %v40
  %v125 = vunpack.c.l.b16 %v41
  %v126 = vunpack.c.l.b16 %v42
  %v127 = vunpack.c.l.b16 %v43
  %v128 = vunpack.c.l.b16 %v44
  %v129 = vunpack.c.l.b16 %v45
  %v130 = vunpack.c.l.b16 %v46
  %v131 = vunpack.c.l.b16 %v47
  %v132 = vunpack.c.l.b16 %v48
  %v133 = vunpack.c.l.b16 %v49
  %v134 = vunpack.c.l.b16 %v50
  %v135 = vunpack.c.l.b16 %v51
  %v136 = vunpack.c.l.b16 %v52
  %v137 = vunpack.c.l.b16 %v53
  %v138 = vunpack.c.l.b16 %v54
  %v139 = vunpack.c.l.b16 %v55
  %v140 = vunpack.c.l.b16 %v56
  %v141 = vunpack.c.l.b16 %v57
  %v142 = vunpack.c.l.b16 %v58
  %v143 = vunpack.c.l.b16 %v59
  %v144 = vunpack.c.l.b16 %v60
  %v145 = vunpack.c.l.b16 %v61
  %v146 = vunpack.c.l.b16 %v62
  %v147 = vunpack.c.l.b16 %v63
  %v148 = vunpack.c.l.b16 %v64
  %v149 = vunpack.c.l.b16 %v65
  %v150 = vunpack.c.l.b16 %v66
  %v151 = vunpack.c.l.b16 %v67
  %v152 = vunpack.c.l.b16 %v68
  %v153 = vpack.c.b16 %v122, %v121
  %v154 = vpack.c.b16 %v124, %v123
  %v155 = vpack.c.b16 %v126, %v125
  %v156 = vpack.c.b16 %v128, %v127
  %v157 = vpack.c.b16 %v130, %v129
  %v158 = vpack.c.b16 %v132, %v131
  %v159 = vpack.c.b16 %v134, %v133
  %v160 = vpack.c.b16 %v136, %v135
  %v161 = vpack.c.b16 %v138, %v137
  %v162 = vpack.c.b16 %v140, %v139
  %v163 = vpack.c.b16 %v142, %v141
  %v164 = vpack.c.b16 %v144, %v143
  %v165 = vpack.c.b16 %v146, %v145
  %v166 = vpack.c.b16 %v148, %v147
  %v167 = vpack.c.b16 %v150, %v149
  %v168 = vpack.c.b16 %v152, %v151
  %185 = vmatprep.subr.bf16.mxu0 0
  %186 = vmatpush1.bf16.msra.mxu0 %v153
  %187 = vmatprep.subr.bf16.mxu0 0
  %188 = vmatpush1.bf16.msra.mxu0 %v154
  %189 = vmatprep.subr.bf16.mxu0 0
  %190 = vmatpush1.bf16.msra.mxu0 %v155
  %191 = vmatprep.subr.bf16.mxu0 0
  %192 = vmatpush1.bf16.msra.mxu0 %v156
  %193 = vmatprep.subr.bf16.mxu0 0
  %194 = vmatpush1.bf16.msra.mxu0 %v157
  %195 = vmatprep.subr.bf16.mxu0 0
  %196 = vmatpush1.bf16.msra.mxu0 %v158
  %197 = vmatprep.subr.bf16.mxu0 0
  %198 = vmatpush1.bf16.msra.mxu0 %v159
  %199 = vmatprep.subr.bf16.mxu0 0
  %200 = vmatpush1.bf16.msra.mxu0 %v160
  %201 = vmatprep.subr.bf16.mxu0 0
  %202 = vmatpush1.bf16.msra.mxu0 %v161
  %203 = vmatprep.subr.bf16.mxu0 0
  %204 = vmatpush1.bf16.msra.mxu0 %v162
  %205 = vmatprep.subr.bf16.mxu0 0
  %206 = vmatpush1.bf16.msra.mxu0 %v163
  %207 = vmatprep.subr.bf16.mxu0 0
  %208 = vmatpush1.bf16.msra.mxu0 %v164
  %209 = vmatprep.subr.bf16.mxu0 0
  %210 = vmatpush1.bf16.msra.mxu0 %v165
  %211 = vmatprep.subr.bf16.mxu0 0
  %212 = vmatpush1.bf16.msra.mxu0 %v166
  %213 = vmatprep.subr.bf16.mxu0 0
  %214 = vmatpush1.bf16.msra.mxu0 %v167
  %215 = vmatprep.subr.bf16.mxu0 0
  %216 = vmatpush1.bf16.msra.mxu0 %v168
  %217 = vmatprep.mubr.bf16.mxu0 %v82
  %218 = vmatmul.mubr.bf16.gmra.mrb[0].mxu0 %v81
  %v219 = vpop.f32.mrb[0].mxu0
  %v220 = vadd.f32 0.0, %v219
  %v221 = vpop.f32.mrb[0].mxu0
  %v222 = vpop.f32.mrb[0].mxu0
  %v223 = vadd.f32 0.0, %v222
  %v224 = vpop.f32.mrb[0].mxu0
  %225 = vmatprep.mubr.bf16.mxu0 %v84
  %226 = vmatmul.mubr.bf16.gmra.mrb[0].mxu0 %v83
  %v227 = vpop.f32.mrb[0].mxu0
  %v228 = vadd.f32 0.0, %v227
  %v229 = vpop.f32.mrb[0].mxu0
  %v230 = vpop.f32.mrb[0].mxu0
  %v231 = vadd.f32 0.0, %v230
  %v232 = vpop.f32.mrb[0].mxu0
  %233 = vdwg.mxu0
  %v234 = vadd.f32 %v29, %v220
  %v235 = vadd.f32 %v30, %v223
  %v236 = vadd.f32 %v31, %v228
  %v237 = vadd.f32 %v32, %v231
  %238 = vst [vmem:[#allocation2] sm:$0xff] %v234
  %239 = vst [vmem:[#allocation2 + $0x8] sm:$0xff] %v235
  %240 = vst [vmem:[#allocation2 + $0x10] sm:$0xff] %v236
  %241 = vst [vmem:[#allocation2 + $0x18] sm:$0xff] %v237
  // Predicated region
  $region26: #{resnet_forward.21} parent=0 // pred_check
    %p242 = pneg %p21
  $region27: #{resnet_forward.21} parent=0 // pred_check_branch
    %244 = sbr.rel (%p242) target = $region29
  $region28: #{resnet_forward.21} parent=0 // pred_region
    %v245 = vld [vmem:[#allocation2] sm:$0xff]
    %v246 = vld [vmem:[#allocation2 + $0x8] sm:$0xff]
    %v247 = vld [vmem:[#allocation2 + $0x10] sm:$0xff]
    %v248 = vld [vmem:[#allocation2 + $0x18] sm:$0xff]
    %v249 = vld [vmem:[%s2] sm:$0x1]
    %v251 = vlaneseq
    %v252 = vshrl.u32 %v251, 7
    %v253 = vsub.s32 0, %v252
    %v254 = vrot.slane %v249, %v253
    %v256 = vmul.f32 %v245, %v254
    %v257 = vmul.f32 %v246, %v254
    %v258 = vmul.f32 %v247, %v254
    %v259 = vmul.f32 %v248, %v254
    %v260 = vld [vmem:[%s3] sm:$0x1]
    %v262 = vlaneseq
    %v263 = vshrl.u32 %v262, 7
    %v264 = vsub.s32 0, %v263
    %v265 = vrot.slane %v260, %v264
    %v267 = vadd.f32 %v256, %v265
    %v268 = vadd.f32 %v257, %v265
    %v269 = vadd.f32 %v258, %v265
    %v270 = vadd.f32 %v259, %v265
    %v271 = vld [vmem:[%s4] sm:$0xf]
    %v272 = vld [vmem:[%s4 + $0x4] sm:$0xf]
    %v273 = vld [vmem:[%s4 + $0x8] sm:$0xf]
    %v274 = vld [vmem:[%s4 + $0xc] sm:$0xf]
    %v275 = vunpack.c.l.bf16 %v271
    %v276 = vunpack.c.l.bf16 %v272
    %v277 = vunpack.c.l.bf16 %v273
    %v278 = vunpack.c.l.bf16 %v274
    %v279 = vadd.f32 %v267, %v275
    %v280 = vadd.f32 %v268, %v276
    %v281 = vadd.f32 %v269, %v277
    %v282 = vadd.f32 %v270, %v278
    %v283 = vmax.f32 %v279, 0.0
    %v284 = vmax.f32 %v280, 0.0
    %v285 = vmax.f32 %v281, 0.0
    %v286 = vmax.f32 %v282, 0.0
    %v287 = vpack.c.bf16 %v284, %v283
    %v288 = vpack.c.bf16 %v286, %v285
    %v291 = vunpack.c.l.b16 %v287
    %v292 = vunpack.c.h.b16 %v287
    %v293 = vunpack.c.l.b16 %v288
    %v294 = vunpack.c.h.b16 %v288
    %v295 = vpack.c.b16 %v291, %v291
    %v296 = vpack.c.b16 %v292, %v292
    %v297 = vpack.c.b16 %v293, %v293
    %v298 = vpack.c.b16 %v294, %v294
    %303 = vst [vmem:[%s5] sm:$0xf] %v295
    %304 = vst [vmem:[%s5 + $0x4] sm:$0xf] %v296
    %305 = vst [vmem:[%s5 + $0x8] sm:$0xf] %v297
    %306 = vst [vmem:[%s5 + $0xc] sm:$0xf] %v298
  $region29: #{resnet_forward.21} parent=0 // pred_fallthru
    _
  // Predicated region
  $region30: #{resnet_forward.21} parent=0 // pred_check
    _
  $region31: #{resnet_forward.21} parent=0 // pred_check_branch
    %308 = sbr.rel (0) target = $region33
  $region32: #{resnet_forward.21} parent=0 // pred_region
    _
  $region33: #{resnet_forward.21} parent=0 // pred_fallthru
    _
  // Predicated region
  $region34: #{resnet_forward.21} parent=0 // pred_check
    _
  $region35: #{resnet_forward.21} parent=0 // pred_check_branch
    %310 = sbr.rel (0) target = $region37
  $region36: #{resnet_forward.21} parent=0 // pred_region
    _
  $region37: #{resnet_forward.21} parent=0 // pred_fallthru
    _

// kernel: resnet_forward.22
$region0: #{resnet_forward.22}
  #allocation0 [shape = 'u32[]', space=smem, size = 0x4, offset = 0x4, fixed_abs, tag = 'smem constant byte address 0x4 - core index']
  #allocation1 [shape = 'u32[144,128]{1,0:T(1,128)}', space=vmem, size = 0x12000, scoped, tag = 'internal scratch']
  #allocation2 [shape = 'f32[8,128]{1,0:T(8,128)}', space=vmem, size = 0x1000, scoped, tag = 'scratch operand']
  %s0 = inlined_call_operand.vmem [shape: bf16[8,256], index: 0, kind: input, shape index: {}]
  %s1 = inlined_call_operand.vmem [shape: bf16[256,128], index: 1, kind: input, shape index: {}]
  %s2 = inlined_call_operand.vmem [shape: f32[1,128], index: 2, kind: input, shape index: {}]
  %s3 = inlined_call_operand.vmem [shape: f32[1,128], index: 3, kind: input, shape index: {}]
  %s4 = inlined_call_operand.vmem [shape: bf16[8,128], index: 4, kind: output, shape index: {}]
  %s5 = sld [smem:[#allocation0]]
  $region34: #{resnet_forward.22} parent=0
    _
  %s7 = ssub.s32 1, %s5
  %s8 = scalar_select 0, %s7, %s5
  // Predicated region
  $region2: #{resnet_forward.22} parent=0 // pred_check
    _
  $region3: #{resnet_forward.22} parent=0 // pred_check_branch
    %10 = sbr.rel (0) target = $region5
  $region4: #{resnet_forward.22} parent=0 // pred_region
    _
  $region5: #{resnet_forward.22} parent=0 // pred_fallthru
    _
  // Predicated region
  $region6: #{resnet_forward.22} parent=0 // pred_check
    _
  $region7: #{resnet_forward.22} parent=0 // pred_check_branch
    %12 = sbr.rel (0) target = $region9
  $region8: #{resnet_forward.22} parent=0 // pred_region
    _
  $region9: #{resnet_forward.22} parent=0 // pred_fallthru
    _
  // Predicated region
  $region10: #{resnet_forward.22} parent=0 // pred_check
    _
  $region11: #{resnet_forward.22} parent=0 // pred_check_branch
    %14 = sbr.rel (0) target = $region13
  $region12: #{resnet_forward.22} parent=0 // pred_region
    _
  $region13: #{resnet_forward.22} parent=0 // pred_fallthru
    _
  // Predicated region
  $region14: #{resnet_forward.22} parent=0 // pred_check
    _
  $region15: #{resnet_forward.22} parent=0 // pred_check_branch
    %16 = sbr.rel (0) target = $region17
  $region16: #{resnet_forward.22} parent=0 // pred_region
    _
  $region17: #{resnet_forward.22} parent=0 // pred_fallthru
    _
  %p18 = scmp.eq.s32.totalorder 0, 0
  // Predicated region
  $region18: #{resnet_forward.22} parent=0 // pred_check
    %p19 = pneg %p18
  $region19: #{resnet_forward.22} parent=0 // pred_check_branch
    %21 = sbr.rel (%p19) target = $region21
  $region20: #{resnet_forward.22} parent=0 // pred_region
    %22 = vst [vmem:[#allocation2] sm:$0xff] 0.0
  $region21: #{resnet_forward.22} parent=0 // pred_fallthru
    _
  %v23 = vld [vmem:[#allocation2] sm:$0xff]
  %v24 = vld [vmem:[%s0] sm:$0xff]
  %v25 = vld [vmem:[%s1] sm:$0xf]
  %v26 = vld [vmem:[%s1 + $0x4] sm:$0xf]
  %v27 = vld [vmem:[%s1 + $0x8] sm:$0xf]
  %v28 = vld [vmem:[%s1 + $0xc] sm:$0xf]
  %v29 = vld [vmem:[%s1 + $0x10] sm:$0xf]
  %v30 = vld [vmem:[%s1 + $0x14] sm:$0xf]
  %v31 = vld [vmem:[%s1 + $0x18] sm:$0xf]
  %v32 = vld [vmem:[%s1 + $0x1c] sm:$0xf]
  %v33 = vld [vmem:[%s1 + $0x20] sm:$0xf]
  %v34 = vld [vmem:[%s1 + $0x24] sm:$0xf]
  %v35 = vld [vmem:[%s1 + $0x28] sm:$0xf]
  %v36 = vld [vmem:[%s1 + $0x2c] sm:$0xf]
  %v37 = vld [vmem:[%s1 + $0x30] sm:$0xf]
  %v38 = vld [vmem:[%s1 + $0x34] sm:$0xf]
  %v39 = vld [vmem:[%s1 + $0x38] sm:$0xf]
  %v40 = vld [vmem:[%s1 + $0x3c] sm:$0xf]
  %v41 = vld [vmem:[%s1 + $0x40] sm:$0xf]
  %v42 = vld [vmem:[%s1 + $0x44] sm:$0xf]
  %v43 = vld [vmem:[%s1 + $0x48] sm:$0xf]
  %v44 = vld [vmem:[%s1 + $0x4c] sm:$0xf]
  %v45 = vld [vmem:[%s1 + $0x50] sm:$0xf]
  %v46 = vld [vmem:[%s1 + $0x54] sm:$0xf]
  %v47 = vld [vmem:[%s1 + $0x58] sm:$0xf]
  %v48 = vld [vmem:[%s1 + $0x5c] sm:$0xf]
  %v49 = vld [vmem:[%s1 + $0x60] sm:$0xf]
  %v50 = vld [vmem:[%s1 + $0x64] sm:$0xf]
  %v51 = vld [vmem:[%s1 + $0x68] sm:$0xf]
  %v52 = vld [vmem:[%s1 + $0x6c] sm:$0xf]
  %v53 = vld [vmem:[%s1 + $0x70] sm:$0xf]
  %v54 = vld [vmem:[%s1 + $0x74] sm:$0xf]
  %v55 = vld [vmem:[%s1 + $0x78] sm:$0xf]
  %v56 = vld [vmem:[%s1 + $0x7c] sm:$0xf]
  %v58 = vunpack.c.l.b16 %v24
  %v59 = vunpack.c.h.b16 %v24
  %v60 = vpack.c.b16 %v58, %v58
  %v61 = vpack.c.b16 %v59, %v59
  %v96 = vunpack.c.l.b16 %v25
  %v97 = vunpack.c.l.b16 %v26
  %v98 = vunpack.c.l.b16 %v27
  %v99 = vunpack.c.l.b16 %v28
  %v100 = vunpack.c.l.b16 %v29
  %v101 = vunpack.c.l.b16 %v30
  %v102 = vunpack.c.l.b16 %v31
  %v103 = vunpack.c.l.b16 %v32
  %v104 = vunpack.c.l.b16 %v33
  %v105 = vunpack.c.l.b16 %v34
  %v106 = vunpack.c.l.b16 %v35
  %v107 = vunpack.c.l.b16 %v36
  %v108 = vunpack.c.l.b16 %v37
  %v109 = vunpack.c.l.b16 %v38
  %v110 = vunpack.c.l.b16 %v39
  %v111 = vunpack.c.l.b16 %v40
  %v112 = vunpack.c.l.b16 %v41
  %v113 = vunpack.c.l.b16 %v42
  %v114 = vunpack.c.l.b16 %v43
  %v115 = vunpack.c.l.b16 %v44
  %v116 = vunpack.c.l.b16 %v45
  %v117 = vunpack.c.l.b16 %v46
  %v118 = vunpack.c.l.b16 %v47
  %v119 = vunpack.c.l.b16 %v48
  %v120 = vunpack.c.l.b16 %v49
  %v121 = vunpack.c.l.b16 %v50
  %v122 = vunpack.c.l.b16 %v51
  %v123 = vunpack.c.l.b16 %v52
  %v124 = vunpack.c.l.b16 %v53
  %v125 = vunpack.c.l.b16 %v54
  %v126 = vunpack.c.l.b16 %v55
  %v127 = vunpack.c.l.b16 %v56
  %v128 = vpack.c.b16 %v97, %v96
  %v129 = vpack.c.b16 %v99, %v98
  %v130 = vpack.c.b16 %v101, %v100
  %v131 = vpack.c.b16 %v103, %v102
  %v132 = vpack.c.b16 %v105, %v104
  %v133 = vpack.c.b16 %v107, %v106
  %v134 = vpack.c.b16 %v109, %v108
  %v135 = vpack.c.b16 %v111, %v110
  %v136 = vpack.c.b16 %v113, %v112
  %v137 = vpack.c.b16 %v115, %v114
  %v138 = vpack.c.b16 %v117, %v116
  %v139 = vpack.c.b16 %v119, %v118
  %v140 = vpack.c.b16 %v121, %v120
  %v141 = vpack.c.b16 %v123, %v122
  %v142 = vpack.c.b16 %v125, %v124
  %v143 = vpack.c.b16 %v127, %v126
  %160 = vmatprep.subr.bf16.mxu0 0
  %161 = vmatpush1.bf16.msra.mxu0 %v128
  %162 = vmatprep.subr.bf16.mxu0 0
  %163 = vmatpush1.bf16.msra.mxu0 %v129
  %164 = vmatprep.subr.bf16.mxu0 0
  %165 = vmatpush1.bf16.msra.mxu0 %v130
  %166 = vmatprep.subr.bf16.mxu0 0
  %167 = vmatpush1.bf16.msra.mxu0 %v131
  %168 = vmatprep.subr.bf16.mxu0 0
  %169 = vmatpush1.bf16.msra.mxu0 %v132
  %170 = vmatprep.subr.bf16.mxu0 0
  %171 = vmatpush1.bf16.msra.mxu0 %v133
  %172 = vmatprep.subr.bf16.mxu0 0
  %173 = vmatpush1.bf16.msra.mxu0 %v134
  %174 = vmatprep.subr.bf16.mxu0 0
  %175 = vmatpush1.bf16.msra.mxu0 %v135
  %176 = vmatprep.subr.bf16.mxu0 0
  %177 = vmatpush1.bf16.msra.mxu0 %v136
  %178 = vmatprep.subr.bf16.mxu0 0
  %179 = vmatpush1.bf16.msra.mxu0 %v137
  %180 = vmatprep.subr.bf16.mxu0 0
  %181 = vmatpush1.bf16.msra.mxu0 %v138
  %182 = vmatprep.subr.bf16.mxu0 0
  %183 = vmatpush1.bf16.msra.mxu0 %v139
  %184 = vmatprep.subr.bf16.mxu0 0
  %185 = vmatpush1.bf16.msra.mxu0 %v140
  %186 = vmatprep.subr.bf16.mxu0 0
  %187 = vmatpush1.bf16.msra.mxu0 %v141
  %188 = vmatprep.subr.bf16.mxu0 0
  %189 = vmatpush1.bf16.msra.mxu0 %v142
  %190 = vmatprep.subr.bf16.mxu0 0
  %191 = vmatpush1.bf16.msra.mxu0 %v143
  %192 = vmatprep.mubr.bf16.mxu0 %v61
  %193 = vmatmul.mubr.bf16.gmra.mrb[0].mxu0 %v60
  %v194 = vpop.f32.mrb[0].mxu0
  %v195 = vadd.f32 0.0, %v194
  %v196 = vpop.f32.mrb[0].mxu0
  %v197 = vpop.f32.mrb[0].mxu0
  %v198 = vpop.f32.mrb[0].mxu0
  %199 = vdwg.mxu0
  %v200 = vadd.f32 %v23, %v195
  %201 = vst [vmem:[#allocation2] sm:$0xff] %v200
  // Predicated region
  $region22: #{resnet_forward.22} parent=0 // pred_check
    %p202 = pneg %p18
  $region23: #{resnet_forward.22} parent=0 // pred_check_branch
    %204 = sbr.rel (%p202) target = $region25
  $region24: #{resnet_forward.22} parent=0 // pred_region
    %v205 = vld [vmem:[#allocation2] sm:$0xff]
    %v206 = vld [vmem:[%s2] sm:$0x1]
    %v208 = vlaneseq
    %v209 = vshrl.u32 %v208, 7
    %v210 = vsub.s32 0, %v209
    %v211 = vrot.slane %v206, %v210
    %v213 = vmul.f32 %v205, %v211
    %v214 = vld [vmem:[%s3] sm:$0x1]
    %v216 = vlaneseq
    %v217 = vshrl.u32 %v216, 7
    %v218 = vsub.s32 0, %v217
    %v219 = vrot.slane %v214, %v218
    %v221 = vadd.f32 %v213, %v219
    %v222 = vmax.f32 %v221, 0.0
    %v223 = vpack.c.bf16 %v222, %v222
    %224 = vst [vmem:[%s4] sm:$0xf] %v223
  $region25: #{resnet_forward.22} parent=0 // pred_fallthru
    _
  // Predicated region
  $region26: #{resnet_forward.22} parent=0 // pred_check
    _
  $region27: #{resnet_forward.22} parent=0 // pred_check_branch
    %226 = sbr.rel (0) target = $region29
  $region28: #{resnet_forward.22} parent=0 // pred_region
    _
  $region29: #{resnet_forward.22} parent=0 // pred_fallthru
    _
  // Predicated region
  $region30: #{resnet_forward.22} parent=0 // pred_check
    _
  $region31: #{resnet_forward.22} parent=0 // pred_check_branch
    %228 = sbr.rel (0) target = $region33
  $region32: #{resnet_forward.22} parent=0 // pred_region
    _
  $region33: #{resnet_forward.22} parent=0 // pred_fallthru
    _

// kernel: resnet_forward.24
$region0: #{resnet_forward.24}
  #allocation0 [shape = 'u32[]', space=smem, size = 0x4, offset = 0x4, fixed_abs, tag = 'smem constant byte address 0x4 - core index']
  #allocation1 [shape = 'u32[144,128]{1,0:T(1,128)}', space=vmem, size = 0x12000, scoped, tag = 'internal scratch']
  #allocation2 [shape = 'f32[8,128]{1,0:T(8,128)}', space=vmem, size = 0x1000, scoped, tag = 'scratch operand']
  %s0 = inlined_call_operand.vmem [shape: bf16[8,384], index: 0, kind: input, shape index: {}]
  %s1 = inlined_call_operand.vmem [shape: bf16[384,128], index: 1, kind: input, shape index: {}]
  %s2 = inlined_call_operand.vmem [shape: f32[1,128], index: 2, kind: input, shape index: {}]
  %s3 = inlined_call_operand.vmem [shape: f32[1,128], index: 3, kind: input, shape index: {}]
  %s4 = inlined_call_operand.vmem [shape: bf16[8,128], index: 4, kind: input, shape index: {}]
  %s5 = inlined_call_operand.vmem [shape: bf16[8,128], index: 5, kind: output, shape index: {}]
  %s6 = sld [smem:[#allocation0]]
  $region38: #{resnet_forward.24} parent=0
    _
  %s8 = ssub.s32 1, %s6
  %s9 = scalar_select 0, %s8, %s6
  // Predicated region
  $region2: #{resnet_forward.24} parent=0 // pred_check
    _
  $region3: #{resnet_forward.24} parent=0 // pred_check_branch
    %11 = sbr.rel (0) target = $region5
  $region4: #{resnet_forward.24} parent=0 // pred_region
    _
  $region5: #{resnet_forward.24} parent=0 // pred_fallthru
    _
  // Predicated region
  $region6: #{resnet_forward.24} parent=0 // pred_check
    _
  $region7: #{resnet_forward.24} parent=0 // pred_check_branch
    %13 = sbr.rel (0) target = $region9
  $region8: #{resnet_forward.24} parent=0 // pred_region
    _
  $region9: #{resnet_forward.24} parent=0 // pred_fallthru
    _
  // Predicated region
  $region10: #{resnet_forward.24} parent=0 // pred_check
    _
  $region11: #{resnet_forward.24} parent=0 // pred_check_branch
    %15 = sbr.rel (0) target = $region13
  $region12: #{resnet_forward.24} parent=0 // pred_region
    _
  $region13: #{resnet_forward.24} parent=0 // pred_fallthru
    _
  // Predicated region
  $region14: #{resnet_forward.24} parent=0 // pred_check
    _
  $region15: #{resnet_forward.24} parent=0 // pred_check_branch
    %17 = sbr.rel (0) target = $region17
  $region16: #{resnet_forward.24} parent=0 // pred_region
    _
  $region17: #{resnet_forward.24} parent=0 // pred_fallthru
    _
  // Predicated region
  $region18: #{resnet_forward.24} parent=0 // pred_check
    _
  $region19: #{resnet_forward.24} parent=0 // pred_check_branch
    %19 = sbr.rel (0) target = $region21
  $region20: #{resnet_forward.24} parent=0 // pred_region
    _
  $region21: #{resnet_forward.24} parent=0 // pred_fallthru
    _
  %p21 = scmp.eq.s32.totalorder 0, 0
  // Predicated region
  $region22: #{resnet_forward.24} parent=0 // pred_check
    %p22 = pneg %p21
  $region23: #{resnet_forward.24} parent=0 // pred_check_branch
    %24 = sbr.rel (%p22) target = $region25
  $region24: #{resnet_forward.24} parent=0 // pred_region
    %25 = vst [vmem:[#allocation2] sm:$0xff] 0.0
  $region25: #{resnet_forward.24} parent=0 // pred_fallthru
    _
  %v26 = vld [vmem:[#allocation2] sm:$0xff]
  %v27 = vld [vmem:[%s0] sm:$0xff]
  %v28 = vld [vmem:[%s0 + $0x8] sm:$0xf]
  %v29 = vld [vmem:[%s1] sm:$0xf]
  %v30 = vld [vmem:[%s1 + $0x4] sm:$0xf]
  %v31 = vld [vmem:[%s1 + $0x8] sm:$0xf]
  %v32 = vld [vmem:[%s1 + $0xc] sm:$0xf]
  %v33 = vld [vmem:[%s1 + $0x10] sm:$0xf]
  %v34 = vld [vmem:[%s1 + $0x14] sm:$0xf]
  %v35 = vld [vmem:[%s1 + $0x18] sm:$0xf]
  %v36 = vld [vmem:[%s1 + $0x1c] sm:$0xf]
  %v37 = vld [vmem:[%s1 + $0x20] sm:$0xf]
  %v38 = vld [vmem:[%s1 + $0x24] sm:$0xf]
  %v39 = vld [vmem:[%s1 + $0x28] sm:$0xf]
  %v40 = vld [vmem:[%s1 + $0x2c] sm:$0xf]
  %v41 = vld [vmem:[%s1 + $0x30] sm:$0xf]
  %v42 = vld [vmem:[%s1 + $0x34] sm:$0xf]
  %v43 = vld [vmem:[%s1 + $0x38] sm:$0xf]
  %v44 = vld [vmem:[%s1 + $0x3c] sm:$0xf]
  %v45 = vld [vmem:[%s1 + $0x40] sm:$0xf]
  %v46 = vld [vmem:[%s1 + $0x44] sm:$0xf]
  %v47 = vld [vmem:[%s1 + $0x48] sm:$0xf]
  %v48 = vld [vmem:[%s1 + $0x4c] sm:$0xf]
  %v49 = vld [vmem:[%s1 + $0x50] sm:$0xf]
  %v50 = vld [vmem:[%s1 + $0x54] sm:$0xf]
  %v51 = vld [vmem:[%s1 + $0x58] sm:$0xf]
  %v52 = vld [vmem:[%s1 + $0x5c] sm:$0xf]
  %v53 = vld [vmem:[%s1 + $0x60] sm:$0xf]
  %v54 = vld [vmem:[%s1 + $0x64] sm:$0xf]
  %v55 = vld [vmem:[%s1 + $0x68] sm:$0xf]
  %v56 = vld [vmem:[%s1 + $0x6c] sm:$0xf]
  %v57 = vld [vmem:[%s1 + $0x70] sm:$0xf]
  %v58 = vld [vmem:[%s1 + $0x74] sm:$0xf]
  %v59 = vld [vmem:[%s1 + $0x78] sm:$0xf]
  %v60 = vld [vmem:[%s1 + $0x7c] sm:$0xf]
  %v61 = vld [vmem:[%s1 + $0x80] sm:$0xf]
  %v62 = vld [vmem:[%s1 + $0x84] sm:$0xf]
  %v63 = vld [vmem:[%s1 + $0x88] sm:$0xf]
  %v64 = vld [vmem:[%s1 + $0x8c] sm:$0xf]
  %v65 = vld [vmem:[%s1 + $0x90] sm:$0xf]
  %v66 = vld [vmem:[%s1 + $0x94] sm:$0xf]
  %v67 = vld [vmem:[%s1 + $0x98] sm:$0xf]
  %v68 = vld [vmem:[%s1 + $0x9c] sm:$0xf]
  %v69 = vld [vmem:[%s1 + $0xa0] sm:$0xf]
  %v70 = vld [vmem:[%s1 + $0xa4] sm:$0xf]
  %v71 = vld [vmem:[%s1 + $0xa8] sm:$0xf]
  %v72 = vld [vmem:[%s1 + $0xac] sm:$0xf]
  %v73 = vld [vmem:[%s1 + $0xb0] sm:$0xf]
  %v74 = vld [vmem:[%s1 + $0xb4] sm:$0xf]
  %v75 = vld [vmem:[%s1 + $0xb8] sm:$0xf]
  %v76 = vld [vmem:[%s1 + $0xbc] sm:$0xf]
  %v79 = vunpack.c.l.b16 %v27
  %v80 = vunpack.c.h.b16 %v27
  %v81 = vunpack.c.l.b16 %v28
  %v82 = vpack.c.b16 %v79, %v79
  %v83 = vpack.c.b16 %v80, %v80
  %v84 = vpack.c.b16 %v81, %v81
  %v136 = vunpack.c.l.b16 %v29
  %v137 = vunpack.c.l.b16 %v30
  %v138 = vunpack.c.l.b16 %v31
  %v139 = vunpack.c.l.b16 %v32
  %v140 = vunpack.c.l.b16 %v33
  %v141 = vunpack.c.l.b16 %v34
  %v142 = vunpack.c.l.b16 %v35
  %v143 = vunpack.c.l.b16 %v36
  %v144 = vunpack.c.l.b16 %v37
  %v145 = vunpack.c.l.b16 %v38
  %v146 = vunpack.c.l.b16 %v39
  %v147 = vunpack.c.l.b16 %v40
  %v148 = vunpack.c.l.b16 %v41
  %v149 = vunpack.c.l.b16 %v42
  %v150 = vunpack.c.l.b16 %v43
  %v151 = vunpack.c.l.b16 %v44
  %v152 = vunpack.c.l.b16 %v45
  %v153 = vunpack.c.l.b16 %v46
  %v154 = vunpack.c.l.b16 %v47
  %v155 = vunpack.c.l.b16 %v48
  %v156 = vunpack.c.l.b16 %v49
  %v157 = vunpack.c.l.b16 %v50
  %v158 = vunpack.c.l.b16 %v51
  %v159 = vunpack.c.l.b16 %v52
  %v160 = vunpack.c.l.b16 %v53
  %v161 = vunpack.c.l.b16 %v54
  %v162 = vunpack.c.l.b16 %v55
  %v163 = vunpack.c.l.b16 %v56
  %v164 = vunpack.c.l.b16 %v57
  %v165 = vunpack.c.l.b16 %v58
  %v166 = vunpack.c.l.b16 %v59
  %v167 = vunpack.c.l.b16 %v60
  %v168 = vunpack.c.l.b16 %v61
  %v169 = vunpack.c.l.b16 %v62
  %v170 = vunpack.c.l.b16 %v63
  %v171 = vunpack.c.l.b16 %v64
  %v172 = vunpack.c.l.b16 %v65
  %v173 = vunpack.c.l.b16 %v66
  %v174 = vunpack.c.l.b16 %v67
  %v175 = vunpack.c.l.b16 %v68
  %v176 = vunpack.c.l.b16 %v69
  %v177 = vunpack.c.l.b16 %v70
  %v178 = vunpack.c.l.b16 %v71
  %v179 = vunpack.c.l.b16 %v72
  %v180 = vunpack.c.l.b16 %v73
  %v181 = vunpack.c.l.b16 %v74
  %v182 = vunpack.c.l.b16 %v75
  %v183 = vunpack.c.l.b16 %v76
  %v184 = vpack.c.b16 %v137, %v136
  %v185 = vpack.c.b16 %v139, %v138
  %v186 = vpack.c.b16 %v141, %v140
  %v187 = vpack.c.b16 %v143, %v142
  %v188 = vpack.c.b16 %v145, %v144
  %v189 = vpack.c.b16 %v147, %v146
  %v190 = vpack.c.b16 %v149, %v148
  %v191 = vpack.c.b16 %v151, %v150
  %v192 = vpack.c.b16 %v153, %v152
  %v193 = vpack.c.b16 %v155, %v154
  %v194 = vpack.c.b16 %v157, %v156
  %v195 = vpack.c.b16 %v159, %v158
  %v196 = vpack.c.b16 %v161, %v160
  %v197 = vpack.c.b16 %v163, %v162
  %v198 = vpack.c.b16 %v165, %v164
  %v199 = vpack.c.b16 %v167, %v166
  %v200 = vpack.c.b16 %v169, %v168
  %v201 = vpack.c.b16 %v171, %v170
  %v202 = vpack.c.b16 %v173, %v172
  %v203 = vpack.c.b16 %v175, %v174
  %v204 = vpack.c.b16 %v177, %v176
  %v205 = vpack.c.b16 %v179, %v178
  %v206 = vpack.c.b16 %v181, %v180
  %v207 = vpack.c.b16 %v183, %v182
  %232 = vmatprep.subr.bf16.mxu0 0
  %233 = vmatpush1.bf16.msra.mxu0 %v184
  %234 = vmatprep.subr.bf16.mxu0 0
  %235 = vmatpush1.bf16.msra.mxu0 %v185
  %236 = vmatprep.subr.bf16.mxu0 0
  %237 = vmatpush1.bf16.msra.mxu0 %v186
  %238 = vmatprep.subr.bf16.mxu0 0
  %239 = vmatpush1.bf16.msra.mxu0 %v187
  %240 = vmatprep.subr.bf16.mxu0 0
  %241 = vmatpush1.bf16.msra.mxu0 %v188
  %242 = vmatprep.subr.bf16.mxu0 0
  %243 = vmatpush1.bf16.msra.mxu0 %v189
  %244 = vmatprep.subr.bf16.mxu0 0
  %245 = vmatpush1.bf16.msra.mxu0 %v190
  %246 = vmatprep.subr.bf16.mxu0 0
  %247 = vmatpush1.bf16.msra.mxu0 %v191
  %248 = vmatprep.subr.bf16.mxu0 0
  %249 = vmatpush1.bf16.msra.mxu0 %v192
  %250 = vmatprep.subr.bf16.mxu0 0
  %251 = vmatpush1.bf16.msra.mxu0 %v193
  %252 = vmatprep.subr.bf16.mxu0 0
  %253 = vmatpush1.bf16.msra.mxu0 %v194
  %254 = vmatprep.subr.bf16.mxu0 0
  %255 = vmatpush1.bf16.msra.mxu0 %v195
  %256 = vmatprep.subr.bf16.mxu0 0
  %257 = vmatpush1.bf16.msra.mxu0 %v196
  %258 = vmatprep.subr.bf16.mxu0 0
  %259 = vmatpush1.bf16.msra.mxu0 %v197
  %260 = vmatprep.subr.bf16.mxu0 0
  %261 = vmatpush1.bf16.msra.mxu0 %v198
  %262 = vmatprep.subr.bf16.mxu0 0
  %263 = vmatpush1.bf16.msra.mxu0 %v199
  %264 = vmatprep.mubr.bf16.mxu0 %v83
  %265 = vmatmul.mubr.bf16.gmra.mrb[0].mxu0 %v82
  %v266 = vpop.f32.mrb[0].mxu0
  %v267 = vadd.f32 0.0, %v266
  %v268 = vpop.f32.mrb[0].mxu0
  %v269 = vpop.f32.mrb[0].mxu0
  %v270 = vpop.f32.mrb[0].mxu0
  %271 = vdwg.mxu0
  %272 = vmatprep.subr.bf16.mxu0 0
  %273 = vmatpush1.bf16.msra.mxu0 %v200
  %274 = vmatprep.subr.bf16.mxu0 0
  %275 = vmatpush1.bf16.msra.mxu0 %v201
  %276 = vmatprep.subr.bf16.mxu0 0
  %277 = vmatpush1.bf16.msra.mxu0 %v202
  %278 = vmatprep.subr.bf16.mxu0 0
  %279 = vmatpush1.bf16.msra.mxu0 %v203
  %280 = vmatprep.subr.bf16.mxu0 0
  %281 = vmatpush1.bf16.msra.mxu0 %v204
  %282 = vmatprep.subr.bf16.mxu0 0
  %283 = vmatpush1.bf16.msra.mxu0 %v205
  %284 = vmatprep.subr.bf16.mxu0 0
  %285 = vmatpush1.bf16.msra.mxu0 %v206
  %286 = vmatprep.subr.bf16.mxu0 0
  %287 = vmatpush1.bf16.msra.mxu0 %v207
  %288 = vmatprep.subr.bf16.mxu0 0
  %289 = vmatpush1.bf16.msra.mxu0 0
  %290 = vmatprep.subr.bf16.mxu0 0
  %291 = vmatpush1.bf16.msra.mxu0 0
  %292 = vmatprep.subr.bf16.mxu0 0
  %293 = vmatpush1.bf16.msra.mxu0 0
  %294 = vmatprep.subr.bf16.mxu0 0
  %295 = vmatpush1.bf16.msra.mxu0 0
  %296 = vmatprep.subr.bf16.mxu0 0
  %297 = vmatpush1.bf16.msra.mxu0 0
  %298 = vmatprep.subr.bf16.mxu0 0
  %299 = vmatpush1.bf16.msra.mxu0 0
  %300 = vmatprep.subr.bf16.mxu0 0
  %301 = vmatpush1.bf16.msra.mxu0 0
  %302 = vmatprep.subr.bf16.mxu0 0
  %303 = vmatpush1.bf16.msra.mxu0 0
  %304 = vmatprep.mubr.bf16.mxu0 0
  %305 = vmatmul.mubr.bf16.gmra.mrb[0].mxu0 %v84
  %v306 = vpop.f32.mrb[0].mxu0
  %v307 = vadd.f32 %v267, %v306
  %v308 = vpop.f32.mrb[0].mxu0
  %v309 = vpop.f32.mrb[0].mxu0
  %v310 = vpop.f32.mrb[0].mxu0
  %311 = vdwg.mxu0
  %v312 = vadd.f32 %v26, %v307
  %313 = vst [vmem:[#allocation2] sm:$0xff] %v312
  // Predicated region
  $region26: #{resnet_forward.24} parent=0 // pred_check
    %p314 = pneg %p21
  $region27: #{resnet_forward.24} parent=0 // pred_check_branch
    %316 = sbr.rel (%p314) target = $region29
  $region28: #{resnet_forward.24} parent=0 // pred_region
    %v317 = vld [vmem:[#allocation2] sm:$0xff]
    %v318 = vld [vmem:[%s2] sm:$0x1]
    %v320 = vlaneseq
    %v321 = vshrl.u32 %v320, 7
    %v322 = vsub.s32 0, %v321
    %v323 = vrot.slane %v318, %v322
    %v325 = vmul.f32 %v317, %v323
    %v326 = vld [vmem:[%s3] sm:$0x1]
    %v328 = vlaneseq
    %v329 = vshrl.u32 %v328, 7
    %v330 = vsub.s32 0, %v329
    %v331 = vrot.slane %v326, %v330
    %v333 = vadd.f32 %v325, %v331
    %v334 = vld [vmem:[%s4] sm:$0xf]
    %v335 = vunpack.c.l.bf16 %v334
    %v336 = vadd.f32 %v333, %v335
    %v337 = vmax.f32 %v336, 0.0
    %v338 = vpack.c.bf16 %v337, %v337
    %339 = vst [vmem:[%s5] sm:$0xf] %v338
  $region29: #{resnet_forward.24} parent=0 // pred_fallthru
    _
  // Predicated region
  $region30: #{resnet_forward.24} parent=0 // pred_check
    _
  $region31: #{resnet_forward.24} parent=0 // pred_check_branch
    %341 = sbr.rel (0) target = $region33
  $region32: #{resnet_forward.24} parent=0 // pred_region
    _
  $region33: #{resnet_forward.24} parent=0 // pred_fallthru
    _
  // Predicated region
  $region34: #{resnet_forward.24} parent=0 // pred_check
    _
  $region35: #{resnet_forward.24} parent=0 // pred_check_branch
    %343 = sbr.rel (0) target = $region37
  $region36: #{resnet_forward.24} parent=0 // pred_region
    _
  $region37: #{resnet_forward.24} parent=0 // pred_fallthru
    _

// kernel: resnet_forward.23
$region0: #{resnet_forward.23}
  #allocation0 [shape = 'u32[]', space=smem, size = 0x4, offset = 0x4, fixed_abs, tag = 'smem constant byte address 0x4 - core index']
  #allocation1 [shape = 'u32[144,128]{1,0:T(1,128)}', space=vmem, size = 0x12000, scoped, tag = 'internal scratch']
  #allocation2 [shape = 'f32[8,128]{1,0:T(8,128)}', space=vmem, size = 0x1000, scoped, tag = 'scratch operand']
  %s0 = inlined_call_operand.vmem [shape: bf16[8,128], index: 0, kind: input, shape index: {}]
  %s1 = inlined_call_operand.vmem [shape: bf16[128,128], index: 1, kind: input, shape index: {}]
  %s2 = inlined_call_operand.vmem [shape: f32[1,128], index: 2, kind: input, shape index: {}]
  %s3 = inlined_call_operand.vmem [shape: f32[1,128], index: 3, kind: input, shape index: {}]
  %s4 = inlined_call_operand.vmem [shape: bf16[8,128], index: 4, kind: output, shape index: {}]
  %s5 = sld [smem:[#allocation0]]
  $region34: #{resnet_forward.23} parent=0
    _
  %s7 = ssub.s32 1, %s5
  %s8 = scalar_select 0, %s7, %s5
  // Predicated region
  $region2: #{resnet_forward.23} parent=0 // pred_check
    _
  $region3: #{resnet_forward.23} parent=0 // pred_check_branch
    %10 = sbr.rel (0) target = $region5
  $region4: #{resnet_forward.23} parent=0 // pred_region
    _
  $region5: #{resnet_forward.23} parent=0 // pred_fallthru
    _
  // Predicated region
  $region6: #{resnet_forward.23} parent=0 // pred_check
    _
  $region7: #{resnet_forward.23} parent=0 // pred_check_branch
    %12 = sbr.rel (0) target = $region9
  $region8: #{resnet_forward.23} parent=0 // pred_region
    _
  $region9: #{resnet_forward.23} parent=0 // pred_fallthru
    _
  // Predicated region
  $region10: #{resnet_forward.23} parent=0 // pred_check
    _
  $region11: #{resnet_forward.23} parent=0 // pred_check_branch
    %14 = sbr.rel (0) target = $region13
  $region12: #{resnet_forward.23} parent=0 // pred_region
    _
  $region13: #{resnet_forward.23} parent=0 // pred_fallthru
    _
  // Predicated region
  $region14: #{resnet_forward.23} parent=0 // pred_check
    _
  $region15: #{resnet_forward.23} parent=0 // pred_check_branch
    %16 = sbr.rel (0) target = $region17
  $region16: #{resnet_forward.23} parent=0 // pred_region
    _
  $region17: #{resnet_forward.23} parent=0 // pred_fallthru
    _
  %p18 = scmp.eq.s32.totalorder 0, 0
  // Predicated region
  $region18: #{resnet_forward.23} parent=0 // pred_check
    %p19 = pneg %p18
  $region19: #{resnet_forward.23} parent=0 // pred_check_branch
    %21 = sbr.rel (%p19) target = $region21
  $region20: #{resnet_forward.23} parent=0 // pred_region
    %22 = vst [vmem:[#allocation2] sm:$0xff] 0.0
  $region21: #{resnet_forward.23} parent=0 // pred_fallthru
    _
  %v23 = vld [vmem:[#allocation2] sm:$0xff]
  %v24 = vld [vmem:[%s0] sm:$0xf]
  %v25 = vld [vmem:[%s1] sm:$0xf]
  %v26 = vld [vmem:[%s1 + $0x4] sm:$0xf]
  %v27 = vld [vmem:[%s1 + $0x8] sm:$0xf]
  %v28 = vld [vmem:[%s1 + $0xc] sm:$0xf]
  %v29 = vld [vmem:[%s1 + $0x10] sm:$0xf]
  %v30 = vld [vmem:[%s1 + $0x14] sm:$0xf]
  %v31 = vld [vmem:[%s1 + $0x18] sm:$0xf]
  %v32 = vld [vmem:[%s1 + $0x1c] sm:$0xf]
  %v33 = vld [vmem:[%s1 + $0x20] sm:$0xf]
  %v34 = vld [vmem:[%s1 + $0x24] sm:$0xf]
  %v35 = vld [vmem:[%s1 + $0x28] sm:$0xf]
  %v36 = vld [vmem:[%s1 + $0x2c] sm:$0xf]
  %v37 = vld [vmem:[%s1 + $0x30] sm:$0xf]
  %v38 = vld [vmem:[%s1 + $0x34] sm:$0xf]
  %v39 = vld [vmem:[%s1 + $0x38] sm:$0xf]
  %v40 = vld [vmem:[%s1 + $0x3c] sm:$0xf]
  %v57 = vunpack.c.l.b16 %v25
  %v58 = vunpack.c.l.b16 %v26
  %v59 = vunpack.c.l.b16 %v27
  %v60 = vunpack.c.l.b16 %v28
  %v61 = vunpack.c.l.b16 %v29
  %v62 = vunpack.c.l.b16 %v30
  %v63 = vunpack.c.l.b16 %v31
  %v64 = vunpack.c.l.b16 %v32
  %v65 = vunpack.c.l.b16 %v33
  %v66 = vunpack.c.l.b16 %v34
  %v67 = vunpack.c.l.b16 %v35
  %v68 = vunpack.c.l.b16 %v36
  %v69 = vunpack.c.l.b16 %v37
  %v70 = vunpack.c.l.b16 %v38
  %v71 = vunpack.c.l.b16 %v39
  %v72 = vunpack.c.l.b16 %v40
  %v73 = vpack.c.b16 %v58, %v57
  %v74 = vpack.c.b16 %v60, %v59
  %v75 = vpack.c.b16 %v62, %v61
  %v76 = vpack.c.b16 %v64, %v63
  %v77 = vpack.c.b16 %v66, %v65
  %v78 = vpack.c.b16 %v68, %v67
  %v79 = vpack.c.b16 %v70, %v69
  %v80 = vpack.c.b16 %v72, %v71
  %89 = vmatprep.subr.bf16.mxu0 0
  %90 = vmatpush1.bf16.msra.mxu0 %v73
  %91 = vmatprep.subr.bf16.mxu0 0
  %92 = vmatpush1.bf16.msra.mxu0 %v74
  %93 = vmatprep.subr.bf16.mxu0 0
  %94 = vmatpush1.bf16.msra.mxu0 %v75
  %95 = vmatprep.subr.bf16.mxu0 0
  %96 = vmatpush1.bf16.msra.mxu0 %v76
  %97 = vmatprep.subr.bf16.mxu0 0
  %98 = vmatpush1.bf16.msra.mxu0 %v77
  %99 = vmatprep.subr.bf16.mxu0 0
  %100 = vmatpush1.bf16.msra.mxu0 %v78
  %101 = vmatprep.subr.bf16.mxu0 0
  %102 = vmatpush1.bf16.msra.mxu0 %v79
  %103 = vmatprep.subr.bf16.mxu0 0
  %104 = vmatpush1.bf16.msra.mxu0 %v80
  %105 = vmatprep.subr.bf16.mxu0 0
  %106 = vmatpush1.bf16.msra.mxu0 0
  %107 = vmatprep.subr.bf16.mxu0 0
  %108 = vmatpush1.bf16.msra.mxu0 0
  %109 = vmatprep.subr.bf16.mxu0 0
  %110 = vmatpush1.bf16.msra.mxu0 0
  %111 = vmatprep.subr.bf16.mxu0 0
  %112 = vmatpush1.bf16.msra.mxu0 0
  %113 = vmatprep.subr.bf16.mxu0 0
  %114 = vmatpush1.bf16.msra.mxu0 0
  %115 = vmatprep.subr.bf16.mxu0 0
  %116 = vmatpush1.bf16.msra.mxu0 0
  %117 = vmatprep.subr.bf16.mxu0 0
  %118 = vmatpush1.bf16.msra.mxu0 0
  %119 = vmatprep.subr.bf16.mxu0 0
  %120 = vmatpush1.bf16.msra.mxu0 0
  %121 = vmatprep.mubr.bf16.mxu0 0
  %122 = vmatmul.mubr.bf16.gmra.mrb[0].mxu0 %v24
  %v123 = vpop.f32.mrb[0].mxu0
  %v124 = vadd.f32 0.0, %v123
  %v125 = vpop.f32.mrb[0].mxu0
  %v126 = vpop.f32.mrb[0].mxu0
  %v127 = vpop.f32.mrb[0].mxu0
  %128 = vdwg.mxu0
  %v129 = vadd.f32 %v23, %v124
  %130 = vst [vmem:[#allocation2] sm:$0xff] %v129
  // Predicated region
  $region22: #{resnet_forward.23} parent=0 // pred_check
    %p131 = pneg %p18
  $region23: #{resnet_forward.23} parent=0 // pred_check_branch
    %133 = sbr.rel (%p131) target = $region25
  $region24: #{resnet_forward.23} parent=0 // pred_region
    %v134 = vld [vmem:[#allocation2] sm:$0xff]
    %v135 = vld [vmem:[%s2] sm:$0x1]
    %v137 = vlaneseq
    %v138 = vshrl.u32 %v137, 7
    %v139 = vsub.s32 0, %v138
    %v140 = vrot.slane %v135, %v139
    %v142 = vmul.f32 %v134, %v140
    %v143 = vld [vmem:[%s3] sm:$0x1]
    %v145 = vlaneseq
    %v146 = vshrl.u32 %v145, 7
    %v147 = vsub.s32 0, %v146
    %v148 = vrot.slane %v143, %v147
    %v150 = vadd.f32 %v142, %v148
    %v151 = vpack.c.bf16 %v150, %v150
    %152 = vst [vmem:[%s4] sm:$0xf] %v151
  $region25: #{resnet_forward.23} parent=0 // pred_fallthru
    _
  // Predicated region
  $region26: #{resnet_forward.23} parent=0 // pred_check
    _
  $region27: #{resnet_forward.23} parent=0 // pred_check_branch
    %154 = sbr.rel (0) target = $region29
  $region28: #{resnet_forward.23} parent=0 // pred_region
    _
  $region29: #{resnet_forward.23} parent=0 // pred_fallthru
    _
  // Predicated region
  $region30: #{resnet_forward.23} parent=0 // pred_check
    _
  $region31: #{resnet_forward.23} parent=0 // pred_check_branch
    %156 = sbr.rel (0) target = $region33
  $region32: #{resnet_forward.23} parent=0 // pred_region
    _
  $region33: #{resnet_forward.23} parent=0 // pred_fallthru
    _

// kernel: resnet_forward.25
$region0: #{resnet_forward.25}
  #allocation0 [shape = 'u32[]', space=smem, size = 0x4, offset = 0x4, fixed_abs, tag = 'smem constant byte address 0x4 - core index']
  #allocation1 [shape = 'u32[144,128]{1,0:T(1,128)}', space=vmem, size = 0x12000, scoped, tag = 'internal scratch']
  #allocation2 [shape = 'f32[8,128]{1,0:T(8,128)}', space=vmem, size = 0x1000, scoped, tag = 'scratch operand']
  %s0 = inlined_call_operand.vmem [shape: bf16[8,384], index: 0, kind: input, shape index: {}]
  %s1 = inlined_call_operand.vmem [shape: bf16[384,128], index: 1, kind: input, shape index: {}]
  %s2 = inlined_call_operand.vmem [shape: f32[1,128], index: 2, kind: input, shape index: {}]
  %s3 = inlined_call_operand.vmem [shape: f32[1,128], index: 3, kind: input, shape index: {}]
  %s4 = inlined_call_operand.vmem [shape: bf16[8,128], index: 4, kind: output, shape index: {}]
  %s5 = sld [smem:[#allocation0]]
  $region34: #{resnet_forward.25} parent=0
    _
  %s7 = ssub.s32 1, %s5
  %s8 = scalar_select 0, %s7, %s5
  // Predicated region
  $region2: #{resnet_forward.25} parent=0 // pred_check
    _
  $region3: #{resnet_forward.25} parent=0 // pred_check_branch
    %10 = sbr.rel (0) target = $region5
  $region4: #{resnet_forward.25} parent=0 // pred_region
    _
  $region5: #{resnet_forward.25} parent=0 // pred_fallthru
    _
  // Predicated region
  $region6: #{resnet_forward.25} parent=0 // pred_check
    _
  $region7: #{resnet_forward.25} parent=0 // pred_check_branch
    %12 = sbr.rel (0) target = $region9
  $region8: #{resnet_forward.25} parent=0 // pred_region
    _
  $region9: #{resnet_forward.25} parent=0 // pred_fallthru
    _
  // Predicated region
  $region10: #{resnet_forward.25} parent=0 // pred_check
    _
  $region11: #{resnet_forward.25} parent=0 // pred_check_branch
    %14 = sbr.rel (0) target = $region13
  $region12: #{resnet_forward.25} parent=0 // pred_region
    _
  $region13: #{resnet_forward.25} parent=0 // pred_fallthru
    _
  // Predicated region
  $region14: #{resnet_forward.25} parent=0 // pred_check
    _
  $region15: #{resnet_forward.25} parent=0 // pred_check_branch
    %16 = sbr.rel (0) target = $region17
  $region16: #{resnet_forward.25} parent=0 // pred_region
    _
  $region17: #{resnet_forward.25} parent=0 // pred_fallthru
    _
  %p18 = scmp.eq.s32.totalorder 0, 0
  // Predicated region
  $region18: #{resnet_forward.25} parent=0 // pred_check
    %p19 = pneg %p18
  $region19: #{resnet_forward.25} parent=0 // pred_check_branch
    %21 = sbr.rel (%p19) target = $region21
  $region20: #{resnet_forward.25} parent=0 // pred_region
    %22 = vst [vmem:[#allocation2] sm:$0xff] 0.0
  $region21: #{resnet_forward.25} parent=0 // pred_fallthru
    _
  %v23 = vld [vmem:[#allocation2] sm:$0xff]
  %v24 = vld [vmem:[%s0] sm:$0xff]
  %v25 = vld [vmem:[%s0 + $0x8] sm:$0xf]
  %v26 = vld [vmem:[%s1] sm:$0xf]
  %v27 = vld [vmem:[%s1 + $0x4] sm:$0xf]
  %v28 = vld [vmem:[%s1 + $0x8] sm:$0xf]
  %v29 = vld [vmem:[%s1 + $0xc] sm:$0xf]
  %v30 = vld [vmem:[%s1 + $0x10] sm:$0xf]
  %v31 = vld [vmem:[%s1 + $0x14] sm:$0xf]
  %v32 = vld [vmem:[%s1 + $0x18] sm:$0xf]
  %v33 = vld [vmem:[%s1 + $0x1c] sm:$0xf]
  %v34 = vld [vmem:[%s1 + $0x20] sm:$0xf]
  %v35 = vld [vmem:[%s1 + $0x24] sm:$0xf]
  %v36 = vld [vmem:[%s1 + $0x28] sm:$0xf]
  %v37 = vld [vmem:[%s1 + $0x2c] sm:$0xf]
  %v38 = vld [vmem:[%s1 + $0x30] sm:$0xf]
  %v39 = vld [vmem:[%s1 + $0x34] sm:$0xf]
  %v40 = vld [vmem:[%s1 + $0x38] sm:$0xf]
  %v41 = vld [vmem:[%s1 + $0x3c] sm:$0xf]
  %v42 = vld [vmem:[%s1 + $0x40] sm:$0xf]
  %v43 = vld [vmem:[%s1 + $0x44] sm:$0xf]
  %v44 = vld [vmem:[%s1 + $0x48] sm:$0xf]
  %v45 = vld [vmem:[%s1 + $0x4c] sm:$0xf]
  %v46 = vld [vmem:[%s1 + $0x50] sm:$0xf]
  %v47 = vld [vmem:[%s1 + $0x54] sm:$0xf]
  %v48 = vld [vmem:[%s1 + $0x58] sm:$0xf]
  %v49 = vld [vmem:[%s1 + $0x5c] sm:$0xf]
  %v50 = vld [vmem:[%s1 + $0x60] sm:$0xf]
  %v51 = vld [vmem:[%s1 + $0x64] sm:$0xf]
  %v52 = vld [vmem:[%s1 + $0x68] sm:$0xf]
  %v53 = vld [vmem:[%s1 + $0x6c] sm:$0xf]
  %v54 = vld [vmem:[%s1 + $0x70] sm:$0xf]
  %v55 = vld [vmem:[%s1 + $0x74] sm:$0xf]
  %v56 = vld [vmem:[%s1 + $0x78] sm:$0xf]
  %v57 = vld [vmem:[%s1 + $0x7c] sm:$0xf]
  %v58 = vld [vmem:[%s1 + $0x80] sm:$0xf]
  %v59 = vld [vmem:[%s1 + $0x84] sm:$0xf]
  %v60 = vld [vmem:[%s1 + $0x88] sm:$0xf]
  %v61 = vld [vmem:[%s1 + $0x8c] sm:$0xf]
  %v62 = vld [vmem:[%s1 + $0x90] sm:$0xf]
  %v63 = vld [vmem:[%s1 + $0x94] sm:$0xf]
  %v64 = vld [vmem:[%s1 + $0x98] sm:$0xf]
  %v65 = vld [vmem:[%s1 + $0x9c] sm:$0xf]
  %v66 = vld [vmem:[%s1 + $0xa0] sm:$0xf]
  %v67 = vld [vmem:[%s1 + $0xa4] sm:$0xf]
  %v68 = vld [vmem:[%s1 + $0xa8] sm:$0xf]
  %v69 = vld [vmem:[%s1 + $0xac] sm:$0xf]
  %v70 = vld [vmem:[%s1 + $0xb0] sm:$0xf]
  %v71 = vld [vmem:[%s1 + $0xb4] sm:$0xf]
  %v72 = vld [vmem:[%s1 + $0xb8] sm:$0xf]
  %v73 = vld [vmem:[%s1 + $0xbc] sm:$0xf]
  %v76 = vunpack.c.l.b16 %v24
  %v77 = vunpack.c.h.b16 %v24
  %v78 = vunpack.c.l.b16 %v25
  %v79 = vpack.c.b16 %v76, %v76
  %v80 = vpack.c.b16 %v77, %v77
  %v81 = vpack.c.b16 %v78, %v78
  %v133 = vunpack.c.l.b16 %v26
  %v134 = vunpack.c.l.b16 %v27
  %v135 = vunpack.c.l.b16 %v28
  %v136 = vunpack.c.l.b16 %v29
  %v137 = vunpack.c.l.b16 %v30
  %v138 = vunpack.c.l.b16 %v31
  %v139 = vunpack.c.l.b16 %v32
  %v140 = vunpack.c.l.b16 %v33
  %v141 = vunpack.c.l.b16 %v34
  %v142 = vunpack.c.l.b16 %v35
  %v143 = vunpack.c.l.b16 %v36
  %v144 = vunpack.c.l.b16 %v37
  %v145 = vunpack.c.l.b16 %v38
  %v146 = vunpack.c.l.b16 %v39
  %v147 = vunpack.c.l.b16 %v40
  %v148 = vunpack.c.l.b16 %v41
  %v149 = vunpack.c.l.b16 %v42
  %v150 = vunpack.c.l.b16 %v43
  %v151 = vunpack.c.l.b16 %v44
  %v152 = vunpack.c.l.b16 %v45
  %v153 = vunpack.c.l.b16 %v46
  %v154 = vunpack.c.l.b16 %v47
  %v155 = vunpack.c.l.b16 %v48
  %v156 = vunpack.c.l.b16 %v49
  %v157 = vunpack.c.l.b16 %v50
  %v158 = vunpack.c.l.b16 %v51
  %v159 = vunpack.c.l.b16 %v52
  %v160 = vunpack.c.l.b16 %v53
  %v161 = vunpack.c.l.b16 %v54
  %v162 = vunpack.c.l.b16 %v55
  %v163 = vunpack.c.l.b16 %v56
  %v164 = vunpack.c.l.b16 %v57
  %v165 = vunpack.c.l.b16 %v58
  %v166 = vunpack.c.l.b16 %v59
  %v167 = vunpack.c.l.b16 %v60
  %v168 = vunpack.c.l.b16 %v61
  %v169 = vunpack.c.l.b16 %v62
  %v170 = vunpack.c.l.b16 %v63
  %v171 = vunpack.c.l.b16 %v64
  %v172 = vunpack.c.l.b16 %v65
  %v173 = vunpack.c.l.b16 %v66
  %v174 = vunpack.c.l.b16 %v67
  %v175 = vunpack.c.l.b16 %v68
  %v176 = vunpack.c.l.b16 %v69
  %v177 = vunpack.c.l.b16 %v70
  %v178 = vunpack.c.l.b16 %v71
  %v179 = vunpack.c.l.b16 %v72
  %v180 = vunpack.c.l.b16 %v73
  %v181 = vpack.c.b16 %v134, %v133
  %v182 = vpack.c.b16 %v136, %v135
  %v183 = vpack.c.b16 %v138, %v137
  %v184 = vpack.c.b16 %v140, %v139
  %v185 = vpack.c.b16 %v142, %v141
  %v186 = vpack.c.b16 %v144, %v143
  %v187 = vpack.c.b16 %v146, %v145
  %v188 = vpack.c.b16 %v148, %v147
  %v189 = vpack.c.b16 %v150, %v149
  %v190 = vpack.c.b16 %v152, %v151
  %v191 = vpack.c.b16 %v154, %v153
  %v192 = vpack.c.b16 %v156, %v155
  %v193 = vpack.c.b16 %v158, %v157
  %v194 = vpack.c.b16 %v160, %v159
  %v195 = vpack.c.b16 %v162, %v161
  %v196 = vpack.c.b16 %v164, %v163
  %v197 = vpack.c.b16 %v166, %v165
  %v198 = vpack.c.b16 %v168, %v167
  %v199 = vpack.c.b16 %v170, %v169
  %v200 = vpack.c.b16 %v172, %v171
  %v201 = vpack.c.b16 %v174, %v173
  %v202 = vpack.c.b16 %v176, %v175
  %v203 = vpack.c.b16 %v178, %v177
  %v204 = vpack.c.b16 %v180, %v179
  %229 = vmatprep.subr.bf16.mxu0 0
  %230 = vmatpush1.bf16.msra.mxu0 %v181
  %231 = vmatprep.subr.bf16.mxu0 0
  %232 = vmatpush1.bf16.msra.mxu0 %v182
  %233 = vmatprep.subr.bf16.mxu0 0
  %234 = vmatpush1.bf16.msra.mxu0 %v183
  %235 = vmatprep.subr.bf16.mxu0 0
  %236 = vmatpush1.bf16.msra.mxu0 %v184
  %237 = vmatprep.subr.bf16.mxu0 0
  %238 = vmatpush1.bf16.msra.mxu0 %v185
  %239 = vmatprep.subr.bf16.mxu0 0
  %240 = vmatpush1.bf16.msra.mxu0 %v186
  %241 = vmatprep.subr.bf16.mxu0 0
  %242 = vmatpush1.bf16.msra.mxu0 %v187
  %243 = vmatprep.subr.bf16.mxu0 0
  %244 = vmatpush1.bf16.msra.mxu0 %v188
  %245 = vmatprep.subr.bf16.mxu0 0
  %246 = vmatpush1.bf16.msra.mxu0 %v189
  %247 = vmatprep.subr.bf16.mxu0 0
  %248 = vmatpush1.bf16.msra.mxu0 %v190
  %249 = vmatprep.subr.bf16.mxu0 0
  %250 = vmatpush1.bf16.msra.mxu0 %v191
  %251 = vmatprep.subr.bf16.mxu0 0
  %252 = vmatpush1.bf16.msra.mxu0 %v192
  %253 = vmatprep.subr.bf16.mxu0 0
  %254 = vmatpush1.bf16.msra.mxu0 %v193
  %255 = vmatprep.subr.bf16.mxu0 0
  %256 = vmatpush1.bf16.msra.mxu0 %v194
  %257 = vmatprep.subr.bf16.mxu0 0
  %258 = vmatpush1.bf16.msra.mxu0 %v195
  %259 = vmatprep.subr.bf16.mxu0 0
  %260 = vmatpush1.bf16.msra.mxu0 %v196
  %261 = vmatprep.mubr.bf16.mxu0 %v80
  %262 = vmatmul.mubr.bf16.gmra.mrb[0].mxu0 %v79
  %v263 = vpop.f32.mrb[0].mxu0
  %v264 = vadd.f32 0.0, %v263
  %v265 = vpop.f32.mrb[0].mxu0
  %v266 = vpop.f32.mrb[0].mxu0
  %v267 = vpop.f32.mrb[0].mxu0
  %268 = vdwg.mxu0
  %269 = vmatprep.subr.bf16.mxu0 0
  %270 = vmatpush1.bf16.msra.mxu0 %v197
  %271 = vmatprep.subr.bf16.mxu0 0
  %272 = vmatpush1.bf16.msra.mxu0 %v198
  %273 = vmatprep.subr.bf16.mxu0 0
  %274 = vmatpush1.bf16.msra.mxu0 %v199
  %275 = vmatprep.subr.bf16.mxu0 0
  %276 = vmatpush1.bf16.msra.mxu0 %v200
  %277 = vmatprep.subr.bf16.mxu0 0
  %278 = vmatpush1.bf16.msra.mxu0 %v201
  %279 = vmatprep.subr.bf16.mxu0 0
  %280 = vmatpush1.bf16.msra.mxu0 %v202
  %281 = vmatprep.subr.bf16.mxu0 0
  %282 = vmatpush1.bf16.msra.mxu0 %v203
  %283 = vmatprep.subr.bf16.mxu0 0
  %284 = vmatpush1.bf16.msra.mxu0 %v204
  %285 = vmatprep.subr.bf16.mxu0 0
  %286 = vmatpush1.bf16.msra.mxu0 0
  %287 = vmatprep.subr.bf16.mxu0 0
  %288 = vmatpush1.bf16.msra.mxu0 0
  %289 = vmatprep.subr.bf16.mxu0 0
  %290 = vmatpush1.bf16.msra.mxu0 0
  %291 = vmatprep.subr.bf16.mxu0 0
  %292 = vmatpush1.bf16.msra.mxu0 0
  %293 = vmatprep.subr.bf16.mxu0 0
  %294 = vmatpush1.bf16.msra.mxu0 0
  %295 = vmatprep.subr.bf16.mxu0 0
  %296 = vmatpush1.bf16.msra.mxu0 0
  %297 = vmatprep.subr.bf16.mxu0 0
  %298 = vmatpush1.bf16.msra.mxu0 0
  %299 = vmatprep.subr.bf16.mxu0 0
  %300 = vmatpush1.bf16.msra.mxu0 0
  %301 = vmatprep.mubr.bf16.mxu0 0
  %302 = vmatmul.mubr.bf16.gmra.mrb[0].mxu0 %v81
  %v303 = vpop.f32.mrb[0].mxu0
  %v304 = vadd.f32 %v264, %v303
  %v305 = vpop.f32.mrb[0].mxu0
  %v306 = vpop.f32.mrb[0].mxu0
  %v307 = vpop.f32.mrb[0].mxu0
  %308 = vdwg.mxu0
  %v309 = vadd.f32 %v23, %v304
  %310 = vst [vmem:[#allocation2] sm:$0xff] %v309
  // Predicated region
  $region22: #{resnet_forward.25} parent=0 // pred_check
    %p311 = pneg %p18
  $region23: #{resnet_forward.25} parent=0 // pred_check_branch
    %313 = sbr.rel (%p311) target = $region25
  $region24: #{resnet_forward.25} parent=0 // pred_region
    %v314 = vld [vmem:[#allocation2] sm:$0xff]
    %v315 = vld [vmem:[%s2] sm:$0x1]
    %v317 = vlaneseq
    %v318 = vshrl.u32 %v317, 7
    %v319 = vsub.s32 0, %v318
    %v320 = vrot.slane %v315, %v319
    %v322 = vmul.f32 %v314, %v320
    %v323 = vld [vmem:[%s3] sm:$0x1]
    %v325 = vlaneseq
    %v326 = vshrl.u32 %v325, 7
    %v327 = vsub.s32 0, %v326
    %v328 = vrot.slane %v323, %v327
    %v330 = vadd.f32 %v322, %v328
    %v331 = vmax.f32 %v330, 0.0
    %v332 = vpack.c.bf16 %v331, %v331
    %333 = vst [vmem:[%s4] sm:$0xf] %v332
  $region25: #{resnet_forward.25} parent=0 // pred_fallthru
    _
  // Predicated region
  $region26: #{resnet_forward.25} parent=0 // pred_check
    _
  $region27: #{resnet_forward.25} parent=0 // pred_check_branch
    %335 = sbr.rel (0) target = $region29
  $region28: #{resnet_forward.25} parent=0 // pred_region
    _
  $region29: #{resnet_forward.25} parent=0 // pred_fallthru
    _
  // Predicated region
  $region30: #{resnet_forward.25} parent=0 // pred_check
    _
  $region31: #{resnet_forward.25} parent=0 // pred_check_branch
    %337 = sbr.rel (0) target = $region33
  $region32: #{resnet_forward.25} parent=0 // pred_region
    _
  $region33: #{resnet_forward.25} parent=0 // pred_fallthru
    _

// kernel: resnet_forward.27
$region0: #{resnet_forward.27}
  #allocation0 [shape = 'u32[]', space=smem, size = 0x4, offset = 0x4, fixed_abs, tag = 'smem constant byte address 0x4 - core index']
  #allocation1 [shape = 'u32[144,128]{1,0:T(1,128)}', space=vmem, size = 0x12000, scoped, tag = 'internal scratch']
  #allocation2 [shape = 'f32[8,128]{1,0:T(8,128)}', space=vmem, size = 0x1000, scoped, tag = 'scratch operand']
  %s0 = inlined_call_operand.vmem [shape: bf16[8,640], index: 0, kind: input, shape index: {}]
  %s1 = inlined_call_operand.vmem [shape: bf16[640,128], index: 1, kind: input, shape index: {}]
  %s2 = inlined_call_operand.vmem [shape: f32[1,128], index: 2, kind: input, shape index: {}]
  %s3 = inlined_call_operand.vmem [shape: f32[1,128], index: 3, kind: input, shape index: {}]
  %s4 = inlined_call_operand.vmem [shape: bf16[8,128], index: 4, kind: input, shape index: {}]
  %s5 = inlined_call_operand.vmem [shape: bf16[8,128], index: 5, kind: output, shape index: {}]
  %s6 = sld [smem:[#allocation0]]
  $region61: #{resnet_forward.27} parent=0
    _
  %s8 = ssub.s32 1, %s6
  %s9 = scalar_select 0, %s8, %s6
  loop: start=0, step=1, limit=7
  $region2: #{resnet_forward.27} parent=0 // loop_pre_header
    _
  $region3: #{resnet_forward.27} parent=0 // loop_header
    %s11 = sphi 0, %s15
    %p12 = scmp.ge.s32.totalorder %s11, 7
    %s18 = sphi 0, %s37
    %s19 = sphi 0, %s33
    %s20 = sphi 0, %s29
    %s21 = sphi 0, %s18
    %s22 = sphi 0, %s19
    %s23 = sphi 0, %s20
    %s24 = sphi 0, %s21
    %s25 = sphi 0, %s22
    %s26 = sphi 0, %s23
    %s42 = sphi 0, %s44
    %s45 = sphi 0, %s42
    %s46 = sphi 0, %s45
    %s62 = sphi 0, %s46
    %s70 = sphi 0, %s72
    %s73 = sphi 0, %s70
    %s74 = sphi 0, %s73
    %s90 = sphi 0, %s74
    %s96 = sphi 0, %s98
    %s99 = sphi 0, %s96
    %s100 = sphi 0, %s99
    %s116 = sphi 0, %s100
    %s122 = sphi 0, %s124
    %s125 = sphi 0, %s122
    %s126 = sphi 0, %s125
    %s142 = sphi 0, %s126
    %s150 = sphi 0, %s152
    %s153 = sphi 0, %s150
    %s154 = sphi 0, %s153
    %s170 = sphi 0, %s154
    %s178 = sphi 0, %s180
    %s181 = sphi 0, %s178
    %s182 = sphi 0, %s181
    %s198 = sphi 0, %s182
  $region4: #{resnet_forward.27} parent=0 // loop_header_branch
    %14 = sbr.rel (%p12) target = $region8
  $region5: #{resnet_forward.27} parent=0 // loop_body
    %s16 = ssub.s32 %s11, 1
    %s17 = ssub.s32 %s11, 2
    %s27 = sadd.s32 1, %s20
    %p28 = scmp.ge.s32.totalorder %s27, 5
    %s29 = scalar_select %p28, 0, %s27
    %s30 = sadd.s32 1, %s19
    %s31 = scalar_select %p28, %s30, %s19
    %p32 = scmp.ge.s32.totalorder %s31, 1
    %s33 = scalar_select %p32, 0, %s31
    %s34 = sadd.s32 1, %s18
    %s35 = scalar_select %p32, %s34, %s18
    %p36 = scmp.ge.s32.totalorder %s35, 1
    %s37 = scalar_select %p36, 0, %s35
    %s38 = ssub.s32 %s18, %s37
    %s39 = ssub.s32 %s20, %s29
    %s40 = sor.u32 %s38, %s39
    %p41 = scmp.eq.s32.totalorder %s40, 0
    %s43 = sadd.s32 %s42, 1
    %s44 = scalar_select %p41, %s42, %s43
    %p47 = pneg %p41
    %p48 = scmp.eq.s32.totalorder %s11, 4
    %p49 = por %p47, %p48
    %p50 = scmp.ne.s32.totalorder %s42, %s45
    %p51 = scmp.eq.s32.totalorder %s11, 0
    %p52 = por %p50, %p51
    %p53 = scmp.ne.s32.totalorder %s42, %s45
    %p54 = scmp.eq.s32.totalorder %s16, 4
    %p55 = por %p53, %p54
    %p56 = scmp.ne.s32.totalorder %s45, %s46
    %p57 = scmp.eq.s32.totalorder %s16, 0
    %p58 = por %p56, %p57
    %p59 = scmp.ne.s32.totalorder %s45, %s46
    %p60 = scmp.eq.s32.totalorder %s17, 4
    %p61 = por %p59, %p60
    %p63 = scmp.ne.s32.totalorder %s46, %s62
    %p64 = scmp.eq.s32.totalorder %s17, 0
    %p65 = por %p63, %p64
    %s66 = ssub.s32 %s20, %s29
    %s67 = ssub.s32 %s19, %s33
    %s68 = sor.u32 %s66, %s67
    %p69 = scmp.eq.s32.totalorder %s68, 0
    %s71 = sadd.s32 %s70, 1
    %s72 = scalar_select %p69, %s70, %s71
    %p75 = pneg %p69
    %p76 = scmp.eq.s32.totalorder %s11, 4
    %p77 = por %p75, %p76
    %p78 = scmp.ne.s32.totalorder %s70, %s73
    %p79 = scmp.eq.s32.totalorder %s11, 0
    %p80 = por %p78, %p79
    %p81 = scmp.ne.s32.totalorder %s70, %s73
    %p82 = scmp.eq.s32.totalorder %s16, 4
    %p83 = por %p81, %p82
    %p84 = scmp.ne.s32.totalorder %s73, %s74
    %p85 = scmp.eq.s32.totalorder %s16, 0
    %p86 = por %p84, %p85
    %p87 = scmp.ne.s32.totalorder %s73, %s74
    %p88 = scmp.eq.s32.totalorder %s17, 4
    %p89 = por %p87, %p88
    %p91 = scmp.ne.s32.totalorder %s74, %s90
    %p92 = scmp.eq.s32.totalorder %s17, 0
    %p93 = por %p91, %p92
    %s94 = ssub.s32 %s19, %s33
    %p95 = scmp.eq.s32.totalorder %s94, 0
    %s97 = sadd.s32 %s96, 1
    %s98 = scalar_select %p95, %s96, %s97
    %p101 = pneg %p95
    %p102 = scmp.eq.s32.totalorder %s11, 4
    %p103 = por %p101, %p102
    %p104 = scmp.ne.s32.totalorder %s96, %s99
    %p105 = scmp.eq.s32.totalorder %s11, 0
    %p106 = por %p104, %p105
    %p107 = scmp.ne.s32.totalorder %s96, %s99
    %p108 = scmp.eq.s32.totalorder %s16, 4
    %p109 = por %p107, %p108
    %p110 = scmp.ne.s32.totalorder %s99, %s100
    %p111 = scmp.eq.s32.totalorder %s16, 0
    %p112 = por %p110, %p111
    %p113 = scmp.ne.s32.totalorder %s99, %s100
    %p114 = scmp.eq.s32.totalorder %s17, 4
    %p115 = por %p113, %p114
    %p117 = scmp.ne.s32.totalorder %s100, %s116
    %p118 = scmp.eq.s32.totalorder %s17, 0
    %p119 = por %p117, %p118
    %s120 = ssub.s32 %s19, %s33
    %p121 = scmp.eq.s32.totalorder %s120, 0
    %s123 = sadd.s32 %s122, 1
    %s124 = scalar_select %p121, %s122, %s123
    %p127 = pneg %p121
    %p128 = scmp.eq.s32.totalorder %s11, 4
    %p129 = por %p127, %p128
    %p130 = scmp.ne.s32.totalorder %s122, %s125
    %p131 = scmp.eq.s32.totalorder %s11, 0
    %p132 = por %p130, %p131
    %p133 = scmp.ne.s32.totalorder %s122, %s125
    %p134 = scmp.eq.s32.totalorder %s16, 4
    %p135 = por %p133, %p134
    %p136 = scmp.ne.s32.totalorder %s125, %s126
    %p137 = scmp.eq.s32.totalorder %s16, 0
    %p138 = por %p136, %p137
    %p139 = scmp.ne.s32.totalorder %s125, %s126
    %p140 = scmp.eq.s32.totalorder %s17, 4
    %p141 = por %p139, %p140
    %p143 = scmp.ne.s32.totalorder %s126, %s142
    %p144 = scmp.eq.s32.totalorder %s17, 0
    %p145 = por %p143, %p144
    %s146 = ssub.s32 %s18, %s37
    %s147 = ssub.s32 %s19, %s33
    %s148 = sor.u32 %s146, %s147
    %p149 = scmp.eq.s32.totalorder %s148, 0
    %s151 = sadd.s32 %s150, 1
    %s152 = scalar_select %p149, %s150, %s151
    %p155 = pneg %p149
    %p156 = scmp.eq.s32.totalorder %s11, 4
    %p157 = por %p155, %p156
    %p158 = scmp.ne.s32.totalorder %s150, %s153
    %p159 = scmp.eq.s32.totalorder %s11, 0
    %p160 = por %p158, %p159
    %p161 = scmp.ne.s32.totalorder %s150, %s153
    %p162 = scmp.eq.s32.totalorder %s16, 4
    %p163 = por %p161, %p162
    %p164 = scmp.ne.s32.totalorder %s153, %s154
    %p165 = scmp.eq.s32.totalorder %s16, 0
    %p166 = por %p164, %p165
    %p167 = scmp.ne.s32.totalorder %s153, %s154
    %p168 = scmp.eq.s32.totalorder %s17, 4
    %p169 = por %p167, %p168
    %p171 = scmp.ne.s32.totalorder %s154, %s170
    %p172 = scmp.eq.s32.totalorder %s17, 0
    %p173 = por %p171, %p172
    %s174 = ssub.s32 %s18, %s37
    %s175 = ssub.s32 %s19, %s33
    %s176 = sor.u32 %s174, %s175
    %p177 = scmp.eq.s32.totalorder %s176, 0
    %s179 = sadd.s32 %s178, 1
    %s180 = scalar_select %p177, %s178, %s179
    %p183 = pneg %p177
    %p184 = scmp.eq.s32.totalorder %s11, 4
    %p185 = por %p183, %p184
    %p186 = scmp.ne.s32.totalorder %s178, %s181
    %p187 = scmp.eq.s32.totalorder %s11, 0
    %p188 = por %p186, %p187
    %p189 = scmp.ne.s32.totalorder %s178, %s181
    %p190 = scmp.eq.s32.totalorder %s16, 4
    %p191 = por %p189, %p190
    %p192 = scmp.ne.s32.totalorder %s181, %s182
    %p193 = scmp.eq.s32.totalorder %s16, 0
    %p194 = por %p192, %p193
    %p195 = scmp.ne.s32.totalorder %s181, %s182
    %p196 = scmp.eq.s32.totalorder %s17, 4
    %p197 = por %p195, %p196
    %p199 = scmp.ne.s32.totalorder %s182, %s198
    %p200 = scmp.eq.s32.totalorder %s17, 0
    %p201 = por %p199, %p200
    %p202 = scmp.le.s32.totalorder 1, %s11
    %p203 = scmp.lt.s32.totalorder %s11, 6
    %p204 = pnand %p202, %p203
    %p205 = pneg %p204
    // Predicated region
    $region9: #{resnet_forward.27} parent=5 // pred_check
      _
    $region10: #{resnet_forward.27} parent=5 // pred_check_branch
      %207 = sbr.rel (%p204) target = $region12
    $region11: #{resnet_forward.27} parent=5 // pred_region
      %s208 = ssub.s32 %s11, 1
      // Predicated region
      $region13: #{resnet_forward.27} parent=11 // pred_check
        %p209 = pneg %p112
      $region14: #{resnet_forward.27} parent=11 // pred_check_branch
        %211 = sbr.rel (%p209) target = $region16
      $region15: #{resnet_forward.27} parent=11 // pred_region
        %p212 = scmp.lt.s32.totalorder %s22, 0
        %s213 = scalar_select %p212, %s22, 0
        %s214 = scalar_lea.vmem %s2, %s213
      $region16: #{resnet_forward.27} parent=11 // pred_fallthru
        _
      // Predicated region
      $region17: #{resnet_forward.27} parent=11 // pred_check
        %p215 = pneg %p138
      $region18: #{resnet_forward.27} parent=11 // pred_check_branch
        %217 = sbr.rel (%p215) target = $region20
      $region19: #{resnet_forward.27} parent=11 // pred_region
        %p218 = scmp.lt.s32.totalorder %s22, 0
        %s219 = scalar_select %p218, %s22, 0
        %s220 = scalar_lea.vmem %s3, %s219
      $region20: #{resnet_forward.27} parent=11 // pred_fallthru
        _
      // Predicated region
      $region21: #{resnet_forward.27} parent=11 // pred_check
        %p221 = pneg %p166
      $region22: #{resnet_forward.27} parent=11 // pred_check_branch
        %223 = sbr.rel (%p221) target = $region24
      $region23: #{resnet_forward.27} parent=11 // pred_region
        %p224 = scmp.lt.s32.totalorder %s21, 0
        %s225 = scalar_select %p224, %s21, 0
        %p226 = scmp.lt.s32.totalorder %s22, 0
        %s227 = scalar_select %p226, %s22, 0
        %s228 = sadd.s32 %s227, %s225
        %s229 = smul.addr %s228, 4
        %s230 = scalar_lea.vmem %s4, %s229
      $region24: #{resnet_forward.27} parent=11 // pred_fallthru
        _
    $region12: #{resnet_forward.27} parent=5 // pred_fallthru
      _
    %p231 = scmp.lt.s32.totalorder %s11, 5
    // Predicated region
    $region25: #{resnet_forward.27} parent=5 // pred_check
      %p232 = pneg %p231
    $region26: #{resnet_forward.27} parent=5 // pred_check_branch
      %234 = sbr.rel (%p232) target = $region28
    $region27: #{resnet_forward.27} parent=5 // pred_region
      // Predicated region
      $region29: #{resnet_forward.27} parent=27 // pred_check
        %p235 = pneg %p52
      $region30: #{resnet_forward.27} parent=27 // pred_check_branch
        %237 = sbr.rel (%p235) target = $region32
      $region31: #{resnet_forward.27} parent=27 // pred_region
        %p238 = scmp.lt.s32.totalorder %s18, 0
        %s239 = scalar_select %p238, %s18, 0
        %p240 = scmp.lt.s32.totalorder %s20, 4
        %s241 = scalar_select %p240, %s20, 4
        %s242 = smul.addr %s239, 5
        %s243 = sadd.s32 %s241, %s242
        %s244 = smul.addr %s243, 4
        %s245 = scalar_lea.vmem %s0, %s244
      $region32: #{resnet_forward.27} parent=27 // pred_fallthru
        _
      // Predicated region
      $region33: #{resnet_forward.27} parent=27 // pred_check
        %p246 = pneg %p80
      $region34: #{resnet_forward.27} parent=27 // pred_check_branch
        %248 = sbr.rel (%p246) target = $region36
      $region35: #{resnet_forward.27} parent=27 // pred_region
        %s249 = smul.u32 16, %s20
        %p250 = scmp.lt.s32.totalorder %s249, 79
        %s251 = scalar_select %p250, %s249, 79
        %p252 = scmp.lt.s32.totalorder %s19, 0
        %s253 = scalar_select %p252, %s19, 0
        %s254 = sadd.s32 %s253, %s251
        %s255 = smul.addr %s254, 4
        %s256 = scalar_lea.vmem %s1, %s255
        %s257 = smul.u32 16, %s20
      $region36: #{resnet_forward.27} parent=27 // pred_fallthru
        _
    $region28: #{resnet_forward.27} parent=5 // pred_fallthru
      _
    %p258 = scmp.le.s32.totalorder 1, %s11
    %p259 = scmp.lt.s32.totalorder %s11, 6
    %p260 = pnand %p258, %p259
    %p261 = pneg %p260
    // Predicated region
    $region37: #{resnet_forward.27} parent=5 // pred_check
      _
    $region38: #{resnet_forward.27} parent=5 // pred_check_branch
      %263 = sbr.rel (%p260) target = $region40
    $region39: #{resnet_forward.27} parent=5 // pred_region
      %s264 = ssub.s32 %s11, 1
      %p265 = scmp.lt.s32.totalorder %s21, 0
      %s266 = scalar_select %p265, %s21, 0
      %p267 = scmp.lt.s32.totalorder %s23, 4
      %s268 = scalar_select %p267, %s23, 4
      %s269 = smul.addr %s266, 5
      %s270 = sadd.s32 %s268, %s269
      %s271 = smul.addr %s270, 4
      %s272 = scalar_lea.vmem %s0, %s271
      %p273 = pneg %p58
      %p274 = pneg %p55
      %s275 = smul.u32 16, %s23
      %p276 = scmp.lt.s32.totalorder %s275, 79
      %s277 = scalar_select %p276, %s275, 79
      %p278 = scmp.lt.s32.totalorder %s22, 0
      %s279 = scalar_select %p278, %s22, 0
      %s280 = sadd.s32 %s279, %s277
      %s281 = smul.addr %s280, 4
      %s282 = scalar_lea.vmem %s1, %s281
      %p283 = pneg %p86
      %p284 = pneg %p83
      %p285 = scmp.lt.s32.totalorder %s22, 0
      %s286 = scalar_select %p285, %s22, 0
      %s287 = scalar_lea.vmem %s2, %s286
      %p288 = pneg %p112
      %p289 = pneg %p109
      %p290 = scmp.lt.s32.totalorder %s22, 0
      %s291 = scalar_select %p290, %s22, 0
      %s292 = scalar_lea.vmem %s3, %s291
      %p293 = pneg %p138
      %p294 = pneg %p135
      %p295 = scmp.lt.s32.totalorder %s21, 0
      %s296 = scalar_select %p295, %s21, 0
      %p297 = scmp.lt.s32.totalorder %s22, 0
      %s298 = scalar_select %p297, %s22, 0
      %s299 = sadd.s32 %s298, %s296
      %s300 = smul.addr %s299, 4
      %s301 = scalar_lea.vmem %s4, %s300
      %p302 = pneg %p166
      %p303 = pneg %p163
      %p304 = pneg %p194
      %p305 = pneg %p191
      %p306 = scmp.lt.s32.totalorder %s21, 0
      %s307 = scalar_select %p306, %s21, 0
      %p308 = scmp.lt.s32.totalorder %s22, 0
      %s309 = scalar_select %p308, %s22, 0
      %s310 = sadd.s32 %s309, %s307
      %s311 = smul.addr %s310, 4
      %s312 = scalar_lea.vmem %s5, %s311
      %p313 = scmp.lt.s32.totalorder %s21, 0
      %s314 = scalar_select %p313, %s21, 0
      %p315 = scmp.lt.s32.totalorder %s23, 4
      %s316 = scalar_select %p315, %s23, 4
      %s317 = smul.addr %s314, 5
      %s318 = sadd.s32 %s316, %s317
      %s319 = smul.addr %s318, 4
      %s320 = scalar_lea.vmem %s0, %s319
      %s321 = smul.u32 16, %s23
      %p322 = scmp.lt.s32.totalorder %s321, 79
      %s323 = scalar_select %p322, %s321, 79
      %p324 = scmp.lt.s32.totalorder %s22, 0
      %s325 = scalar_select %p324, %s22, 0
      %s326 = sadd.s32 %s325, %s323
      %s327 = smul.addr %s326, 4
      %s328 = scalar_lea.vmem %s1, %s327
      %s329 = smul.u32 16, %s23
      %p330 = scmp.lt.s32.totalorder %s22, 0
      %s331 = scalar_select %p330, %s22, 0
      %s332 = scalar_lea.vmem %s2, %s331
      %p333 = scmp.lt.s32.totalorder %s22, 0
      %s334 = scalar_select %p333, %s22, 0
      %s335 = scalar_lea.vmem %s3, %s334
      %p336 = scmp.lt.s32.totalorder %s21, 0
      %s337 = scalar_select %p336, %s21, 0
      %p338 = scmp.lt.s32.totalorder %s22, 0
      %s339 = scalar_select %p338, %s22, 0
      %s340 = sadd.s32 %s339, %s337
      %s341 = smul.addr %s340, 4
      %s342 = scalar_lea.vmem %s4, %s341
      %p343 = scmp.lt.s32.totalorder %s21, 0
      %s344 = scalar_select %p343, %s21, 0
      %p345 = scmp.lt.s32.totalorder %s22, 0
      %s346 = scalar_select %p345, %s22, 0
      %s347 = sadd.s32 %s346, %s344
      %s348 = smul.addr %s347, 4
      %s349 = scalar_lea.vmem %s5, %s348
      %p351 = scmp.eq.s32.totalorder %s23, 0
      // Predicated region
      $region41: #{resnet_forward.27} parent=39 // pred_check
        %p352 = pneg %p351
      $region42: #{resnet_forward.27} parent=39 // pred_check_branch
        %354 = sbr.rel (%p352) target = $region44
      $region43: #{resnet_forward.27} parent=39 // pred_region
        %355 = vst [vmem:[#allocation2] sm:$0xff] 0.0
      $region44: #{resnet_forward.27} parent=39 // pred_fallthru
        _
      %v356 = vld [vmem:[#allocation2] sm:$0xff]
      %v357 = vld [vmem:[%s320] sm:$0xf]
      %v358 = vld [vmem:[%s328] sm:$0xf]
      %v359 = vld [vmem:[%s328 + $0x4] sm:$0xf]
      %v360 = vld [vmem:[%s328 + $0x8] sm:$0xf]
      %v361 = vld [vmem:[%s328 + $0xc] sm:$0xf]
      %v362 = vld [vmem:[%s328 + $0x10] sm:$0xf]
      %v363 = vld [vmem:[%s328 + $0x14] sm:$0xf]
      %v364 = vld [vmem:[%s328 + $0x18] sm:$0xf]
      %v365 = vld [vmem:[%s328 + $0x1c] sm:$0xf]
      %v366 = vld [vmem:[%s328 + $0x20] sm:$0xf]
      %v367 = vld [vmem:[%s328 + $0x24] sm:$0xf]
      %v368 = vld [vmem:[%s328 + $0x28] sm:$0xf]
      %v369 = vld [vmem:[%s328 + $0x2c] sm:$0xf]
      %v370 = vld [vmem:[%s328 + $0x30] sm:$0xf]
      %v371 = vld [vmem:[%s328 + $0x34] sm:$0xf]
      %v372 = vld [vmem:[%s328 + $0x38] sm:$0xf]
      %v373 = vld [vmem:[%s328 + $0x3c] sm:$0xf]
      %v390 = vunpack.c.l.b16 %v358
      %v391 = vunpack.c.l.b16 %v359
      %v392 = vunpack.c.l.b16 %v360
      %v393 = vunpack.c.l.b16 %v361
      %v394 = vunpack.c.l.b16 %v362
      %v395 = vunpack.c.l.b16 %v363
      %v396 = vunpack.c.l.b16 %v364
      %v397 = vunpack.c.l.b16 %v365
      %v398 = vunpack.c.l.b16 %v366
      %v399 = vunpack.c.l.b16 %v367
      %v400 = vunpack.c.l.b16 %v368
      %v401 = vunpack.c.l.b16 %v369
      %v402 = vunpack.c.l.b16 %v370
      %v403 = vunpack.c.l.b16 %v371
      %v404 = vunpack.c.l.b16 %v372
      %v405 = vunpack.c.l.b16 %v373
      %v406 = vpack.c.b16 %v391, %v390
      %v407 = vpack.c.b16 %v393, %v392
      %v408 = vpack.c.b16 %v395, %v394
      %v409 = vpack.c.b16 %v397, %v396
      %v410 = vpack.c.b16 %v399, %v398
      %v411 = vpack.c.b16 %v401, %v400
      %v412 = vpack.c.b16 %v403, %v402
      %v413 = vpack.c.b16 %v405, %v404
      %422 = vmatprep.subr.bf16.mxu0 0
      %423 = vmatpush1.bf16.msra.mxu0 %v406
      %424 = vmatprep.subr.bf16.mxu0 0
      %425 = vmatpush1.bf16.msra.mxu0 %v407
      %426 = vmatprep.subr.bf16.mxu0 0
      %427 = vmatpush1.bf16.msra.mxu0 %v408
      %428 = vmatprep.subr.bf16.mxu0 0
      %429 = vmatpush1.bf16.msra.mxu0 %v409
      %430 = vmatprep.subr.bf16.mxu0 0
      %431 = vmatpush1.bf16.msra.mxu0 %v410
      %432 = vmatprep.subr.bf16.mxu0 0
      %433 = vmatpush1.bf16.msra.mxu0 %v411
      %434 = vmatprep.subr.bf16.mxu0 0
      %435 = vmatpush1.bf16.msra.mxu0 %v412
      %436 = vmatprep.subr.bf16.mxu0 0
      %437 = vmatpush1.bf16.msra.mxu0 %v413
      %438 = vmatprep.subr.bf16.mxu0 0
      %439 = vmatpush1.bf16.msra.mxu0 0
      %440 = vmatprep.subr.bf16.mxu0 0
      %441 = vmatpush1.bf16.msra.mxu0 0
      %442 = vmatprep.subr.bf16.mxu0 0
      %443 = vmatpush1.bf16.msra.mxu0 0
      %444 = vmatprep.subr.bf16.mxu0 0
      %445 = vmatpush1.bf16.msra.mxu0 0
      %446 = vmatprep.subr.bf16.mxu0 0
      %447 = vmatpush1.bf16.msra.mxu0 0
      %448 = vmatprep.subr.bf16.mxu0 0
      %449 = vmatpush1.bf16.msra.mxu0 0
      %450 = vmatprep.subr.bf16.mxu0 0
      %451 = vmatpush1.bf16.msra.mxu0 0
      %452 = vmatprep.subr.bf16.mxu0 0
      %453 = vmatpush1.bf16.msra.mxu0 0
      %454 = vmatprep.mubr.bf16.mxu0 0
      %455 = vmatmul.mubr.bf16.gmra.mrb[0].mxu0 %v357
      %v456 = vpop.f32.mrb[0].mxu0
      %v457 = vadd.f32 0.0, %v456
      %v458 = vpop.f32.mrb[0].mxu0
      %v459 = vpop.f32.mrb[0].mxu0
      %v460 = vpop.f32.mrb[0].mxu0
      %461 = vdwg.mxu0
      %v462 = vadd.f32 %v356, %v457
      %463 = vst [vmem:[#allocation2] sm:$0xff] %v462
      %p464 = scmp.eq.s32.totalorder %s23, 4
      // Predicated region
      $region45: #{resnet_forward.27} parent=39 // pred_check
        %p465 = pneg %p464
      $region46: #{resnet_forward.27} parent=39 // pred_check_branch
        %467 = sbr.rel (%p465) target = $region48
      $region47: #{resnet_forward.27} parent=39 // pred_region
        %v468 = vld [vmem:[#allocation2] sm:$0xff]
        %v469 = vld [vmem:[%s332] sm:$0x1]
        %v471 = vlaneseq
        %v472 = vshrl.u32 %v471, 7
        %v473 = vsub.s32 0, %v472
        %v474 = vrot.slane %v469, %v473
        %v476 = vmul.f32 %v468, %v474
        %v477 = vld [vmem:[%s335] sm:$0x1]
        %v479 = vlaneseq
        %v480 = vshrl.u32 %v479, 7
        %v481 = vsub.s32 0, %v480
        %v482 = vrot.slane %v477, %v481
        %v484 = vadd.f32 %v476, %v482
        %v485 = vld [vmem:[%s342] sm:$0xf]
        %v486 = vunpack.c.l.bf16 %v485
        %v487 = vadd.f32 %v484, %v486
        %v488 = vmax.f32 %v487, 0.0
        %v489 = vpack.c.bf16 %v488, %v488
        %490 = vst [vmem:[%s349] sm:$0xf] %v489
      $region48: #{resnet_forward.27} parent=39 // pred_fallthru
        _
      %p491 = scmp.lt.s32.totalorder %s21, 0
      %s492 = scalar_select %p491, %s21, 0
      %p493 = scmp.lt.s32.totalorder %s22, 0
      %s494 = scalar_select %p493, %s22, 0
      %s495 = sadd.s32 %s494, %s492
      %s496 = smul.addr %s495, 4
      %s497 = scalar_lea.vmem %s5, %s496
      // Predicated region
      $region49: #{resnet_forward.27} parent=39 // pred_check
        %p498 = pneg %p191
      $region50: #{resnet_forward.27} parent=39 // pred_check_branch
        %500 = sbr.rel (%p498) target = $region52
      $region51: #{resnet_forward.27} parent=39 // pred_region
        _
      $region52: #{resnet_forward.27} parent=39 // pred_fallthru
        _
      // Predicated region
      $region53: #{resnet_forward.27} parent=39 // pred_check
        %p501 = pneg %p191
      $region54: #{resnet_forward.27} parent=39 // pred_check_branch
        %503 = sbr.rel (%p501) target = $region56
      $region55: #{resnet_forward.27} parent=39 // pred_region
        %p504 = scmp.lt.s32.totalorder %s21, 0
        %s505 = scalar_select %p504, %s21, 0
        %p506 = scmp.lt.s32.totalorder %s22, 0
        %s507 = scalar_select %p506, %s22, 0
        %s508 = sadd.s32 %s507, %s505
        %s509 = smul.addr %s508, 4
        %s510 = scalar_lea.vmem %s5, %s509
      $region56: #{resnet_forward.27} parent=39 // pred_fallthru
        _
    $region40: #{resnet_forward.27} parent=5 // pred_fallthru
      _
    %p511 = scmp.le.s32.totalorder 2, %s11
    // Predicated region
    $region57: #{resnet_forward.27} parent=5 // pred_check
      %p512 = pneg %p511
    $region58: #{resnet_forward.27} parent=5 // pred_check_branch
      %514 = sbr.rel (%p512) target = $region60
    $region59: #{resnet_forward.27} parent=5 // pred_region
      %s515 = ssub.s32 %s11, 2
    $region60: #{resnet_forward.27} parent=5 // pred_fallthru
      _
  $region6: #{resnet_forward.27} parent=0 // loop_footer
    %s15 = sadd.s32 1, %s11
  $region7: #{resnet_forward.27} parent=0 // loop_footer_branch
    %10 = sbr.rel target = $region3
  $region8: #{resnet_forward.27} parent=0 // loop_exit
    _

// kernel: resnet_forward.28
$region0: #{resnet_forward.28}
  #allocation0 [shape = 'u32[]', space=smem, size = 0x4, offset = 0x4, fixed_abs, tag = 'smem constant byte address 0x4 - core index']
  #allocation1 [shape = 'u32[144,128]{1,0:T(1,128)}', space=vmem, size = 0x12000, scoped, tag = 'internal scratch']
  #allocation2 [shape = 'f32[8,64]{1,0:T(8,128)}', space=vmem, size = 0x1000, scoped, tag = 'scratch operand']
  %s0 = inlined_call_operand.vmem [shape: bf16[8,8,64], index: 0, kind: input, shape index: {}]
  %s1 = inlined_call_operand.vmem [shape: f32[8,64], index: 1, kind: output, shape index: {}]
  %s2 = sld [smem:[#allocation0]]
  $region22: #{resnet_forward.28} parent=0
    _
  %s4 = ssub.s32 1, %s2
  %s5 = scalar_select 0, %s4, %s2
  // Predicated region
  $region2: #{resnet_forward.28} parent=0 // pred_check
    _
  $region3: #{resnet_forward.28} parent=0 // pred_check_branch
    %7 = sbr.rel (0) target = $region5
  $region4: #{resnet_forward.28} parent=0 // pred_region
    _
  $region5: #{resnet_forward.28} parent=0 // pred_fallthru
    _
  %p8 = scmp.eq.s32.totalorder 0, 0
  // Predicated region
  $region6: #{resnet_forward.28} parent=0 // pred_check
    %p9 = pneg %p8
  $region7: #{resnet_forward.28} parent=0 // pred_check_branch
    %11 = sbr.rel (%p9) target = $region9
  $region8: #{resnet_forward.28} parent=0 // pred_region
    %vm12 = vcmask 523264
    %13 = vst.msk [vmem:[#allocation2] sm:$0xff] %vm12, 0.0
  $region9: #{resnet_forward.28} parent=0 // pred_fallthru
    _
  %v14 = vld [vmem:[#allocation2] sm:$0xff]
  %v15 = vld [vmem:[%s0] sm:$0xf]
  %v16 = vld [vmem:[%s0 + $0x4] sm:$0xf]
  %v17 = vld [vmem:[%s0 + $0x8] sm:$0xf]
  %v18 = vld [vmem:[%s0 + $0xc] sm:$0xf]
  %v19 = vld [vmem:[%s0 + $0x10] sm:$0xf]
  %v20 = vld [vmem:[%s0 + $0x14] sm:$0xf]
  %v21 = vld [vmem:[%s0 + $0x18] sm:$0xf]
  %v22 = vld [vmem:[%s0 + $0x1c] sm:$0xf]
  %v23 = vunpack.c.l.bf16 %v15
  %v24 = vunpack.c.l.bf16 %v16
  %v25 = vunpack.c.l.bf16 %v17
  %v26 = vunpack.c.l.bf16 %v18
  %v27 = vunpack.c.l.bf16 %v19
  %v28 = vunpack.c.l.bf16 %v20
  %v29 = vunpack.c.l.bf16 %v21
  %v30 = vunpack.c.l.bf16 %v22
  %vm31 = vcmask 523264
  %v32 = vsel %vm31, %v23, 0.0
  %v33 = vrot.slane %v32, 4
  %v34 = vadd.f32 %v32, %v33
  %v35 = vrot.slane %v34, 2
  %v36 = vadd.f32 %v34, %v35
  %v37 = vrot.slane %v36, 1
  %v38 = vadd.f32 %v36, %v37
  %v39 = vsel %vm31, %v24, 0.0
  %v40 = vrot.slane %v39, 4
  %v41 = vadd.f32 %v39, %v40
  %v42 = vrot.slane %v41, 2
  %v43 = vadd.f32 %v41, %v42
  %v44 = vrot.slane %v43, 1
  %v45 = vadd.f32 %v43, %v44
  %v46 = vsel %vm31, %v25, 0.0
  %v47 = vrot.slane %v46, 4
  %v48 = vadd.f32 %v46, %v47
  %v49 = vrot.slane %v48, 2
  %v50 = vadd.f32 %v48, %v49
  %v51 = vrot.slane %v50, 1
  %v52 = vadd.f32 %v50, %v51
  %v53 = vsel %vm31, %v26, 0.0
  %v54 = vrot.slane %v53, 4
  %v55 = vadd.f32 %v53, %v54
  %v56 = vrot.slane %v55, 2
  %v57 = vadd.f32 %v55, %v56
  %v58 = vrot.slane %v57, 1
  %v59 = vadd.f32 %v57, %v58
  %v60 = vsel %vm31, %v27, 0.0
  %v61 = vrot.slane %v60, 4
  %v62 = vadd.f32 %v60, %v61
  %v63 = vrot.slane %v62, 2
  %v64 = vadd.f32 %v62, %v63
  %v65 = vrot.slane %v64, 1
  %v66 = vadd.f32 %v64, %v65
  %v67 = vsel %vm31, %v28, 0.0
  %v68 = vrot.slane %v67, 4
  %v69 = vadd.f32 %v67, %v68
  %v70 = vrot.slane %v69, 2
  %v71 = vadd.f32 %v69, %v70
  %v72 = vrot.slane %v71, 1
  %v73 = vadd.f32 %v71, %v72
  %v74 = vsel %vm31, %v29, 0.0
  %v75 = vrot.slane %v74, 4
  %v76 = vadd.f32 %v74, %v75
  %v77 = vrot.slane %v76, 2
  %v78 = vadd.f32 %v76, %v77
  %v79 = vrot.slane %v78, 1
  %v80 = vadd.f32 %v78, %v79
  %v81 = vsel %vm31, %v30, 0.0
  %v82 = vrot.slane %v81, 4
  %v83 = vadd.f32 %v81, %v82
  %v84 = vrot.slane %v83, 2
  %v85 = vadd.f32 %v83, %v84
  %v86 = vrot.slane %v85, 1
  %v87 = vadd.f32 %v85, %v86
  %vm96 = vcmask 1041409
  %v97 = vsel %vm96, %v45, %v38
  %vm98 = vcmask 1042434
  %v99 = vsel %vm98, %v52, %v97
  %vm100 = vcmask 1043459
  %v101 = vsel %vm100, %v59, %v99
  %vm102 = vcmask 1044484
  %v103 = vsel %vm102, %v66, %v101
  %vm104 = vcmask 1045509
  %v105 = vsel %vm104, %v73, %v103
  %vm106 = vcmask 1046534
  %v107 = vsel %vm106, %v80, %v105
  %vm108 = vcmask 1047559
  %v109 = vsel %vm108, %v87, %v107
  %v111 = vadd.f32 %v14, %v109
  %112 = vst.msk [vmem:[#allocation2] sm:$0xff] %vm31, %v111
  // Predicated region
  $region10: #{resnet_forward.28} parent=0 // pred_check
    %p113 = pneg %p8
  $region11: #{resnet_forward.28} parent=0 // pred_check_branch
    %115 = sbr.rel (%p113) target = $region13
  $region12: #{resnet_forward.28} parent=0 // pred_region
    %v116 = vld [vmem:[#allocation2] sm:$0xff]
    %117 = vst.msk [vmem:[%s1] sm:$0xff] %vm31, %v116
  $region13: #{resnet_forward.28} parent=0 // pred_fallthru
    _
  // Predicated region
  $region14: #{resnet_forward.28} parent=0 // pred_check
    _
  $region15: #{resnet_forward.28} parent=0 // pred_check_branch
    %119 = sbr.rel (0) target = $region17
  $region16: #{resnet_forward.28} parent=0 // pred_region
    _
  $region17: #{resnet_forward.28} parent=0 // pred_fallthru
    _
  // Predicated region
  $region18: #{resnet_forward.28} parent=0 // pred_check
    _
  $region19: #{resnet_forward.28} parent=0 // pred_check_branch
    %121 = sbr.rel (0) target = $region21
  $region20: #{resnet_forward.28} parent=0 // pred_region
    _
  $region21: #{resnet_forward.28} parent=0 // pred_fallthru
    _

// kernel: resnet_forward.29
$region0: #{resnet_forward.29}
  #allocation0 [shape = 'u32[]', space=smem, size = 0x4, offset = 0x4, fixed_abs, tag = 'smem constant byte address 0x4 - core index']
  #allocation1 [shape = 'u32[144,128]{1,0:T(1,128)}', space=vmem, size = 0x12000, scoped, tag = 'internal scratch']
  #allocation2 [shape = 'f32[8,128]{1,0:T(8,128)}', space=vmem, size = 0x1000, scoped, tag = 'scratch operand']
  %s0 = inlined_call_operand.vmem [shape: bf16[8,128], index: 0, kind: input, shape index: {}]
  %s1 = inlined_call_operand.vmem [shape: bf16[128,128], index: 1, kind: input, shape index: {}]
  %s2 = inlined_call_operand.vmem [shape: f32[1,128], index: 2, kind: input, shape index: {}]
  %s3 = inlined_call_operand.vmem [shape: f32[1,128], index: 3, kind: input, shape index: {}]
  %s4 = inlined_call_operand.vmem [shape: f32[8,128], index: 4, kind: output, shape index: {}]
  %s5 = sld [smem:[#allocation0]]
  $region34: #{resnet_forward.29} parent=0
    _
  %s7 = ssub.s32 1, %s5
  %s8 = scalar_select 0, %s7, %s5
  // Predicated region
  $region2: #{resnet_forward.29} parent=0 // pred_check
    _
  $region3: #{resnet_forward.29} parent=0 // pred_check_branch
    %10 = sbr.rel (0) target = $region5
  $region4: #{resnet_forward.29} parent=0 // pred_region
    _
  $region5: #{resnet_forward.29} parent=0 // pred_fallthru
    _
  // Predicated region
  $region6: #{resnet_forward.29} parent=0 // pred_check
    _
  $region7: #{resnet_forward.29} parent=0 // pred_check_branch
    %12 = sbr.rel (0) target = $region9
  $region8: #{resnet_forward.29} parent=0 // pred_region
    _
  $region9: #{resnet_forward.29} parent=0 // pred_fallthru
    _
  // Predicated region
  $region10: #{resnet_forward.29} parent=0 // pred_check
    _
  $region11: #{resnet_forward.29} parent=0 // pred_check_branch
    %14 = sbr.rel (0) target = $region13
  $region12: #{resnet_forward.29} parent=0 // pred_region
    _
  $region13: #{resnet_forward.29} parent=0 // pred_fallthru
    _
  // Predicated region
  $region14: #{resnet_forward.29} parent=0 // pred_check
    _
  $region15: #{resnet_forward.29} parent=0 // pred_check_branch
    %16 = sbr.rel (0) target = $region17
  $region16: #{resnet_forward.29} parent=0 // pred_region
    _
  $region17: #{resnet_forward.29} parent=0 // pred_fallthru
    _
  %p18 = scmp.eq.s32.totalorder 0, 0
  // Predicated region
  $region18: #{resnet_forward.29} parent=0 // pred_check
    %p19 = pneg %p18
  $region19: #{resnet_forward.29} parent=0 // pred_check_branch
    %21 = sbr.rel (%p19) target = $region21
  $region20: #{resnet_forward.29} parent=0 // pred_region
    %22 = vst [vmem:[#allocation2] sm:$0xff] 0.0
  $region21: #{resnet_forward.29} parent=0 // pred_fallthru
    _
  %v23 = vld [vmem:[#allocation2] sm:$0xff]
  %v24 = vld [vmem:[%s0] sm:$0xf]
  %v25 = vld [vmem:[%s1] sm:$0xf]
  %v26 = vld [vmem:[%s1 + $0x4] sm:$0xf]
  %v27 = vld [vmem:[%s1 + $0x8] sm:$0xf]
  %v28 = vld [vmem:[%s1 + $0xc] sm:$0xf]
  %v29 = vld [vmem:[%s1 + $0x10] sm:$0xf]
  %v30 = vld [vmem:[%s1 + $0x14] sm:$0xf]
  %v31 = vld [vmem:[%s1 + $0x18] sm:$0xf]
  %v32 = vld [vmem:[%s1 + $0x1c] sm:$0xf]
  %v33 = vld [vmem:[%s1 + $0x20] sm:$0xf]
  %v34 = vld [vmem:[%s1 + $0x24] sm:$0xf]
  %v35 = vld [vmem:[%s1 + $0x28] sm:$0xf]
  %v36 = vld [vmem:[%s1 + $0x2c] sm:$0xf]
  %v37 = vld [vmem:[%s1 + $0x30] sm:$0xf]
  %v38 = vld [vmem:[%s1 + $0x34] sm:$0xf]
  %v39 = vld [vmem:[%s1 + $0x38] sm:$0xf]
  %v40 = vld [vmem:[%s1 + $0x3c] sm:$0xf]
  %v57 = vunpack.c.l.b16 %v25
  %v58 = vunpack.c.l.b16 %v26
  %v59 = vunpack.c.l.b16 %v27
  %v60 = vunpack.c.l.b16 %v28
  %v61 = vunpack.c.l.b16 %v29
  %v62 = vunpack.c.l.b16 %v30
  %v63 = vunpack.c.l.b16 %v31
  %v64 = vunpack.c.l.b16 %v32
  %v65 = vunpack.c.l.b16 %v33
  %v66 = vunpack.c.l.b16 %v34
  %v67 = vunpack.c.l.b16 %v35
  %v68 = vunpack.c.l.b16 %v36
  %v69 = vunpack.c.l.b16 %v37
  %v70 = vunpack.c.l.b16 %v38
  %v71 = vunpack.c.l.b16 %v39
  %v72 = vunpack.c.l.b16 %v40
  %v73 = vpack.c.b16 %v58, %v57
  %v74 = vpack.c.b16 %v60, %v59
  %v75 = vpack.c.b16 %v62, %v61
  %v76 = vpack.c.b16 %v64, %v63
  %v77 = vpack.c.b16 %v66, %v65
  %v78 = vpack.c.b16 %v68, %v67
  %v79 = vpack.c.b16 %v70, %v69
  %v80 = vpack.c.b16 %v72, %v71
  %89 = vmatprep.subr.bf16.mxu0 0
  %90 = vmatpush1.bf16.msra.mxu0 %v73
  %91 = vmatprep.subr.bf16.mxu0 0
  %92 = vmatpush1.bf16.msra.mxu0 %v74
  %93 = vmatprep.subr.bf16.mxu0 0
  %94 = vmatpush1.bf16.msra.mxu0 %v75
  %95 = vmatprep.subr.bf16.mxu0 0
  %96 = vmatpush1.bf16.msra.mxu0 %v76
  %97 = vmatprep.subr.bf16.mxu0 0
  %98 = vmatpush1.bf16.msra.mxu0 %v77
  %99 = vmatprep.subr.bf16.mxu0 0
  %100 = vmatpush1.bf16.msra.mxu0 %v78
  %101 = vmatprep.subr.bf16.mxu0 0
  %102 = vmatpush1.bf16.msra.mxu0 %v79
  %103 = vmatprep.subr.bf16.mxu0 0
  %104 = vmatpush1.bf16.msra.mxu0 %v80
  %105 = vmatprep.subr.bf16.mxu0 0
  %106 = vmatpush1.bf16.msra.mxu0 0
  %107 = vmatprep.subr.bf16.mxu0 0
  %108 = vmatpush1.bf16.msra.mxu0 0
  %109 = vmatprep.subr.bf16.mxu0 0
  %110 = vmatpush1.bf16.msra.mxu0 0
  %111 = vmatprep.subr.bf16.mxu0 0
  %112 = vmatpush1.bf16.msra.mxu0 0
  %113 = vmatprep.subr.bf16.mxu0 0
  %114 = vmatpush1.bf16.msra.mxu0 0
  %115 = vmatprep.subr.bf16.mxu0 0
  %116 = vmatpush1.bf16.msra.mxu0 0
  %117 = vmatprep.subr.bf16.mxu0 0
  %118 = vmatpush1.bf16.msra.mxu0 0
  %119 = vmatprep.subr.bf16.mxu0 0
  %120 = vmatpush1.bf16.msra.mxu0 0
  %121 = vmatprep.mubr.bf16.mxu0 0
  %122 = vmatmul.mubr.bf16.gmra.mrb[0].mxu0 %v24
  %v123 = vpop.f32.mrb[0].mxu0
  %v124 = vadd.f32 0.0, %v123
  %v125 = vpop.f32.mrb[0].mxu0
  %v126 = vpop.f32.mrb[0].mxu0
  %v127 = vpop.f32.mrb[0].mxu0
  %128 = vdwg.mxu0
  %v129 = vadd.f32 %v23, %v124
  %130 = vst [vmem:[#allocation2] sm:$0xff] %v129
  // Predicated region
  $region22: #{resnet_forward.29} parent=0 // pred_check
    %p131 = pneg %p18
  $region23: #{resnet_forward.29} parent=0 // pred_check_branch
    %133 = sbr.rel (%p131) target = $region25
  $region24: #{resnet_forward.29} parent=0 // pred_region
    %v134 = vld [vmem:[#allocation2] sm:$0xff]
    %v135 = vld [vmem:[%s2] sm:$0x1]
    %v137 = vlaneseq
    %v138 = vshrl.u32 %v137, 7
    %v139 = vsub.s32 0, %v138
    %v140 = vrot.slane %v135, %v139
    %v142 = vmul.f32 %v134, %v140
    %v143 = vld [vmem:[%s3] sm:$0x1]
    %v145 = vlaneseq
    %v146 = vshrl.u32 %v145, 7
    %v147 = vsub.s32 0, %v146
    %v148 = vrot.slane %v143, %v147
    %v150 = vadd.f32 %v142, %v148
    %151 = vst [vmem:[%s4] sm:$0xff] %v150
  $region25: #{resnet_forward.29} parent=0 // pred_fallthru
    _
  // Predicated region
  $region26: #{resnet_forward.29} parent=0 // pred_check
    _
  $region27: #{resnet_forward.29} parent=0 // pred_check_branch
    %153 = sbr.rel (0) target = $region29
  $region28: #{resnet_forward.29} parent=0 // pred_region
    _
  $region29: #{resnet_forward.29} parent=0 // pred_fallthru
    _
  // Predicated region
  $region30: #{resnet_forward.29} parent=0 // pred_check
    _
  $region31: #{resnet_forward.29} parent=0 // pred_check_branch
    %155 = sbr.rel (0) target = $region33
  $region32: #{resnet_forward.29} parent=0 // pred_region
    _
  $region33: #{resnet_forward.29} parent=0 // pred_fallthru
    _

</llo_original>
